<compile_context>
chip_gen: v6e
topology: v6e:2x2x1
jax: 0.10.0
libtpu: 0.0.40
codegen_flags: <defaults>
</compile_context>

<pallas_src>
import jax
import jax.numpy as jnp
from jax.experimental import pallas as pl
from jax.experimental.pallas import tpu as pltpu

F32 = jnp.float32
BF16 = jnp.bfloat16
EPS = 1e-5
SLOPE = 0.01


# ----------------------------------------------------------------------------
# pallas_call helper: grid over batch; per-batch blocks for activations, whole
# blocks for (tiny) weights.  Batch axis marked "parallel" (2nd TC on v7x).
# ----------------------------------------------------------------------------
def _batched_call(kernel, out_shape, arrays, batched, scratch_shapes=()):
    B = out_shape.shape[0]

    def _bspec(shape, is_batched):
        nd = len(shape)
        if is_batched:
            return pl.BlockSpec((1,) + tuple(shape[1:]),
                                (lambda n: lambda b: (b,) + (0,) * (n - 1))(nd))
        return pl.BlockSpec(tuple(shape), (lambda n: lambda b: (0,) * n)(nd))

    in_specs = [_bspec(a.shape, f) for a, f in zip(arrays, batched)]
    out_spec = _bspec(out_shape.shape, True)
    return pl.pallas_call(
        kernel,
        out_shape=out_shape,
        grid=(B,),
        in_specs=in_specs,
        out_specs=out_spec,
        scratch_shapes=list(scratch_shapes),
        compiler_params=pltpu.CompilerParams(dimension_semantics=("parallel",)),
    )(*arrays)


# ----------------------------------------------------------------------------
# fused conv / instance-norm / residual / activation kernels
# ----------------------------------------------------------------------------
def _in_affine(acc, g, b):
    # InstanceNorm (biased variance) + affine, per channel over the HW lane dim.
    mean = jnp.mean(acc, axis=-1, keepdims=True)
    var = jnp.mean(jnp.square(acc - mean), axis=-1, keepdims=True)
    return (acc - mean) * jax.lax.rsqrt(var + EPS) * g + b


def _lrelu(y):
    return jnp.where(y >= 0, y, SLOPE * y)


def _make_conv_in_kernel(final_act):
    def kern(col_ref, w_ref, g_ref, b_ref, o_ref):
        # (Cout,K) @ (K,HW) on the MXU in bf16, f32 accumulation.
        acc = jnp.dot(w_ref[...], col_ref[0], preferred_element_type=jnp.float32)
        y = _in_affine(acc, g_ref[...], b_ref[...])
        if final_act:
            y = _lrelu(y)
        o_ref[0] = y
    return kern


def _conv_in_res_kernel(col_ref, w_ref, g_ref, b_ref, res_ref, o_ref):
    acc = jnp.dot(w_ref[...], col_ref[0], preferred_element_type=jnp.float32)
    y = _in_affine(acc, g_ref[...], b_ref[...]) + res_ref[0]
    o_ref[0] = _lrelu(y)


def _pool_conv_in_kernel(s0, s1, s2, s3, w_ref, g_ref, b_ref, o_ref):
    # fused skip branch: 2x2 AvgPool -> 1x1 conv -> InstanceNorm (no nonlin)
    pooled = (0.25 * (s0[0] + s1[0] + s2[0] + s3[0])).astype(BF16)
    acc = jnp.dot(w_ref[...], pooled, preferred_element_type=jnp.float32)
    o_ref[0] = _in_affine(acc, g_ref[...], b_ref[...])


def _pool_kernel(s0, s1, s2, s3, o_ref):
    o_ref[0] = 0.25 * (s0[0] + s1[0] + s2[0] + s3[0])


# ----------------------------------------------------------------------------
# conv = im2col (JAX glue, no transposes) + fused Pallas kernel
# ----------------------------------------------------------------------------
def _im2col(x, kh, kw, stride, pad):
    # Produces (B, Cin*kh*kw, Ho*Wo): HW lane-dense, matches w.reshape(Cout,-1).
    # TODO(synk): for large activations move the window gather into the kernel
    # (DMA the padded tile once) to avoid the kh*kw-sized col buffer in HBM.
    B, Cin, H, W = x.shape
    xp = jnp.pad(x, ((0, 0), (0, 0), (pad, pad), (pad, pad)))
    Ho = (H + 2 * pad - kh) // stride + 1
    Wo = (W + 2 * pad - kw) // stride + 1
    cols = []
    for i in range(kh):
        for j in range(kw):
            cols.append(xp[:, :, i:i + stride * (Ho - 1) + 1:stride,
                           j:j + stride * (Wo - 1) + 1:stride])
    col = jnp.stack(cols, axis=2).reshape(B, Cin * kh * kw, Ho * Wo)
    return col, Ho, Wo


def conv_in_block(x, w, gamma, beta, stride, pad, *, final_act=True, res=None):
    """conv (no bias) -> InstanceNorm -> [+res] -> [LeakyReLU], one kernel."""
    B, Cin, H, W = x.shape
    Cout, _, kh, kw = w.shape
    col, Ho, Wo = _im2col(x, kh, kw, stride, pad)
    col = col.astype(BF16)                       # feed MXU in bf16, f32 accumulate
    w2d = w.reshape(Cout, Cin * kh * kw).astype(BF16)
    g = gamma.reshape(Cout, 1).astype(F32)
    bt = beta.reshape(Cout, 1).astype(F32)
    out_shape = jax.ShapeDtypeStruct((B, Cout, Ho * Wo), F32)
    if res is None:
        out = _batched_call(_make_conv_in_kernel(final_act), out_shape,
                            [col, w2d, g, bt], [True, False, False, False])
    else:
        out = _batched_call(_conv_in_res_kernel, out_shape,
                            [col, w2d, g, bt, res],
                            [True, False, False, False, True])
    return out.reshape(B, Cout, Ho, Wo)


def _pool_slices(x):
    # TODO(synk): hard-codes 2x2 AvgPool with even H/W (matches strides=[1,2,2,2])
    B, C, H, W = x.shape
    HW = (H // 2) * (W // 2)
    return [x[:, :, i::2, j::2].reshape(B, C, HW) for i in (0, 1) for j in (0, 1)]


def skip_pool_proj(x, w, gamma, beta):
    B, Cin, H, W = x.shape
    Cout = w.shape[0]
    sl = _pool_slices(x)
    HW = sl[0].shape[-1]
    w2d = w.reshape(Cout, Cin).astype(BF16)
    g = gamma.reshape(Cout, 1).astype(F32)
    bt = beta.reshape(Cout, 1).astype(F32)
    return _batched_call(_pool_conv_in_kernel,
                         jax.ShapeDtypeStruct((B, Cout, HW), F32),
                         sl + [w2d, g, bt], [True] * 4 + [False] * 3)


def skip_pool(x):
    B, C, H, W = x.shape
    sl = _pool_slices(x)
    HW = sl[0].shape[-1]
    return _batched_call(_pool_kernel, jax.ShapeDtypeStruct((B, C, HW), F32),
                         sl, [True] * 4)


# ----------------------------------------------------------------------------
# Mamba / MambaLayer: one fused kernel per batch
# ----------------------------------------------------------------------------
def _make_mamba_kernel(L, C, d_inner, n, dt_rank, K):
    unroll = L if L <= 8 else 8

    def kern(x_ref, lng_ref, lnb_ref, win_ref, cw_ref, cb_ref, wxp_ref,
             dtw_ref, dtb_ref, at_ref, dskip_ref, wout_ref, o_ref,
             xpad_s, dA_s, dBu_s, c3_s, y_s):
        x = x_ref[0]                                            # (L, C)

        # --- LayerNorm(dim) ---
        mean = jnp.mean(x, axis=-1, keepdims=True)
        var = jnp.mean(jnp.square(x - mean), axis=-1, keepdims=True)
        xn = (x - mean) * jax.lax.rsqrt(var + EPS) * lng_ref[...] + lnb_ref[...]

        # --- in_proj -> (xs, z) ---
        xz = jnp.dot(xn, win_ref[...], preferred_element_type=jnp.float32)  # (L, 2di)
        xs = xz[:, :d_inner]
        z = xz[:, d_inner:]

        # --- causal depthwise conv1d + SiLU (left zero-pad in VMEM scratch) ---
        xpad_s[...] = jnp.zeros((L + K - 1, d_inner), jnp.float32)
        xpad_s[K - 1:K - 1 + L, :] = xs
        cw = cw_ref[...]                                        # (K, di)
        acc = jnp.zeros((L, d_inner), jnp.float32)
        for j in range(K):                                      # K small & static
            acc = acc + xpad_s[j:j + L, :] * cw[j:j + 1, :]
        acc = acc + cb_ref[...]
        u = acc * jax.nn.sigmoid(acc)                           # SiLU, (L, di)

        # --- x_proj -> (dt, B, C) ; dt_proj + softplus -> delta ---
        xdbl = jnp.dot(u, wxp_ref[...], preferred_element_type=jnp.float32)  # (L, R)
        dtr = xdbl[:, :dt_rank]
        Bm = xdbl[:, dt_rank:dt_rank + n]
        Cm = xdbl[:, dt_rank + n:]
        delta = jax.nn.softplus(
            jnp.dot(dtr, dtw_ref[...], preferred_element_type=jnp.float32)
            + dtb_ref[...])                                     # (L, di)
        zg = z * jax.nn.sigmoid(z)                              # silu gate, (L, di)

        # --- precompute scan terms; exp / outer products hoisted out of loop ---
        du = delta * u                                          # (L, di)
        dA_s[...] = jnp.exp(delta[:, None, :] * at_ref[...][None, :, :])   # (L,n,di)
        dBu_s[...] = Bm[:, :, None] * du[:, None, :]                        # (L,n,di)
        c3_s[...] = jnp.broadcast_to(Cm[:, :, None], (L, n, d_inner))       # (L,n,di)

        # --- sequential selective scan (state carried, output to VMEM scratch) ---
        def body(t, state):                                     # state (n, di)
            state = dA_s[t] * state + dBu_s[t]
            y_s[pl.ds(t, 1), :] = jnp.sum(state * c3_s[t], axis=0, keepdims=True)
            return state

        jax.lax.fori_loop(0, L, body, jnp.zeros((n, d_inner), jnp.float32),
                          unroll=unroll)

        # --- D skip, SiLU(z) gate, out_proj ---
        y = (y_s[...] + u * dskip_ref[...]) * zg                # (L, di)
        o_ref[0] = jnp.dot(y, wout_ref[...], preferred_element_type=jnp.float32)

    return kern


def mamba_layer(x, p):
    # MambaLayer.forward: flatten spatial -> LayerNorm -> Mamba -> unflatten
    B, C, H, W = x.shape
    L = H * W
    d_inner = p["in_proj_w"].shape[0] // 2
    n = p["A_log"].shape[1]
    dt_rank = p["dt_proj_w"].shape[1]
    K = p["conv1d_w"].shape[1]

    x_tok = x.reshape(B, C, L).transpose(0, 2, 1).astype(F32)   # (B, L, C)

    arrays = [
        x_tok,
        p["ln_g"].reshape(1, C).astype(F32),
        p["ln_b"].reshape(1, C).astype(F32),
        p["in_proj_w"].T.astype(F32),                  # (C, 2*d_inner)
        p["conv1d_w"].T.astype(F32),                   # (K, d_inner)
        p["conv1d_b"].reshape(1, d_inner).astype(F32),
        p["x_proj_w"].T.astype(F32),                   # (d_inner, dt_rank+2n)
        p["dt_proj_w"].T.astype(F32),                  # (dt_rank, d_inner)
        p["dt_proj_b"].reshape(1, d_inner).astype(F32),
        (-jnp.exp(p["A_log"])).T.astype(F32),          # (n, d_inner)
        p["D"].reshape(1, d_inner).astype(F32),
        p["out_proj_w"].T.astype(F32),                 # (d_inner, C)
    ]
    batched = [True] + [False] * (len(arrays) - 1)
    scratch = [
        pltpu.VMEM((L + K - 1, d_inner), F32),         # left-padded xs
        pltpu.VMEM((L, n, d_inner), F32),              # exp(delta*A)
        pltpu.VMEM((L, n, d_inner), F32),              # delta*B*u
        pltpu.VMEM((L, n, d_inner), F32),              # C broadcast
        pltpu.VMEM((L, d_inner), F32),                 # scan output
    ]
    out = _batched_call(_make_mamba_kernel(L, C, d_inner, n, dt_rank, K),
                        jax.ShapeDtypeStruct((B, L, C), F32),
                        arrays, batched, scratch)
    return out.transpose(0, 2, 1).reshape(B, C, H, W)


# ----------------------------------------------------------------------------
# BasicBlockD / encoder forward
# ----------------------------------------------------------------------------
def basic_block(x, p, stride):
    B, Cin, H, W = x.shape
    Cout = p["conv1_w"].shape[0]
    k = p["conv1_w"].shape[-1]
    pad = (k - 1) // 2

    out1 = conv_in_block(x, p["conv1_w"], p["in1_g"], p["in1_b"], stride, pad,
                         final_act=True)

    # residual branch (fused AvgPool + optional 1x1 conv + InstanceNorm)
    if stride == 1 and Cin == Cout:
        res = x.reshape(B, Cin, H * W)
    elif stride == 1:
        res = conv_in_block(x, p["skip_w"], p["skip_g"], p["skip_b"], 1, 0,
                            final_act=False).reshape(B, Cout, H * W)
    elif Cin == Cout:
        res = skip_pool(x)
    else:
        res = skip_pool_proj(x, p["skip_w"], p["skip_g"], p["skip_b"])

    # conv2 + InstanceNorm + residual add + LeakyReLU fused in one kernel
    # (stochastic_depth_p=0 and squeeze_excitation=False -> identity)
    return conv_in_block(out1, p["conv2_w"], p["in2_g"], p["in2_b"], 1, pad,
                         final_act=True, res=res)


def encoder_forward(x, params, strides):
    # stem: ConvDropoutNormReLU (conv k3 s1 -> IN -> LeakyReLU) fused
    k = params["stem"]["conv_w"].shape[-1]
    x = conv_in_block(x, params["stem"]["conv_w"], params["stem"]["in_g"],
                      params["stem"]["in_b"], 1, (k - 1) // 2, final_act=True)
    ret = []
    for s, sp in enumerate(params["stages"]):
        x = basic_block(x, sp, strides[s])
        if s >= 3:
            x = mamba_layer(x, params["mamba"][s - 3])
        ret.append(x)
    return [ret[-1]]                                   # return_skips=False


# ----------------------------------------------------------------------------
# deterministic parameter init (synthetic, matches the module's shapes)
# ----------------------------------------------------------------------------
def init_params(key, input_channels, features, kernel_size,
                d_state=16, d_conv=4, expand=2):
    keys = iter(jax.random.split(key, 256))

    def nrm(shape, scale=0.1):
        return scale * jax.random.normal(next(keys), shape, dtype=F32)

    params = {}
    stem_ch = features[0]
    params["stem"] = dict(
        conv_w=nrm((stem_ch, input_channels, kernel_size, kernel_size)),
        in_g=1.0 + nrm((stem_ch,)), in_b=nrm((stem_ch,)))

    in_ch = stem_ch
    stages, mambas = [], []
    for s, out_ch in enumerate(features):
        p = dict(
            conv1_w=nrm((out_ch, in_ch, kernel_size, kernel_size)),
            in1_g=1.0 + nrm((out_ch,)), in1_b=nrm((out_ch,)),
            conv2_w=nrm((out_ch, out_ch, kernel_size, kernel_size)),
            in2_g=1.0 + nrm((out_ch,)), in2_b=nrm((out_ch,)))
        if in_ch != out_ch:
            p.update(skip_w=nrm((out_ch, in_ch, 1, 1)),
                     skip_g=1.0 + nrm((out_ch,)), skip_b=nrm((out_ch,)))
        stages.append(p)
        in_ch = out_ch
        if s >= 3:
            dim = out_ch
            d_inner = expand * dim
            dt_rank = max(1, -(-dim // 16))
            mambas.append(dict(
                ln_g=1.0 + nrm((dim,)), ln_b=nrm((dim,)),
                in_proj_w=nrm((2 * d_inner, dim)),
                conv1d_w=nrm((d_inner, d_conv)),
                conv1d_b=nrm((d_inner,)),
                x_proj_w=nrm((dt_rank + 2 * d_state, d_inner)),
                dt_proj_w=nrm((d_inner, dt_rank)),
                dt_proj_b=nrm((d_inner,), 0.05),
                A_log=jnp.log(jnp.broadcast_to(
                    jnp.arange(1, d_state + 1, dtype=F32), (d_inner, d_state))),
                D=jnp.ones((d_inner,), F32),
                out_proj_w=nrm((dim, d_inner)),
            ))
    params["stages"] = stages
    params["mamba"] = mambas
    return params


if __name__ == "__main__":
    key = jax.random.PRNGKey(0)
    k_in, k_p = jax.random.split(key)

    input_channels = 2
    features = [8, 16, 16, 16]          # n_stages=4; dim for MambaLayer = 16
    strides = [1, 2, 2, 2]
    x = jax.random.normal(k_in, (2, input_channels, 16, 16), dtype=F32)

    params = init_params(k_p, input_channels, features, kernel_size=3)

    fwd = jax.jit(lambda xx, pp: encoder_forward(xx, pp, strides))
    out = fwd(x, params)
    out = [jax.block_until_ready(o) for o in out]

    assert out[0].shape == (2, features[-1], 2, 2), out[0].shape
    assert bool(jnp.all(jnp.isfinite(out[0])))
    print("KERNEL_OK")
</pallas_src>

<mosaic_0001>
module attributes {stable_mosaic.version = 11 : i64} {
  func.func @kern(%arg0: i32, %arg1: memref<1x18x256xbf16, #tpu.memory_space<vmem>>, %arg2: memref<8x18xbf16, #tpu.memory_space<vmem>>, %arg3: memref<8x1xf32, #tpu.memory_space<vmem>>, %arg4: memref<8x1xf32, #tpu.memory_space<vmem>>, %arg5: memref<1x8x256xf32, #tpu.memory_space<vmem>>) attributes {dimension_semantics = [#tpu.dimension_semantics<parallel>], iteration_bounds = array<i64: 2>, scalar_prefetch = 0 : i64, scratch_operands = 0 : i64, tpu.core_type = #tpu.core_type<tc>, window_params = [{transform_indices = @transform_0, window_bounds = array<i64: 1, 18, 256>}, {pipeline_mode = #tpu.pipeline_mode<synchronous>, transform_indices = @transform_1, window_bounds = array<i64: 8, 18>}, {pipeline_mode = #tpu.pipeline_mode<synchronous>, transform_indices = @transform_2, window_bounds = array<i64: 8, 1>}, {pipeline_mode = #tpu.pipeline_mode<synchronous>, transform_indices = @transform_3, window_bounds = array<i64: 8, 1>}, {transform_indices = @transform_4, window_bounds = array<i64: 1, 8, 256>}]} {
    %c0 = arith.constant 0 : index
    %c0_0 = arith.constant 0 : index
    %0 = vector.load %arg2[%c0, %c0_0] : memref<8x18xbf16, #tpu.memory_space<vmem>>, vector<8x18xbf16>
    %c0_1 = arith.constant 0 : index
    %c0_2 = arith.constant 0 : index
    %c0_3 = arith.constant 0 : index
    %1 = vector.load %arg1[%c0_1, %c0_2, %c0_3] : memref<1x18x256xbf16, #tpu.memory_space<vmem>>, vector<1x18x256xbf16>
    %2 = vector.shape_cast %1 : vector<1x18x256xbf16> to vector<18x256xbf16>
    %cst = arith.constant dense<0.000000e+00> : vector<8x256xf32>
    %3 = tpu.matmul %0, %2, %cst {dimension_numbers = #tpu.dot_dimension_numbers<[1], [0], [0], [1], [0, 0, 1, 1], [], []>} : vector<8x18xbf16>, vector<18x256xbf16>, vector<8x256xf32> -> vector<8x256xf32>
    %c0_4 = arith.constant 0 : index
    %c0_5 = arith.constant 0 : index
    %4 = vector.load %arg3[%c0_4, %c0_5] : memref<8x1xf32, #tpu.memory_space<vmem>>, vector<8x1xf32>
    %c0_6 = arith.constant 0 : index
    %c0_7 = arith.constant 0 : index
    %5 = vector.load %arg4[%c0_6, %c0_7] : memref<8x1xf32, #tpu.memory_space<vmem>>, vector<8x1xf32>
    %cst_8 = arith.constant dense<0.000000e+00> : vector<8xf32>
    %6 = vector.multi_reduction <add>, %3, %cst_8 [1] : vector<8x256xf32> to vector<8xf32>
    %7 = vector.shape_cast %6 : vector<8xf32> to vector<8x1xf32>
    %cst_9 = arith.constant 2.560000e+02 : f32
    %8 = vector.broadcast %cst_9 : f32 to vector<8x1xf32>
    %9 = arith.divf %7, %8 : vector<8x1xf32>
    %10 = vector.broadcast %9 : vector<8x1xf32> to vector<8x256xf32>
    %11 = arith.subf %3, %10 : vector<8x256xf32>
    %12 = arith.mulf %11, %11 : vector<8x256xf32>
    %cst_10 = arith.constant dense<0.000000e+00> : vector<8xf32>
    %13 = vector.multi_reduction <add>, %12, %cst_10 [1] : vector<8x256xf32> to vector<8xf32>
    %14 = vector.shape_cast %13 : vector<8xf32> to vector<8x1xf32>
    %cst_11 = arith.constant 2.560000e+02 : f32
    %15 = vector.broadcast %cst_11 : f32 to vector<8x1xf32>
    %16 = arith.divf %14, %15 : vector<8x1xf32>
    %17 = vector.broadcast %9 : vector<8x1xf32> to vector<8x256xf32>
    %18 = arith.subf %3, %17 : vector<8x256xf32>
    %cst_12 = arith.constant 9.99999974E-6 : f32
    %19 = vector.broadcast %cst_12 : f32 to vector<8x1xf32>
    %20 = arith.addf %16, %19 : vector<8x1xf32>
    %21 = math.rsqrt %20 : vector<8x1xf32>
    %22 = vector.broadcast %21 : vector<8x1xf32> to vector<8x256xf32>
    %23 = arith.mulf %18, %22 : vector<8x256xf32>
    %24 = vector.broadcast %4 : vector<8x1xf32> to vector<8x256xf32>
    %25 = arith.mulf %23, %24 : vector<8x256xf32>
    %26 = vector.broadcast %5 : vector<8x1xf32> to vector<8x256xf32>
    %27 = arith.addf %25, %26 : vector<8x256xf32>
    %cst_13 = arith.constant 0.000000e+00 : f32
    %28 = vector.broadcast %cst_13 : f32 to vector<8x256xf32>
    %29 = arith.cmpf oge, %27, %28 : vector<8x256xf32>
    %cst_14 = arith.constant 0.00999999977 : f32
    %30 = vector.broadcast %cst_14 : f32 to vector<8x256xf32>
    %31 = arith.mulf %30, %27 : vector<8x256xf32>
    %32 = arith.select %29, %27, %31 : vector<8x256xi1>, vector<8x256xf32>
    %c0_15 = arith.constant 0 : index
    %c0_16 = arith.constant 0 : index
    %c0_17 = arith.constant 0 : index
    %33 = vector.load %arg5[%c0_15, %c0_16, %c0_17] : memref<1x8x256xf32, #tpu.memory_space<vmem>>, vector<1x8x256xf32>
    %34 = vector.shape_cast %33 : vector<1x8x256xf32> to vector<8x256xf32>
    %35 = vector.shape_cast %32 : vector<8x256xf32> to vector<1x8x256xf32>
    tpu.vector_store %arg5[%c0_15, %c0_16, %c0_17], %35 {strides = array<i32>} : memref<1x8x256xf32, #tpu.memory_space<vmem>>, vector<1x8x256xf32>,
    return
  }
  func.func @transform_0(%arg0: i32) -> (i32, i32, i32) {
    %c0_i32 = arith.constant 0 : i32
    %c0_i32_0 = arith.constant 0 : i32
    %c0_i32_1 = arith.constant 0 : i32
    return %arg0, %c0_i32, %c0_i32_0 : i32, i32, i32
  }
  func.func @transform_1(%arg0: i32) -> (i32, i32) {
    %c0_i32 = arith.constant 0 : i32
    %c0_i32_0 = arith.constant 0 : i32
    %c0_i32_1 = arith.constant 0 : i32
    return %c0_i32, %c0_i32_0 : i32, i32
  }
  func.func @transform_2(%arg0: i32) -> (i32, i32) {
    %c0_i32 = arith.constant 0 : i32
    %c0_i32_0 = arith.constant 0 : i32
    %c0_i32_1 = arith.constant 0 : i32
    return %c0_i32, %c0_i32_0 : i32, i32
  }
  func.func @transform_3(%arg0: i32) -> (i32, i32) {
    %c0_i32 = arith.constant 0 : i32
    %c0_i32_0 = arith.constant 0 : i32
    %c0_i32_1 = arith.constant 0 : i32
    return %c0_i32, %c0_i32_0 : i32, i32
  }
  func.func @transform_4(%arg0: i32) -> (i32, i32, i32) {
    %c0_i32 = arith.constant 0 : i32
    %c0_i32_0 = arith.constant 0 : i32
    %c0_i32_1 = arith.constant 0 : i32
    return %arg0, %c0_i32, %c0_i32_0 : i32, i32, i32
  }
}

module attributes {stable_mosaic.version = 11 : i64} {
  func.func @kern(%arg0: i32, %arg1: memref<1x72x256xbf16, #tpu.memory_space<vmem>>, %arg2: memref<8x72xbf16, #tpu.memory_space<vmem>>, %arg3: memref<8x1xf32, #tpu.memory_space<vmem>>, %arg4: memref<8x1xf32, #tpu.memory_space<vmem>>, %arg5: memref<1x8x256xf32, #tpu.memory_space<vmem>>) attributes {dimension_semantics = [#tpu.dimension_semantics<parallel>], iteration_bounds = array<i64: 2>, scalar_prefetch = 0 : i64, scratch_operands = 0 : i64, tpu.core_type = #tpu.core_type<tc>, window_params = [{transform_indices = @transform_0, window_bounds = array<i64: 1, 72, 256>}, {pipeline_mode = #tpu.pipeline_mode<synchronous>, transform_indices = @transform_1, window_bounds = array<i64: 8, 72>}, {pipeline_mode = #tpu.pipeline_mode<synchronous>, transform_indices = @transform_2, window_bounds = array<i64: 8, 1>}, {pipeline_mode = #tpu.pipeline_mode<synchronous>, transform_indices = @transform_3, window_bounds = array<i64: 8, 1>}, {transform_indices = @transform_4, window_bounds = array<i64: 1, 8, 256>}]} {
    %c0 = arith.constant 0 : index
    %c0_0 = arith.constant 0 : index
    %0 = vector.load %arg2[%c0, %c0_0] : memref<8x72xbf16, #tpu.memory_space<vmem>>, vector<8x72xbf16>
    %c0_1 = arith.constant 0 : index
    %c0_2 = arith.constant 0 : index
    %c0_3 = arith.constant 0 : index
    %1 = vector.load %arg1[%c0_1, %c0_2, %c0_3] : memref<1x72x256xbf16, #tpu.memory_space<vmem>>, vector<1x72x256xbf16>
    %2 = vector.shape_cast %1 : vector<1x72x256xbf16> to vector<72x256xbf16>
    %cst = arith.constant dense<0.000000e+00> : vector<8x256xf32>
    %3 = tpu.matmul %0, %2, %cst {dimension_numbers = #tpu.dot_dimension_numbers<[1], [0], [0], [1], [0, 0, 1, 1], [], []>} : vector<8x72xbf16>, vector<72x256xbf16>, vector<8x256xf32> -> vector<8x256xf32>
    %c0_4 = arith.constant 0 : index
    %c0_5 = arith.constant 0 : index
    %4 = vector.load %arg3[%c0_4, %c0_5] : memref<8x1xf32, #tpu.memory_space<vmem>>, vector<8x1xf32>
    %c0_6 = arith.constant 0 : index
    %c0_7 = arith.constant 0 : index
    %5 = vector.load %arg4[%c0_6, %c0_7] : memref<8x1xf32, #tpu.memory_space<vmem>>, vector<8x1xf32>
    %cst_8 = arith.constant dense<0.000000e+00> : vector<8xf32>
    %6 = vector.multi_reduction <add>, %3, %cst_8 [1] : vector<8x256xf32> to vector<8xf32>
    %7 = vector.shape_cast %6 : vector<8xf32> to vector<8x1xf32>
    %cst_9 = arith.constant 2.560000e+02 : f32
    %8 = vector.broadcast %cst_9 : f32 to vector<8x1xf32>
    %9 = arith.divf %7, %8 : vector<8x1xf32>
    %10 = vector.broadcast %9 : vector<8x1xf32> to vector<8x256xf32>
    %11 = arith.subf %3, %10 : vector<8x256xf32>
    %12 = arith.mulf %11, %11 : vector<8x256xf32>
    %cst_10 = arith.constant dense<0.000000e+00> : vector<8xf32>
    %13 = vector.multi_reduction <add>, %12, %cst_10 [1] : vector<8x256xf32> to vector<8xf32>
    %14 = vector.shape_cast %13 : vector<8xf32> to vector<8x1xf32>
    %cst_11 = arith.constant 2.560000e+02 : f32
    %15 = vector.broadcast %cst_11 : f32 to vector<8x1xf32>
    %16 = arith.divf %14, %15 : vector<8x1xf32>
    %17 = vector.broadcast %9 : vector<8x1xf32> to vector<8x256xf32>
    %18 = arith.subf %3, %17 : vector<8x256xf32>
    %cst_12 = arith.constant 9.99999974E-6 : f32
    %19 = vector.broadcast %cst_12 : f32 to vector<8x1xf32>
    %20 = arith.addf %16, %19 : vector<8x1xf32>
    %21 = math.rsqrt %20 : vector<8x1xf32>
    %22 = vector.broadcast %21 : vector<8x1xf32> to vector<8x256xf32>
    %23 = arith.mulf %18, %22 : vector<8x256xf32>
    %24 = vector.broadcast %4 : vector<8x1xf32> to vector<8x256xf32>
    %25 = arith.mulf %23, %24 : vector<8x256xf32>
    %26 = vector.broadcast %5 : vector<8x1xf32> to vector<8x256xf32>
    %27 = arith.addf %25, %26 : vector<8x256xf32>
    %cst_13 = arith.constant 0.000000e+00 : f32
    %28 = vector.broadcast %cst_13 : f32 to vector<8x256xf32>
    %29 = arith.cmpf oge, %27, %28 : vector<8x256xf32>
    %cst_14 = arith.constant 0.00999999977 : f32
    %30 = vector.broadcast %cst_14 : f32 to vector<8x256xf32>
    %31 = arith.mulf %30, %27 : vector<8x256xf32>
    %32 = arith.select %29, %27, %31 : vector<8x256xi1>, vector<8x256xf32>
    %c0_15 = arith.constant 0 : index
    %c0_16 = arith.constant 0 : index
    %c0_17 = arith.constant 0 : index
    %33 = vector.load %arg5[%c0_15, %c0_16, %c0_17] : memref<1x8x256xf32, #tpu.memory_space<vmem>>, vector<1x8x256xf32>
    %34 = vector.shape_cast %33 : vector<1x8x256xf32> to vector<8x256xf32>
    %35 = vector.shape_cast %32 : vector<8x256xf32> to vector<1x8x256xf32>
    tpu.vector_store %arg5[%c0_15, %c0_16, %c0_17], %35 {strides = array<i32>} : memref<1x8x256xf32, #tpu.memory_space<vmem>>, vector<1x8x256xf32>,
    return
  }
  func.func @transform_0(%arg0: i32) -> (i32, i32, i32) {
    %c0_i32 = arith.constant 0 : i32
    %c0_i32_0 = arith.constant 0 : i32
    %c0_i32_1 = arith.constant 0 : i32
    return %arg0, %c0_i32, %c0_i32_0 : i32, i32, i32
  }
  func.func @transform_1(%arg0: i32) -> (i32, i32) {
    %c0_i32 = arith.constant 0 : i32
    %c0_i32_0 = arith.constant 0 : i32
    %c0_i32_1 = arith.constant 0 : i32
    return %c0_i32, %c0_i32_0 : i32, i32
  }
  func.func @transform_2(%arg0: i32) -> (i32, i32) {
    %c0_i32 = arith.constant 0 : i32
    %c0_i32_0 = arith.constant 0 : i32
    %c0_i32_1 = arith.constant 0 : i32
    return %c0_i32, %c0_i32_0 : i32, i32
  }
  func.func @transform_3(%arg0: i32) -> (i32, i32) {
    %c0_i32 = arith.constant 0 : i32
    %c0_i32_0 = arith.constant 0 : i32
    %c0_i32_1 = arith.constant 0 : i32
    return %c0_i32, %c0_i32_0 : i32, i32
  }
  func.func @transform_4(%arg0: i32) -> (i32, i32, i32) {
    %c0_i32 = arith.constant 0 : i32
    %c0_i32_0 = arith.constant 0 : i32
    %c0_i32_1 = arith.constant 0 : i32
    return %arg0, %c0_i32, %c0_i32_0 : i32, i32, i32
  }
}

module attributes {stable_mosaic.version = 11 : i64} {
  func.func @_conv_in_res_kernel(%arg0: i32, %arg1: memref<1x72x256xbf16, #tpu.memory_space<vmem>>, %arg2: memref<8x72xbf16, #tpu.memory_space<vmem>>, %arg3: memref<8x1xf32, #tpu.memory_space<vmem>>, %arg4: memref<8x1xf32, #tpu.memory_space<vmem>>, %arg5: memref<1x8x256xf32, #tpu.memory_space<vmem>>, %arg6: memref<1x8x256xf32, #tpu.memory_space<vmem>>) attributes {dimension_semantics = [#tpu.dimension_semantics<parallel>], iteration_bounds = array<i64: 2>, scalar_prefetch = 0 : i64, scratch_operands = 0 : i64, tpu.core_type = #tpu.core_type<tc>, window_params = [{transform_indices = @transform_0, window_bounds = array<i64: 1, 72, 256>}, {pipeline_mode = #tpu.pipeline_mode<synchronous>, transform_indices = @transform_1, window_bounds = array<i64: 8, 72>}, {pipeline_mode = #tpu.pipeline_mode<synchronous>, transform_indices = @transform_2, window_bounds = array<i64: 8, 1>}, {pipeline_mode = #tpu.pipeline_mode<synchronous>, transform_indices = @transform_3, window_bounds = array<i64: 8, 1>}, {transform_indices = @transform_4, window_bounds = array<i64: 1, 8, 256>}, {transform_indices = @transform_5, window_bounds = array<i64: 1, 8, 256>}]} {
    %c0 = arith.constant 0 : index
    %c0_0 = arith.constant 0 : index
    %0 = vector.load %arg2[%c0, %c0_0] : memref<8x72xbf16, #tpu.memory_space<vmem>>, vector<8x72xbf16>
    %c0_1 = arith.constant 0 : index
    %c0_2 = arith.constant 0 : index
    %c0_3 = arith.constant 0 : index
    %1 = vector.load %arg1[%c0_1, %c0_2, %c0_3] : memref<1x72x256xbf16, #tpu.memory_space<vmem>>, vector<1x72x256xbf16>
    %2 = vector.shape_cast %1 : vector<1x72x256xbf16> to vector<72x256xbf16>
    %cst = arith.constant dense<0.000000e+00> : vector<8x256xf32>
    %3 = tpu.matmul %0, %2, %cst {dimension_numbers = #tpu.dot_dimension_numbers<[1], [0], [0], [1], [0, 0, 1, 1], [], []>} : vector<8x72xbf16>, vector<72x256xbf16>, vector<8x256xf32> -> vector<8x256xf32>
    %c0_4 = arith.constant 0 : index
    %c0_5 = arith.constant 0 : index
    %4 = vector.load %arg3[%c0_4, %c0_5] : memref<8x1xf32, #tpu.memory_space<vmem>>, vector<8x1xf32>
    %c0_6 = arith.constant 0 : index
    %c0_7 = arith.constant 0 : index
    %5 = vector.load %arg4[%c0_6, %c0_7] : memref<8x1xf32, #tpu.memory_space<vmem>>, vector<8x1xf32>
    %cst_8 = arith.constant dense<0.000000e+00> : vector<8xf32>
    %6 = vector.multi_reduction <add>, %3, %cst_8 [1] : vector<8x256xf32> to vector<8xf32>
    %7 = vector.shape_cast %6 : vector<8xf32> to vector<8x1xf32>
    %cst_9 = arith.constant 2.560000e+02 : f32
    %8 = vector.broadcast %cst_9 : f32 to vector<8x1xf32>
    %9 = arith.divf %7, %8 : vector<8x1xf32>
    %10 = vector.broadcast %9 : vector<8x1xf32> to vector<8x256xf32>
    %11 = arith.subf %3, %10 : vector<8x256xf32>
    %12 = arith.mulf %11, %11 : vector<8x256xf32>
    %cst_10 = arith.constant dense<0.000000e+00> : vector<8xf32>
    %13 = vector.multi_reduction <add>, %12, %cst_10 [1] : vector<8x256xf32> to vector<8xf32>
    %14 = vector.shape_cast %13 : vector<8xf32> to vector<8x1xf32>
    %cst_11 = arith.constant 2.560000e+02 : f32
    %15 = vector.broadcast %cst_11 : f32 to vector<8x1xf32>
    %16 = arith.divf %14, %15 : vector<8x1xf32>
    %17 = vector.broadcast %9 : vector<8x1xf32> to vector<8x256xf32>
    %18 = arith.subf %3, %17 : vector<8x256xf32>
    %cst_12 = arith.constant 9.99999974E-6 : f32
    %19 = vector.broadcast %cst_12 : f32 to vector<8x1xf32>
    %20 = arith.addf %16, %19 : vector<8x1xf32>
    %21 = math.rsqrt %20 : vector<8x1xf32>
    %22 = vector.broadcast %21 : vector<8x1xf32> to vector<8x256xf32>
    %23 = arith.mulf %18, %22 : vector<8x256xf32>
    %24 = vector.broadcast %4 : vector<8x1xf32> to vector<8x256xf32>
    %25 = arith.mulf %23, %24 : vector<8x256xf32>
    %26 = vector.broadcast %5 : vector<8x1xf32> to vector<8x256xf32>
    %27 = arith.addf %25, %26 : vector<8x256xf32>
    %c0_13 = arith.constant 0 : index
    %c0_14 = arith.constant 0 : index
    %c0_15 = arith.constant 0 : index
    %28 = vector.load %arg5[%c0_13, %c0_14, %c0_15] : memref<1x8x256xf32, #tpu.memory_space<vmem>>, vector<1x8x256xf32>
    %29 = vector.shape_cast %28 : vector<1x8x256xf32> to vector<8x256xf32>
    %30 = arith.addf %27, %29 : vector<8x256xf32>
    %cst_16 = arith.constant 0.000000e+00 : f32
    %31 = vector.broadcast %cst_16 : f32 to vector<8x256xf32>
    %32 = arith.cmpf oge, %30, %31 : vector<8x256xf32>
    %cst_17 = arith.constant 0.00999999977 : f32
    %33 = vector.broadcast %cst_17 : f32 to vector<8x256xf32>
    %34 = arith.mulf %33, %30 : vector<8x256xf32>
    %35 = arith.select %32, %30, %34 : vector<8x256xi1>, vector<8x256xf32>
    %c0_18 = arith.constant 0 : index
    %c0_19 = arith.constant 0 : index
    %c0_20 = arith.constant 0 : index
    %36 = vector.load %arg6[%c0_18, %c0_19, %c0_20] : memref<1x8x256xf32, #tpu.memory_space<vmem>>, vector<1x8x256xf32>
    %37 = vector.shape_cast %36 : vector<1x8x256xf32> to vector<8x256xf32>
    %38 = vector.shape_cast %35 : vector<8x256xf32> to vector<1x8x256xf32>
    tpu.vector_store %arg6[%c0_18, %c0_19, %c0_20], %38 {strides = array<i32>} : memref<1x8x256xf32, #tpu.memory_space<vmem>>, vector<1x8x256xf32>,
    return
  }
  func.func @transform_0(%arg0: i32) -> (i32, i32, i32) {
    %c0_i32 = arith.constant 0 : i32
    %c0_i32_0 = arith.constant 0 : i32
    %c0_i32_1 = arith.constant 0 : i32
    return %arg0, %c0_i32, %c0_i32_0 : i32, i32, i32
  }
  func.func @transform_1(%arg0: i32) -> (i32, i32) {
    %c0_i32 = arith.constant 0 : i32
    %c0_i32_0 = arith.constant 0 : i32
    %c0_i32_1 = arith.constant 0 : i32
    return %c0_i32, %c0_i32_0 : i32, i32
  }
  func.func @transform_2(%arg0: i32) -> (i32, i32) {
    %c0_i32 = arith.constant 0 : i32
    %c0_i32_0 = arith.constant 0 : i32
    %c0_i32_1 = arith.constant 0 : i32
    return %c0_i32, %c0_i32_0 : i32, i32
  }
  func.func @transform_3(%arg0: i32) -> (i32, i32) {
    %c0_i32 = arith.constant 0 : i32
    %c0_i32_0 = arith.constant 0 : i32
    %c0_i32_1 = arith.constant 0 : i32
    return %c0_i32, %c0_i32_0 : i32, i32
  }
  func.func @transform_4(%arg0: i32) -> (i32, i32, i32) {
    %c0_i32 = arith.constant 0 : i32
    %c0_i32_0 = arith.constant 0 : i32
    %c0_i32_1 = arith.constant 0 : i32
    return %arg0, %c0_i32, %c0_i32_0 : i32, i32, i32
  }
  func.func @transform_5(%arg0: i32) -> (i32, i32, i32) {
    %c0_i32 = arith.constant 0 : i32
    %c0_i32_0 = arith.constant 0 : i32
    %c0_i32_1 = arith.constant 0 : i32
    return %arg0, %c0_i32, %c0_i32_0 : i32, i32, i32
  }
}

module attributes {stable_mosaic.version = 11 : i64} {
  func.func @_pool_conv_in_kernel(%arg0: i32, %arg1: memref<1x8x64xf32, #tpu.memory_space<vmem>>, %arg2: memref<1x8x64xf32, #tpu.memory_space<vmem>>, %arg3: memref<1x8x64xf32, #tpu.memory_space<vmem>>, %arg4: memref<1x8x64xf32, #tpu.memory_space<vmem>>, %arg5: memref<16x8xbf16, #tpu.memory_space<vmem>>, %arg6: memref<16x1xf32, #tpu.memory_space<vmem>>, %arg7: memref<16x1xf32, #tpu.memory_space<vmem>>, %arg8: memref<1x16x64xf32, #tpu.memory_space<vmem>>) attributes {dimension_semantics = [#tpu.dimension_semantics<parallel>], iteration_bounds = array<i64: 2>, scalar_prefetch = 0 : i64, scratch_operands = 0 : i64, tpu.core_type = #tpu.core_type<tc>, window_params = [{transform_indices = @transform_0, window_bounds = array<i64: 1, 8, 64>}, {transform_indices = @transform_1, window_bounds = array<i64: 1, 8, 64>}, {transform_indices = @transform_2, window_bounds = array<i64: 1, 8, 64>}, {transform_indices = @transform_3, window_bounds = array<i64: 1, 8, 64>}, {pipeline_mode = #tpu.pipeline_mode<synchronous>, transform_indices = @transform_4, window_bounds = array<i64: 16, 8>}, {pipeline_mode = #tpu.pipeline_mode<synchronous>, transform_indices = @transform_5, window_bounds = array<i64: 16, 1>}, {pipeline_mode = #tpu.pipeline_mode<synchronous>, transform_indices = @transform_6, window_bounds = array<i64: 16, 1>}, {transform_indices = @transform_7, window_bounds = array<i64: 1, 16, 64>}]} {
    %c0 = arith.constant 0 : index
    %c0_0 = arith.constant 0 : index
    %c0_1 = arith.constant 0 : index
    %0 = vector.load %arg1[%c0, %c0_0, %c0_1] : memref<1x8x64xf32, #tpu.memory_space<vmem>>, vector<1x8x64xf32>
    %1 = vector.shape_cast %0 : vector<1x8x64xf32> to vector<8x64xf32>
    %c0_2 = arith.constant 0 : index
    %c0_3 = arith.constant 0 : index
    %c0_4 = arith.constant 0 : index
    %2 = vector.load %arg2[%c0_2, %c0_3, %c0_4] : memref<1x8x64xf32, #tpu.memory_space<vmem>>, vector<1x8x64xf32>
    %3 = vector.shape_cast %2 : vector<1x8x64xf32> to vector<8x64xf32>
    %4 = arith.addf %1, %3 : vector<8x64xf32>
    %c0_5 = arith.constant 0 : index
    %c0_6 = arith.constant 0 : index
    %c0_7 = arith.constant 0 : index
    %5 = vector.load %arg3[%c0_5, %c0_6, %c0_7] : memref<1x8x64xf32, #tpu.memory_space<vmem>>, vector<1x8x64xf32>
    %6 = vector.shape_cast %5 : vector<1x8x64xf32> to vector<8x64xf32>
    %7 = arith.addf %4, %6 : vector<8x64xf32>
    %c0_8 = arith.constant 0 : index
    %c0_9 = arith.constant 0 : index
    %c0_10 = arith.constant 0 : index
    %8 = vector.load %arg4[%c0_8, %c0_9, %c0_10] : memref<1x8x64xf32, #tpu.memory_space<vmem>>, vector<1x8x64xf32>
    %9 = vector.shape_cast %8 : vector<1x8x64xf32> to vector<8x64xf32>
    %10 = arith.addf %7, %9 : vector<8x64xf32>
    %cst = arith.constant 2.500000e-01 : f32
    %11 = vector.broadcast %cst : f32 to vector<8x64xf32>
    %12 = arith.mulf %11, %10 : vector<8x64xf32>
    %13 = arith.truncf %12 : vector<8x64xf32> to vector<8x64xbf16>
    %c0_11 = arith.constant 0 : index
    %c0_12 = arith.constant 0 : index
    %14 = vector.load %arg5[%c0_11, %c0_12] : memref<16x8xbf16, #tpu.memory_space<vmem>>, vector<16x8xbf16>
    %cst_13 = arith.constant dense<0.000000e+00> : vector<16x64xf32>
    %15 = tpu.matmul %14, %13, %cst_13 {dimension_numbers = #tpu.dot_dimension_numbers<[1], [0], [0], [1], [0, 0, 1, 1], [], []>} : vector<16x8xbf16>, vector<8x64xbf16>, vector<16x64xf32> -> vector<16x64xf32>
    %c0_14 = arith.constant 0 : index
    %c0_15 = arith.constant 0 : index
    %16 = vector.load %arg6[%c0_14, %c0_15] : memref<16x1xf32, #tpu.memory_space<vmem>>, vector<16x1xf32>
    %c0_16 = arith.constant 0 : index
    %c0_17 = arith.constant 0 : index
    %17 = vector.load %arg7[%c0_16, %c0_17] : memref<16x1xf32, #tpu.memory_space<vmem>>, vector<16x1xf32>
    %cst_18 = arith.constant dense<0.000000e+00> : vector<16xf32>
    %18 = vector.multi_reduction <add>, %15, %cst_18 [1] : vector<16x64xf32> to vector<16xf32>
    %19 = vector.shape_cast %18 : vector<16xf32> to vector<16x1xf32>
    %cst_19 = arith.constant 6.400000e+01 : f32
    %20 = vector.broadcast %cst_19 : f32 to vector<16x1xf32>
    %21 = arith.divf %19, %20 : vector<16x1xf32>
    %22 = vector.broadcast %21 : vector<16x1xf32> to vector<16x64xf32>
    %23 = arith.subf %15, %22 : vector<16x64xf32>
    %24 = arith.mulf %23, %23 : vector<16x64xf32>
    %cst_20 = arith.constant dense<0.000000e+00> : vector<16xf32>
    %25 = vector.multi_reduction <add>, %24, %cst_20 [1] : vector<16x64xf32> to vector<16xf32>
    %26 = vector.shape_cast %25 : vector<16xf32> to vector<16x1xf32>
    %cst_21 = arith.constant 6.400000e+01 : f32
    %27 = vector.broadcast %cst_21 : f32 to vector<16x1xf32>
    %28 = arith.divf %26, %27 : vector<16x1xf32>
    %29 = vector.broadcast %21 : vector<16x1xf32> to vector<16x64xf32>
    %30 = arith.subf %15, %29 : vector<16x64xf32>
    %cst_22 = arith.constant 9.99999974E-6 : f32
    %31 = vector.broadcast %cst_22 : f32 to vector<16x1xf32>
    %32 = arith.addf %28, %31 : vector<16x1xf32>
    %33 = math.rsqrt %32 : vector<16x1xf32>
    %34 = vector.broadcast %33 : vector<16x1xf32> to vector<16x64xf32>
    %35 = arith.mulf %30, %34 : vector<16x64xf32>
    %36 = vector.broadcast %16 : vector<16x1xf32> to vector<16x64xf32>
    %37 = arith.mulf %35, %36 : vector<16x64xf32>
    %38 = vector.broadcast %17 : vector<16x1xf32> to vector<16x64xf32>
    %39 = arith.addf %37, %38 : vector<16x64xf32>
    %c0_23 = arith.constant 0 : index
    %c0_24 = arith.constant 0 : index
    %c0_25 = arith.constant 0 : index
    %40 = vector.load %arg8[%c0_23, %c0_24, %c0_25] : memref<1x16x64xf32, #tpu.memory_space<vmem>>, vector<1x16x64xf32>
    %41 = vector.shape_cast %40 : vector<1x16x64xf32> to vector<16x64xf32>
    %42 = vector.shape_cast %39 : vector<16x64xf32> to vector<1x16x64xf32>
    tpu.vector_store %arg8[%c0_23, %c0_24, %c0_25], %42 {strides = array<i32>} : memref<1x16x64xf32, #tpu.memory_space<vmem>>, vector<1x16x64xf32>,
    return
  }
  func.func @transform_0(%arg0: i32) -> (i32, i32, i32) {
    %c0_i32 = arith.constant 0 : i32
    %c0_i32_0 = arith.constant 0 : i32
    %c0_i32_1 = arith.constant 0 : i32
    return %arg0, %c0_i32, %c0_i32_0 : i32, i32, i32
  }
  func.func @transform_1(%arg0: i32) -> (i32, i32, i32) {
    %c0_i32 = arith.constant 0 : i32
    %c0_i32_0 = arith.constant 0 : i32
    %c0_i32_1 = arith.constant 0 : i32
    return %arg0, %c0_i32, %c0_i32_0 : i32, i32, i32
  }
  func.func @transform_2(%arg0: i32) -> (i32, i32, i32) {
    %c0_i32 = arith.constant 0 : i32
    %c0_i32_0 = arith.constant 0 : i32
    %c0_i32_1 = arith.constant 0 : i32
    return %arg0, %c0_i32, %c0_i32_0 : i32, i32, i32
  }
  func.func @transform_3(%arg0: i32) -> (i32, i32, i32) {
    %c0_i32 = arith.constant 0 : i32
    %c0_i32_0 = arith.constant 0 : i32
    %c0_i32_1 = arith.constant 0 : i32
    return %arg0, %c0_i32, %c0_i32_0 : i32, i32, i32
  }
  func.func @transform_4(%arg0: i32) -> (i32, i32) {
    %c0_i32 = arith.constant 0 : i32
    %c0_i32_0 = arith.constant 0 : i32
    %c0_i32_1 = arith.constant 0 : i32
    return %c0_i32, %c0_i32_0 : i32, i32
  }
  func.func @transform_5(%arg0: i32) -> (i32, i32) {
    %c0_i32 = arith.constant 0 : i32
    %c0_i32_0 = arith.constant 0 : i32
    %c0_i32_1 = arith.constant 0 : i32
    return %c0_i32, %c0_i32_0 : i32, i32
  }
  func.func @transform_6(%arg0: i32) -> (i32, i32) {
    %c0_i32 = arith.constant 0 : i32
    %c0_i32_0 = arith.constant 0 : i32
    %c0_i32_1 = arith.constant 0 : i32
    return %c0_i32, %c0_i32_0 : i32, i32
  }
  func.func @transform_7(%arg0: i32) -> (i32, i32, i32) {
    %c0_i32 = arith.constant 0 : i32
    %c0_i32_0 = arith.constant 0 : i32
    %c0_i32_1 = arith.constant 0 : i32
    return %arg0, %c0_i32, %c0_i32_0 : i32, i32, i32
  }
}

module attributes {stable_mosaic.version = 11 : i64} {
  func.func @kern(%arg0: i32, %arg1: memref<1x72x64xbf16, #tpu.memory_space<vmem>>, %arg2: memref<16x72xbf16, #tpu.memory_space<vmem>>, %arg3: memref<16x1xf32, #tpu.memory_space<vmem>>, %arg4: memref<16x1xf32, #tpu.memory_space<vmem>>, %arg5: memref<1x16x64xf32, #tpu.memory_space<vmem>>) attributes {dimension_semantics = [#tpu.dimension_semantics<parallel>], iteration_bounds = array<i64: 2>, scalar_prefetch = 0 : i64, scratch_operands = 0 : i64, tpu.core_type = #tpu.core_type<tc>, window_params = [{transform_indices = @transform_0, window_bounds = array<i64: 1, 72, 64>}, {pipeline_mode = #tpu.pipeline_mode<synchronous>, transform_indices = @transform_1, window_bounds = array<i64: 16, 72>}, {pipeline_mode = #tpu.pipeline_mode<synchronous>, transform_indices = @transform_2, window_bounds = array<i64: 16, 1>}, {pipeline_mode = #tpu.pipeline_mode<synchronous>, transform_indices = @transform_3, window_bounds = array<i64: 16, 1>}, {transform_indices = @transform_4, window_bounds = array<i64: 1, 16, 64>}]} {
    %c0 = arith.constant 0 : index
    %c0_0 = arith.constant 0 : index
    %0 = vector.load %arg2[%c0, %c0_0] : memref<16x72xbf16, #tpu.memory_space<vmem>>, vector<16x72xbf16>
    %c0_1 = arith.constant 0 : index
    %c0_2 = arith.constant 0 : index
    %c0_3 = arith.constant 0 : index
    %1 = vector.load %arg1[%c0_1, %c0_2, %c0_3] : memref<1x72x64xbf16, #tpu.memory_space<vmem>>, vector<1x72x64xbf16>
    %2 = vector.shape_cast %1 : vector<1x72x64xbf16> to vector<72x64xbf16>
    %cst = arith.constant dense<0.000000e+00> : vector<16x64xf32>
    %3 = tpu.matmul %0, %2, %cst {dimension_numbers = #tpu.dot_dimension_numbers<[1], [0], [0], [1], [0, 0, 1, 1], [], []>} : vector<16x72xbf16>, vector<72x64xbf16>, vector<16x64xf32> -> vector<16x64xf32>
    %c0_4 = arith.constant 0 : index
    %c0_5 = arith.constant 0 : index
    %4 = vector.load %arg3[%c0_4, %c0_5] : memref<16x1xf32, #tpu.memory_space<vmem>>, vector<16x1xf32>
    %c0_6 = arith.constant 0 : index
    %c0_7 = arith.constant 0 : index
    %5 = vector.load %arg4[%c0_6, %c0_7] : memref<16x1xf32, #tpu.memory_space<vmem>>, vector<16x1xf32>
    %cst_8 = arith.constant dense<0.000000e+00> : vector<16xf32>
    %6 = vector.multi_reduction <add>, %3, %cst_8 [1] : vector<16x64xf32> to vector<16xf32>
    %7 = vector.shape_cast %6 : vector<16xf32> to vector<16x1xf32>
    %cst_9 = arith.constant 6.400000e+01 : f32
    %8 = vector.broadcast %cst_9 : f32 to vector<16x1xf32>
    %9 = arith.divf %7, %8 : vector<16x1xf32>
    %10 = vector.broadcast %9 : vector<16x1xf32> to vector<16x64xf32>
    %11 = arith.subf %3, %10 : vector<16x64xf32>
    %12 = arith.mulf %11, %11 : vector<16x64xf32>
    %cst_10 = arith.constant dense<0.000000e+00> : vector<16xf32>
    %13 = vector.multi_reduction <add>, %12, %cst_10 [1] : vector<16x64xf32> to vector<16xf32>
    %14 = vector.shape_cast %13 : vector<16xf32> to vector<16x1xf32>
    %cst_11 = arith.constant 6.400000e+01 : f32
    %15 = vector.broadcast %cst_11 : f32 to vector<16x1xf32>
    %16 = arith.divf %14, %15 : vector<16x1xf32>
    %17 = vector.broadcast %9 : vector<16x1xf32> to vector<16x64xf32>
    %18 = arith.subf %3, %17 : vector<16x64xf32>
    %cst_12 = arith.constant 9.99999974E-6 : f32
    %19 = vector.broadcast %cst_12 : f32 to vector<16x1xf32>
    %20 = arith.addf %16, %19 : vector<16x1xf32>
    %21 = math.rsqrt %20 : vector<16x1xf32>
    %22 = vector.broadcast %21 : vector<16x1xf32> to vector<16x64xf32>
    %23 = arith.mulf %18, %22 : vector<16x64xf32>
    %24 = vector.broadcast %4 : vector<16x1xf32> to vector<16x64xf32>
    %25 = arith.mulf %23, %24 : vector<16x64xf32>
    %26 = vector.broadcast %5 : vector<16x1xf32> to vector<16x64xf32>
    %27 = arith.addf %25, %26 : vector<16x64xf32>
    %cst_13 = arith.constant 0.000000e+00 : f32
    %28 = vector.broadcast %cst_13 : f32 to vector<16x64xf32>
    %29 = arith.cmpf oge, %27, %28 : vector<16x64xf32>
    %cst_14 = arith.constant 0.00999999977 : f32
    %30 = vector.broadcast %cst_14 : f32 to vector<16x64xf32>
    %31 = arith.mulf %30, %27 : vector<16x64xf32>
    %32 = arith.select %29, %27, %31 : vector<16x64xi1>, vector<16x64xf32>
    %c0_15 = arith.constant 0 : index
    %c0_16 = arith.constant 0 : index
    %c0_17 = arith.constant 0 : index
    %33 = vector.load %arg5[%c0_15, %c0_16, %c0_17] : memref<1x16x64xf32, #tpu.memory_space<vmem>>, vector<1x16x64xf32>
    %34 = vector.shape_cast %33 : vector<1x16x64xf32> to vector<16x64xf32>
    %35 = vector.shape_cast %32 : vector<16x64xf32> to vector<1x16x64xf32>
    tpu.vector_store %arg5[%c0_15, %c0_16, %c0_17], %35 {strides = array<i32>} : memref<1x16x64xf32, #tpu.memory_space<vmem>>, vector<1x16x64xf32>,
    return
  }
  func.func @transform_0(%arg0: i32) -> (i32, i32, i32) {
    %c0_i32 = arith.constant 0 : i32
    %c0_i32_0 = arith.constant 0 : i32
    %c0_i32_1 = arith.constant 0 : i32
    return %arg0, %c0_i32, %c0_i32_0 : i32, i32, i32
  }
  func.func @transform_1(%arg0: i32) -> (i32, i32) {
    %c0_i32 = arith.constant 0 : i32
    %c0_i32_0 = arith.constant 0 : i32
    %c0_i32_1 = arith.constant 0 : i32
    return %c0_i32, %c0_i32_0 : i32, i32
  }
  func.func @transform_2(%arg0: i32) -> (i32, i32) {
    %c0_i32 = arith.constant 0 : i32
    %c0_i32_0 = arith.constant 0 : i32
    %c0_i32_1 = arith.constant 0 : i32
    return %c0_i32, %c0_i32_0 : i32, i32
  }
  func.func @transform_3(%arg0: i32) -> (i32, i32) {
    %c0_i32 = arith.constant 0 : i32
    %c0_i32_0 = arith.constant 0 : i32
    %c0_i32_1 = arith.constant 0 : i32
    return %c0_i32, %c0_i32_0 : i32, i32
  }
  func.func @transform_4(%arg0: i32) -> (i32, i32, i32) {
    %c0_i32 = arith.constant 0 : i32
    %c0_i32_0 = arith.constant 0 : i32
    %c0_i32_1 = arith.constant 0 : i32
    return %arg0, %c0_i32, %c0_i32_0 : i32, i32, i32
  }
}

module attributes {stable_mosaic.version = 11 : i64} {
  func.func @_conv_in_res_kernel(%arg0: i32, %arg1: memref<1x144x64xbf16, #tpu.memory_space<vmem>>, %arg2: memref<16x144xbf16, #tpu.memory_space<vmem>>, %arg3: memref<16x1xf32, #tpu.memory_space<vmem>>, %arg4: memref<16x1xf32, #tpu.memory_space<vmem>>, %arg5: memref<1x16x64xf32, #tpu.memory_space<vmem>>, %arg6: memref<1x16x64xf32, #tpu.memory_space<vmem>>) attributes {dimension_semantics = [#tpu.dimension_semantics<parallel>], iteration_bounds = array<i64: 2>, scalar_prefetch = 0 : i64, scratch_operands = 0 : i64, tpu.core_type = #tpu.core_type<tc>, window_params = [{transform_indices = @transform_0, window_bounds = array<i64: 1, 144, 64>}, {pipeline_mode = #tpu.pipeline_mode<synchronous>, transform_indices = @transform_1, window_bounds = array<i64: 16, 144>}, {pipeline_mode = #tpu.pipeline_mode<synchronous>, transform_indices = @transform_2, window_bounds = array<i64: 16, 1>}, {pipeline_mode = #tpu.pipeline_mode<synchronous>, transform_indices = @transform_3, window_bounds = array<i64: 16, 1>}, {transform_indices = @transform_4, window_bounds = array<i64: 1, 16, 64>}, {transform_indices = @transform_5, window_bounds = array<i64: 1, 16, 64>}]} {
    %c0 = arith.constant 0 : index
    %c0_0 = arith.constant 0 : index
    %0 = vector.load %arg2[%c0, %c0_0] : memref<16x144xbf16, #tpu.memory_space<vmem>>, vector<16x144xbf16>
    %c0_1 = arith.constant 0 : index
    %c0_2 = arith.constant 0 : index
    %c0_3 = arith.constant 0 : index
    %1 = vector.load %arg1[%c0_1, %c0_2, %c0_3] : memref<1x144x64xbf16, #tpu.memory_space<vmem>>, vector<1x144x64xbf16>
    %2 = vector.shape_cast %1 : vector<1x144x64xbf16> to vector<144x64xbf16>
    %cst = arith.constant dense<0.000000e+00> : vector<16x64xf32>
    %3 = tpu.matmul %0, %2, %cst {dimension_numbers = #tpu.dot_dimension_numbers<[1], [0], [0], [1], [0, 0, 1, 1], [], []>} : vector<16x144xbf16>, vector<144x64xbf16>, vector<16x64xf32> -> vector<16x64xf32>
    %c0_4 = arith.constant 0 : index
    %c0_5 = arith.constant 0 : index
    %4 = vector.load %arg3[%c0_4, %c0_5] : memref<16x1xf32, #tpu.memory_space<vmem>>, vector<16x1xf32>
    %c0_6 = arith.constant 0 : index
    %c0_7 = arith.constant 0 : index
    %5 = vector.load %arg4[%c0_6, %c0_7] : memref<16x1xf32, #tpu.memory_space<vmem>>, vector<16x1xf32>
    %cst_8 = arith.constant dense<0.000000e+00> : vector<16xf32>
    %6 = vector.multi_reduction <add>, %3, %cst_8 [1] : vector<16x64xf32> to vector<16xf32>
    %7 = vector.shape_cast %6 : vector<16xf32> to vector<16x1xf32>
    %cst_9 = arith.constant 6.400000e+01 : f32
    %8 = vector.broadcast %cst_9 : f32 to vector<16x1xf32>
    %9 = arith.divf %7, %8 : vector<16x1xf32>
    %10 = vector.broadcast %9 : vector<16x1xf32> to vector<16x64xf32>
    %11 = arith.subf %3, %10 : vector<16x64xf32>
    %12 = arith.mulf %11, %11 : vector<16x64xf32>
    %cst_10 = arith.constant dense<0.000000e+00> : vector<16xf32>
    %13 = vector.multi_reduction <add>, %12, %cst_10 [1] : vector<16x64xf32> to vector<16xf32>
    %14 = vector.shape_cast %13 : vector<16xf32> to vector<16x1xf32>
    %cst_11 = arith.constant 6.400000e+01 : f32
    %15 = vector.broadcast %cst_11 : f32 to vector<16x1xf32>
    %16 = arith.divf %14, %15 : vector<16x1xf32>
    %17 = vector.broadcast %9 : vector<16x1xf32> to vector<16x64xf32>
    %18 = arith.subf %3, %17 : vector<16x64xf32>
    %cst_12 = arith.constant 9.99999974E-6 : f32
    %19 = vector.broadcast %cst_12 : f32 to vector<16x1xf32>
    %20 = arith.addf %16, %19 : vector<16x1xf32>
    %21 = math.rsqrt %20 : vector<16x1xf32>
    %22 = vector.broadcast %21 : vector<16x1xf32> to vector<16x64xf32>
    %23 = arith.mulf %18, %22 : vector<16x64xf32>
    %24 = vector.broadcast %4 : vector<16x1xf32> to vector<16x64xf32>
    %25 = arith.mulf %23, %24 : vector<16x64xf32>
    %26 = vector.broadcast %5 : vector<16x1xf32> to vector<16x64xf32>
    %27 = arith.addf %25, %26 : vector<16x64xf32>
    %c0_13 = arith.constant 0 : index
    %c0_14 = arith.constant 0 : index
    %c0_15 = arith.constant 0 : index
    %28 = vector.load %arg5[%c0_13, %c0_14, %c0_15] : memref<1x16x64xf32, #tpu.memory_space<vmem>>, vector<1x16x64xf32>
    %29 = vector.shape_cast %28 : vector<1x16x64xf32> to vector<16x64xf32>
    %30 = arith.addf %27, %29 : vector<16x64xf32>
    %cst_16 = arith.constant 0.000000e+00 : f32
    %31 = vector.broadcast %cst_16 : f32 to vector<16x64xf32>
    %32 = arith.cmpf oge, %30, %31 : vector<16x64xf32>
    %cst_17 = arith.constant 0.00999999977 : f32
    %33 = vector.broadcast %cst_17 : f32 to vector<16x64xf32>
    %34 = arith.mulf %33, %30 : vector<16x64xf32>
    %35 = arith.select %32, %30, %34 : vector<16x64xi1>, vector<16x64xf32>
    %c0_18 = arith.constant 0 : index
    %c0_19 = arith.constant 0 : index
    %c0_20 = arith.constant 0 : index
    %36 = vector.load %arg6[%c0_18, %c0_19, %c0_20] : memref<1x16x64xf32, #tpu.memory_space<vmem>>, vector<1x16x64xf32>
    %37 = vector.shape_cast %36 : vector<1x16x64xf32> to vector<16x64xf32>
    %38 = vector.shape_cast %35 : vector<16x64xf32> to vector<1x16x64xf32>
    tpu.vector_store %arg6[%c0_18, %c0_19, %c0_20], %38 {strides = array<i32>} : memref<1x16x64xf32, #tpu.memory_space<vmem>>, vector<1x16x64xf32>,
    return
  }
  func.func @transform_0(%arg0: i32) -> (i32, i32, i32) {
    %c0_i32 = arith.constant 0 : i32
    %c0_i32_0 = arith.constant 0 : i32
    %c0_i32_1 = arith.constant 0 : i32
    return %arg0, %c0_i32, %c0_i32_0 : i32, i32, i32
  }
  func.func @transform_1(%arg0: i32) -> (i32, i32) {
    %c0_i32 = arith.constant 0 : i32
    %c0_i32_0 = arith.constant 0 : i32
    %c0_i32_1 = arith.constant 0 : i32
    return %c0_i32, %c0_i32_0 : i32, i32
  }
  func.func @transform_2(%arg0: i32) -> (i32, i32) {
    %c0_i32 = arith.constant 0 : i32
    %c0_i32_0 = arith.constant 0 : i32
    %c0_i32_1 = arith.constant 0 : i32
    return %c0_i32, %c0_i32_0 : i32, i32
  }
  func.func @transform_3(%arg0: i32) -> (i32, i32) {
    %c0_i32 = arith.constant 0 : i32
    %c0_i32_0 = arith.constant 0 : i32
    %c0_i32_1 = arith.constant 0 : i32
    return %c0_i32, %c0_i32_0 : i32, i32
  }
  func.func @transform_4(%arg0: i32) -> (i32, i32, i32) {
    %c0_i32 = arith.constant 0 : i32
    %c0_i32_0 = arith.constant 0 : i32
    %c0_i32_1 = arith.constant 0 : i32
    return %arg0, %c0_i32, %c0_i32_0 : i32, i32, i32
  }
  func.func @transform_5(%arg0: i32) -> (i32, i32, i32) {
    %c0_i32 = arith.constant 0 : i32
    %c0_i32_0 = arith.constant 0 : i32
    %c0_i32_1 = arith.constant 0 : i32
    return %arg0, %c0_i32, %c0_i32_0 : i32, i32, i32
  }
}

module attributes {stable_mosaic.version = 11 : i64} {
  func.func @_pool_kernel(%arg0: i32, %arg1: memref<1x16x16xf32, #tpu.memory_space<vmem>>, %arg2: memref<1x16x16xf32, #tpu.memory_space<vmem>>, %arg3: memref<1x16x16xf32, #tpu.memory_space<vmem>>, %arg4: memref<1x16x16xf32, #tpu.memory_space<vmem>>, %arg5: memref<1x16x16xf32, #tpu.memory_space<vmem>>) attributes {dimension_semantics = [#tpu.dimension_semantics<parallel>], iteration_bounds = array<i64: 2>, scalar_prefetch = 0 : i64, scratch_operands = 0 : i64, tpu.core_type = #tpu.core_type<tc>, window_params = [{transform_indices = @transform_0, window_bounds = array<i64: 1, 16, 16>}, {transform_indices = @transform_1, window_bounds = array<i64: 1, 16, 16>}, {transform_indices = @transform_2, window_bounds = array<i64: 1, 16, 16>}, {transform_indices = @transform_3, window_bounds = array<i64: 1, 16, 16>}, {transform_indices = @transform_4, window_bounds = array<i64: 1, 16, 16>}]} {
    %c0 = arith.constant 0 : index
    %c0_0 = arith.constant 0 : index
    %c0_1 = arith.constant 0 : index
    %0 = vector.load %arg1[%c0, %c0_0, %c0_1] : memref<1x16x16xf32, #tpu.memory_space<vmem>>, vector<1x16x16xf32>
    %1 = vector.shape_cast %0 : vector<1x16x16xf32> to vector<16x16xf32>
    %c0_2 = arith.constant 0 : index
    %c0_3 = arith.constant 0 : index
    %c0_4 = arith.constant 0 : index
    %2 = vector.load %arg2[%c0_2, %c0_3, %c0_4] : memref<1x16x16xf32, #tpu.memory_space<vmem>>, vector<1x16x16xf32>
    %3 = vector.shape_cast %2 : vector<1x16x16xf32> to vector<16x16xf32>
    %4 = arith.addf %1, %3 : vector<16x16xf32>
    %c0_5 = arith.constant 0 : index
    %c0_6 = arith.constant 0 : index
    %c0_7 = arith.constant 0 : index
    %5 = vector.load %arg3[%c0_5, %c0_6, %c0_7] : memref<1x16x16xf32, #tpu.memory_space<vmem>>, vector<1x16x16xf32>
    %6 = vector.shape_cast %5 : vector<1x16x16xf32> to vector<16x16xf32>
    %7 = arith.addf %4, %6 : vector<16x16xf32>
    %c0_8 = arith.constant 0 : index
    %c0_9 = arith.constant 0 : index
    %c0_10 = arith.constant 0 : index
    %8 = vector.load %arg4[%c0_8, %c0_9, %c0_10] : memref<1x16x16xf32, #tpu.memory_space<vmem>>, vector<1x16x16xf32>
    %9 = vector.shape_cast %8 : vector<1x16x16xf32> to vector<16x16xf32>
    %10 = arith.addf %7, %9 : vector<16x16xf32>
    %cst = arith.constant 2.500000e-01 : f32
    %11 = vector.broadcast %cst : f32 to vector<16x16xf32>
    %12 = arith.mulf %11, %10 : vector<16x16xf32>
    %c0_11 = arith.constant 0 : index
    %c0_12 = arith.constant 0 : index
    %c0_13 = arith.constant 0 : index
    %13 = vector.load %arg5[%c0_11, %c0_12, %c0_13] : memref<1x16x16xf32, #tpu.memory_space<vmem>>, vector<1x16x16xf32>
    %14 = vector.shape_cast %13 : vector<1x16x16xf32> to vector<16x16xf32>
    %15 = vector.shape_cast %12 : vector<16x16xf32> to vector<1x16x16xf32>
    tpu.vector_store %arg5[%c0_11, %c0_12, %c0_13], %15 {strides = array<i32>} : memref<1x16x16xf32, #tpu.memory_space<vmem>>, vector<1x16x16xf32>,
    return
  }
  func.func @transform_0(%arg0: i32) -> (i32, i32, i32) {
    %c0_i32 = arith.constant 0 : i32
    %c0_i32_0 = arith.constant 0 : i32
    %c0_i32_1 = arith.constant 0 : i32
    return %arg0, %c0_i32, %c0_i32_0 : i32, i32, i32
  }
  func.func @transform_1(%arg0: i32) -> (i32, i32, i32) {
    %c0_i32 = arith.constant 0 : i32
    %c0_i32_0 = arith.constant 0 : i32
    %c0_i32_1 = arith.constant 0 : i32
    return %arg0, %c0_i32, %c0_i32_0 : i32, i32, i32
  }
  func.func @transform_2(%arg0: i32) -> (i32, i32, i32) {
    %c0_i32 = arith.constant 0 : i32
    %c0_i32_0 = arith.constant 0 : i32
    %c0_i32_1 = arith.constant 0 : i32
    return %arg0, %c0_i32, %c0_i32_0 : i32, i32, i32
  }
  func.func @transform_3(%arg0: i32) -> (i32, i32, i32) {
    %c0_i32 = arith.constant 0 : i32
    %c0_i32_0 = arith.constant 0 : i32
    %c0_i32_1 = arith.constant 0 : i32
    return %arg0, %c0_i32, %c0_i32_0 : i32, i32, i32
  }
  func.func @transform_4(%arg0: i32) -> (i32, i32, i32) {
    %c0_i32 = arith.constant 0 : i32
    %c0_i32_0 = arith.constant 0 : i32
    %c0_i32_1 = arith.constant 0 : i32
    return %arg0, %c0_i32, %c0_i32_0 : i32, i32, i32
  }
}

module attributes {stable_mosaic.version = 11 : i64} {
  func.func @kern(%arg0: i32, %arg1: memref<1x144x16xbf16, #tpu.memory_space<vmem>>, %arg2: memref<16x144xbf16, #tpu.memory_space<vmem>>, %arg3: memref<16x1xf32, #tpu.memory_space<vmem>>, %arg4: memref<16x1xf32, #tpu.memory_space<vmem>>, %arg5: memref<1x16x16xf32, #tpu.memory_space<vmem>>) attributes {dimension_semantics = [#tpu.dimension_semantics<parallel>], iteration_bounds = array<i64: 2>, scalar_prefetch = 0 : i64, scratch_operands = 0 : i64, tpu.core_type = #tpu.core_type<tc>, window_params = [{transform_indices = @transform_0, window_bounds = array<i64: 1, 144, 16>}, {pipeline_mode = #tpu.pipeline_mode<synchronous>, transform_indices = @transform_1, window_bounds = array<i64: 16, 144>}, {pipeline_mode = #tpu.pipeline_mode<synchronous>, transform_indices = @transform_2, window_bounds = array<i64: 16, 1>}, {pipeline_mode = #tpu.pipeline_mode<synchronous>, transform_indices = @transform_3, window_bounds = array<i64: 16, 1>}, {transform_indices = @transform_4, window_bounds = array<i64: 1, 16, 16>}]} {
    %c0 = arith.constant 0 : index
    %c0_0 = arith.constant 0 : index
    %0 = vector.load %arg2[%c0, %c0_0] : memref<16x144xbf16, #tpu.memory_space<vmem>>, vector<16x144xbf16>
    %c0_1 = arith.constant 0 : index
    %c0_2 = arith.constant 0 : index
    %c0_3 = arith.constant 0 : index
    %1 = vector.load %arg1[%c0_1, %c0_2, %c0_3] : memref<1x144x16xbf16, #tpu.memory_space<vmem>>, vector<1x144x16xbf16>
    %2 = vector.shape_cast %1 : vector<1x144x16xbf16> to vector<144x16xbf16>
    %cst = arith.constant dense<0.000000e+00> : vector<16x16xf32>
    %3 = tpu.matmul %0, %2, %cst {dimension_numbers = #tpu.dot_dimension_numbers<[1], [0], [0], [1], [0, 0, 1, 1], [], []>} : vector<16x144xbf16>, vector<144x16xbf16>, vector<16x16xf32> -> vector<16x16xf32>
    %c0_4 = arith.constant 0 : index
    %c0_5 = arith.constant 0 : index
    %4 = vector.load %arg3[%c0_4, %c0_5] : memref<16x1xf32, #tpu.memory_space<vmem>>, vector<16x1xf32>
    %c0_6 = arith.constant 0 : index
    %c0_7 = arith.constant 0 : index
    %5 = vector.load %arg4[%c0_6, %c0_7] : memref<16x1xf32, #tpu.memory_space<vmem>>, vector<16x1xf32>
    %cst_8 = arith.constant dense<0.000000e+00> : vector<16xf32>
    %6 = vector.multi_reduction <add>, %3, %cst_8 [1] : vector<16x16xf32> to vector<16xf32>
    %7 = vector.shape_cast %6 : vector<16xf32> to vector<16x1xf32>
    %cst_9 = arith.constant 1.600000e+01 : f32
    %8 = vector.broadcast %cst_9 : f32 to vector<16x1xf32>
    %9 = arith.divf %7, %8 : vector<16x1xf32>
    %10 = vector.broadcast %9 : vector<16x1xf32> to vector<16x16xf32>
    %11 = arith.subf %3, %10 : vector<16x16xf32>
    %12 = arith.mulf %11, %11 : vector<16x16xf32>
    %cst_10 = arith.constant dense<0.000000e+00> : vector<16xf32>
    %13 = vector.multi_reduction <add>, %12, %cst_10 [1] : vector<16x16xf32> to vector<16xf32>
    %14 = vector.shape_cast %13 : vector<16xf32> to vector<16x1xf32>
    %cst_11 = arith.constant 1.600000e+01 : f32
    %15 = vector.broadcast %cst_11 : f32 to vector<16x1xf32>
    %16 = arith.divf %14, %15 : vector<16x1xf32>
    %17 = vector.broadcast %9 : vector<16x1xf32> to vector<16x16xf32>
    %18 = arith.subf %3, %17 : vector<16x16xf32>
    %cst_12 = arith.constant 9.99999974E-6 : f32
    %19 = vector.broadcast %cst_12 : f32 to vector<16x1xf32>
    %20 = arith.addf %16, %19 : vector<16x1xf32>
    %21 = math.rsqrt %20 : vector<16x1xf32>
    %22 = vector.broadcast %21 : vector<16x1xf32> to vector<16x16xf32>
    %23 = arith.mulf %18, %22 : vector<16x16xf32>
    %24 = vector.broadcast %4 : vector<16x1xf32> to vector<16x16xf32>
    %25 = arith.mulf %23, %24 : vector<16x16xf32>
    %26 = vector.broadcast %5 : vector<16x1xf32> to vector<16x16xf32>
    %27 = arith.addf %25, %26 : vector<16x16xf32>
    %cst_13 = arith.constant 0.000000e+00 : f32
    %28 = vector.broadcast %cst_13 : f32 to vector<16x16xf32>
    %29 = arith.cmpf oge, %27, %28 : vector<16x16xf32>
    %cst_14 = arith.constant 0.00999999977 : f32
    %30 = vector.broadcast %cst_14 : f32 to vector<16x16xf32>
    %31 = arith.mulf %30, %27 : vector<16x16xf32>
    %32 = arith.select %29, %27, %31 : vector<16x16xi1>, vector<16x16xf32>
    %c0_15 = arith.constant 0 : index
    %c0_16 = arith.constant 0 : index
    %c0_17 = arith.constant 0 : index
    %33 = vector.load %arg5[%c0_15, %c0_16, %c0_17] : memref<1x16x16xf32, #tpu.memory_space<vmem>>, vector<1x16x16xf32>
    %34 = vector.shape_cast %33 : vector<1x16x16xf32> to vector<16x16xf32>
    %35 = vector.shape_cast %32 : vector<16x16xf32> to vector<1x16x16xf32>
    tpu.vector_store %arg5[%c0_15, %c0_16, %c0_17], %35 {strides = array<i32>} : memref<1x16x16xf32, #tpu.memory_space<vmem>>, vector<1x16x16xf32>,
    return
  }
  func.func @transform_0(%arg0: i32) -> (i32, i32, i32) {
    %c0_i32 = arith.constant 0 : i32
    %c0_i32_0 = arith.constant 0 : i32
    %c0_i32_1 = arith.constant 0 : i32
    return %arg0, %c0_i32, %c0_i32_0 : i32, i32, i32
  }
  func.func @transform_1(%arg0: i32) -> (i32, i32) {
    %c0_i32 = arith.constant 0 : i32
    %c0_i32_0 = arith.constant 0 : i32
    %c0_i32_1 = arith.constant 0 : i32
    return %c0_i32, %c0_i32_0 : i32, i32
  }
  func.func @transform_2(%arg0: i32) -> (i32, i32) {
    %c0_i32 = arith.constant 0 : i32
    %c0_i32_0 = arith.constant 0 : i32
    %c0_i32_1 = arith.constant 0 : i32
    return %c0_i32, %c0_i32_0 : i32, i32
  }
  func.func @transform_3(%arg0: i32) -> (i32, i32) {
    %c0_i32 = arith.constant 0 : i32
    %c0_i32_0 = arith.constant 0 : i32
    %c0_i32_1 = arith.constant 0 : i32
    return %c0_i32, %c0_i32_0 : i32, i32
  }
  func.func @transform_4(%arg0: i32) -> (i32, i32, i32) {
    %c0_i32 = arith.constant 0 : i32
    %c0_i32_0 = arith.constant 0 : i32
    %c0_i32_1 = arith.constant 0 : i32
    return %arg0, %c0_i32, %c0_i32_0 : i32, i32, i32
  }
}

module attributes {stable_mosaic.version = 11 : i64} {
  func.func @_conv_in_res_kernel(%arg0: i32, %arg1: memref<1x144x16xbf16, #tpu.memory_space<vmem>>, %arg2: memref<16x144xbf16, #tpu.memory_space<vmem>>, %arg3: memref<16x1xf32, #tpu.memory_space<vmem>>, %arg4: memref<16x1xf32, #tpu.memory_space<vmem>>, %arg5: memref<1x16x16xf32, #tpu.memory_space<vmem>>, %arg6: memref<1x16x16xf32, #tpu.memory_space<vmem>>) attributes {dimension_semantics = [#tpu.dimension_semantics<parallel>], iteration_bounds = array<i64: 2>, scalar_prefetch = 0 : i64, scratch_operands = 0 : i64, tpu.core_type = #tpu.core_type<tc>, window_params = [{transform_indices = @transform_0, window_bounds = array<i64: 1, 144, 16>}, {pipeline_mode = #tpu.pipeline_mode<synchronous>, transform_indices = @transform_1, window_bounds = array<i64: 16, 144>}, {pipeline_mode = #tpu.pipeline_mode<synchronous>, transform_indices = @transform_2, window_bounds = array<i64: 16, 1>}, {pipeline_mode = #tpu.pipeline_mode<synchronous>, transform_indices = @transform_3, window_bounds = array<i64: 16, 1>}, {transform_indices = @transform_4, window_bounds = array<i64: 1, 16, 16>}, {transform_indices = @transform_5, window_bounds = array<i64: 1, 16, 16>}]} {
    %c0 = arith.constant 0 : index
    %c0_0 = arith.constant 0 : index
    %0 = vector.load %arg2[%c0, %c0_0] : memref<16x144xbf16, #tpu.memory_space<vmem>>, vector<16x144xbf16>
    %c0_1 = arith.constant 0 : index
    %c0_2 = arith.constant 0 : index
    %c0_3 = arith.constant 0 : index
    %1 = vector.load %arg1[%c0_1, %c0_2, %c0_3] : memref<1x144x16xbf16, #tpu.memory_space<vmem>>, vector<1x144x16xbf16>
    %2 = vector.shape_cast %1 : vector<1x144x16xbf16> to vector<144x16xbf16>
    %cst = arith.constant dense<0.000000e+00> : vector<16x16xf32>
    %3 = tpu.matmul %0, %2, %cst {dimension_numbers = #tpu.dot_dimension_numbers<[1], [0], [0], [1], [0, 0, 1, 1], [], []>} : vector<16x144xbf16>, vector<144x16xbf16>, vector<16x16xf32> -> vector<16x16xf32>
    %c0_4 = arith.constant 0 : index
    %c0_5 = arith.constant 0 : index
    %4 = vector.load %arg3[%c0_4, %c0_5] : memref<16x1xf32, #tpu.memory_space<vmem>>, vector<16x1xf32>
    %c0_6 = arith.constant 0 : index
    %c0_7 = arith.constant 0 : index
    %5 = vector.load %arg4[%c0_6, %c0_7] : memref<16x1xf32, #tpu.memory_space<vmem>>, vector<16x1xf32>
    %cst_8 = arith.constant dense<0.000000e+00> : vector<16xf32>
    %6 = vector.multi_reduction <add>, %3, %cst_8 [1] : vector<16x16xf32> to vector<16xf32>
    %7 = vector.shape_cast %6 : vector<16xf32> to vector<16x1xf32>
    %cst_9 = arith.constant 1.600000e+01 : f32
    %8 = vector.broadcast %cst_9 : f32 to vector<16x1xf32>
    %9 = arith.divf %7, %8 : vector<16x1xf32>
    %10 = vector.broadcast %9 : vector<16x1xf32> to vector<16x16xf32>
    %11 = arith.subf %3, %10 : vector<16x16xf32>
    %12 = arith.mulf %11, %11 : vector<16x16xf32>
    %cst_10 = arith.constant dense<0.000000e+00> : vector<16xf32>
    %13 = vector.multi_reduction <add>, %12, %cst_10 [1] : vector<16x16xf32> to vector<16xf32>
    %14 = vector.shape_cast %13 : vector<16xf32> to vector<16x1xf32>
    %cst_11 = arith.constant 1.600000e+01 : f32
    %15 = vector.broadcast %cst_11 : f32 to vector<16x1xf32>
    %16 = arith.divf %14, %15 : vector<16x1xf32>
    %17 = vector.broadcast %9 : vector<16x1xf32> to vector<16x16xf32>
    %18 = arith.subf %3, %17 : vector<16x16xf32>
    %cst_12 = arith.constant 9.99999974E-6 : f32
    %19 = vector.broadcast %cst_12 : f32 to vector<16x1xf32>
    %20 = arith.addf %16, %19 : vector<16x1xf32>
    %21 = math.rsqrt %20 : vector<16x1xf32>
    %22 = vector.broadcast %21 : vector<16x1xf32> to vector<16x16xf32>
    %23 = arith.mulf %18, %22 : vector<16x16xf32>
    %24 = vector.broadcast %4 : vector<16x1xf32> to vector<16x16xf32>
    %25 = arith.mulf %23, %24 : vector<16x16xf32>
    %26 = vector.broadcast %5 : vector<16x1xf32> to vector<16x16xf32>
    %27 = arith.addf %25, %26 : vector<16x16xf32>
    %c0_13 = arith.constant 0 : index
    %c0_14 = arith.constant 0 : index
    %c0_15 = arith.constant 0 : index
    %28 = vector.load %arg5[%c0_13, %c0_14, %c0_15] : memref<1x16x16xf32, #tpu.memory_space<vmem>>, vector<1x16x16xf32>
    %29 = vector.shape_cast %28 : vector<1x16x16xf32> to vector<16x16xf32>
    %30 = arith.addf %27, %29 : vector<16x16xf32>
    %cst_16 = arith.constant 0.000000e+00 : f32
    %31 = vector.broadcast %cst_16 : f32 to vector<16x16xf32>
    %32 = arith.cmpf oge, %30, %31 : vector<16x16xf32>
    %cst_17 = arith.constant 0.00999999977 : f32
    %33 = vector.broadcast %cst_17 : f32 to vector<16x16xf32>
    %34 = arith.mulf %33, %30 : vector<16x16xf32>
    %35 = arith.select %32, %30, %34 : vector<16x16xi1>, vector<16x16xf32>
    %c0_18 = arith.constant 0 : index
    %c0_19 = arith.constant 0 : index
    %c0_20 = arith.constant 0 : index
    %36 = vector.load %arg6[%c0_18, %c0_19, %c0_20] : memref<1x16x16xf32, #tpu.memory_space<vmem>>, vector<1x16x16xf32>
    %37 = vector.shape_cast %36 : vector<1x16x16xf32> to vector<16x16xf32>
    %38 = vector.shape_cast %35 : vector<16x16xf32> to vector<1x16x16xf32>
    tpu.vector_store %arg6[%c0_18, %c0_19, %c0_20], %38 {strides = array<i32>} : memref<1x16x16xf32, #tpu.memory_space<vmem>>, vector<1x16x16xf32>,
    return
  }
  func.func @transform_0(%arg0: i32) -> (i32, i32, i32) {
    %c0_i32 = arith.constant 0 : i32
    %c0_i32_0 = arith.constant 0 : i32
    %c0_i32_1 = arith.constant 0 : i32
    return %arg0, %c0_i32, %c0_i32_0 : i32, i32, i32
  }
  func.func @transform_1(%arg0: i32) -> (i32, i32) {
    %c0_i32 = arith.constant 0 : i32
    %c0_i32_0 = arith.constant 0 : i32
    %c0_i32_1 = arith.constant 0 : i32
    return %c0_i32, %c0_i32_0 : i32, i32
  }
  func.func @transform_2(%arg0: i32) -> (i32, i32) {
    %c0_i32 = arith.constant 0 : i32
    %c0_i32_0 = arith.constant 0 : i32
    %c0_i32_1 = arith.constant 0 : i32
    return %c0_i32, %c0_i32_0 : i32, i32
  }
  func.func @transform_3(%arg0: i32) -> (i32, i32) {
    %c0_i32 = arith.constant 0 : i32
    %c0_i32_0 = arith.constant 0 : i32
    %c0_i32_1 = arith.constant 0 : i32
    return %c0_i32, %c0_i32_0 : i32, i32
  }
  func.func @transform_4(%arg0: i32) -> (i32, i32, i32) {
    %c0_i32 = arith.constant 0 : i32
    %c0_i32_0 = arith.constant 0 : i32
    %c0_i32_1 = arith.constant 0 : i32
    return %arg0, %c0_i32, %c0_i32_0 : i32, i32, i32
  }
  func.func @transform_5(%arg0: i32) -> (i32, i32, i32) {
    %c0_i32 = arith.constant 0 : i32
    %c0_i32_0 = arith.constant 0 : i32
    %c0_i32_1 = arith.constant 0 : i32
    return %arg0, %c0_i32, %c0_i32_0 : i32, i32, i32
  }
}

module attributes {stable_mosaic.version = 11 : i64} {
  func.func @_pool_kernel(%arg0: i32, %arg1: memref<1x16x4xf32, #tpu.memory_space<vmem>>, %arg2: memref<1x16x4xf32, #tpu.memory_space<vmem>>, %arg3: memref<1x16x4xf32, #tpu.memory_space<vmem>>, %arg4: memref<1x16x4xf32, #tpu.memory_space<vmem>>, %arg5: memref<1x16x4xf32, #tpu.memory_space<vmem>>) attributes {dimension_semantics = [#tpu.dimension_semantics<parallel>], iteration_bounds = array<i64: 2>, scalar_prefetch = 0 : i64, scratch_operands = 0 : i64, tpu.core_type = #tpu.core_type<tc>, window_params = [{transform_indices = @transform_0, window_bounds = array<i64: 1, 16, 4>}, {transform_indices = @transform_1, window_bounds = array<i64: 1, 16, 4>}, {transform_indices = @transform_2, window_bounds = array<i64: 1, 16, 4>}, {transform_indices = @transform_3, window_bounds = array<i64: 1, 16, 4>}, {transform_indices = @transform_4, window_bounds = array<i64: 1, 16, 4>}]} {
    %c0 = arith.constant 0 : index
    %c0_0 = arith.constant 0 : index
    %c0_1 = arith.constant 0 : index
    %0 = vector.load %arg1[%c0, %c0_0, %c0_1] : memref<1x16x4xf32, #tpu.memory_space<vmem>>, vector<1x16x4xf32>
    %1 = vector.shape_cast %0 : vector<1x16x4xf32> to vector<16x4xf32>
    %c0_2 = arith.constant 0 : index
    %c0_3 = arith.constant 0 : index
    %c0_4 = arith.constant 0 : index
    %2 = vector.load %arg2[%c0_2, %c0_3, %c0_4] : memref<1x16x4xf32, #tpu.memory_space<vmem>>, vector<1x16x4xf32>
    %3 = vector.shape_cast %2 : vector<1x16x4xf32> to vector<16x4xf32>
    %4 = arith.addf %1, %3 : vector<16x4xf32>
    %c0_5 = arith.constant 0 : index
    %c0_6 = arith.constant 0 : index
    %c0_7 = arith.constant 0 : index
    %5 = vector.load %arg3[%c0_5, %c0_6, %c0_7] : memref<1x16x4xf32, #tpu.memory_space<vmem>>, vector<1x16x4xf32>
    %6 = vector.shape_cast %5 : vector<1x16x4xf32> to vector<16x4xf32>
    %7 = arith.addf %4, %6 : vector<16x4xf32>
    %c0_8 = arith.constant 0 : index
    %c0_9 = arith.constant 0 : index
    %c0_10 = arith.constant 0 : index
    %8 = vector.load %arg4[%c0_8, %c0_9, %c0_10] : memref<1x16x4xf32, #tpu.memory_space<vmem>>, vector<1x16x4xf32>
    %9 = vector.shape_cast %8 : vector<1x16x4xf32> to vector<16x4xf32>
    %10 = arith.addf %7, %9 : vector<16x4xf32>
    %cst = arith.constant 2.500000e-01 : f32
    %11 = vector.broadcast %cst : f32 to vector<16x4xf32>
    %12 = arith.mulf %11, %10 : vector<16x4xf32>
    %c0_11 = arith.constant 0 : index
    %c0_12 = arith.constant 0 : index
    %c0_13 = arith.constant 0 : index
    %13 = vector.load %arg5[%c0_11, %c0_12, %c0_13] : memref<1x16x4xf32, #tpu.memory_space<vmem>>, vector<1x16x4xf32>
    %14 = vector.shape_cast %13 : vector<1x16x4xf32> to vector<16x4xf32>
    %15 = vector.shape_cast %12 : vector<16x4xf32> to vector<1x16x4xf32>
    tpu.vector_store %arg5[%c0_11, %c0_12, %c0_13], %15 {strides = array<i32>} : memref<1x16x4xf32, #tpu.memory_space<vmem>>, vector<1x16x4xf32>,
    return
  }
  func.func @transform_0(%arg0: i32) -> (i32, i32, i32) {
    %c0_i32 = arith.constant 0 : i32
    %c0_i32_0 = arith.constant 0 : i32
    %c0_i32_1 = arith.constant 0 : i32
    return %arg0, %c0_i32, %c0_i32_0 : i32, i32, i32
  }
  func.func @transform_1(%arg0: i32) -> (i32, i32, i32) {
    %c0_i32 = arith.constant 0 : i32
    %c0_i32_0 = arith.constant 0 : i32
    %c0_i32_1 = arith.constant 0 : i32
    return %arg0, %c0_i32, %c0_i32_0 : i32, i32, i32
  }
  func.func @transform_2(%arg0: i32) -> (i32, i32, i32) {
    %c0_i32 = arith.constant 0 : i32
    %c0_i32_0 = arith.constant 0 : i32
    %c0_i32_1 = arith.constant 0 : i32
    return %arg0, %c0_i32, %c0_i32_0 : i32, i32, i32
  }
  func.func @transform_3(%arg0: i32) -> (i32, i32, i32) {
    %c0_i32 = arith.constant 0 : i32
    %c0_i32_0 = arith.constant 0 : i32
    %c0_i32_1 = arith.constant 0 : i32
    return %arg0, %c0_i32, %c0_i32_0 : i32, i32, i32
  }
  func.func @transform_4(%arg0: i32) -> (i32, i32, i32) {
    %c0_i32 = arith.constant 0 : i32
    %c0_i32_0 = arith.constant 0 : i32
    %c0_i32_1 = arith.constant 0 : i32
    return %arg0, %c0_i32, %c0_i32_0 : i32, i32, i32
  }
}

module attributes {stable_mosaic.version = 11 : i64} {
  func.func @kern(%arg0: i32, %arg1: memref<1x144x4xbf16, #tpu.memory_space<vmem>>, %arg2: memref<16x144xbf16, #tpu.memory_space<vmem>>, %arg3: memref<16x1xf32, #tpu.memory_space<vmem>>, %arg4: memref<16x1xf32, #tpu.memory_space<vmem>>, %arg5: memref<1x16x4xf32, #tpu.memory_space<vmem>>) attributes {dimension_semantics = [#tpu.dimension_semantics<parallel>], iteration_bounds = array<i64: 2>, scalar_prefetch = 0 : i64, scratch_operands = 0 : i64, tpu.core_type = #tpu.core_type<tc>, window_params = [{transform_indices = @transform_0, window_bounds = array<i64: 1, 144, 4>}, {pipeline_mode = #tpu.pipeline_mode<synchronous>, transform_indices = @transform_1, window_bounds = array<i64: 16, 144>}, {pipeline_mode = #tpu.pipeline_mode<synchronous>, transform_indices = @transform_2, window_bounds = array<i64: 16, 1>}, {pipeline_mode = #tpu.pipeline_mode<synchronous>, transform_indices = @transform_3, window_bounds = array<i64: 16, 1>}, {transform_indices = @transform_4, window_bounds = array<i64: 1, 16, 4>}]} {
    %c0 = arith.constant 0 : index
    %c0_0 = arith.constant 0 : index
    %0 = vector.load %arg2[%c0, %c0_0] : memref<16x144xbf16, #tpu.memory_space<vmem>>, vector<16x144xbf16>
    %c0_1 = arith.constant 0 : index
    %c0_2 = arith.constant 0 : index
    %c0_3 = arith.constant 0 : index
    %1 = vector.load %arg1[%c0_1, %c0_2, %c0_3] : memref<1x144x4xbf16, #tpu.memory_space<vmem>>, vector<1x144x4xbf16>
    %2 = vector.shape_cast %1 : vector<1x144x4xbf16> to vector<144x4xbf16>
    %cst = arith.constant dense<0.000000e+00> : vector<16x4xf32>
    %3 = tpu.matmul %0, %2, %cst {dimension_numbers = #tpu.dot_dimension_numbers<[1], [0], [0], [1], [0, 0, 1, 1], [], []>} : vector<16x144xbf16>, vector<144x4xbf16>, vector<16x4xf32> -> vector<16x4xf32>
    %c0_4 = arith.constant 0 : index
    %c0_5 = arith.constant 0 : index
    %4 = vector.load %arg3[%c0_4, %c0_5] : memref<16x1xf32, #tpu.memory_space<vmem>>, vector<16x1xf32>
    %c0_6 = arith.constant 0 : index
    %c0_7 = arith.constant 0 : index
    %5 = vector.load %arg4[%c0_6, %c0_7] : memref<16x1xf32, #tpu.memory_space<vmem>>, vector<16x1xf32>
    %cst_8 = arith.constant dense<0.000000e+00> : vector<16xf32>
    %6 = vector.multi_reduction <add>, %3, %cst_8 [1] : vector<16x4xf32> to vector<16xf32>
    %7 = vector.shape_cast %6 : vector<16xf32> to vector<16x1xf32>
    %cst_9 = arith.constant 4.000000e+00 : f32
    %8 = vector.broadcast %cst_9 : f32 to vector<16x1xf32>
    %9 = arith.divf %7, %8 : vector<16x1xf32>
    %10 = vector.broadcast %9 : vector<16x1xf32> to vector<16x4xf32>
    %11 = arith.subf %3, %10 : vector<16x4xf32>
    %12 = arith.mulf %11, %11 : vector<16x4xf32>
    %cst_10 = arith.constant dense<0.000000e+00> : vector<16xf32>
    %13 = vector.multi_reduction <add>, %12, %cst_10 [1] : vector<16x4xf32> to vector<16xf32>
    %14 = vector.shape_cast %13 : vector<16xf32> to vector<16x1xf32>
    %cst_11 = arith.constant 4.000000e+00 : f32
    %15 = vector.broadcast %cst_11 : f32 to vector<16x1xf32>
    %16 = arith.divf %14, %15 : vector<16x1xf32>
    %17 = vector.broadcast %9 : vector<16x1xf32> to vector<16x4xf32>
    %18 = arith.subf %3, %17 : vector<16x4xf32>
    %cst_12 = arith.constant 9.99999974E-6 : f32
    %19 = vector.broadcast %cst_12 : f32 to vector<16x1xf32>
    %20 = arith.addf %16, %19 : vector<16x1xf32>
    %21 = math.rsqrt %20 : vector<16x1xf32>
    %22 = vector.broadcast %21 : vector<16x1xf32> to vector<16x4xf32>
    %23 = arith.mulf %18, %22 : vector<16x4xf32>
    %24 = vector.broadcast %4 : vector<16x1xf32> to vector<16x4xf32>
    %25 = arith.mulf %23, %24 : vector<16x4xf32>
    %26 = vector.broadcast %5 : vector<16x1xf32> to vector<16x4xf32>
    %27 = arith.addf %25, %26 : vector<16x4xf32>
    %cst_13 = arith.constant 0.000000e+00 : f32
    %28 = vector.broadcast %cst_13 : f32 to vector<16x4xf32>
    %29 = arith.cmpf oge, %27, %28 : vector<16x4xf32>
    %cst_14 = arith.constant 0.00999999977 : f32
    %30 = vector.broadcast %cst_14 : f32 to vector<16x4xf32>
    %31 = arith.mulf %30, %27 : vector<16x4xf32>
    %32 = arith.select %29, %27, %31 : vector<16x4xi1>, vector<16x4xf32>
    %c0_15 = arith.constant 0 : index
    %c0_16 = arith.constant 0 : index
    %c0_17 = arith.constant 0 : index
    %33 = vector.load %arg5[%c0_15, %c0_16, %c0_17] : memref<1x16x4xf32, #tpu.memory_space<vmem>>, vector<1x16x4xf32>
    %34 = vector.shape_cast %33 : vector<1x16x4xf32> to vector<16x4xf32>
    %35 = vector.shape_cast %32 : vector<16x4xf32> to vector<1x16x4xf32>
    tpu.vector_store %arg5[%c0_15, %c0_16, %c0_17], %35 {strides = array<i32>} : memref<1x16x4xf32, #tpu.memory_space<vmem>>, vector<1x16x4xf32>,
    return
  }
  func.func @transform_0(%arg0: i32) -> (i32, i32, i32) {
    %c0_i32 = arith.constant 0 : i32
    %c0_i32_0 = arith.constant 0 : i32
    %c0_i32_1 = arith.constant 0 : i32
    return %arg0, %c0_i32, %c0_i32_0 : i32, i32, i32
  }
  func.func @transform_1(%arg0: i32) -> (i32, i32) {
    %c0_i32 = arith.constant 0 : i32
    %c0_i32_0 = arith.constant 0 : i32
    %c0_i32_1 = arith.constant 0 : i32
    return %c0_i32, %c0_i32_0 : i32, i32
  }
  func.func @transform_2(%arg0: i32) -> (i32, i32) {
    %c0_i32 = arith.constant 0 : i32
    %c0_i32_0 = arith.constant 0 : i32
    %c0_i32_1 = arith.constant 0 : i32
    return %c0_i32, %c0_i32_0 : i32, i32
  }
  func.func @transform_3(%arg0: i32) -> (i32, i32) {
    %c0_i32 = arith.constant 0 : i32
    %c0_i32_0 = arith.constant 0 : i32
    %c0_i32_1 = arith.constant 0 : i32
    return %c0_i32, %c0_i32_0 : i32, i32
  }
  func.func @transform_4(%arg0: i32) -> (i32, i32, i32) {
    %c0_i32 = arith.constant 0 : i32
    %c0_i32_0 = arith.constant 0 : i32
    %c0_i32_1 = arith.constant 0 : i32
    return %arg0, %c0_i32, %c0_i32_0 : i32, i32, i32
  }
}

module attributes {stable_mosaic.version = 11 : i64} {
  func.func @_conv_in_res_kernel(%arg0: i32, %arg1: memref<1x144x4xbf16, #tpu.memory_space<vmem>>, %arg2: memref<16x144xbf16, #tpu.memory_space<vmem>>, %arg3: memref<16x1xf32, #tpu.memory_space<vmem>>, %arg4: memref<16x1xf32, #tpu.memory_space<vmem>>, %arg5: memref<1x16x4xf32, #tpu.memory_space<vmem>>, %arg6: memref<1x16x4xf32, #tpu.memory_space<vmem>>) attributes {dimension_semantics = [#tpu.dimension_semantics<parallel>], iteration_bounds = array<i64: 2>, scalar_prefetch = 0 : i64, scratch_operands = 0 : i64, tpu.core_type = #tpu.core_type<tc>, window_params = [{transform_indices = @transform_0, window_bounds = array<i64: 1, 144, 4>}, {pipeline_mode = #tpu.pipeline_mode<synchronous>, transform_indices = @transform_1, window_bounds = array<i64: 16, 144>}, {pipeline_mode = #tpu.pipeline_mode<synchronous>, transform_indices = @transform_2, window_bounds = array<i64: 16, 1>}, {pipeline_mode = #tpu.pipeline_mode<synchronous>, transform_indices = @transform_3, window_bounds = array<i64: 16, 1>}, {transform_indices = @transform_4, window_bounds = array<i64: 1, 16, 4>}, {transform_indices = @transform_5, window_bounds = array<i64: 1, 16, 4>}]} {
    %c0 = arith.constant 0 : index
    %c0_0 = arith.constant 0 : index
    %0 = vector.load %arg2[%c0, %c0_0] : memref<16x144xbf16, #tpu.memory_space<vmem>>, vector<16x144xbf16>
    %c0_1 = arith.constant 0 : index
    %c0_2 = arith.constant 0 : index
    %c0_3 = arith.constant 0 : index
    %1 = vector.load %arg1[%c0_1, %c0_2, %c0_3] : memref<1x144x4xbf16, #tpu.memory_space<vmem>>, vector<1x144x4xbf16>
    %2 = vector.shape_cast %1 : vector<1x144x4xbf16> to vector<144x4xbf16>
    %cst = arith.constant dense<0.000000e+00> : vector<16x4xf32>
    %3 = tpu.matmul %0, %2, %cst {dimension_numbers = #tpu.dot_dimension_numbers<[1], [0], [0], [1], [0, 0, 1, 1], [], []>} : vector<16x144xbf16>, vector<144x4xbf16>, vector<16x4xf32> -> vector<16x4xf32>
    %c0_4 = arith.constant 0 : index
    %c0_5 = arith.constant 0 : index
    %4 = vector.load %arg3[%c0_4, %c0_5] : memref<16x1xf32, #tpu.memory_space<vmem>>, vector<16x1xf32>
    %c0_6 = arith.constant 0 : index
    %c0_7 = arith.constant 0 : index
    %5 = vector.load %arg4[%c0_6, %c0_7] : memref<16x1xf32, #tpu.memory_space<vmem>>, vector<16x1xf32>
    %cst_8 = arith.constant dense<0.000000e+00> : vector<16xf32>
    %6 = vector.multi_reduction <add>, %3, %cst_8 [1] : vector<16x4xf32> to vector<16xf32>
    %7 = vector.shape_cast %6 : vector<16xf32> to vector<16x1xf32>
    %cst_9 = arith.constant 4.000000e+00 : f32
    %8 = vector.broadcast %cst_9 : f32 to vector<16x1xf32>
    %9 = arith.divf %7, %8 : vector<16x1xf32>
    %10 = vector.broadcast %9 : vector<16x1xf32> to vector<16x4xf32>
    %11 = arith.subf %3, %10 : vector<16x4xf32>
    %12 = arith.mulf %11, %11 : vector<16x4xf32>
    %cst_10 = arith.constant dense<0.000000e+00> : vector<16xf32>
    %13 = vector.multi_reduction <add>, %12, %cst_10 [1] : vector<16x4xf32> to vector<16xf32>
    %14 = vector.shape_cast %13 : vector<16xf32> to vector<16x1xf32>
    %cst_11 = arith.constant 4.000000e+00 : f32
    %15 = vector.broadcast %cst_11 : f32 to vector<16x1xf32>
    %16 = arith.divf %14, %15 : vector<16x1xf32>
    %17 = vector.broadcast %9 : vector<16x1xf32> to vector<16x4xf32>
    %18 = arith.subf %3, %17 : vector<16x4xf32>
    %cst_12 = arith.constant 9.99999974E-6 : f32
    %19 = vector.broadcast %cst_12 : f32 to vector<16x1xf32>
    %20 = arith.addf %16, %19 : vector<16x1xf32>
    %21 = math.rsqrt %20 : vector<16x1xf32>
    %22 = vector.broadcast %21 : vector<16x1xf32> to vector<16x4xf32>
    %23 = arith.mulf %18, %22 : vector<16x4xf32>
    %24 = vector.broadcast %4 : vector<16x1xf32> to vector<16x4xf32>
    %25 = arith.mulf %23, %24 : vector<16x4xf32>
    %26 = vector.broadcast %5 : vector<16x1xf32> to vector<16x4xf32>
    %27 = arith.addf %25, %26 : vector<16x4xf32>
    %c0_13 = arith.constant 0 : index
    %c0_14 = arith.constant 0 : index
    %c0_15 = arith.constant 0 : index
    %28 = vector.load %arg5[%c0_13, %c0_14, %c0_15] : memref<1x16x4xf32, #tpu.memory_space<vmem>>, vector<1x16x4xf32>
    %29 = vector.shape_cast %28 : vector<1x16x4xf32> to vector<16x4xf32>
    %30 = arith.addf %27, %29 : vector<16x4xf32>
    %cst_16 = arith.constant 0.000000e+00 : f32
    %31 = vector.broadcast %cst_16 : f32 to vector<16x4xf32>
    %32 = arith.cmpf oge, %30, %31 : vector<16x4xf32>
    %cst_17 = arith.constant 0.00999999977 : f32
    %33 = vector.broadcast %cst_17 : f32 to vector<16x4xf32>
    %34 = arith.mulf %33, %30 : vector<16x4xf32>
    %35 = arith.select %32, %30, %34 : vector<16x4xi1>, vector<16x4xf32>
    %c0_18 = arith.constant 0 : index
    %c0_19 = arith.constant 0 : index
    %c0_20 = arith.constant 0 : index
    %36 = vector.load %arg6[%c0_18, %c0_19, %c0_20] : memref<1x16x4xf32, #tpu.memory_space<vmem>>, vector<1x16x4xf32>
    %37 = vector.shape_cast %36 : vector<1x16x4xf32> to vector<16x4xf32>
    %38 = vector.shape_cast %35 : vector<16x4xf32> to vector<1x16x4xf32>
    tpu.vector_store %arg6[%c0_18, %c0_19, %c0_20], %38 {strides = array<i32>} : memref<1x16x4xf32, #tpu.memory_space<vmem>>, vector<1x16x4xf32>,
    return
  }
  func.func @transform_0(%arg0: i32) -> (i32, i32, i32) {
    %c0_i32 = arith.constant 0 : i32
    %c0_i32_0 = arith.constant 0 : i32
    %c0_i32_1 = arith.constant 0 : i32
    return %arg0, %c0_i32, %c0_i32_0 : i32, i32, i32
  }
  func.func @transform_1(%arg0: i32) -> (i32, i32) {
    %c0_i32 = arith.constant 0 : i32
    %c0_i32_0 = arith.constant 0 : i32
    %c0_i32_1 = arith.constant 0 : i32
    return %c0_i32, %c0_i32_0 : i32, i32
  }
  func.func @transform_2(%arg0: i32) -> (i32, i32) {
    %c0_i32 = arith.constant 0 : i32
    %c0_i32_0 = arith.constant 0 : i32
    %c0_i32_1 = arith.constant 0 : i32
    return %c0_i32, %c0_i32_0 : i32, i32
  }
  func.func @transform_3(%arg0: i32) -> (i32, i32) {
    %c0_i32 = arith.constant 0 : i32
    %c0_i32_0 = arith.constant 0 : i32
    %c0_i32_1 = arith.constant 0 : i32
    return %c0_i32, %c0_i32_0 : i32, i32
  }
  func.func @transform_4(%arg0: i32) -> (i32, i32, i32) {
    %c0_i32 = arith.constant 0 : i32
    %c0_i32_0 = arith.constant 0 : i32
    %c0_i32_1 = arith.constant 0 : i32
    return %arg0, %c0_i32, %c0_i32_0 : i32, i32, i32
  }
  func.func @transform_5(%arg0: i32) -> (i32, i32, i32) {
    %c0_i32 = arith.constant 0 : i32
    %c0_i32_0 = arith.constant 0 : i32
    %c0_i32_1 = arith.constant 0 : i32
    return %arg0, %c0_i32, %c0_i32_0 : i32, i32, i32
  }
}

module attributes {stable_mosaic.version = 11 : i64} {
  func.func @kern(%arg0: i32, %arg1: memref<1x4x16xf32, #tpu.memory_space<vmem>>, %arg2: memref<1x16xf32, #tpu.memory_space<vmem>>, %arg3: memref<1x16xf32, #tpu.memory_space<vmem>>, %arg4: memref<16x64xf32, #tpu.memory_space<vmem>>, %arg5: memref<4x32xf32, #tpu.memory_space<vmem>>, %arg6: memref<1x32xf32, #tpu.memory_space<vmem>>, %arg7: memref<32x33xf32, #tpu.memory_space<vmem>>, %arg8: memref<1x32xf32, #tpu.memory_space<vmem>>, %arg9: memref<1x32xf32, #tpu.memory_space<vmem>>, %arg10: memref<16x32xf32, #tpu.memory_space<vmem>>, %arg11: memref<1x32xf32, #tpu.memory_space<vmem>>, %arg12: memref<32x16xf32, #tpu.memory_space<vmem>>, %arg13: memref<1x4x16xf32, #tpu.memory_space<vmem>>, %arg14: memref<7x32xf32, #tpu.memory_space<vmem>>, %arg15: memref<4x16x32xf32, #tpu.memory_space<vmem>>, %arg16: memref<4x16x32xf32, #tpu.memory_space<vmem>>, %arg17: memref<4x16x32xf32, #tpu.memory_space<vmem>>, %arg18: memref<4x32xf32, #tpu.memory_space<vmem>>) attributes {dimension_semantics = [#tpu.dimension_semantics<parallel>], iteration_bounds = array<i64: 2>, scalar_prefetch = 0 : i64, scratch_operands = 5 : i64, tpu.core_type = #tpu.core_type<tc>, window_params = [{transform_indices = @transform_0, window_bounds = array<i64: 1, 4, 16>}, {pipeline_mode = #tpu.pipeline_mode<synchronous>, transform_indices = @transform_1, window_bounds = array<i64: 1, 16>}, {pipeline_mode = #tpu.pipeline_mode<synchronous>, transform_indices = @transform_2, window_bounds = array<i64: 1, 16>}, {pipeline_mode = #tpu.pipeline_mode<synchronous>, transform_indices = @transform_3, window_bounds = array<i64: 16, 64>}, {pipeline_mode = #tpu.pipeline_mode<synchronous>, transform_indices = @transform_4, window_bounds = array<i64: 4, 32>}, {pipeline_mode = #tpu.pipeline_mode<synchronous>, transform_indices = @transform_5, window_bounds = array<i64: 1, 32>}, {pipeline_mode = #tpu.pipeline_mode<synchronous>, transform_indices = @transform_6, window_bounds = array<i64: 32, 33>}, {pipeline_mode = #tpu.pipeline_mode<synchronous>, transform_indices = @transform_7, window_bounds = array<i64: 1, 32>}, {pipeline_mode = #tpu.pipeline_mode<synchronous>, transform_indices = @transform_8, window_bounds = array<i64: 1, 32>}, {pipeline_mode = #tpu.pipeline_mode<synchronous>, transform_indices = @transform_9, window_bounds = array<i64: 16, 32>}, {pipeline_mode = #tpu.pipeline_mode<synchronous>, transform_indices = @transform_10, window_bounds = array<i64: 1, 32>}, {pipeline_mode = #tpu.pipeline_mode<synchronous>, transform_indices = @transform_11, window_bounds = array<i64: 32, 16>}, {transform_indices = @transform_12, window_bounds = array<i64: 1, 4, 16>}]} {
    %c0 = arith.constant 0 : index
    %c0_0 = arith.constant 0 : index
    %c0_1 = arith.constant 0 : index
    %0 = vector.load %arg1[%c0, %c0_0, %c0_1] : memref<1x4x16xf32, #tpu.memory_space<vmem>>, vector<1x4x16xf32>
    %1 = vector.shape_cast %0 : vector<1x4x16xf32> to vector<4x16xf32>
    %cst = arith.constant dense<0.000000e+00> : vector<4xf32>
    %2 = vector.multi_reduction <add>, %1, %cst [1] : vector<4x16xf32> to vector<4xf32>
    %3 = vector.shape_cast %2 : vector<4xf32> to vector<4x1xf32>
    %cst_2 = arith.constant 1.600000e+01 : f32
    %4 = vector.broadcast %cst_2 : f32 to vector<4x1xf32>
    %5 = arith.divf %3, %4 : vector<4x1xf32>
    %6 = vector.broadcast %5 : vector<4x1xf32> to vector<4x16xf32>
    %7 = arith.subf %1, %6 : vector<4x16xf32>
    %8 = arith.mulf %7, %7 : vector<4x16xf32>
    %cst_3 = arith.constant dense<0.000000e+00> : vector<4xf32>
    %9 = vector.multi_reduction <add>, %8, %cst_3 [1] : vector<4x16xf32> to vector<4xf32>
    %10 = vector.shape_cast %9 : vector<4xf32> to vector<4x1xf32>
    %cst_4 = arith.constant 1.600000e+01 : f32
    %11 = vector.broadcast %cst_4 : f32 to vector<4x1xf32>
    %12 = arith.divf %10, %11 : vector<4x1xf32>
    %13 = vector.broadcast %5 : vector<4x1xf32> to vector<4x16xf32>
    %14 = arith.subf %1, %13 : vector<4x16xf32>
    %cst_5 = arith.constant 9.99999974E-6 : f32
    %15 = vector.broadcast %cst_5 : f32 to vector<4x1xf32>
    %16 = arith.addf %12, %15 : vector<4x1xf32>
    %17 = math.rsqrt %16 : vector<4x1xf32>
    %18 = vector.broadcast %17 : vector<4x1xf32> to vector<4x16xf32>
    %19 = arith.mulf %14, %18 : vector<4x16xf32>
    %c0_6 = arith.constant 0 : index
    %c0_7 = arith.constant 0 : index
    %20 = vector.load %arg2[%c0_6, %c0_7] : memref<1x16xf32, #tpu.memory_space<vmem>>, vector<1x16xf32>
    %21 = vector.broadcast %20 : vector<1x16xf32> to vector<4x16xf32>
    %22 = arith.mulf %19, %21 : vector<4x16xf32>
    %c0_8 = arith.constant 0 : index
    %c0_9 = arith.constant 0 : index
    %23 = vector.load %arg3[%c0_8, %c0_9] : memref<1x16xf32, #tpu.memory_space<vmem>>, vector<1x16xf32>
    %24 = vector.broadcast %23 : vector<1x16xf32> to vector<4x16xf32>
    %25 = arith.addf %22, %24 : vector<4x16xf32>
    %c0_10 = arith.constant 0 : index
    %c0_11 = arith.constant 0 : index
    %26 = vector.load %arg4[%c0_10, %c0_11] : memref<16x64xf32, #tpu.memory_space<vmem>>, vector<16x64xf32>
    %cst_12 = arith.constant dense<0.000000e+00> : vector<4x64xf32>
    %27 = tpu.matmul %25, %26, %cst_12 {dimension_numbers = #tpu.dot_dimension_numbers<[1], [0], [0], [1], [0, 0, 1, 1], [], []>} : vector<4x16xf32>, vector<16x64xf32>, vector<4x64xf32> -> vector<4x64xf32>
    %28 = vector.extract_strided_slice %27 {offsets = [0, 0], sizes = [4, 32], strides = [1, 1]} : vector<4x64xf32> to vector<4x32xf32>
    %29 = vector.extract_strided_slice %27 {offsets = [0, 32], sizes = [4, 32], strides = [1, 1]} : vector<4x64xf32> to vector<4x32xf32>
    %cst_13 = arith.constant 0.000000e+00 : f32
    %30 = vector.broadcast %cst_13 : f32 to vector<7x32xf32>
    %c0_14 = arith.constant 0 : index
    %c0_15 = arith.constant 0 : index
    %31 = vector.load %arg14[%c0_14, %c0_15] : memref<7x32xf32, #tpu.memory_space<vmem>>, vector<7x32xf32>
    tpu.vector_store %arg14[%c0_14, %c0_15], %30 {strides = array<i32>} : memref<7x32xf32, #tpu.memory_space<vmem>>, vector<7x32xf32>,
    %c3 = arith.constant 3 : index
    %c0_16 = arith.constant 0 : index
    %32 = vector.load %arg14[%c3, %c0_16] : memref<7x32xf32, #tpu.memory_space<vmem>>, vector<4x32xf32>
    tpu.vector_store %arg14[%c3, %c0_16], %28 {strides = array<i32>} : memref<7x32xf32, #tpu.memory_space<vmem>>, vector<4x32xf32>,
    %c0_17 = arith.constant 0 : index
    %c0_18 = arith.constant 0 : index
    %33 = vector.load %arg5[%c0_17, %c0_18] : memref<4x32xf32, #tpu.memory_space<vmem>>, vector<4x32xf32>
    %cst_19 = arith.constant 0.000000e+00 : f32
    %34 = vector.broadcast %cst_19 : f32 to vector<4x32xf32>
    %c0_20 = arith.constant 0 : index
    %c0_21 = arith.constant 0 : index
    %35 = vector.load %arg14[%c0_20, %c0_21] : memref<7x32xf32, #tpu.memory_space<vmem>>, vector<4x32xf32>
    %36 = vector.extract_strided_slice %33 {offsets = [0, 0], sizes = [1, 32], strides = [1, 1]} : vector<4x32xf32> to vector<1x32xf32>
    %37 = vector.broadcast %36 : vector<1x32xf32> to vector<4x32xf32>
    %38 = arith.mulf %35, %37 : vector<4x32xf32>
    %39 = arith.addf %34, %38 : vector<4x32xf32>
    %c1 = arith.constant 1 : index
    %c0_22 = arith.constant 0 : index
    %40 = vector.load %arg14[%c1, %c0_22] : memref<7x32xf32, #tpu.memory_space<vmem>>, vector<4x32xf32>
    %41 = vector.extract_strided_slice %33 {offsets = [1, 0], sizes = [1, 32], strides = [1, 1]} : vector<4x32xf32> to vector<1x32xf32>
    %42 = vector.broadcast %41 : vector<1x32xf32> to vector<4x32xf32>
    %43 = arith.mulf %40, %42 : vector<4x32xf32>
    %44 = arith.addf %39, %43 : vector<4x32xf32>
    %c2 = arith.constant 2 : index
    %c0_23 = arith.constant 0 : index
    %45 = vector.load %arg14[%c2, %c0_23] : memref<7x32xf32, #tpu.memory_space<vmem>>, vector<4x32xf32>
    %46 = vector.extract_strided_slice %33 {offsets = [2, 0], sizes = [1, 32], strides = [1, 1]} : vector<4x32xf32> to vector<1x32xf32>
    %47 = vector.broadcast %46 : vector<1x32xf32> to vector<4x32xf32>
    %48 = arith.mulf %45, %47 : vector<4x32xf32>
    %49 = arith.addf %44, %48 : vector<4x32xf32>
    %c3_24 = arith.constant 3 : index
    %c0_25 = arith.constant 0 : index
    %50 = vector.load %arg14[%c3_24, %c0_25] : memref<7x32xf32, #tpu.memory_space<vmem>>, vector<4x32xf32>
    %51 = vector.extract_strided_slice %33 {offsets = [3, 0], sizes = [1, 32], strides = [1, 1]} : vector<4x32xf32> to vector<1x32xf32>
    %52 = vector.broadcast %51 : vector<1x32xf32> to vector<4x32xf32>
    %53 = arith.mulf %50, %52 : vector<4x32xf32>
    %54 = arith.addf %49, %53 : vector<4x32xf32>
    %c0_26 = arith.constant 0 : index
    %c0_27 = arith.constant 0 : index
    %55 = vector.load %arg6[%c0_26, %c0_27] : memref<1x32xf32, #tpu.memory_space<vmem>>, vector<1x32xf32>
    %56 = vector.broadcast %55 : vector<1x32xf32> to vector<4x32xf32>
    %57 = arith.addf %54, %56 : vector<4x32xf32>
    %58 = arith.negf %57 : vector<4x32xf32>
    %59 = math.exp %58 : vector<4x32xf32>
    %cst_28 = arith.constant 1.000000e+00 : f32
    %60 = vector.broadcast %cst_28 : f32 to vector<4x32xf32>
    %61 = arith.addf %60, %59 : vector<4x32xf32>
    %62 = arith.divf %60, %61 : vector<4x32xf32>
    %63 = arith.mulf %57, %62 : vector<4x32xf32>
    %c0_29 = arith.constant 0 : index
    %c0_30 = arith.constant 0 : index
    %64 = vector.load %arg7[%c0_29, %c0_30] : memref<32x33xf32, #tpu.memory_space<vmem>>, vector<32x33xf32>
    %cst_31 = arith.constant dense<0.000000e+00> : vector<4x33xf32>
    %65 = tpu.matmul %63, %64, %cst_31 {dimension_numbers = #tpu.dot_dimension_numbers<[1], [0], [0], [1], [0, 0, 1, 1], [], []>} : vector<4x32xf32>, vector<32x33xf32>, vector<4x33xf32> -> vector<4x33xf32>
    %66 = vector.extract_strided_slice %65 {offsets = [0, 0], sizes = [4, 1], strides = [1, 1]} : vector<4x33xf32> to vector<4x1xf32>
    %67 = vector.extract_strided_slice %65 {offsets = [0, 1], sizes = [4, 16], strides = [1, 1]} : vector<4x33xf32> to vector<4x16xf32>
    %68 = vector.extract_strided_slice %65 {offsets = [0, 17], sizes = [4, 16], strides = [1, 1]} : vector<4x33xf32> to vector<4x16xf32>
    %c0_32 = arith.constant 0 : index
    %c0_33 = arith.constant 0 : index
    %69 = vector.load %arg8[%c0_32, %c0_33] : memref<1x32xf32, #tpu.memory_space<vmem>>, vector<1x32xf32>
    %cst_34 = arith.constant dense<0.000000e+00> : vector<4x32xf32>
    %70 = tpu.matmul %66, %69, %cst_34 {dimension_numbers = #tpu.dot_dimension_numbers<[1], [0], [0], [1], [0, 0, 1, 1], [], []>} : vector<4x1xf32>, vector<1x32xf32>, vector<4x32xf32> -> vector<4x32xf32>
    %c0_35 = arith.constant 0 : index
    %c0_36 = arith.constant 0 : index
    %71 = vector.load %arg9[%c0_35, %c0_36] : memref<1x32xf32, #tpu.memory_space<vmem>>, vector<1x32xf32>
    %72 = vector.broadcast %71 : vector<1x32xf32> to vector<4x32xf32>
    %73 = arith.addf %70, %72 : vector<4x32xf32>
    %cst_37 = arith.constant 0.000000e+00 : f32
    %74 = vector.broadcast %cst_37 : f32 to vector<4x32xf32>
    %75 = arith.maximumf %73, %74 : vector<4x32xf32>
    %76 = vector.broadcast %cst_37 : f32 to vector<4x32xf32>
    %77 = arith.subf %73, %76 : vector<4x32xf32>
    %78 = arith.cmpf one, %77, %77 : vector<4x32xf32>
    %79 = vector.broadcast %cst_37 : f32 to vector<4x32xf32>
    %80 = arith.addf %73, %79 : vector<4x32xf32>
    %81 = math.absf %77 : vector<4x32xf32>
    %cst_38 = arith.constant 0.000000e+00 : f32
    %82 = vector.broadcast %cst_38 : f32 to vector<4x32xf32>
    %83 = arith.subf %82, %81 : vector<4x32xf32>
    %84 = math.exp %83 : vector<4x32xf32>
    %85 = math.log1p %84 : vector<4x32xf32>
    %86 = arith.addf %75, %85 : vector<4x32xf32>
    %87 = arith.select %78, %80, %86 : vector<4x32xi1>, vector<4x32xf32>
    %88 = arith.negf %29 : vector<4x32xf32>
    %89 = math.exp %88 : vector<4x32xf32>
    %cst_39 = arith.constant 1.000000e+00 : f32
    %90 = vector.broadcast %cst_39 : f32 to vector<4x32xf32>
    %91 = arith.addf %90, %89 : vector<4x32xf32>
    %92 = arith.divf %90, %91 : vector<4x32xf32>
    %93 = arith.mulf %29, %92 : vector<4x32xf32>
    %94 = arith.mulf %87, %63 : vector<4x32xf32>
    %95 = vector.shape_cast %87 : vector<4x32xf32> to vector<4x1x32xf32>
    %c0_40 = arith.constant 0 : index
    %c0_41 = arith.constant 0 : index
    %96 = vector.load %arg10[%c0_40, %c0_41] : memref<16x32xf32, #tpu.memory_space<vmem>>, vector<16x32xf32>
    %97 = vector.shape_cast %96 : vector<16x32xf32> to vector<1x16x32xf32>
    %98 = vector.broadcast %95 : vector<4x1x32xf32> to vector<4x16x32xf32>
    %99 = vector.broadcast %97 : vector<1x16x32xf32> to vector<4x16x32xf32>
    %100 = arith.mulf %98, %99 : vector<4x16x32xf32>
    %101 = math.exp %100 : vector<4x16x32xf32>
    %c0_42 = arith.constant 0 : index
    %c0_43 = arith.constant 0 : index
    %c0_44 = arith.constant 0 : index
    %102 = vector.load %arg15[%c0_42, %c0_43, %c0_44] : memref<4x16x32xf32, #tpu.memory_space<vmem>>, vector<4x16x32xf32>
    tpu.vector_store %arg15[%c0_42, %c0_43, %c0_44], %101 {strides = array<i32>} : memref<4x16x32xf32, #tpu.memory_space<vmem>>, vector<4x16x32xf32>,
    %103 = vector.shape_cast %67 : vector<4x16xf32> to vector<4x16x1xf32>
    %104 = vector.shape_cast %94 : vector<4x32xf32> to vector<4x1x32xf32>
    %105 = vector.broadcast %103 : vector<4x16x1xf32> to vector<4x16x32xf32>
    %106 = vector.broadcast %104 : vector<4x1x32xf32> to vector<4x16x32xf32>
    %107 = arith.mulf %105, %106 : vector<4x16x32xf32>
    %c0_45 = arith.constant 0 : index
    %c0_46 = arith.constant 0 : index
    %c0_47 = arith.constant 0 : index
    %108 = vector.load %arg16[%c0_45, %c0_46, %c0_47] : memref<4x16x32xf32, #tpu.memory_space<vmem>>, vector<4x16x32xf32>
    tpu.vector_store %arg16[%c0_45, %c0_46, %c0_47], %107 {strides = array<i32>} : memref<4x16x32xf32, #tpu.memory_space<vmem>>, vector<4x16x32xf32>,
    %109 = vector.shape_cast %68 : vector<4x16xf32> to vector<4x16x1xf32>
    %110 = vector.shape_cast %109 : vector<4x16x1xf32> to vector<4x16x1xf32>
    %111 = vector.broadcast %110 : vector<4x16x1xf32> to vector<4x16x32xf32>
    %c0_48 = arith.constant 0 : index
    %c0_49 = arith.constant 0 : index
    %c0_50 = arith.constant 0 : index
    %112 = vector.load %arg17[%c0_48, %c0_49, %c0_50] : memref<4x16x32xf32, #tpu.memory_space<vmem>>, vector<4x16x32xf32>
    tpu.vector_store %arg17[%c0_48, %c0_49, %c0_50], %111 {strides = array<i32>} : memref<4x16x32xf32, #tpu.memory_space<vmem>>, vector<4x16x32xf32>,
    %cst_51 = arith.constant 0.000000e+00 : f32
    %113 = vector.broadcast %cst_51 : f32 to vector<16x32xf32>
    %c0_i32 = arith.constant 0 : i32
    %114 = arith.index_cast %c0_i32 : i32 to index
    %c0_52 = arith.constant 0 : index
    %c0_53 = arith.constant 0 : index
    %115 = vector.load %arg15[%114, %c0_52, %c0_53] : memref<4x16x32xf32, #tpu.memory_space<vmem>>, vector<1x16x32xf32>
    %116 = vector.shape_cast %115 : vector<1x16x32xf32> to vector<16x32xf32>
    %117 = arith.mulf %116, %113 : vector<16x32xf32>
    %118 = arith.index_cast %c0_i32 : i32 to index
    %c0_54 = arith.constant 0 : index
    %c0_55 = arith.constant 0 : index
    %119 = vector.load %arg16[%118, %c0_54, %c0_55] : memref<4x16x32xf32, #tpu.memory_space<vmem>>, vector<1x16x32xf32>
    %120 = vector.shape_cast %119 : vector<1x16x32xf32> to vector<16x32xf32>
    %121 = arith.addf %117, %120 : vector<16x32xf32>
    %122 = arith.index_cast %c0_i32 : i32 to index
    %c0_56 = arith.constant 0 : index
    %c0_57 = arith.constant 0 : index
    %123 = vector.load %arg17[%122, %c0_56, %c0_57] : memref<4x16x32xf32, #tpu.memory_space<vmem>>, vector<1x16x32xf32>
    %124 = vector.shape_cast %123 : vector<1x16x32xf32> to vector<16x32xf32>
    %125 = arith.mulf %121, %124 : vector<16x32xf32>
    %cst_58 = arith.constant dense<0.000000e+00> : vector<32xf32>
    %126 = vector.multi_reduction <add>, %125, %cst_58 [0] : vector<16x32xf32> to vector<32xf32>
    %127 = vector.shape_cast %126 : vector<32xf32> to vector<1x32xf32>
    %128 = arith.index_cast %c0_i32 : i32 to index
    %c0_59 = arith.constant 0 : index
    %129 = vector.load %arg18[%128, %c0_59] : memref<4x32xf32, #tpu.memory_space<vmem>>, vector<1x32xf32>
    tpu.vector_store %arg18[%128, %c0_59], %127 {strides = array<i32>} : memref<4x32xf32, #tpu.memory_space<vmem>>, vector<1x32xf32>,
    %c1_i32 = arith.constant 1 : i32
    %130 = arith.index_cast %c1_i32 : i32 to index
    %c0_60 = arith.constant 0 : index
    %c0_61 = arith.constant 0 : index
    %131 = vector.load %arg15[%130, %c0_60, %c0_61] : memref<4x16x32xf32, #tpu.memory_space<vmem>>, vector<1x16x32xf32>
    %132 = vector.shape_cast %131 : vector<1x16x32xf32> to vector<16x32xf32>
    %133 = arith.mulf %132, %121 : vector<16x32xf32>
    %134 = arith.index_cast %c1_i32 : i32 to index
    %c0_62 = arith.constant 0 : index
    %c0_63 = arith.constant 0 : index
    %135 = vector.load %arg16[%134, %c0_62, %c0_63] : memref<4x16x32xf32, #tpu.memory_space<vmem>>, vector<1x16x32xf32>
    %136 = vector.shape_cast %135 : vector<1x16x32xf32> to vector<16x32xf32>
    %137 = arith.addf %133, %136 : vector<16x32xf32>
    %138 = arith.index_cast %c1_i32 : i32 to index
    %c0_64 = arith.constant 0 : index
    %c0_65 = arith.constant 0 : index
    %139 = vector.load %arg17[%138, %c0_64, %c0_65] : memref<4x16x32xf32, #tpu.memory_space<vmem>>, vector<1x16x32xf32>
    %140 = vector.shape_cast %139 : vector<1x16x32xf32> to vector<16x32xf32>
    %141 = arith.mulf %137, %140 : vector<16x32xf32>
    %cst_66 = arith.constant dense<0.000000e+00> : vector<32xf32>
    %142 = vector.multi_reduction <add>, %141, %cst_66 [0] : vector<16x32xf32> to vector<32xf32>
    %143 = vector.shape_cast %142 : vector<32xf32> to vector<1x32xf32>
    %144 = arith.index_cast %c1_i32 : i32 to index
    %c0_67 = arith.constant 0 : index
    %145 = vector.load %arg18[%144, %c0_67] : memref<4x32xf32, #tpu.memory_space<vmem>>, vector<1x32xf32>
    tpu.vector_store %arg18[%144, %c0_67], %143 {strides = array<i32>} : memref<4x32xf32, #tpu.memory_space<vmem>>, vector<1x32xf32>,
    %c2_i32 = arith.constant 2 : i32
    %146 = arith.index_cast %c2_i32 : i32 to index
    %c0_68 = arith.constant 0 : index
    %c0_69 = arith.constant 0 : index
    %147 = vector.load %arg15[%146, %c0_68, %c0_69] : memref<4x16x32xf32, #tpu.memory_space<vmem>>, vector<1x16x32xf32>
    %148 = vector.shape_cast %147 : vector<1x16x32xf32> to vector<16x32xf32>
    %149 = arith.mulf %148, %137 : vector<16x32xf32>
    %150 = arith.index_cast %c2_i32 : i32 to index
    %c0_70 = arith.constant 0 : index
    %c0_71 = arith.constant 0 : index
    %151 = vector.load %arg16[%150, %c0_70, %c0_71] : memref<4x16x32xf32, #tpu.memory_space<vmem>>, vector<1x16x32xf32>
    %152 = vector.shape_cast %151 : vector<1x16x32xf32> to vector<16x32xf32>
    %153 = arith.addf %149, %152 : vector<16x32xf32>
    %154 = arith.index_cast %c2_i32 : i32 to index
    %c0_72 = arith.constant 0 : index
    %c0_73 = arith.constant 0 : index
    %155 = vector.load %arg17[%154, %c0_72, %c0_73] : memref<4x16x32xf32, #tpu.memory_space<vmem>>, vector<1x16x32xf32>
    %156 = vector.shape_cast %155 : vector<1x16x32xf32> to vector<16x32xf32>
    %157 = arith.mulf %153, %156 : vector<16x32xf32>
    %cst_74 = arith.constant dense<0.000000e+00> : vector<32xf32>
    %158 = vector.multi_reduction <add>, %157, %cst_74 [0] : vector<16x32xf32> to vector<32xf32>
    %159 = vector.shape_cast %158 : vector<32xf32> to vector<1x32xf32>
    %160 = arith.index_cast %c2_i32 : i32 to index
    %c0_75 = arith.constant 0 : index
    %161 = vector.load %arg18[%160, %c0_75] : memref<4x32xf32, #tpu.memory_space<vmem>>, vector<1x32xf32>
    tpu.vector_store %arg18[%160, %c0_75], %159 {strides = array<i32>} : memref<4x32xf32, #tpu.memory_space<vmem>>, vector<1x32xf32>,
    %c3_i32 = arith.constant 3 : i32
    %162 = arith.index_cast %c3_i32 : i32 to index
    %c0_76 = arith.constant 0 : index
    %c0_77 = arith.constant 0 : index
    %163 = vector.load %arg15[%162, %c0_76, %c0_77] : memref<4x16x32xf32, #tpu.memory_space<vmem>>, vector<1x16x32xf32>
    %164 = vector.shape_cast %163 : vector<1x16x32xf32> to vector<16x32xf32>
    %165 = arith.mulf %164, %153 : vector<16x32xf32>
    %166 = arith.index_cast %c3_i32 : i32 to index
    %c0_78 = arith.constant 0 : index
    %c0_79 = arith.constant 0 : index
    %167 = vector.load %arg16[%166, %c0_78, %c0_79] : memref<4x16x32xf32, #tpu.memory_space<vmem>>, vector<1x16x32xf32>
    %168 = vector.shape_cast %167 : vector<1x16x32xf32> to vector<16x32xf32>
    %169 = arith.addf %165, %168 : vector<16x32xf32>
    %170 = arith.index_cast %c3_i32 : i32 to index
    %c0_80 = arith.constant 0 : index
    %c0_81 = arith.constant 0 : index
    %171 = vector.load %arg17[%170, %c0_80, %c0_81] : memref<4x16x32xf32, #tpu.memory_space<vmem>>, vector<1x16x32xf32>
    %172 = vector.shape_cast %171 : vector<1x16x32xf32> to vector<16x32xf32>
    %173 = arith.mulf %169, %172 : vector<16x32xf32>
    %cst_82 = arith.constant dense<0.000000e+00> : vector<32xf32>
    %174 = vector.multi_reduction <add>, %173, %cst_82 [0] : vector<16x32xf32> to vector<32xf32>
    %175 = vector.shape_cast %174 : vector<32xf32> to vector<1x32xf32>
    %176 = arith.index_cast %c3_i32 : i32 to index
    %c0_83 = arith.constant 0 : index
    %177 = vector.load %arg18[%176, %c0_83] : memref<4x32xf32, #tpu.memory_space<vmem>>, vector<1x32xf32>
    tpu.vector_store %arg18[%176, %c0_83], %175 {strides = array<i32>} : memref<4x32xf32, #tpu.memory_space<vmem>>, vector<1x32xf32>,
    %c4_i32 = arith.constant 4 : i32
    %c0_84 = arith.constant 0 : index
    %c0_85 = arith.constant 0 : index
    %178 = vector.load %arg18[%c0_84, %c0_85] : memref<4x32xf32, #tpu.memory_space<vmem>>, vector<4x32xf32>
    %c0_86 = arith.constant 0 : index
    %c0_87 = arith.constant 0 : index
    %179 = vector.load %arg11[%c0_86, %c0_87] : memref<1x32xf32, #tpu.memory_space<vmem>>, vector<1x32xf32>
    %180 = vector.broadcast %179 : vector<1x32xf32> to vector<4x32xf32>
    %181 = arith.mulf %63, %180 : vector<4x32xf32>
    %182 = arith.addf %178, %181 : vector<4x32xf32>
    %183 = arith.mulf %182, %93 : vector<4x32xf32>
    %c0_88 = arith.constant 0 : index
    %c0_89 = arith.constant 0 : index
    %184 = vector.load %arg12[%c0_88, %c0_89] : memref<32x16xf32, #tpu.memory_space<vmem>>, vector<32x16xf32>
    %cst_90 = arith.constant dense<0.000000e+00> : vector<4x16xf32>
    %185 = tpu.matmul %183, %184, %cst_90 {dimension_numbers = #tpu.dot_dimension_numbers<[1], [0], [0], [1], [0, 0, 1, 1], [], []>} : vector<4x32xf32>, vector<32x16xf32>, vector<4x16xf32> -> vector<4x16xf32>
    %c0_91 = arith.constant 0 : index
    %c0_92 = arith.constant 0 : index
    %c0_93 = arith.constant 0 : index
    %186 = vector.load %arg13[%c0_91, %c0_92, %c0_93] : memref<1x4x16xf32, #tpu.memory_space<vmem>>, vector<1x4x16xf32>
    %187 = vector.shape_cast %186 : vector<1x4x16xf32> to vector<4x16xf32>
    %188 = vector.shape_cast %185 : vector<4x16xf32> to vector<1x4x16xf32>
    tpu.vector_store %arg13[%c0_91, %c0_92, %c0_93], %188 {strides = array<i32>} : memref<1x4x16xf32, #tpu.memory_space<vmem>>, vector<1x4x16xf32>,
    return
  }
  func.func @transform_0(%arg0: i32) -> (i32, i32, i32) {
    %c0_i32 = arith.constant 0 : i32
    %c0_i32_0 = arith.constant 0 : i32
    %c0_i32_1 = arith.constant 0 : i32
    return %arg0, %c0_i32, %c0_i32_0 : i32, i32, i32
  }
  func.func @transform_1(%arg0: i32) -> (i32, i32) {
    %c0_i32 = arith.constant 0 : i32
    %c0_i32_0 = arith.constant 0 : i32
    %c0_i32_1 = arith.constant 0 : i32
    return %c0_i32, %c0_i32_0 : i32, i32
  }
  func.func @transform_2(%arg0: i32) -> (i32, i32) {
    %c0_i32 = arith.constant 0 : i32
    %c0_i32_0 = arith.constant 0 : i32
    %c0_i32_1 = arith.constant 0 : i32
    return %c0_i32, %c0_i32_0 : i32, i32
  }
  func.func @transform_3(%arg0: i32) -> (i32, i32) {
    %c0_i32 = arith.constant 0 : i32
    %c0_i32_0 = arith.constant 0 : i32
    %c0_i32_1 = arith.constant 0 : i32
    return %c0_i32, %c0_i32_0 : i32, i32
  }
  func.func @transform_4(%arg0: i32) -> (i32, i32) {
    %c0_i32 = arith.constant 0 : i32
    %c0_i32_0 = arith.constant 0 : i32
    %c0_i32_1 = arith.constant 0 : i32
    return %c0_i32, %c0_i32_0 : i32, i32
  }
  func.func @transform_5(%arg0: i32) -> (i32, i32) {
    %c0_i32 = arith.constant 0 : i32
    %c0_i32_0 = arith.constant 0 : i32
    %c0_i32_1 = arith.constant 0 : i32
    return %c0_i32, %c0_i32_0 : i32, i32
  }
  func.func @transform_6(%arg0: i32) -> (i32, i32) {
    %c0_i32 = arith.constant 0 : i32
    %c0_i32_0 = arith.constant 0 : i32
    %c0_i32_1 = arith.constant 0 : i32
    return %c0_i32, %c0_i32_0 : i32, i32
  }
  func.func @transform_7(%arg0: i32) -> (i32, i32) {
    %c0_i32 = arith.constant 0 : i32
    %c0_i32_0 = arith.constant 0 : i32
    %c0_i32_1 = arith.constant 0 : i32
    return %c0_i32, %c0_i32_0 : i32, i32
  }
  func.func @transform_8(%arg0: i32) -> (i32, i32) {
    %c0_i32 = arith.constant 0 : i32
    %c0_i32_0 = arith.constant 0 : i32
    %c0_i32_1 = arith.constant 0 : i32
    return %c0_i32, %c0_i32_0 : i32, i32
  }
  func.func @transform_9(%arg0: i32) -> (i32, i32) {
    %c0_i32 = arith.constant 0 : i32
    %c0_i32_0 = arith.constant 0 : i32
    %c0_i32_1 = arith.constant 0 : i32
    return %c0_i32, %c0_i32_0 : i32, i32
  }
  func.func @transform_10(%arg0: i32) -> (i32, i32) {
    %c0_i32 = arith.constant 0 : i32
    %c0_i32_0 = arith.constant 0 : i32
    %c0_i32_1 = arith.constant 0 : i32
    return %c0_i32, %c0_i32_0 : i32, i32
  }
  func.func @transform_11(%arg0: i32) -> (i32, i32) {
    %c0_i32 = arith.constant 0 : i32
    %c0_i32_0 = arith.constant 0 : i32
    %c0_i32_1 = arith.constant 0 : i32
    return %c0_i32, %c0_i32_0 : i32, i32
  }
  func.func @transform_12(%arg0: i32) -> (i32, i32, i32) {
    %c0_i32 = arith.constant 0 : i32
    %c0_i32_0 = arith.constant 0 : i32
    %c0_i32_1 = arith.constant 0 : i32
    return %arg0, %c0_i32, %c0_i32_0 : i32, i32, i32
  }
}

</mosaic_0001>

<llo_original>
// kernel: _lambda_.13
$region0: #{_lambda_.13}
  #allocation0 [shape = 'u32[]', space=smem, size = 0x4, offset = 0x4, fixed_abs, tag = 'smem constant byte address 0x4 - core index']
  #allocation1 [shape = 'u32[144,128]{1,0:T(1,128)}', space=vmem, size = 0x12000, scoped, tag = 'internal scratch']
  %s0 = inlined_call_operand.vmem [shape: bf16[2,18,256], index: 0, kind: input, shape index: {}]
  %s1 = inlined_call_operand.vmem [shape: bf16[8,18], index: 1, kind: input, shape index: {}]
  %s2 = inlined_call_operand.vmem [shape: f32[8,1], index: 2, kind: input, shape index: {}]
  %s3 = inlined_call_operand.vmem [shape: f32[8,1], index: 3, kind: input, shape index: {}]
  %s4 = inlined_call_operand.vmem [shape: f32[2,8,256], index: 4, kind: output, shape index: {}]
  %s5 = sld [smem:[#allocation0]]
  $region49: #{_lambda_.13} parent=0
    _
  %s7 = ssub.s32 1, %s5
  %s8 = scalar_select 0, %s7, %s5
  loop: start=0, step=1, limit=4
  $region2: #{_lambda_.13} parent=0 // loop_pre_header
    _
  $region3: #{_lambda_.13} parent=0 // loop_header
    %s10 = sphi 0, %s14
    %p11 = scmp.ge.s32.totalorder %s10, 4
    %s20 = sphi 0, %s22
    %s23 = sphi 0, %s20
    %s24 = sphi 0, %s23
    %s40 = sphi 0, %s24
    %s44 = sphi 0, %s44
    %s46 = sphi 0, %s44
    %s47 = sphi 0, %s46
    %s61 = sphi 0, %s47
    %s65 = sphi 0, %s65
    %s67 = sphi 0, %s65
    %s68 = sphi 0, %s67
    %s82 = sphi 0, %s68
    %s86 = sphi 0, %s86
    %s88 = sphi 0, %s86
    %s89 = sphi 0, %s88
    %s103 = sphi 0, %s89
    %s109 = sphi 0, %s111
    %s112 = sphi 0, %s109
    %s113 = sphi 0, %s112
    %s129 = sphi 0, %s113
  $region4: #{_lambda_.13} parent=0 // loop_header_branch
    %13 = sbr.rel (%p11) target = $region8
  $region5: #{_lambda_.13} parent=0 // loop_body
    %s15 = ssub.s32 %s10, 1
    %s16 = ssub.s32 %s10, 2
    %s17 = sadd.s32 %s10, 1
    %s18 = ssub.s32 %s10, %s17
    %p19 = scmp.eq.s32.totalorder %s18, 0
    %s21 = sadd.s32 %s20, 1
    %s22 = scalar_select %p19, %s20, %s21
    %p25 = pneg %p19
    %p26 = scmp.eq.s32.totalorder %s10, 1
    %p27 = por %p25, %p26
    %p28 = scmp.ne.s32.totalorder %s20, %s23
    %p29 = scmp.eq.s32.totalorder %s10, 0
    %p30 = por %p28, %p29
    %p31 = scmp.ne.s32.totalorder %s20, %s23
    %p32 = scmp.eq.s32.totalorder %s15, 1
    %p33 = por %p31, %p32
    %p34 = scmp.ne.s32.totalorder %s23, %s24
    %p35 = scmp.eq.s32.totalorder %s15, 0
    %p36 = por %p34, %p35
    %p37 = scmp.ne.s32.totalorder %s23, %s24
    %p38 = scmp.eq.s32.totalorder %s16, 1
    %p39 = por %p37, %p38
    %p41 = scmp.ne.s32.totalorder %s24, %s40
    %p42 = scmp.eq.s32.totalorder %s16, 0
    %p43 = por %p41, %p42
    %s45 = sadd.s32 %s44, 1
    %p48 = scmp.eq.s32.totalorder %s10, 1
    %p49 = scmp.ne.s32.totalorder %s44, %s46
    %p50 = scmp.eq.s32.totalorder %s10, 0
    %p51 = por %p49, %p50
    %p52 = scmp.ne.s32.totalorder %s44, %s46
    %p53 = scmp.eq.s32.totalorder %s15, 1
    %p54 = por %p52, %p53
    %p55 = scmp.ne.s32.totalorder %s46, %s47
    %p56 = scmp.eq.s32.totalorder %s15, 0
    %p57 = por %p55, %p56
    %p58 = scmp.ne.s32.totalorder %s46, %s47
    %p59 = scmp.eq.s32.totalorder %s16, 1
    %p60 = por %p58, %p59
    %p62 = scmp.ne.s32.totalorder %s47, %s61
    %p63 = scmp.eq.s32.totalorder %s16, 0
    %p64 = por %p62, %p63
    %s66 = sadd.s32 %s65, 1
    %p69 = scmp.eq.s32.totalorder %s10, 1
    %p70 = scmp.ne.s32.totalorder %s65, %s67
    %p71 = scmp.eq.s32.totalorder %s10, 0
    %p72 = por %p70, %p71
    %p73 = scmp.ne.s32.totalorder %s65, %s67
    %p74 = scmp.eq.s32.totalorder %s15, 1
    %p75 = por %p73, %p74
    %p76 = scmp.ne.s32.totalorder %s67, %s68
    %p77 = scmp.eq.s32.totalorder %s15, 0
    %p78 = por %p76, %p77
    %p79 = scmp.ne.s32.totalorder %s67, %s68
    %p80 = scmp.eq.s32.totalorder %s16, 1
    %p81 = por %p79, %p80
    %p83 = scmp.ne.s32.totalorder %s68, %s82
    %p84 = scmp.eq.s32.totalorder %s16, 0
    %p85 = por %p83, %p84
    %s87 = sadd.s32 %s86, 1
    %p90 = scmp.eq.s32.totalorder %s10, 1
    %p91 = scmp.ne.s32.totalorder %s86, %s88
    %p92 = scmp.eq.s32.totalorder %s10, 0
    %p93 = por %p91, %p92
    %p94 = scmp.ne.s32.totalorder %s86, %s88
    %p95 = scmp.eq.s32.totalorder %s15, 1
    %p96 = por %p94, %p95
    %p97 = scmp.ne.s32.totalorder %s88, %s89
    %p98 = scmp.eq.s32.totalorder %s15, 0
    %p99 = por %p97, %p98
    %p100 = scmp.ne.s32.totalorder %s88, %s89
    %p101 = scmp.eq.s32.totalorder %s16, 1
    %p102 = por %p100, %p101
    %p104 = scmp.ne.s32.totalorder %s89, %s103
    %p105 = scmp.eq.s32.totalorder %s16, 0
    %p106 = por %p104, %p105
    %s107 = ssub.s32 %s10, %s17
    %p108 = scmp.eq.s32.totalorder %s107, 0
    %s110 = sadd.s32 %s109, 1
    %s111 = scalar_select %p108, %s109, %s110
    %p114 = pneg %p108
    %p115 = scmp.eq.s32.totalorder %s10, 1
    %p116 = por %p114, %p115
    %p117 = scmp.ne.s32.totalorder %s109, %s112
    %p118 = scmp.eq.s32.totalorder %s10, 0
    %p119 = por %p117, %p118
    %p120 = scmp.ne.s32.totalorder %s109, %s112
    %p121 = scmp.eq.s32.totalorder %s15, 1
    %p122 = por %p120, %p121
    %p123 = scmp.ne.s32.totalorder %s112, %s113
    %p124 = scmp.eq.s32.totalorder %s15, 0
    %p125 = por %p123, %p124
    %p126 = scmp.ne.s32.totalorder %s112, %s113
    %p127 = scmp.eq.s32.totalorder %s16, 1
    %p128 = por %p126, %p127
    %p130 = scmp.ne.s32.totalorder %s113, %s129
    %p131 = scmp.eq.s32.totalorder %s16, 0
    %p132 = por %p130, %p131
    %p133 = scmp.le.s32.totalorder 1, %s10
    %p134 = scmp.lt.s32.totalorder %s10, 3
    %p135 = pnand %p133, %p134
    %p136 = pneg %p135
    // Predicated region
    $region9: #{_lambda_.13} parent=5 // pred_check
      _
    $region10: #{_lambda_.13} parent=5 // pred_check_branch
      %138 = sbr.rel (%p135) target = $region12
    $region11: #{_lambda_.13} parent=5 // pred_region
      %s139 = ssub.s32 %s10, 1
      // Predicated region
      $region13: #{_lambda_.13} parent=11 // pred_check
        %p140 = pneg %p57
      $region14: #{_lambda_.13} parent=11 // pred_check_branch
        %142 = sbr.rel (%p140) target = $region16
      $region15: #{_lambda_.13} parent=11 // pred_region
        _
      $region16: #{_lambda_.13} parent=11 // pred_fallthru
        _
      // Predicated region
      $region17: #{_lambda_.13} parent=11 // pred_check
        %p143 = pneg %p78
      $region18: #{_lambda_.13} parent=11 // pred_check_branch
        %145 = sbr.rel (%p143) target = $region20
      $region19: #{_lambda_.13} parent=11 // pred_region
        _
      $region20: #{_lambda_.13} parent=11 // pred_fallthru
        _
      // Predicated region
      $region21: #{_lambda_.13} parent=11 // pred_check
        %p146 = pneg %p99
      $region22: #{_lambda_.13} parent=11 // pred_check_branch
        %148 = sbr.rel (%p146) target = $region24
      $region23: #{_lambda_.13} parent=11 // pred_region
        _
      $region24: #{_lambda_.13} parent=11 // pred_fallthru
        _
    $region12: #{_lambda_.13} parent=5 // pred_fallthru
      _
    %p149 = scmp.lt.s32.totalorder %s10, 2
    // Predicated region
    $region25: #{_lambda_.13} parent=5 // pred_check
      %p150 = pneg %p149
    $region26: #{_lambda_.13} parent=5 // pred_check_branch
      %152 = sbr.rel (%p150) target = $region28
    $region27: #{_lambda_.13} parent=5 // pred_region
      // Predicated region
      $region29: #{_lambda_.13} parent=27 // pred_check
        %p153 = pneg %p30
      $region30: #{_lambda_.13} parent=27 // pred_check_branch
        %155 = sbr.rel (%p153) target = $region32
      $region31: #{_lambda_.13} parent=27 // pred_region
        %p156 = scmp.lt.s32.totalorder %s10, 1
        %s157 = scalar_select %p156, %s10, 1
        %s158 = smul.addr %s157, 6
        %s159 = smul.addr %s158, 4
        %s160 = scalar_lea.vmem %s0, %s159
      $region32: #{_lambda_.13} parent=27 // pred_fallthru
        _
    $region28: #{_lambda_.13} parent=5 // pred_fallthru
      _
    %p161 = scmp.le.s32.totalorder 1, %s10
    %p162 = scmp.lt.s32.totalorder %s10, 3
    %p163 = pnand %p161, %p162
    %p164 = pneg %p163
    // Predicated region
    $region33: #{_lambda_.13} parent=5 // pred_check
      _
    $region34: #{_lambda_.13} parent=5 // pred_check_branch
      %166 = sbr.rel (%p163) target = $region36
    $region35: #{_lambda_.13} parent=5 // pred_region
      %s167 = ssub.s32 %s10, 1
      %p168 = scmp.lt.s32.totalorder %s15, 1
      %s169 = scalar_select %p168, %s15, 1
      %s170 = smul.addr %s169, 6
      %s171 = smul.addr %s170, 4
      %s172 = scalar_lea.vmem %s0, %s171
      %p173 = pneg %p36
      %p174 = pneg %p33
      %p175 = pneg %p57
      %p176 = pneg %p54
      %p177 = pneg %p78
      %p178 = pneg %p75
      %p179 = pneg %p99
      %p180 = pneg %p96
      %p181 = pneg %p125
      %p182 = pneg %p122
      %p183 = scmp.lt.s32.totalorder %s15, 1
      %s184 = scalar_select %p183, %s15, 1
      %s185 = smul.addr %s184, 2
      %s186 = smul.addr %s185, 8
      %s187 = scalar_lea.vmem %s4, %s186
      %p188 = scmp.lt.s32.totalorder %s15, 1
      %s189 = scalar_select %p188, %s15, 1
      %s190 = smul.addr %s189, 6
      %s191 = smul.addr %s190, 4
      %s192 = scalar_lea.vmem %s0, %s191
      %p193 = scmp.lt.s32.totalorder %s15, 1
      %s194 = scalar_select %p193, %s15, 1
      %s195 = smul.addr %s194, 2
      %s196 = smul.addr %s195, 8
      %s197 = scalar_lea.vmem %s4, %s196
      %v199 = vld [vmem:[%s1] sm:$0xf]
      %v200 = vld [vmem:[%s192] sm:$0xff]
      %v201 = vld [vmem:[%s192 + $0x8] sm:$0xff]
      %v202 = vld [vmem:[%s192 + $0x10] sm:$0x11]
      %v206 = vunpack.c.l.b16 %v200
      %v207 = vunpack.c.h.b16 %v200
      %v208 = vunpack.c.l.b16 %v201
      %v209 = vunpack.c.h.b16 %v201
      %v210 = vunpack.c.l.b16 %v202
      %v211 = vunpack.c.h.b16 %v202
      %v212 = vpack.c.b16 %v208, %v206
      %v213 = vpack.c.b16 %v209, %v207
      %v214 = vpack.c.b16 %v210, %v210
      %v215 = vpack.c.b16 %v211, %v211
      %vm218 = vcmask 146432
      %v220 = vsel %vm218, %v199, 0
      %vm222 = vcmask 1040384
      %v224 = vsel %vm222, %v214, 0
      %v227 = vsel %vm222, %v215, 0
      %229 = vmatprep.subr.bf16.mxu0 0
      %230 = vmatpush1.bf16.msra.mxu0 0
      %231 = vmatprep.subr.bf16.mxu0 0
      %232 = vmatpush1.bf16.msra.mxu0 0
      %233 = vmatprep.subr.bf16.mxu0 0
      %234 = vmatpush1.bf16.msra.mxu0 0
      %235 = vmatprep.subr.bf16.mxu0 0
      %236 = vmatpush1.bf16.msra.mxu0 0
      %237 = vmatprep.subr.bf16.mxu0 0
      %238 = vmatpush1.bf16.msra.mxu0 0
      %239 = vmatprep.subr.bf16.mxu0 0
      %240 = vmatpush1.bf16.msra.mxu0 0
      %241 = vmatprep.subr.bf16.mxu0 %v227
      %242 = vmatpush1.bf16.msra.mxu0 %v224
      %243 = vmatprep.subr.bf16.mxu0 %v213
      %244 = vmatpush1.bf16.msra.mxu0 %v212
      %245 = vmatprep.subr.bf16.mxu0 0
      %246 = vmatpush2.bf16.msra.mxu0 0
      %247 = vmatprep.subr.bf16.mxu0 0
      %248 = vmatpush2.bf16.msra.mxu0 0
      %249 = vmatprep.subr.bf16.mxu0 0
      %250 = vmatpush2.bf16.msra.mxu0 0
      %251 = vmatprep.subr.bf16.mxu0 0
      %252 = vmatpush2.bf16.msra.mxu0 0
      %253 = vmatprep.subr.bf16.mxu0 0
      %254 = vmatpush2.bf16.msra.mxu0 0
      %255 = vmatprep.subr.bf16.mxu0 0
      %256 = vmatpush2.bf16.msra.mxu0 0
      %257 = vmatprep.subr.bf16.mxu0 0
      %258 = vmatpush2.bf16.msra.mxu0 0
      %259 = vmatprep.subr.bf16.mxu0 0
      %260 = vmatpush2.bf16.msra.mxu0 0
      %261 = vmatprep.mubr.bf16.mxu0 0
      %262 = vmatmul.mubr.bf16.gmra.mxu0 %v220
      %v263 = vpop.f32.mrf.mxu0
      %v264 = vadd.f32 0.0, %v263
      %v265 = vpop.f32.mrf.mxu0
      %v266 = vadd.f32 0.0, %v265
      %v267 = vpop.f32.mrf.mxu0
      %v268 = vpop.f32.mrf.mxu0
      %269 = vdwg.mxu0
      %v270 = vld [vmem:[%s2] sm:$0xff]
      %v271 = vld [vmem:[%s3] sm:$0xff]
      %v272 = vadd.f32 %v264, %v266
      %273 = vadd.xlane.f32.xlu0 %v272
      %v274 = vpop.xlane.xlu0 %273
      %v275 = vrcp.pop 256.0
      %v276 = vmul.f32 %v274, %v275
      %v277 = vsub.f32 %v264, %v276
      %v278 = vsub.f32 %v266, %v276
      %v279 = vmul.f32 %v277, %v277
      %v280 = vmul.f32 %v278, %v278
      %v281 = vadd.f32 %v279, %v280
      %282 = vadd.xlane.f32.xlu0 %v281
      %v283 = vpop.xlane.xlu0 %282
      %v284 = vmul.f32 %v283, %v275
      %v285 = vadd.f32 %v284, 1e-05
      %v286 = vrsqrt.pop %v285
      %v287 = vmul.f32 %v277, %v286
      %v288 = vmul.f32 %v278, %v286
      %290 = vset.pattern.permute.xlu0 0
      %291 = vperm.xlu0 %290, %v270
      %v292 = vpop.permute.xlu0 %291
      %v294 = vmul.f32 %v287, %v292
      %v295 = vmul.f32 %v288, %v292
      %297 = vset.pattern.permute.xlu0 0
      %298 = vperm.xlu0 %297, %v271
      %v299 = vpop.permute.xlu0 %298
      %v301 = vadd.f32 %v294, %v299
      %v302 = vadd.f32 %v295, %v299
      %vm303 = vcmp.ge.f32.partialorder %v301, 0.0
      %vm304 = vcmp.ge.f32.partialorder %v302, 0.0
      %v305 = vmul.f32 %v301, 0.01
      %v306 = vmul.f32 %v302, 0.01
      %v307 = vsel %vm303, %v301, %v305
      %v308 = vsel %vm304, %v302, %v306
      %309 = vst [vmem:[%s197] sm:$0xff] %v307
      %310 = vst [vmem:[%s197 + $0x8] sm:$0xff] %v308
      %p311 = scmp.lt.s32.totalorder %s15, 1
      %s312 = scalar_select %p311, %s15, 1
      %s313 = smul.addr %s312, 2
      %s314 = smul.addr %s313, 8
      %s315 = scalar_lea.vmem %s4, %s314
      // Predicated region
      $region37: #{_lambda_.13} parent=35 // pred_check
        %p316 = pneg %p122
      $region38: #{_lambda_.13} parent=35 // pred_check_branch
        %318 = sbr.rel (%p316) target = $region40
      $region39: #{_lambda_.13} parent=35 // pred_region
        _
      $region40: #{_lambda_.13} parent=35 // pred_fallthru
        _
    $region36: #{_lambda_.13} parent=5 // pred_fallthru
      _
    %p319 = scmp.le.s32.totalorder 2, %s10
    // Predicated region
    $region41: #{_lambda_.13} parent=5 // pred_check
      %p320 = pneg %p319
    $region42: #{_lambda_.13} parent=5 // pred_check_branch
      %322 = sbr.rel (%p320) target = $region44
    $region43: #{_lambda_.13} parent=5 // pred_region
      %s323 = ssub.s32 %s10, 2
      // Predicated region
      $region45: #{_lambda_.13} parent=43 // pred_check
        %p324 = pneg %p128
      $region46: #{_lambda_.13} parent=43 // pred_check_branch
        %326 = sbr.rel (%p324) target = $region48
      $region47: #{_lambda_.13} parent=43 // pred_region
        %p327 = scmp.lt.s32.totalorder %s16, 1
        %s328 = scalar_select %p327, %s16, 1
        %s329 = smul.addr %s328, 2
        %s330 = smul.addr %s329, 8
        %s331 = scalar_lea.vmem %s4, %s330
      $region48: #{_lambda_.13} parent=43 // pred_fallthru
        _
    $region44: #{_lambda_.13} parent=5 // pred_fallthru
      _
  $region6: #{_lambda_.13} parent=0 // loop_footer
    %s14 = sadd.s32 1, %s10
  $region7: #{_lambda_.13} parent=0 // loop_footer_branch
    %9 = sbr.rel target = $region3
  $region8: #{_lambda_.13} parent=0 // loop_exit
    _

// kernel: _lambda_.14
$region0: #{_lambda_.14}
  #allocation0 [shape = 'u32[]', space=smem, size = 0x4, offset = 0x4, fixed_abs, tag = 'smem constant byte address 0x4 - core index']
  #allocation1 [shape = 'u32[144,128]{1,0:T(1,128)}', space=vmem, size = 0x12000, scoped, tag = 'internal scratch']
  %s0 = inlined_call_operand.vmem [shape: bf16[2,72,256], index: 0, kind: input, shape index: {}]
  %s1 = inlined_call_operand.vmem [shape: bf16[8,72], index: 1, kind: input, shape index: {}]
  %s2 = inlined_call_operand.vmem [shape: f32[8,1], index: 2, kind: input, shape index: {}]
  %s3 = inlined_call_operand.vmem [shape: f32[8,1], index: 3, kind: input, shape index: {}]
  %s4 = inlined_call_operand.vmem [shape: f32[2,8,256], index: 4, kind: output, shape index: {}]
  %s5 = sld [smem:[#allocation0]]
  $region49: #{_lambda_.14} parent=0
    _
  %s7 = ssub.s32 1, %s5
  %s8 = scalar_select 0, %s7, %s5
  loop: start=0, step=1, limit=4
  $region2: #{_lambda_.14} parent=0 // loop_pre_header
    _
  $region3: #{_lambda_.14} parent=0 // loop_header
    %s10 = sphi 0, %s14
    %p11 = scmp.ge.s32.totalorder %s10, 4
    %s20 = sphi 0, %s22
    %s23 = sphi 0, %s20
    %s24 = sphi 0, %s23
    %s40 = sphi 0, %s24
    %s44 = sphi 0, %s44
    %s46 = sphi 0, %s44
    %s47 = sphi 0, %s46
    %s61 = sphi 0, %s47
    %s65 = sphi 0, %s65
    %s67 = sphi 0, %s65
    %s68 = sphi 0, %s67
    %s82 = sphi 0, %s68
    %s86 = sphi 0, %s86
    %s88 = sphi 0, %s86
    %s89 = sphi 0, %s88
    %s103 = sphi 0, %s89
    %s109 = sphi 0, %s111
    %s112 = sphi 0, %s109
    %s113 = sphi 0, %s112
    %s129 = sphi 0, %s113
  $region4: #{_lambda_.14} parent=0 // loop_header_branch
    %13 = sbr.rel (%p11) target = $region8
  $region5: #{_lambda_.14} parent=0 // loop_body
    %s15 = ssub.s32 %s10, 1
    %s16 = ssub.s32 %s10, 2
    %s17 = sadd.s32 %s10, 1
    %s18 = ssub.s32 %s10, %s17
    %p19 = scmp.eq.s32.totalorder %s18, 0
    %s21 = sadd.s32 %s20, 1
    %s22 = scalar_select %p19, %s20, %s21
    %p25 = pneg %p19
    %p26 = scmp.eq.s32.totalorder %s10, 1
    %p27 = por %p25, %p26
    %p28 = scmp.ne.s32.totalorder %s20, %s23
    %p29 = scmp.eq.s32.totalorder %s10, 0
    %p30 = por %p28, %p29
    %p31 = scmp.ne.s32.totalorder %s20, %s23
    %p32 = scmp.eq.s32.totalorder %s15, 1
    %p33 = por %p31, %p32
    %p34 = scmp.ne.s32.totalorder %s23, %s24
    %p35 = scmp.eq.s32.totalorder %s15, 0
    %p36 = por %p34, %p35
    %p37 = scmp.ne.s32.totalorder %s23, %s24
    %p38 = scmp.eq.s32.totalorder %s16, 1
    %p39 = por %p37, %p38
    %p41 = scmp.ne.s32.totalorder %s24, %s40
    %p42 = scmp.eq.s32.totalorder %s16, 0
    %p43 = por %p41, %p42
    %s45 = sadd.s32 %s44, 1
    %p48 = scmp.eq.s32.totalorder %s10, 1
    %p49 = scmp.ne.s32.totalorder %s44, %s46
    %p50 = scmp.eq.s32.totalorder %s10, 0
    %p51 = por %p49, %p50
    %p52 = scmp.ne.s32.totalorder %s44, %s46
    %p53 = scmp.eq.s32.totalorder %s15, 1
    %p54 = por %p52, %p53
    %p55 = scmp.ne.s32.totalorder %s46, %s47
    %p56 = scmp.eq.s32.totalorder %s15, 0
    %p57 = por %p55, %p56
    %p58 = scmp.ne.s32.totalorder %s46, %s47
    %p59 = scmp.eq.s32.totalorder %s16, 1
    %p60 = por %p58, %p59
    %p62 = scmp.ne.s32.totalorder %s47, %s61
    %p63 = scmp.eq.s32.totalorder %s16, 0
    %p64 = por %p62, %p63
    %s66 = sadd.s32 %s65, 1
    %p69 = scmp.eq.s32.totalorder %s10, 1
    %p70 = scmp.ne.s32.totalorder %s65, %s67
    %p71 = scmp.eq.s32.totalorder %s10, 0
    %p72 = por %p70, %p71
    %p73 = scmp.ne.s32.totalorder %s65, %s67
    %p74 = scmp.eq.s32.totalorder %s15, 1
    %p75 = por %p73, %p74
    %p76 = scmp.ne.s32.totalorder %s67, %s68
    %p77 = scmp.eq.s32.totalorder %s15, 0
    %p78 = por %p76, %p77
    %p79 = scmp.ne.s32.totalorder %s67, %s68
    %p80 = scmp.eq.s32.totalorder %s16, 1
    %p81 = por %p79, %p80
    %p83 = scmp.ne.s32.totalorder %s68, %s82
    %p84 = scmp.eq.s32.totalorder %s16, 0
    %p85 = por %p83, %p84
    %s87 = sadd.s32 %s86, 1
    %p90 = scmp.eq.s32.totalorder %s10, 1
    %p91 = scmp.ne.s32.totalorder %s86, %s88
    %p92 = scmp.eq.s32.totalorder %s10, 0
    %p93 = por %p91, %p92
    %p94 = scmp.ne.s32.totalorder %s86, %s88
    %p95 = scmp.eq.s32.totalorder %s15, 1
    %p96 = por %p94, %p95
    %p97 = scmp.ne.s32.totalorder %s88, %s89
    %p98 = scmp.eq.s32.totalorder %s15, 0
    %p99 = por %p97, %p98
    %p100 = scmp.ne.s32.totalorder %s88, %s89
    %p101 = scmp.eq.s32.totalorder %s16, 1
    %p102 = por %p100, %p101
    %p104 = scmp.ne.s32.totalorder %s89, %s103
    %p105 = scmp.eq.s32.totalorder %s16, 0
    %p106 = por %p104, %p105
    %s107 = ssub.s32 %s10, %s17
    %p108 = scmp.eq.s32.totalorder %s107, 0
    %s110 = sadd.s32 %s109, 1
    %s111 = scalar_select %p108, %s109, %s110
    %p114 = pneg %p108
    %p115 = scmp.eq.s32.totalorder %s10, 1
    %p116 = por %p114, %p115
    %p117 = scmp.ne.s32.totalorder %s109, %s112
    %p118 = scmp.eq.s32.totalorder %s10, 0
    %p119 = por %p117, %p118
    %p120 = scmp.ne.s32.totalorder %s109, %s112
    %p121 = scmp.eq.s32.totalorder %s15, 1
    %p122 = por %p120, %p121
    %p123 = scmp.ne.s32.totalorder %s112, %s113
    %p124 = scmp.eq.s32.totalorder %s15, 0
    %p125 = por %p123, %p124
    %p126 = scmp.ne.s32.totalorder %s112, %s113
    %p127 = scmp.eq.s32.totalorder %s16, 1
    %p128 = por %p126, %p127
    %p130 = scmp.ne.s32.totalorder %s113, %s129
    %p131 = scmp.eq.s32.totalorder %s16, 0
    %p132 = por %p130, %p131
    %p133 = scmp.le.s32.totalorder 1, %s10
    %p134 = scmp.lt.s32.totalorder %s10, 3
    %p135 = pnand %p133, %p134
    %p136 = pneg %p135
    // Predicated region
    $region9: #{_lambda_.14} parent=5 // pred_check
      _
    $region10: #{_lambda_.14} parent=5 // pred_check_branch
      %138 = sbr.rel (%p135) target = $region12
    $region11: #{_lambda_.14} parent=5 // pred_region
      %s139 = ssub.s32 %s10, 1
      // Predicated region
      $region13: #{_lambda_.14} parent=11 // pred_check
        %p140 = pneg %p57
      $region14: #{_lambda_.14} parent=11 // pred_check_branch
        %142 = sbr.rel (%p140) target = $region16
      $region15: #{_lambda_.14} parent=11 // pred_region
        _
      $region16: #{_lambda_.14} parent=11 // pred_fallthru
        _
      // Predicated region
      $region17: #{_lambda_.14} parent=11 // pred_check
        %p143 = pneg %p78
      $region18: #{_lambda_.14} parent=11 // pred_check_branch
        %145 = sbr.rel (%p143) target = $region20
      $region19: #{_lambda_.14} parent=11 // pred_region
        _
      $region20: #{_lambda_.14} parent=11 // pred_fallthru
        _
      // Predicated region
      $region21: #{_lambda_.14} parent=11 // pred_check
        %p146 = pneg %p99
      $region22: #{_lambda_.14} parent=11 // pred_check_branch
        %148 = sbr.rel (%p146) target = $region24
      $region23: #{_lambda_.14} parent=11 // pred_region
        _
      $region24: #{_lambda_.14} parent=11 // pred_fallthru
        _
    $region12: #{_lambda_.14} parent=5 // pred_fallthru
      _
    %p149 = scmp.lt.s32.totalorder %s10, 2
    // Predicated region
    $region25: #{_lambda_.14} parent=5 // pred_check
      %p150 = pneg %p149
    $region26: #{_lambda_.14} parent=5 // pred_check_branch
      %152 = sbr.rel (%p150) target = $region28
    $region27: #{_lambda_.14} parent=5 // pred_region
      // Predicated region
      $region29: #{_lambda_.14} parent=27 // pred_check
        %p153 = pneg %p30
      $region30: #{_lambda_.14} parent=27 // pred_check_branch
        %155 = sbr.rel (%p153) target = $region32
      $region31: #{_lambda_.14} parent=27 // pred_region
        %p156 = scmp.lt.s32.totalorder %s10, 1
        %s157 = scalar_select %p156, %s10, 1
        %s158 = smul.addr %s157, 18
        %s159 = smul.addr %s158, 4
        %s160 = scalar_lea.vmem %s0, %s159
      $region32: #{_lambda_.14} parent=27 // pred_fallthru
        _
    $region28: #{_lambda_.14} parent=5 // pred_fallthru
      _
    %p161 = scmp.le.s32.totalorder 1, %s10
    %p162 = scmp.lt.s32.totalorder %s10, 3
    %p163 = pnand %p161, %p162
    %p164 = pneg %p163
    // Predicated region
    $region33: #{_lambda_.14} parent=5 // pred_check
      _
    $region34: #{_lambda_.14} parent=5 // pred_check_branch
      %166 = sbr.rel (%p163) target = $region36
    $region35: #{_lambda_.14} parent=5 // pred_region
      %s167 = ssub.s32 %s10, 1
      %p168 = scmp.lt.s32.totalorder %s15, 1
      %s169 = scalar_select %p168, %s15, 1
      %s170 = smul.addr %s169, 18
      %s171 = smul.addr %s170, 4
      %s172 = scalar_lea.vmem %s0, %s171
      %p173 = pneg %p36
      %p174 = pneg %p33
      %p175 = pneg %p57
      %p176 = pneg %p54
      %p177 = pneg %p78
      %p178 = pneg %p75
      %p179 = pneg %p99
      %p180 = pneg %p96
      %p181 = pneg %p125
      %p182 = pneg %p122
      %p183 = scmp.lt.s32.totalorder %s15, 1
      %s184 = scalar_select %p183, %s15, 1
      %s185 = smul.addr %s184, 2
      %s186 = smul.addr %s185, 8
      %s187 = scalar_lea.vmem %s4, %s186
      %p188 = scmp.lt.s32.totalorder %s15, 1
      %s189 = scalar_select %p188, %s15, 1
      %s190 = smul.addr %s189, 18
      %s191 = smul.addr %s190, 4
      %s192 = scalar_lea.vmem %s0, %s191
      %p193 = scmp.lt.s32.totalorder %s15, 1
      %s194 = scalar_select %p193, %s15, 1
      %s195 = smul.addr %s194, 2
      %s196 = smul.addr %s195, 8
      %s197 = scalar_lea.vmem %s4, %s196
      %v199 = vld [vmem:[%s1] sm:$0xf]
      %v200 = vld [vmem:[%s192] sm:$0xff]
      %v201 = vld [vmem:[%s192 + $0x8] sm:$0xff]
      %v202 = vld [vmem:[%s192 + $0x10] sm:$0xff]
      %v203 = vld [vmem:[%s192 + $0x18] sm:$0xff]
      %v204 = vld [vmem:[%s192 + $0x20] sm:$0xff]
      %v205 = vld [vmem:[%s192 + $0x28] sm:$0xff]
      %v206 = vld [vmem:[%s192 + $0x30] sm:$0xff]
      %v207 = vld [vmem:[%s192 + $0x38] sm:$0xff]
      %v208 = vld [vmem:[%s192 + $0x40] sm:$0xff]
      %v218 = vunpack.c.l.b16 %v200
      %v219 = vunpack.c.h.b16 %v200
      %v220 = vunpack.c.l.b16 %v201
      %v221 = vunpack.c.h.b16 %v201
      %v222 = vunpack.c.l.b16 %v202
      %v223 = vunpack.c.h.b16 %v202
      %v224 = vunpack.c.l.b16 %v203
      %v225 = vunpack.c.h.b16 %v203
      %v226 = vunpack.c.l.b16 %v204
      %v227 = vunpack.c.h.b16 %v204
      %v228 = vunpack.c.l.b16 %v205
      %v229 = vunpack.c.h.b16 %v205
      %v230 = vunpack.c.l.b16 %v206
      %v231 = vunpack.c.h.b16 %v206
      %v232 = vunpack.c.l.b16 %v207
      %v233 = vunpack.c.h.b16 %v207
      %v234 = vunpack.c.l.b16 %v208
      %v235 = vunpack.c.h.b16 %v208
      %v236 = vpack.c.b16 %v220, %v218
      %v237 = vpack.c.b16 %v221, %v219
      %v238 = vpack.c.b16 %v224, %v222
      %v239 = vpack.c.b16 %v225, %v223
      %v240 = vpack.c.b16 %v228, %v226
      %v241 = vpack.c.b16 %v229, %v227
      %v242 = vpack.c.b16 %v232, %v230
      %v243 = vpack.c.b16 %v233, %v231
      %v244 = vpack.c.b16 %v234, %v234
      %v245 = vpack.c.b16 %v235, %v235
      %vm254 = vcmask 588800
      %v256 = vsel %vm254, %v199, 0
      %vm258 = vcmask 1043456
      %v260 = vsel %vm258, %v244, 0
      %v263 = vsel %vm258, %v245, 0
      %265 = vmatprep.subr.bf16.mxu0 0
      %266 = vmatpush1.bf16.msra.mxu0 0
      %267 = vmatprep.subr.bf16.mxu0 0
      %268 = vmatpush1.bf16.msra.mxu0 0
      %269 = vmatprep.subr.bf16.mxu0 0
      %270 = vmatpush1.bf16.msra.mxu0 0
      %271 = vmatprep.subr.bf16.mxu0 %v263
      %272 = vmatpush1.bf16.msra.mxu0 %v260
      %273 = vmatprep.subr.bf16.mxu0 %v243
      %274 = vmatpush1.bf16.msra.mxu0 %v242
      %275 = vmatprep.subr.bf16.mxu0 %v241
      %276 = vmatpush1.bf16.msra.mxu0 %v240
      %277 = vmatprep.subr.bf16.mxu0 %v239
      %278 = vmatpush1.bf16.msra.mxu0 %v238
      %279 = vmatprep.subr.bf16.mxu0 %v237
      %280 = vmatpush1.bf16.msra.mxu0 %v236
      %281 = vmatprep.subr.bf16.mxu0 0
      %282 = vmatpush2.bf16.msra.mxu0 0
      %283 = vmatprep.subr.bf16.mxu0 0
      %284 = vmatpush2.bf16.msra.mxu0 0
      %285 = vmatprep.subr.bf16.mxu0 0
      %286 = vmatpush2.bf16.msra.mxu0 0
      %287 = vmatprep.subr.bf16.mxu0 0
      %288 = vmatpush2.bf16.msra.mxu0 0
      %289 = vmatprep.subr.bf16.mxu0 0
      %290 = vmatpush2.bf16.msra.mxu0 0
      %291 = vmatprep.subr.bf16.mxu0 0
      %292 = vmatpush2.bf16.msra.mxu0 0
      %293 = vmatprep.subr.bf16.mxu0 0
      %294 = vmatpush2.bf16.msra.mxu0 0
      %295 = vmatprep.subr.bf16.mxu0 0
      %296 = vmatpush2.bf16.msra.mxu0 0
      %297 = vmatprep.mubr.bf16.mxu0 0
      %298 = vmatmul.mubr.bf16.gmra.mxu0 %v256
      %v299 = vpop.f32.mrf.mxu0
      %v300 = vadd.f32 0.0, %v299
      %v301 = vpop.f32.mrf.mxu0
      %v302 = vadd.f32 0.0, %v301
      %v303 = vpop.f32.mrf.mxu0
      %v304 = vpop.f32.mrf.mxu0
      %305 = vdwg.mxu0
      %v306 = vld [vmem:[%s2] sm:$0xff]
      %v307 = vld [vmem:[%s3] sm:$0xff]
      %v308 = vadd.f32 %v300, %v302
      %309 = vadd.xlane.f32.xlu0 %v308
      %v310 = vpop.xlane.xlu0 %309
      %v311 = vrcp.pop 256.0
      %v312 = vmul.f32 %v310, %v311
      %v313 = vsub.f32 %v300, %v312
      %v314 = vsub.f32 %v302, %v312
      %v315 = vmul.f32 %v313, %v313
      %v316 = vmul.f32 %v314, %v314
      %v317 = vadd.f32 %v315, %v316
      %318 = vadd.xlane.f32.xlu0 %v317
      %v319 = vpop.xlane.xlu0 %318
      %v320 = vmul.f32 %v319, %v311
      %v321 = vadd.f32 %v320, 1e-05
      %v322 = vrsqrt.pop %v321
      %v323 = vmul.f32 %v313, %v322
      %v324 = vmul.f32 %v314, %v322
      %326 = vset.pattern.permute.xlu0 0
      %327 = vperm.xlu0 %326, %v306
      %v328 = vpop.permute.xlu0 %327
      %v330 = vmul.f32 %v323, %v328
      %v331 = vmul.f32 %v324, %v328
      %333 = vset.pattern.permute.xlu0 0
      %334 = vperm.xlu0 %333, %v307
      %v335 = vpop.permute.xlu0 %334
      %v337 = vadd.f32 %v330, %v335
      %v338 = vadd.f32 %v331, %v335
      %vm339 = vcmp.ge.f32.partialorder %v337, 0.0
      %vm340 = vcmp.ge.f32.partialorder %v338, 0.0
      %v341 = vmul.f32 %v337, 0.01
      %v342 = vmul.f32 %v338, 0.01
      %v343 = vsel %vm339, %v337, %v341
      %v344 = vsel %vm340, %v338, %v342
      %345 = vst [vmem:[%s197] sm:$0xff] %v343
      %346 = vst [vmem:[%s197 + $0x8] sm:$0xff] %v344
      %p347 = scmp.lt.s32.totalorder %s15, 1
      %s348 = scalar_select %p347, %s15, 1
      %s349 = smul.addr %s348, 2
      %s350 = smul.addr %s349, 8
      %s351 = scalar_lea.vmem %s4, %s350
      // Predicated region
      $region37: #{_lambda_.14} parent=35 // pred_check
        %p352 = pneg %p122
      $region38: #{_lambda_.14} parent=35 // pred_check_branch
        %354 = sbr.rel (%p352) target = $region40
      $region39: #{_lambda_.14} parent=35 // pred_region
        _
      $region40: #{_lambda_.14} parent=35 // pred_fallthru
        _
    $region36: #{_lambda_.14} parent=5 // pred_fallthru
      _
    %p355 = scmp.le.s32.totalorder 2, %s10
    // Predicated region
    $region41: #{_lambda_.14} parent=5 // pred_check
      %p356 = pneg %p355
    $region42: #{_lambda_.14} parent=5 // pred_check_branch
      %358 = sbr.rel (%p356) target = $region44
    $region43: #{_lambda_.14} parent=5 // pred_region
      %s359 = ssub.s32 %s10, 2
      // Predicated region
      $region45: #{_lambda_.14} parent=43 // pred_check
        %p360 = pneg %p128
      $region46: #{_lambda_.14} parent=43 // pred_check_branch
        %362 = sbr.rel (%p360) target = $region48
      $region47: #{_lambda_.14} parent=43 // pred_region
        %p363 = scmp.lt.s32.totalorder %s16, 1
        %s364 = scalar_select %p363, %s16, 1
        %s365 = smul.addr %s364, 2
        %s366 = smul.addr %s365, 8
        %s367 = scalar_lea.vmem %s4, %s366
      $region48: #{_lambda_.14} parent=43 // pred_fallthru
        _
    $region44: #{_lambda_.14} parent=5 // pred_fallthru
      _
  $region6: #{_lambda_.14} parent=0 // loop_footer
    %s14 = sadd.s32 1, %s10
  $region7: #{_lambda_.14} parent=0 // loop_footer_branch
    %9 = sbr.rel target = $region3
  $region8: #{_lambda_.14} parent=0 // loop_exit
    _

// kernel: _lambda_.15
$region0: #{_lambda_.15}
  #allocation0 [shape = 'u32[]', space=smem, size = 0x4, offset = 0x4, fixed_abs, tag = 'smem constant byte address 0x4 - core index']
  #allocation1 [shape = 'u32[144,128]{1,0:T(1,128)}', space=vmem, size = 0x12000, scoped, tag = 'internal scratch']
  %s0 = inlined_call_operand.vmem [shape: bf16[2,72,256], index: 0, kind: input, shape index: {}]
  %s1 = inlined_call_operand.vmem [shape: bf16[8,72], index: 1, kind: input, shape index: {}]
  %s2 = inlined_call_operand.vmem [shape: f32[8,1], index: 2, kind: input, shape index: {}]
  %s3 = inlined_call_operand.vmem [shape: f32[8,1], index: 3, kind: input, shape index: {}]
  %s4 = inlined_call_operand.vmem [shape: f32[2,8,256], index: 4, kind: input, shape index: {}]
  %s5 = inlined_call_operand.vmem [shape: f32[2,8,256], index: 5, kind: output, shape index: {}]
  %s6 = sld [smem:[#allocation0]]
  $region53: #{_lambda_.15} parent=0
    _
  %s8 = ssub.s32 1, %s6
  %s9 = scalar_select 0, %s8, %s6
  loop: start=0, step=1, limit=4
  $region2: #{_lambda_.15} parent=0 // loop_pre_header
    _
  $region3: #{_lambda_.15} parent=0 // loop_header
    %s11 = sphi 0, %s15
    %p12 = scmp.ge.s32.totalorder %s11, 4
    %s21 = sphi 0, %s23
    %s24 = sphi 0, %s21
    %s25 = sphi 0, %s24
    %s41 = sphi 0, %s25
    %s45 = sphi 0, %s45
    %s47 = sphi 0, %s45
    %s48 = sphi 0, %s47
    %s62 = sphi 0, %s48
    %s66 = sphi 0, %s66
    %s68 = sphi 0, %s66
    %s69 = sphi 0, %s68
    %s83 = sphi 0, %s69
    %s87 = sphi 0, %s87
    %s89 = sphi 0, %s87
    %s90 = sphi 0, %s89
    %s104 = sphi 0, %s90
    %s110 = sphi 0, %s112
    %s113 = sphi 0, %s110
    %s114 = sphi 0, %s113
    %s130 = sphi 0, %s114
    %s136 = sphi 0, %s138
    %s139 = sphi 0, %s136
    %s140 = sphi 0, %s139
    %s156 = sphi 0, %s140
  $region4: #{_lambda_.15} parent=0 // loop_header_branch
    %14 = sbr.rel (%p12) target = $region8
  $region5: #{_lambda_.15} parent=0 // loop_body
    %s16 = ssub.s32 %s11, 1
    %s17 = ssub.s32 %s11, 2
    %s18 = sadd.s32 %s11, 1
    %s19 = ssub.s32 %s11, %s18
    %p20 = scmp.eq.s32.totalorder %s19, 0
    %s22 = sadd.s32 %s21, 1
    %s23 = scalar_select %p20, %s21, %s22
    %p26 = pneg %p20
    %p27 = scmp.eq.s32.totalorder %s11, 1
    %p28 = por %p26, %p27
    %p29 = scmp.ne.s32.totalorder %s21, %s24
    %p30 = scmp.eq.s32.totalorder %s11, 0
    %p31 = por %p29, %p30
    %p32 = scmp.ne.s32.totalorder %s21, %s24
    %p33 = scmp.eq.s32.totalorder %s16, 1
    %p34 = por %p32, %p33
    %p35 = scmp.ne.s32.totalorder %s24, %s25
    %p36 = scmp.eq.s32.totalorder %s16, 0
    %p37 = por %p35, %p36
    %p38 = scmp.ne.s32.totalorder %s24, %s25
    %p39 = scmp.eq.s32.totalorder %s17, 1
    %p40 = por %p38, %p39
    %p42 = scmp.ne.s32.totalorder %s25, %s41
    %p43 = scmp.eq.s32.totalorder %s17, 0
    %p44 = por %p42, %p43
    %s46 = sadd.s32 %s45, 1
    %p49 = scmp.eq.s32.totalorder %s11, 1
    %p50 = scmp.ne.s32.totalorder %s45, %s47
    %p51 = scmp.eq.s32.totalorder %s11, 0
    %p52 = por %p50, %p51
    %p53 = scmp.ne.s32.totalorder %s45, %s47
    %p54 = scmp.eq.s32.totalorder %s16, 1
    %p55 = por %p53, %p54
    %p56 = scmp.ne.s32.totalorder %s47, %s48
    %p57 = scmp.eq.s32.totalorder %s16, 0
    %p58 = por %p56, %p57
    %p59 = scmp.ne.s32.totalorder %s47, %s48
    %p60 = scmp.eq.s32.totalorder %s17, 1
    %p61 = por %p59, %p60
    %p63 = scmp.ne.s32.totalorder %s48, %s62
    %p64 = scmp.eq.s32.totalorder %s17, 0
    %p65 = por %p63, %p64
    %s67 = sadd.s32 %s66, 1
    %p70 = scmp.eq.s32.totalorder %s11, 1
    %p71 = scmp.ne.s32.totalorder %s66, %s68
    %p72 = scmp.eq.s32.totalorder %s11, 0
    %p73 = por %p71, %p72
    %p74 = scmp.ne.s32.totalorder %s66, %s68
    %p75 = scmp.eq.s32.totalorder %s16, 1
    %p76 = por %p74, %p75
    %p77 = scmp.ne.s32.totalorder %s68, %s69
    %p78 = scmp.eq.s32.totalorder %s16, 0
    %p79 = por %p77, %p78
    %p80 = scmp.ne.s32.totalorder %s68, %s69
    %p81 = scmp.eq.s32.totalorder %s17, 1
    %p82 = por %p80, %p81
    %p84 = scmp.ne.s32.totalorder %s69, %s83
    %p85 = scmp.eq.s32.totalorder %s17, 0
    %p86 = por %p84, %p85
    %s88 = sadd.s32 %s87, 1
    %p91 = scmp.eq.s32.totalorder %s11, 1
    %p92 = scmp.ne.s32.totalorder %s87, %s89
    %p93 = scmp.eq.s32.totalorder %s11, 0
    %p94 = por %p92, %p93
    %p95 = scmp.ne.s32.totalorder %s87, %s89
    %p96 = scmp.eq.s32.totalorder %s16, 1
    %p97 = por %p95, %p96
    %p98 = scmp.ne.s32.totalorder %s89, %s90
    %p99 = scmp.eq.s32.totalorder %s16, 0
    %p100 = por %p98, %p99
    %p101 = scmp.ne.s32.totalorder %s89, %s90
    %p102 = scmp.eq.s32.totalorder %s17, 1
    %p103 = por %p101, %p102
    %p105 = scmp.ne.s32.totalorder %s90, %s104
    %p106 = scmp.eq.s32.totalorder %s17, 0
    %p107 = por %p105, %p106
    %s108 = ssub.s32 %s11, %s18
    %p109 = scmp.eq.s32.totalorder %s108, 0
    %s111 = sadd.s32 %s110, 1
    %s112 = scalar_select %p109, %s110, %s111
    %p115 = pneg %p109
    %p116 = scmp.eq.s32.totalorder %s11, 1
    %p117 = por %p115, %p116
    %p118 = scmp.ne.s32.totalorder %s110, %s113
    %p119 = scmp.eq.s32.totalorder %s11, 0
    %p120 = por %p118, %p119
    %p121 = scmp.ne.s32.totalorder %s110, %s113
    %p122 = scmp.eq.s32.totalorder %s16, 1
    %p123 = por %p121, %p122
    %p124 = scmp.ne.s32.totalorder %s113, %s114
    %p125 = scmp.eq.s32.totalorder %s16, 0
    %p126 = por %p124, %p125
    %p127 = scmp.ne.s32.totalorder %s113, %s114
    %p128 = scmp.eq.s32.totalorder %s17, 1
    %p129 = por %p127, %p128
    %p131 = scmp.ne.s32.totalorder %s114, %s130
    %p132 = scmp.eq.s32.totalorder %s17, 0
    %p133 = por %p131, %p132
    %s134 = ssub.s32 %s11, %s18
    %p135 = scmp.eq.s32.totalorder %s134, 0
    %s137 = sadd.s32 %s136, 1
    %s138 = scalar_select %p135, %s136, %s137
    %p141 = pneg %p135
    %p142 = scmp.eq.s32.totalorder %s11, 1
    %p143 = por %p141, %p142
    %p144 = scmp.ne.s32.totalorder %s136, %s139
    %p145 = scmp.eq.s32.totalorder %s11, 0
    %p146 = por %p144, %p145
    %p147 = scmp.ne.s32.totalorder %s136, %s139
    %p148 = scmp.eq.s32.totalorder %s16, 1
    %p149 = por %p147, %p148
    %p150 = scmp.ne.s32.totalorder %s139, %s140
    %p151 = scmp.eq.s32.totalorder %s16, 0
    %p152 = por %p150, %p151
    %p153 = scmp.ne.s32.totalorder %s139, %s140
    %p154 = scmp.eq.s32.totalorder %s17, 1
    %p155 = por %p153, %p154
    %p157 = scmp.ne.s32.totalorder %s140, %s156
    %p158 = scmp.eq.s32.totalorder %s17, 0
    %p159 = por %p157, %p158
    %p160 = scmp.le.s32.totalorder 1, %s11
    %p161 = scmp.lt.s32.totalorder %s11, 3
    %p162 = pnand %p160, %p161
    %p163 = pneg %p162
    // Predicated region
    $region9: #{_lambda_.15} parent=5 // pred_check
      _
    $region10: #{_lambda_.15} parent=5 // pred_check_branch
      %165 = sbr.rel (%p162) target = $region12
    $region11: #{_lambda_.15} parent=5 // pred_region
      %s166 = ssub.s32 %s11, 1
      // Predicated region
      $region13: #{_lambda_.15} parent=11 // pred_check
        %p167 = pneg %p58
      $region14: #{_lambda_.15} parent=11 // pred_check_branch
        %169 = sbr.rel (%p167) target = $region16
      $region15: #{_lambda_.15} parent=11 // pred_region
        _
      $region16: #{_lambda_.15} parent=11 // pred_fallthru
        _
      // Predicated region
      $region17: #{_lambda_.15} parent=11 // pred_check
        %p170 = pneg %p79
      $region18: #{_lambda_.15} parent=11 // pred_check_branch
        %172 = sbr.rel (%p170) target = $region20
      $region19: #{_lambda_.15} parent=11 // pred_region
        _
      $region20: #{_lambda_.15} parent=11 // pred_fallthru
        _
      // Predicated region
      $region21: #{_lambda_.15} parent=11 // pred_check
        %p173 = pneg %p100
      $region22: #{_lambda_.15} parent=11 // pred_check_branch
        %175 = sbr.rel (%p173) target = $region24
      $region23: #{_lambda_.15} parent=11 // pred_region
        _
      $region24: #{_lambda_.15} parent=11 // pred_fallthru
        _
    $region12: #{_lambda_.15} parent=5 // pred_fallthru
      _
    %p176 = scmp.lt.s32.totalorder %s11, 2
    // Predicated region
    $region25: #{_lambda_.15} parent=5 // pred_check
      %p177 = pneg %p176
    $region26: #{_lambda_.15} parent=5 // pred_check_branch
      %179 = sbr.rel (%p177) target = $region28
    $region27: #{_lambda_.15} parent=5 // pred_region
      // Predicated region
      $region29: #{_lambda_.15} parent=27 // pred_check
        %p180 = pneg %p31
      $region30: #{_lambda_.15} parent=27 // pred_check_branch
        %182 = sbr.rel (%p180) target = $region32
      $region31: #{_lambda_.15} parent=27 // pred_region
        %p183 = scmp.lt.s32.totalorder %s11, 1
        %s184 = scalar_select %p183, %s11, 1
        %s185 = smul.addr %s184, 18
        %s186 = smul.addr %s185, 4
        %s187 = scalar_lea.vmem %s0, %s186
      $region32: #{_lambda_.15} parent=27 // pred_fallthru
        _
      // Predicated region
      $region33: #{_lambda_.15} parent=27 // pred_check
        %p188 = pneg %p120
      $region34: #{_lambda_.15} parent=27 // pred_check_branch
        %190 = sbr.rel (%p188) target = $region36
      $region35: #{_lambda_.15} parent=27 // pred_region
        %p191 = scmp.lt.s32.totalorder %s11, 1
        %s192 = scalar_select %p191, %s11, 1
        %s193 = smul.addr %s192, 2
        %s194 = smul.addr %s193, 8
        %s195 = scalar_lea.vmem %s4, %s194
      $region36: #{_lambda_.15} parent=27 // pred_fallthru
        _
    $region28: #{_lambda_.15} parent=5 // pred_fallthru
      _
    %p196 = scmp.le.s32.totalorder 1, %s11
    %p197 = scmp.lt.s32.totalorder %s11, 3
    %p198 = pnand %p196, %p197
    %p199 = pneg %p198
    // Predicated region
    $region37: #{_lambda_.15} parent=5 // pred_check
      _
    $region38: #{_lambda_.15} parent=5 // pred_check_branch
      %201 = sbr.rel (%p198) target = $region40
    $region39: #{_lambda_.15} parent=5 // pred_region
      %s202 = ssub.s32 %s11, 1
      %p203 = scmp.lt.s32.totalorder %s16, 1
      %s204 = scalar_select %p203, %s16, 1
      %s205 = smul.addr %s204, 18
      %s206 = smul.addr %s205, 4
      %s207 = scalar_lea.vmem %s0, %s206
      %p208 = pneg %p37
      %p209 = pneg %p34
      %p210 = pneg %p58
      %p211 = pneg %p55
      %p212 = pneg %p79
      %p213 = pneg %p76
      %p214 = pneg %p100
      %p215 = pneg %p97
      %p216 = scmp.lt.s32.totalorder %s16, 1
      %s217 = scalar_select %p216, %s16, 1
      %s218 = smul.addr %s217, 2
      %s219 = smul.addr %s218, 8
      %s220 = scalar_lea.vmem %s4, %s219
      %p221 = pneg %p126
      %p222 = pneg %p123
      %p223 = pneg %p152
      %p224 = pneg %p149
      %p225 = scmp.lt.s32.totalorder %s16, 1
      %s226 = scalar_select %p225, %s16, 1
      %s227 = smul.addr %s226, 2
      %s228 = smul.addr %s227, 8
      %s229 = scalar_lea.vmem %s5, %s228
      %p230 = scmp.lt.s32.totalorder %s16, 1
      %s231 = scalar_select %p230, %s16, 1
      %s232 = smul.addr %s231, 18
      %s233 = smul.addr %s232, 4
      %s234 = scalar_lea.vmem %s0, %s233
      %p235 = scmp.lt.s32.totalorder %s16, 1
      %s236 = scalar_select %p235, %s16, 1
      %s237 = smul.addr %s236, 2
      %s238 = smul.addr %s237, 8
      %s239 = scalar_lea.vmem %s4, %s238
      %p240 = scmp.lt.s32.totalorder %s16, 1
      %s241 = scalar_select %p240, %s16, 1
      %s242 = smul.addr %s241, 2
      %s243 = smul.addr %s242, 8
      %s244 = scalar_lea.vmem %s5, %s243
      %v246 = vld [vmem:[%s1] sm:$0xf]
      %v247 = vld [vmem:[%s234] sm:$0xff]
      %v248 = vld [vmem:[%s234 + $0x8] sm:$0xff]
      %v249 = vld [vmem:[%s234 + $0x10] sm:$0xff]
      %v250 = vld [vmem:[%s234 + $0x18] sm:$0xff]
      %v251 = vld [vmem:[%s234 + $0x20] sm:$0xff]
      %v252 = vld [vmem:[%s234 + $0x28] sm:$0xff]
      %v253 = vld [vmem:[%s234 + $0x30] sm:$0xff]
      %v254 = vld [vmem:[%s234 + $0x38] sm:$0xff]
      %v255 = vld [vmem:[%s234 + $0x40] sm:$0xff]
      %v265 = vunpack.c.l.b16 %v247
      %v266 = vunpack.c.h.b16 %v247
      %v267 = vunpack.c.l.b16 %v248
      %v268 = vunpack.c.h.b16 %v248
      %v269 = vunpack.c.l.b16 %v249
      %v270 = vunpack.c.h.b16 %v249
      %v271 = vunpack.c.l.b16 %v250
      %v272 = vunpack.c.h.b16 %v250
      %v273 = vunpack.c.l.b16 %v251
      %v274 = vunpack.c.h.b16 %v251
      %v275 = vunpack.c.l.b16 %v252
      %v276 = vunpack.c.h.b16 %v252
      %v277 = vunpack.c.l.b16 %v253
      %v278 = vunpack.c.h.b16 %v253
      %v279 = vunpack.c.l.b16 %v254
      %v280 = vunpack.c.h.b16 %v254
      %v281 = vunpack.c.l.b16 %v255
      %v282 = vunpack.c.h.b16 %v255
      %v283 = vpack.c.b16 %v267, %v265
      %v284 = vpack.c.b16 %v268, %v266
      %v285 = vpack.c.b16 %v271, %v269
      %v286 = vpack.c.b16 %v272, %v270
      %v287 = vpack.c.b16 %v275, %v273
      %v288 = vpack.c.b16 %v276, %v274
      %v289 = vpack.c.b16 %v279, %v277
      %v290 = vpack.c.b16 %v280, %v278
      %v291 = vpack.c.b16 %v281, %v281
      %v292 = vpack.c.b16 %v282, %v282
      %vm301 = vcmask 588800
      %v303 = vsel %vm301, %v246, 0
      %vm305 = vcmask 1043456
      %v307 = vsel %vm305, %v291, 0
      %v310 = vsel %vm305, %v292, 0
      %312 = vmatprep.subr.bf16.mxu0 0
      %313 = vmatpush1.bf16.msra.mxu0 0
      %314 = vmatprep.subr.bf16.mxu0 0
      %315 = vmatpush1.bf16.msra.mxu0 0
      %316 = vmatprep.subr.bf16.mxu0 0
      %317 = vmatpush1.bf16.msra.mxu0 0
      %318 = vmatprep.subr.bf16.mxu0 %v310
      %319 = vmatpush1.bf16.msra.mxu0 %v307
      %320 = vmatprep.subr.bf16.mxu0 %v290
      %321 = vmatpush1.bf16.msra.mxu0 %v289
      %322 = vmatprep.subr.bf16.mxu0 %v288
      %323 = vmatpush1.bf16.msra.mxu0 %v287
      %324 = vmatprep.subr.bf16.mxu0 %v286
      %325 = vmatpush1.bf16.msra.mxu0 %v285
      %326 = vmatprep.subr.bf16.mxu0 %v284
      %327 = vmatpush1.bf16.msra.mxu0 %v283
      %328 = vmatprep.subr.bf16.mxu0 0
      %329 = vmatpush2.bf16.msra.mxu0 0
      %330 = vmatprep.subr.bf16.mxu0 0
      %331 = vmatpush2.bf16.msra.mxu0 0
      %332 = vmatprep.subr.bf16.mxu0 0
      %333 = vmatpush2.bf16.msra.mxu0 0
      %334 = vmatprep.subr.bf16.mxu0 0
      %335 = vmatpush2.bf16.msra.mxu0 0
      %336 = vmatprep.subr.bf16.mxu0 0
      %337 = vmatpush2.bf16.msra.mxu0 0
      %338 = vmatprep.subr.bf16.mxu0 0
      %339 = vmatpush2.bf16.msra.mxu0 0
      %340 = vmatprep.subr.bf16.mxu0 0
      %341 = vmatpush2.bf16.msra.mxu0 0
      %342 = vmatprep.subr.bf16.mxu0 0
      %343 = vmatpush2.bf16.msra.mxu0 0
      %344 = vmatprep.mubr.bf16.mxu0 0
      %345 = vmatmul.mubr.bf16.gmra.mxu0 %v303
      %v346 = vpop.f32.mrf.mxu0
      %v347 = vadd.f32 0.0, %v346
      %v348 = vpop.f32.mrf.mxu0
      %v349 = vadd.f32 0.0, %v348
      %v350 = vpop.f32.mrf.mxu0
      %v351 = vpop.f32.mrf.mxu0
      %352 = vdwg.mxu0
      %v353 = vld [vmem:[%s2] sm:$0xff]
      %v354 = vld [vmem:[%s3] sm:$0xff]
      %v355 = vadd.f32 %v347, %v349
      %356 = vadd.xlane.f32.xlu0 %v355
      %v357 = vpop.xlane.xlu0 %356
      %v358 = vrcp.pop 256.0
      %v359 = vmul.f32 %v357, %v358
      %v360 = vsub.f32 %v347, %v359
      %v361 = vsub.f32 %v349, %v359
      %v362 = vmul.f32 %v360, %v360
      %v363 = vmul.f32 %v361, %v361
      %v364 = vadd.f32 %v362, %v363
      %365 = vadd.xlane.f32.xlu0 %v364
      %v366 = vpop.xlane.xlu0 %365
      %v367 = vmul.f32 %v366, %v358
      %v368 = vadd.f32 %v367, 1e-05
      %v369 = vrsqrt.pop %v368
      %v370 = vmul.f32 %v360, %v369
      %v371 = vmul.f32 %v361, %v369
      %373 = vset.pattern.permute.xlu0 0
      %374 = vperm.xlu0 %373, %v353
      %v375 = vpop.permute.xlu0 %374
      %v377 = vmul.f32 %v370, %v375
      %v378 = vmul.f32 %v371, %v375
      %380 = vset.pattern.permute.xlu0 0
      %381 = vperm.xlu0 %380, %v354
      %v382 = vpop.permute.xlu0 %381
      %v384 = vadd.f32 %v377, %v382
      %v385 = vadd.f32 %v378, %v382
      %v386 = vld [vmem:[%s239] sm:$0xff]
      %v387 = vld [vmem:[%s239 + $0x8] sm:$0xff]
      %v388 = vadd.f32 %v384, %v386
      %v389 = vadd.f32 %v385, %v387
      %vm390 = vcmp.ge.f32.partialorder %v388, 0.0
      %vm391 = vcmp.ge.f32.partialorder %v389, 0.0
      %v392 = vmul.f32 %v388, 0.01
      %v393 = vmul.f32 %v389, 0.01
      %v394 = vsel %vm390, %v388, %v392
      %v395 = vsel %vm391, %v389, %v393
      %396 = vst [vmem:[%s244] sm:$0xff] %v394
      %397 = vst [vmem:[%s244 + $0x8] sm:$0xff] %v395
      %p398 = scmp.lt.s32.totalorder %s16, 1
      %s399 = scalar_select %p398, %s16, 1
      %s400 = smul.addr %s399, 2
      %s401 = smul.addr %s400, 8
      %s402 = scalar_lea.vmem %s5, %s401
      // Predicated region
      $region41: #{_lambda_.15} parent=39 // pred_check
        %p403 = pneg %p149
      $region42: #{_lambda_.15} parent=39 // pred_check_branch
        %405 = sbr.rel (%p403) target = $region44
      $region43: #{_lambda_.15} parent=39 // pred_region
        _
      $region44: #{_lambda_.15} parent=39 // pred_fallthru
        _
    $region40: #{_lambda_.15} parent=5 // pred_fallthru
      _
    %p406 = scmp.le.s32.totalorder 2, %s11
    // Predicated region
    $region45: #{_lambda_.15} parent=5 // pred_check
      %p407 = pneg %p406
    $region46: #{_lambda_.15} parent=5 // pred_check_branch
      %409 = sbr.rel (%p407) target = $region48
    $region47: #{_lambda_.15} parent=5 // pred_region
      %s410 = ssub.s32 %s11, 2
      // Predicated region
      $region49: #{_lambda_.15} parent=47 // pred_check
        %p411 = pneg %p155
      $region50: #{_lambda_.15} parent=47 // pred_check_branch
        %413 = sbr.rel (%p411) target = $region52
      $region51: #{_lambda_.15} parent=47 // pred_region
        %p414 = scmp.lt.s32.totalorder %s17, 1
        %s415 = scalar_select %p414, %s17, 1
        %s416 = smul.addr %s415, 2
        %s417 = smul.addr %s416, 8
        %s418 = scalar_lea.vmem %s5, %s417
      $region52: #{_lambda_.15} parent=47 // pred_fallthru
        _
    $region48: #{_lambda_.15} parent=5 // pred_fallthru
      _
  $region6: #{_lambda_.15} parent=0 // loop_footer
    %s15 = sadd.s32 1, %s11
  $region7: #{_lambda_.15} parent=0 // loop_footer_branch
    %10 = sbr.rel target = $region3
  $region8: #{_lambda_.15} parent=0 // loop_exit
    _

// kernel: _lambda_.17
$region0: #{_lambda_.17}
  #allocation0 [shape = 'u32[]', space=smem, size = 0x4, offset = 0x4, fixed_abs, tag = 'smem constant byte address 0x4 - core index']
  #allocation1 [shape = 'u32[144,128]{1,0:T(1,128)}', space=vmem, size = 0x12000, scoped, tag = 'internal scratch']
  %s0 = inlined_call_operand.vmem [shape: f32[2,8,64], index: 0, kind: input, shape index: {}]
  %s1 = inlined_call_operand.vmem [shape: f32[2,8,64], index: 1, kind: input, shape index: {}]
  %s2 = inlined_call_operand.vmem [shape: f32[2,8,64], index: 2, kind: input, shape index: {}]
  %s3 = inlined_call_operand.vmem [shape: f32[2,8,64], index: 3, kind: input, shape index: {}]
  %s4 = inlined_call_operand.vmem [shape: bf16[16,8], index: 4, kind: input, shape index: {}]
  %s5 = inlined_call_operand.vmem [shape: f32[16,1], index: 5, kind: input, shape index: {}]
  %s6 = inlined_call_operand.vmem [shape: f32[16,1], index: 6, kind: input, shape index: {}]
  %s7 = inlined_call_operand.vmem [shape: f32[2,16,64], index: 7, kind: output, shape index: {}]
  %s8 = sld [smem:[#allocation0]]
  $region61: #{_lambda_.17} parent=0
    _
  %s10 = ssub.s32 1, %s8
  %s11 = scalar_select 0, %s10, %s8
  loop: start=0, step=1, limit=4
  $region2: #{_lambda_.17} parent=0 // loop_pre_header
    _
  $region3: #{_lambda_.17} parent=0 // loop_header
    %s13 = sphi 0, %s17
    %p14 = scmp.ge.s32.totalorder %s13, 4
    %s23 = sphi 0, %s25
    %s26 = sphi 0, %s23
    %s27 = sphi 0, %s26
    %s43 = sphi 0, %s27
    %s49 = sphi 0, %s51
    %s52 = sphi 0, %s49
    %s53 = sphi 0, %s52
    %s69 = sphi 0, %s53
    %s75 = sphi 0, %s77
    %s78 = sphi 0, %s75
    %s79 = sphi 0, %s78
    %s95 = sphi 0, %s79
    %s101 = sphi 0, %s103
    %s104 = sphi 0, %s101
    %s105 = sphi 0, %s104
    %s121 = sphi 0, %s105
    %s125 = sphi 0, %s125
    %s127 = sphi 0, %s125
    %s128 = sphi 0, %s127
    %s142 = sphi 0, %s128
    %s146 = sphi 0, %s146
    %s148 = sphi 0, %s146
    %s149 = sphi 0, %s148
    %s163 = sphi 0, %s149
    %s167 = sphi 0, %s167
    %s169 = sphi 0, %s167
    %s170 = sphi 0, %s169
    %s184 = sphi 0, %s170
    %s190 = sphi 0, %s192
    %s193 = sphi 0, %s190
    %s194 = sphi 0, %s193
    %s210 = sphi 0, %s194
  $region4: #{_lambda_.17} parent=0 // loop_header_branch
    %16 = sbr.rel (%p14) target = $region8
  $region5: #{_lambda_.17} parent=0 // loop_body
    %s18 = ssub.s32 %s13, 1
    %s19 = ssub.s32 %s13, 2
    %s20 = sadd.s32 %s13, 1
    %s21 = ssub.s32 %s13, %s20
    %p22 = scmp.eq.s32.totalorder %s21, 0
    %s24 = sadd.s32 %s23, 1
    %s25 = scalar_select %p22, %s23, %s24
    %p28 = pneg %p22
    %p29 = scmp.eq.s32.totalorder %s13, 1
    %p30 = por %p28, %p29
    %p31 = scmp.ne.s32.totalorder %s23, %s26
    %p32 = scmp.eq.s32.totalorder %s13, 0
    %p33 = por %p31, %p32
    %p34 = scmp.ne.s32.totalorder %s23, %s26
    %p35 = scmp.eq.s32.totalorder %s18, 1
    %p36 = por %p34, %p35
    %p37 = scmp.ne.s32.totalorder %s26, %s27
    %p38 = scmp.eq.s32.totalorder %s18, 0
    %p39 = por %p37, %p38
    %p40 = scmp.ne.s32.totalorder %s26, %s27
    %p41 = scmp.eq.s32.totalorder %s19, 1
    %p42 = por %p40, %p41
    %p44 = scmp.ne.s32.totalorder %s27, %s43
    %p45 = scmp.eq.s32.totalorder %s19, 0
    %p46 = por %p44, %p45
    %s47 = ssub.s32 %s13, %s20
    %p48 = scmp.eq.s32.totalorder %s47, 0
    %s50 = sadd.s32 %s49, 1
    %s51 = scalar_select %p48, %s49, %s50
    %p54 = pneg %p48
    %p55 = scmp.eq.s32.totalorder %s13, 1
    %p56 = por %p54, %p55
    %p57 = scmp.ne.s32.totalorder %s49, %s52
    %p58 = scmp.eq.s32.totalorder %s13, 0
    %p59 = por %p57, %p58
    %p60 = scmp.ne.s32.totalorder %s49, %s52
    %p61 = scmp.eq.s32.totalorder %s18, 1
    %p62 = por %p60, %p61
    %p63 = scmp.ne.s32.totalorder %s52, %s53
    %p64 = scmp.eq.s32.totalorder %s18, 0
    %p65 = por %p63, %p64
    %p66 = scmp.ne.s32.totalorder %s52, %s53
    %p67 = scmp.eq.s32.totalorder %s19, 1
    %p68 = por %p66, %p67
    %p70 = scmp.ne.s32.totalorder %s53, %s69
    %p71 = scmp.eq.s32.totalorder %s19, 0
    %p72 = por %p70, %p71
    %s73 = ssub.s32 %s13, %s20
    %p74 = scmp.eq.s32.totalorder %s73, 0
    %s76 = sadd.s32 %s75, 1
    %s77 = scalar_select %p74, %s75, %s76
    %p80 = pneg %p74
    %p81 = scmp.eq.s32.totalorder %s13, 1
    %p82 = por %p80, %p81
    %p83 = scmp.ne.s32.totalorder %s75, %s78
    %p84 = scmp.eq.s32.totalorder %s13, 0
    %p85 = por %p83, %p84
    %p86 = scmp.ne.s32.totalorder %s75, %s78
    %p87 = scmp.eq.s32.totalorder %s18, 1
    %p88 = por %p86, %p87
    %p89 = scmp.ne.s32.totalorder %s78, %s79
    %p90 = scmp.eq.s32.totalorder %s18, 0
    %p91 = por %p89, %p90
    %p92 = scmp.ne.s32.totalorder %s78, %s79
    %p93 = scmp.eq.s32.totalorder %s19, 1
    %p94 = por %p92, %p93
    %p96 = scmp.ne.s32.totalorder %s79, %s95
    %p97 = scmp.eq.s32.totalorder %s19, 0
    %p98 = por %p96, %p97
    %s99 = ssub.s32 %s13, %s20
    %p100 = scmp.eq.s32.totalorder %s99, 0
    %s102 = sadd.s32 %s101, 1
    %s103 = scalar_select %p100, %s101, %s102
    %p106 = pneg %p100
    %p107 = scmp.eq.s32.totalorder %s13, 1
    %p108 = por %p106, %p107
    %p109 = scmp.ne.s32.totalorder %s101, %s104
    %p110 = scmp.eq.s32.totalorder %s13, 0
    %p111 = por %p109, %p110
    %p112 = scmp.ne.s32.totalorder %s101, %s104
    %p113 = scmp.eq.s32.totalorder %s18, 1
    %p114 = por %p112, %p113
    %p115 = scmp.ne.s32.totalorder %s104, %s105
    %p116 = scmp.eq.s32.totalorder %s18, 0
    %p117 = por %p115, %p116
    %p118 = scmp.ne.s32.totalorder %s104, %s105
    %p119 = scmp.eq.s32.totalorder %s19, 1
    %p120 = por %p118, %p119
    %p122 = scmp.ne.s32.totalorder %s105, %s121
    %p123 = scmp.eq.s32.totalorder %s19, 0
    %p124 = por %p122, %p123
    %s126 = sadd.s32 %s125, 1
    %p129 = scmp.eq.s32.totalorder %s13, 1
    %p130 = scmp.ne.s32.totalorder %s125, %s127
    %p131 = scmp.eq.s32.totalorder %s13, 0
    %p132 = por %p130, %p131
    %p133 = scmp.ne.s32.totalorder %s125, %s127
    %p134 = scmp.eq.s32.totalorder %s18, 1
    %p135 = por %p133, %p134
    %p136 = scmp.ne.s32.totalorder %s127, %s128
    %p137 = scmp.eq.s32.totalorder %s18, 0
    %p138 = por %p136, %p137
    %p139 = scmp.ne.s32.totalorder %s127, %s128
    %p140 = scmp.eq.s32.totalorder %s19, 1
    %p141 = por %p139, %p140
    %p143 = scmp.ne.s32.totalorder %s128, %s142
    %p144 = scmp.eq.s32.totalorder %s19, 0
    %p145 = por %p143, %p144
    %s147 = sadd.s32 %s146, 1
    %p150 = scmp.eq.s32.totalorder %s13, 1
    %p151 = scmp.ne.s32.totalorder %s146, %s148
    %p152 = scmp.eq.s32.totalorder %s13, 0
    %p153 = por %p151, %p152
    %p154 = scmp.ne.s32.totalorder %s146, %s148
    %p155 = scmp.eq.s32.totalorder %s18, 1
    %p156 = por %p154, %p155
    %p157 = scmp.ne.s32.totalorder %s148, %s149
    %p158 = scmp.eq.s32.totalorder %s18, 0
    %p159 = por %p157, %p158
    %p160 = scmp.ne.s32.totalorder %s148, %s149
    %p161 = scmp.eq.s32.totalorder %s19, 1
    %p162 = por %p160, %p161
    %p164 = scmp.ne.s32.totalorder %s149, %s163
    %p165 = scmp.eq.s32.totalorder %s19, 0
    %p166 = por %p164, %p165
    %s168 = sadd.s32 %s167, 1
    %p171 = scmp.eq.s32.totalorder %s13, 1
    %p172 = scmp.ne.s32.totalorder %s167, %s169
    %p173 = scmp.eq.s32.totalorder %s13, 0
    %p174 = por %p172, %p173
    %p175 = scmp.ne.s32.totalorder %s167, %s169
    %p176 = scmp.eq.s32.totalorder %s18, 1
    %p177 = por %p175, %p176
    %p178 = scmp.ne.s32.totalorder %s169, %s170
    %p179 = scmp.eq.s32.totalorder %s18, 0
    %p180 = por %p178, %p179
    %p181 = scmp.ne.s32.totalorder %s169, %s170
    %p182 = scmp.eq.s32.totalorder %s19, 1
    %p183 = por %p181, %p182
    %p185 = scmp.ne.s32.totalorder %s170, %s184
    %p186 = scmp.eq.s32.totalorder %s19, 0
    %p187 = por %p185, %p186
    %s188 = ssub.s32 %s13, %s20
    %p189 = scmp.eq.s32.totalorder %s188, 0
    %s191 = sadd.s32 %s190, 1
    %s192 = scalar_select %p189, %s190, %s191
    %p195 = pneg %p189
    %p196 = scmp.eq.s32.totalorder %s13, 1
    %p197 = por %p195, %p196
    %p198 = scmp.ne.s32.totalorder %s190, %s193
    %p199 = scmp.eq.s32.totalorder %s13, 0
    %p200 = por %p198, %p199
    %p201 = scmp.ne.s32.totalorder %s190, %s193
    %p202 = scmp.eq.s32.totalorder %s18, 1
    %p203 = por %p201, %p202
    %p204 = scmp.ne.s32.totalorder %s193, %s194
    %p205 = scmp.eq.s32.totalorder %s18, 0
    %p206 = por %p204, %p205
    %p207 = scmp.ne.s32.totalorder %s193, %s194
    %p208 = scmp.eq.s32.totalorder %s19, 1
    %p209 = por %p207, %p208
    %p211 = scmp.ne.s32.totalorder %s194, %s210
    %p212 = scmp.eq.s32.totalorder %s19, 0
    %p213 = por %p211, %p212
    %p214 = scmp.le.s32.totalorder 1, %s13
    %p215 = scmp.lt.s32.totalorder %s13, 3
    %p216 = pnand %p214, %p215
    %p217 = pneg %p216
    // Predicated region
    $region9: #{_lambda_.17} parent=5 // pred_check
      _
    $region10: #{_lambda_.17} parent=5 // pred_check_branch
      %219 = sbr.rel (%p216) target = $region12
    $region11: #{_lambda_.17} parent=5 // pred_region
      %s220 = ssub.s32 %s13, 1
      // Predicated region
      $region13: #{_lambda_.17} parent=11 // pred_check
        %p221 = pneg %p138
      $region14: #{_lambda_.17} parent=11 // pred_check_branch
        %223 = sbr.rel (%p221) target = $region16
      $region15: #{_lambda_.17} parent=11 // pred_region
        _
      $region16: #{_lambda_.17} parent=11 // pred_fallthru
        _
      // Predicated region
      $region17: #{_lambda_.17} parent=11 // pred_check
        %p224 = pneg %p159
      $region18: #{_lambda_.17} parent=11 // pred_check_branch
        %226 = sbr.rel (%p224) target = $region20
      $region19: #{_lambda_.17} parent=11 // pred_region
        _
      $region20: #{_lambda_.17} parent=11 // pred_fallthru
        _
      // Predicated region
      $region21: #{_lambda_.17} parent=11 // pred_check
        %p227 = pneg %p180
      $region22: #{_lambda_.17} parent=11 // pred_check_branch
        %229 = sbr.rel (%p227) target = $region24
      $region23: #{_lambda_.17} parent=11 // pred_region
        _
      $region24: #{_lambda_.17} parent=11 // pred_fallthru
        _
    $region12: #{_lambda_.17} parent=5 // pred_fallthru
      _
    %p230 = scmp.lt.s32.totalorder %s13, 2
    // Predicated region
    $region25: #{_lambda_.17} parent=5 // pred_check
      %p231 = pneg %p230
    $region26: #{_lambda_.17} parent=5 // pred_check_branch
      %233 = sbr.rel (%p231) target = $region28
    $region27: #{_lambda_.17} parent=5 // pred_region
      // Predicated region
      $region29: #{_lambda_.17} parent=27 // pred_check
        %p234 = pneg %p33
      $region30: #{_lambda_.17} parent=27 // pred_check_branch
        %236 = sbr.rel (%p234) target = $region32
      $region31: #{_lambda_.17} parent=27 // pred_region
        %p237 = scmp.lt.s32.totalorder %s13, 1
        %s238 = scalar_select %p237, %s13, 1
        %s239 = smul.addr %s238, 8
        %s240 = scalar_lea.vmem %s0, %s239
      $region32: #{_lambda_.17} parent=27 // pred_fallthru
        _
      // Predicated region
      $region33: #{_lambda_.17} parent=27 // pred_check
        %p241 = pneg %p59
      $region34: #{_lambda_.17} parent=27 // pred_check_branch
        %243 = sbr.rel (%p241) target = $region36
      $region35: #{_lambda_.17} parent=27 // pred_region
        %p244 = scmp.lt.s32.totalorder %s13, 1
        %s245 = scalar_select %p244, %s13, 1
        %s246 = smul.addr %s245, 8
        %s247 = scalar_lea.vmem %s1, %s246
      $region36: #{_lambda_.17} parent=27 // pred_fallthru
        _
      // Predicated region
      $region37: #{_lambda_.17} parent=27 // pred_check
        %p248 = pneg %p85
      $region38: #{_lambda_.17} parent=27 // pred_check_branch
        %250 = sbr.rel (%p248) target = $region40
      $region39: #{_lambda_.17} parent=27 // pred_region
        %p251 = scmp.lt.s32.totalorder %s13, 1
        %s252 = scalar_select %p251, %s13, 1
        %s253 = smul.addr %s252, 8
        %s254 = scalar_lea.vmem %s2, %s253
      $region40: #{_lambda_.17} parent=27 // pred_fallthru
        _
      // Predicated region
      $region41: #{_lambda_.17} parent=27 // pred_check
        %p255 = pneg %p111
      $region42: #{_lambda_.17} parent=27 // pred_check_branch
        %257 = sbr.rel (%p255) target = $region44
      $region43: #{_lambda_.17} parent=27 // pred_region
        %p258 = scmp.lt.s32.totalorder %s13, 1
        %s259 = scalar_select %p258, %s13, 1
        %s260 = smul.addr %s259, 8
        %s261 = scalar_lea.vmem %s3, %s260
      $region44: #{_lambda_.17} parent=27 // pred_fallthru
        _
    $region28: #{_lambda_.17} parent=5 // pred_fallthru
      _
    %p262 = scmp.le.s32.totalorder 1, %s13
    %p263 = scmp.lt.s32.totalorder %s13, 3
    %p264 = pnand %p262, %p263
    %p265 = pneg %p264
    // Predicated region
    $region45: #{_lambda_.17} parent=5 // pred_check
      _
    $region46: #{_lambda_.17} parent=5 // pred_check_branch
      %267 = sbr.rel (%p264) target = $region48
    $region47: #{_lambda_.17} parent=5 // pred_region
      %s268 = ssub.s32 %s13, 1
      %p269 = scmp.lt.s32.totalorder %s18, 1
      %s270 = scalar_select %p269, %s18, 1
      %s271 = smul.addr %s270, 8
      %s272 = scalar_lea.vmem %s0, %s271
      %p273 = pneg %p39
      %p274 = pneg %p36
      %p275 = scmp.lt.s32.totalorder %s18, 1
      %s276 = scalar_select %p275, %s18, 1
      %s277 = smul.addr %s276, 8
      %s278 = scalar_lea.vmem %s1, %s277
      %p279 = pneg %p65
      %p280 = pneg %p62
      %p281 = scmp.lt.s32.totalorder %s18, 1
      %s282 = scalar_select %p281, %s18, 1
      %s283 = smul.addr %s282, 8
      %s284 = scalar_lea.vmem %s2, %s283
      %p285 = pneg %p91
      %p286 = pneg %p88
      %p287 = scmp.lt.s32.totalorder %s18, 1
      %s288 = scalar_select %p287, %s18, 1
      %s289 = smul.addr %s288, 8
      %s290 = scalar_lea.vmem %s3, %s289
      %p291 = pneg %p117
      %p292 = pneg %p114
      %p293 = pneg %p138
      %p294 = pneg %p135
      %p295 = pneg %p159
      %p296 = pneg %p156
      %p297 = pneg %p180
      %p298 = pneg %p177
      %p299 = pneg %p206
      %p300 = pneg %p203
      %p301 = scmp.lt.s32.totalorder %s18, 1
      %s302 = scalar_select %p301, %s18, 1
      %s303 = smul.addr %s302, 2
      %s304 = smul.addr %s303, 8
      %s305 = scalar_lea.vmem %s7, %s304
      %p306 = scmp.lt.s32.totalorder %s18, 1
      %s307 = scalar_select %p306, %s18, 1
      %s308 = smul.addr %s307, 8
      %s309 = scalar_lea.vmem %s0, %s308
      %p310 = scmp.lt.s32.totalorder %s18, 1
      %s311 = scalar_select %p310, %s18, 1
      %s312 = smul.addr %s311, 8
      %s313 = scalar_lea.vmem %s1, %s312
      %p314 = scmp.lt.s32.totalorder %s18, 1
      %s315 = scalar_select %p314, %s18, 1
      %s316 = smul.addr %s315, 8
      %s317 = scalar_lea.vmem %s2, %s316
      %p318 = scmp.lt.s32.totalorder %s18, 1
      %s319 = scalar_select %p318, %s18, 1
      %s320 = smul.addr %s319, 8
      %s321 = scalar_lea.vmem %s3, %s320
      %p322 = scmp.lt.s32.totalorder %s18, 1
      %s323 = scalar_select %p322, %s18, 1
      %s324 = smul.addr %s323, 2
      %s325 = smul.addr %s324, 8
      %s326 = scalar_lea.vmem %s7, %s325
      %v328 = vld [vmem:[%s309] sm:$0xff]
      %v329 = vld [vmem:[%s313] sm:$0xff]
      %v330 = vadd.f32 %v328, %v329
      %v331 = vld [vmem:[%s317] sm:$0xff]
      %v332 = vadd.f32 %v330, %v331
      %v333 = vld [vmem:[%s321] sm:$0xff]
      %v334 = vadd.f32 %v332, %v333
      %v335 = vmul.f32 %v334, 0.25
      %v336 = vpack.c.bf16 %v335, %v335
      %v337 = vld [vmem:[%s4] sm:$0xf]
      %v338 = vld [vmem:[%s4 + $0x4] sm:$0xf]
      %v341 = vunpack.c.l.b16 %v337
      %v342 = vunpack.c.l.b16 %v338
      %v343 = vpack.c.b16 %v342, %v341
      %vm344 = vcmask 64512
      %v346 = vsel %vm344, %v343, 0
      %vm348 = vcmask 1043456
      %v350 = vsel %vm348, %v336, 0
      %352 = vmatprep.subr.bf16.mxu0 0
      %353 = vmatpush1.bf16.msra.mxu0 0
      %354 = vmatprep.subr.bf16.mxu0 0
      %355 = vmatpush1.bf16.msra.mxu0 0
      %356 = vmatprep.subr.bf16.mxu0 0
      %357 = vmatpush1.bf16.msra.mxu0 0
      %358 = vmatprep.subr.bf16.mxu0 0
      %359 = vmatpush1.bf16.msra.mxu0 0
      %360 = vmatprep.subr.bf16.mxu0 0
      %361 = vmatpush1.bf16.msra.mxu0 0
      %362 = vmatprep.subr.bf16.mxu0 0
      %363 = vmatpush1.bf16.msra.mxu0 0
      %364 = vmatprep.subr.bf16.mxu0 0
      %365 = vmatpush1.bf16.msra.mxu0 0
      %366 = vmatprep.subr.bf16.mxu0 0
      %367 = vmatpush1.bf16.msra.mxu0 %v350
      %368 = vmatprep.subr.bf16.mxu0 0
      %369 = vmatpush2.bf16.msra.mxu0 0
      %370 = vmatprep.subr.bf16.mxu0 0
      %371 = vmatpush2.bf16.msra.mxu0 0
      %372 = vmatprep.subr.bf16.mxu0 0
      %373 = vmatpush2.bf16.msra.mxu0 0
      %374 = vmatprep.subr.bf16.mxu0 0
      %375 = vmatpush2.bf16.msra.mxu0 0
      %376 = vmatprep.subr.bf16.mxu0 0
      %377 = vmatpush2.bf16.msra.mxu0 0
      %378 = vmatprep.subr.bf16.mxu0 0
      %379 = vmatpush2.bf16.msra.mxu0 0
      %380 = vmatprep.subr.bf16.mxu0 0
      %381 = vmatpush2.bf16.msra.mxu0 0
      %382 = vmatprep.subr.bf16.mxu0 0
      %383 = vmatpush2.bf16.msra.mxu0 0
      %384 = vmatprep.mubr.bf16.mxu0 0
      %385 = vmatmul.mubr.bf16.gmra.mxu0 %v346
      %v386 = vpop.f32.mrf.mxu0
      %v387 = vadd.f32 0.0, %v386
      %v388 = vpop.f32.mrf.mxu0
      %v389 = vpop.f32.mrf.mxu0
      %v390 = vadd.f32 0.0, %v389
      %v391 = vpop.f32.mrf.mxu0
      %392 = vdwg.mxu0
      %v393 = vld [vmem:[%s5] sm:$0xff]
      %v394 = vld [vmem:[%s5 + $0x8] sm:$0xff]
      %v395 = vld [vmem:[%s6] sm:$0xff]
      %v396 = vld [vmem:[%s6 + $0x8] sm:$0xff]
      %vm397 = vcmask 523264
      %v398 = vsel %vm397, %v387, 0.0
      %399 = vadd.xlane.f32.xlu0 %v398
      %v400 = vpop.xlane.xlu0 %399
      %v401 = vsel %vm397, %v390, 0.0
      %402 = vadd.xlane.f32.xlu0 %v401
      %v403 = vpop.xlane.xlu0 %402
      %v404 = vrcp.pop 64.0
      %v405 = vmul.f32 %v400, %v404
      %v406 = vmul.f32 %v403, %v404
      %v407 = vsub.f32 %v387, %v405
      %v408 = vsub.f32 %v390, %v406
      %v409 = vmul.f32 %v407, %v407
      %v410 = vmul.f32 %v408, %v408
      %v411 = vsel %vm397, %v409, 0.0
      %412 = vadd.xlane.f32.xlu0 %v411
      %v413 = vpop.xlane.xlu0 %412
      %v414 = vsel %vm397, %v410, 0.0
      %415 = vadd.xlane.f32.xlu0 %v414
      %v416 = vpop.xlane.xlu0 %415
      %v417 = vmul.f32 %v413, %v404
      %v418 = vmul.f32 %v416, %v404
      %v419 = vadd.f32 %v417, 1e-05
      %v420 = vadd.f32 %v418, 1e-05
      %v421 = vrsqrt.pop %v419
      %v422 = vrsqrt.pop %v420
      %v423 = vmul.f32 %v407, %v421
      %v424 = vmul.f32 %v408, %v422
      %426 = vset.pattern.permute.xlu0 0
      %427 = vperm.xlu0 %426, %v393
      %v428 = vpop.permute.xlu0 %427
      %431 = vset.pattern.permute.xlu0 0
      %432 = vperm.xlu0 %431, %v394
      %v433 = vpop.permute.xlu0 %432
      %v435 = vmul.f32 %v423, %v428
      %v436 = vmul.f32 %v424, %v433
      %438 = vset.pattern.permute.xlu0 0
      %439 = vperm.xlu0 %438, %v395
      %v440 = vpop.permute.xlu0 %439
      %443 = vset.pattern.permute.xlu0 0
      %444 = vperm.xlu0 %443, %v396
      %v445 = vpop.permute.xlu0 %444
      %v447 = vadd.f32 %v435, %v440
      %v448 = vadd.f32 %v436, %v445
      %449 = vst.msk [vmem:[%s326] sm:$0xff] %vm397, %v447
      %450 = vst.msk [vmem:[%s326 + $0x8] sm:$0xff] %vm397, %v448
      %p451 = scmp.lt.s32.totalorder %s18, 1
      %s452 = scalar_select %p451, %s18, 1
      %s453 = smul.addr %s452, 2
      %s454 = smul.addr %s453, 8
      %s455 = scalar_lea.vmem %s7, %s454
      // Predicated region
      $region49: #{_lambda_.17} parent=47 // pred_check
        %p456 = pneg %p203
      $region50: #{_lambda_.17} parent=47 // pred_check_branch
        %458 = sbr.rel (%p456) target = $region52
      $region51: #{_lambda_.17} parent=47 // pred_region
        _
      $region52: #{_lambda_.17} parent=47 // pred_fallthru
        _
    $region48: #{_lambda_.17} parent=5 // pred_fallthru
      _
    %p459 = scmp.le.s32.totalorder 2, %s13
    // Predicated region
    $region53: #{_lambda_.17} parent=5 // pred_check
      %p460 = pneg %p459
    $region54: #{_lambda_.17} parent=5 // pred_check_branch
      %462 = sbr.rel (%p460) target = $region56
    $region55: #{_lambda_.17} parent=5 // pred_region
      %s463 = ssub.s32 %s13, 2
      // Predicated region
      $region57: #{_lambda_.17} parent=55 // pred_check
        %p464 = pneg %p209
      $region58: #{_lambda_.17} parent=55 // pred_check_branch
        %466 = sbr.rel (%p464) target = $region60
      $region59: #{_lambda_.17} parent=55 // pred_region
        %p467 = scmp.lt.s32.totalorder %s19, 1
        %s468 = scalar_select %p467, %s19, 1
        %s469 = smul.addr %s468, 2
        %s470 = smul.addr %s469, 8
        %s471 = scalar_lea.vmem %s7, %s470
      $region60: #{_lambda_.17} parent=55 // pred_fallthru
        _
    $region56: #{_lambda_.17} parent=5 // pred_fallthru
      _
  $region6: #{_lambda_.17} parent=0 // loop_footer
    %s17 = sadd.s32 1, %s13
  $region7: #{_lambda_.17} parent=0 // loop_footer_branch
    %12 = sbr.rel target = $region3
  $region8: #{_lambda_.17} parent=0 // loop_exit
    _

// kernel: _lambda_.16
$region0: #{_lambda_.16}
  #allocation0 [shape = 'u32[]', space=smem, size = 0x4, offset = 0x4, fixed_abs, tag = 'smem constant byte address 0x4 - core index']
  #allocation1 [shape = 'u32[144,128]{1,0:T(1,128)}', space=vmem, size = 0x12000, scoped, tag = 'internal scratch']
  %s0 = inlined_call_operand.vmem [shape: bf16[2,72,64], index: 0, kind: input, shape index: {}]
  %s1 = inlined_call_operand.vmem [shape: bf16[16,72], index: 1, kind: input, shape index: {}]
  %s2 = inlined_call_operand.vmem [shape: f32[16,1], index: 2, kind: input, shape index: {}]
  %s3 = inlined_call_operand.vmem [shape: f32[16,1], index: 3, kind: input, shape index: {}]
  %s4 = inlined_call_operand.vmem [shape: f32[2,16,64], index: 4, kind: output, shape index: {}]
  %s5 = sld [smem:[#allocation0]]
  $region49: #{_lambda_.16} parent=0
    _
  %s7 = ssub.s32 1, %s5
  %s8 = scalar_select 0, %s7, %s5
  loop: start=0, step=1, limit=4
  $region2: #{_lambda_.16} parent=0 // loop_pre_header
    _
  $region3: #{_lambda_.16} parent=0 // loop_header
    %s10 = sphi 0, %s14
    %p11 = scmp.ge.s32.totalorder %s10, 4
    %s20 = sphi 0, %s22
    %s23 = sphi 0, %s20
    %s24 = sphi 0, %s23
    %s40 = sphi 0, %s24
    %s44 = sphi 0, %s44
    %s46 = sphi 0, %s44
    %s47 = sphi 0, %s46
    %s61 = sphi 0, %s47
    %s65 = sphi 0, %s65
    %s67 = sphi 0, %s65
    %s68 = sphi 0, %s67
    %s82 = sphi 0, %s68
    %s86 = sphi 0, %s86
    %s88 = sphi 0, %s86
    %s89 = sphi 0, %s88
    %s103 = sphi 0, %s89
    %s109 = sphi 0, %s111
    %s112 = sphi 0, %s109
    %s113 = sphi 0, %s112
    %s129 = sphi 0, %s113
  $region4: #{_lambda_.16} parent=0 // loop_header_branch
    %13 = sbr.rel (%p11) target = $region8
  $region5: #{_lambda_.16} parent=0 // loop_body
    %s15 = ssub.s32 %s10, 1
    %s16 = ssub.s32 %s10, 2
    %s17 = sadd.s32 %s10, 1
    %s18 = ssub.s32 %s10, %s17
    %p19 = scmp.eq.s32.totalorder %s18, 0
    %s21 = sadd.s32 %s20, 1
    %s22 = scalar_select %p19, %s20, %s21
    %p25 = pneg %p19
    %p26 = scmp.eq.s32.totalorder %s10, 1
    %p27 = por %p25, %p26
    %p28 = scmp.ne.s32.totalorder %s20, %s23
    %p29 = scmp.eq.s32.totalorder %s10, 0
    %p30 = por %p28, %p29
    %p31 = scmp.ne.s32.totalorder %s20, %s23
    %p32 = scmp.eq.s32.totalorder %s15, 1
    %p33 = por %p31, %p32
    %p34 = scmp.ne.s32.totalorder %s23, %s24
    %p35 = scmp.eq.s32.totalorder %s15, 0
    %p36 = por %p34, %p35
    %p37 = scmp.ne.s32.totalorder %s23, %s24
    %p38 = scmp.eq.s32.totalorder %s16, 1
    %p39 = por %p37, %p38
    %p41 = scmp.ne.s32.totalorder %s24, %s40
    %p42 = scmp.eq.s32.totalorder %s16, 0
    %p43 = por %p41, %p42
    %s45 = sadd.s32 %s44, 1
    %p48 = scmp.eq.s32.totalorder %s10, 1
    %p49 = scmp.ne.s32.totalorder %s44, %s46
    %p50 = scmp.eq.s32.totalorder %s10, 0
    %p51 = por %p49, %p50
    %p52 = scmp.ne.s32.totalorder %s44, %s46
    %p53 = scmp.eq.s32.totalorder %s15, 1
    %p54 = por %p52, %p53
    %p55 = scmp.ne.s32.totalorder %s46, %s47
    %p56 = scmp.eq.s32.totalorder %s15, 0
    %p57 = por %p55, %p56
    %p58 = scmp.ne.s32.totalorder %s46, %s47
    %p59 = scmp.eq.s32.totalorder %s16, 1
    %p60 = por %p58, %p59
    %p62 = scmp.ne.s32.totalorder %s47, %s61
    %p63 = scmp.eq.s32.totalorder %s16, 0
    %p64 = por %p62, %p63
    %s66 = sadd.s32 %s65, 1
    %p69 = scmp.eq.s32.totalorder %s10, 1
    %p70 = scmp.ne.s32.totalorder %s65, %s67
    %p71 = scmp.eq.s32.totalorder %s10, 0
    %p72 = por %p70, %p71
    %p73 = scmp.ne.s32.totalorder %s65, %s67
    %p74 = scmp.eq.s32.totalorder %s15, 1
    %p75 = por %p73, %p74
    %p76 = scmp.ne.s32.totalorder %s67, %s68
    %p77 = scmp.eq.s32.totalorder %s15, 0
    %p78 = por %p76, %p77
    %p79 = scmp.ne.s32.totalorder %s67, %s68
    %p80 = scmp.eq.s32.totalorder %s16, 1
    %p81 = por %p79, %p80
    %p83 = scmp.ne.s32.totalorder %s68, %s82
    %p84 = scmp.eq.s32.totalorder %s16, 0
    %p85 = por %p83, %p84
    %s87 = sadd.s32 %s86, 1
    %p90 = scmp.eq.s32.totalorder %s10, 1
    %p91 = scmp.ne.s32.totalorder %s86, %s88
    %p92 = scmp.eq.s32.totalorder %s10, 0
    %p93 = por %p91, %p92
    %p94 = scmp.ne.s32.totalorder %s86, %s88
    %p95 = scmp.eq.s32.totalorder %s15, 1
    %p96 = por %p94, %p95
    %p97 = scmp.ne.s32.totalorder %s88, %s89
    %p98 = scmp.eq.s32.totalorder %s15, 0
    %p99 = por %p97, %p98
    %p100 = scmp.ne.s32.totalorder %s88, %s89
    %p101 = scmp.eq.s32.totalorder %s16, 1
    %p102 = por %p100, %p101
    %p104 = scmp.ne.s32.totalorder %s89, %s103
    %p105 = scmp.eq.s32.totalorder %s16, 0
    %p106 = por %p104, %p105
    %s107 = ssub.s32 %s10, %s17
    %p108 = scmp.eq.s32.totalorder %s107, 0
    %s110 = sadd.s32 %s109, 1
    %s111 = scalar_select %p108, %s109, %s110
    %p114 = pneg %p108
    %p115 = scmp.eq.s32.totalorder %s10, 1
    %p116 = por %p114, %p115
    %p117 = scmp.ne.s32.totalorder %s109, %s112
    %p118 = scmp.eq.s32.totalorder %s10, 0
    %p119 = por %p117, %p118
    %p120 = scmp.ne.s32.totalorder %s109, %s112
    %p121 = scmp.eq.s32.totalorder %s15, 1
    %p122 = por %p120, %p121
    %p123 = scmp.ne.s32.totalorder %s112, %s113
    %p124 = scmp.eq.s32.totalorder %s15, 0
    %p125 = por %p123, %p124
    %p126 = scmp.ne.s32.totalorder %s112, %s113
    %p127 = scmp.eq.s32.totalorder %s16, 1
    %p128 = por %p126, %p127
    %p130 = scmp.ne.s32.totalorder %s113, %s129
    %p131 = scmp.eq.s32.totalorder %s16, 0
    %p132 = por %p130, %p131
    %p133 = scmp.le.s32.totalorder 1, %s10
    %p134 = scmp.lt.s32.totalorder %s10, 3
    %p135 = pnand %p133, %p134
    %p136 = pneg %p135
    // Predicated region
    $region9: #{_lambda_.16} parent=5 // pred_check
      _
    $region10: #{_lambda_.16} parent=5 // pred_check_branch
      %138 = sbr.rel (%p135) target = $region12
    $region11: #{_lambda_.16} parent=5 // pred_region
      %s139 = ssub.s32 %s10, 1
      // Predicated region
      $region13: #{_lambda_.16} parent=11 // pred_check
        %p140 = pneg %p57
      $region14: #{_lambda_.16} parent=11 // pred_check_branch
        %142 = sbr.rel (%p140) target = $region16
      $region15: #{_lambda_.16} parent=11 // pred_region
        _
      $region16: #{_lambda_.16} parent=11 // pred_fallthru
        _
      // Predicated region
      $region17: #{_lambda_.16} parent=11 // pred_check
        %p143 = pneg %p78
      $region18: #{_lambda_.16} parent=11 // pred_check_branch
        %145 = sbr.rel (%p143) target = $region20
      $region19: #{_lambda_.16} parent=11 // pred_region
        _
      $region20: #{_lambda_.16} parent=11 // pred_fallthru
        _
      // Predicated region
      $region21: #{_lambda_.16} parent=11 // pred_check
        %p146 = pneg %p99
      $region22: #{_lambda_.16} parent=11 // pred_check_branch
        %148 = sbr.rel (%p146) target = $region24
      $region23: #{_lambda_.16} parent=11 // pred_region
        _
      $region24: #{_lambda_.16} parent=11 // pred_fallthru
        _
    $region12: #{_lambda_.16} parent=5 // pred_fallthru
      _
    %p149 = scmp.lt.s32.totalorder %s10, 2
    // Predicated region
    $region25: #{_lambda_.16} parent=5 // pred_check
      %p150 = pneg %p149
    $region26: #{_lambda_.16} parent=5 // pred_check_branch
      %152 = sbr.rel (%p150) target = $region28
    $region27: #{_lambda_.16} parent=5 // pred_region
      // Predicated region
      $region29: #{_lambda_.16} parent=27 // pred_check
        %p153 = pneg %p30
      $region30: #{_lambda_.16} parent=27 // pred_check_branch
        %155 = sbr.rel (%p153) target = $region32
      $region31: #{_lambda_.16} parent=27 // pred_region
        %p156 = scmp.lt.s32.totalorder %s10, 1
        %s157 = scalar_select %p156, %s10, 1
        %s158 = smul.addr %s157, 9
        %s159 = smul.addr %s158, 4
        %s160 = scalar_lea.vmem %s0, %s159
      $region32: #{_lambda_.16} parent=27 // pred_fallthru
        _
    $region28: #{_lambda_.16} parent=5 // pred_fallthru
      _
    %p161 = scmp.le.s32.totalorder 1, %s10
    %p162 = scmp.lt.s32.totalorder %s10, 3
    %p163 = pnand %p161, %p162
    %p164 = pneg %p163
    // Predicated region
    $region33: #{_lambda_.16} parent=5 // pred_check
      _
    $region34: #{_lambda_.16} parent=5 // pred_check_branch
      %166 = sbr.rel (%p163) target = $region36
    $region35: #{_lambda_.16} parent=5 // pred_region
      %s167 = ssub.s32 %s10, 1
      %p168 = scmp.lt.s32.totalorder %s15, 1
      %s169 = scalar_select %p168, %s15, 1
      %s170 = smul.addr %s169, 9
      %s171 = smul.addr %s170, 4
      %s172 = scalar_lea.vmem %s0, %s171
      %p173 = pneg %p36
      %p174 = pneg %p33
      %p175 = pneg %p57
      %p176 = pneg %p54
      %p177 = pneg %p78
      %p178 = pneg %p75
      %p179 = pneg %p99
      %p180 = pneg %p96
      %p181 = pneg %p125
      %p182 = pneg %p122
      %p183 = scmp.lt.s32.totalorder %s15, 1
      %s184 = scalar_select %p183, %s15, 1
      %s185 = smul.addr %s184, 2
      %s186 = smul.addr %s185, 8
      %s187 = scalar_lea.vmem %s4, %s186
      %p188 = scmp.lt.s32.totalorder %s15, 1
      %s189 = scalar_select %p188, %s15, 1
      %s190 = smul.addr %s189, 9
      %s191 = smul.addr %s190, 4
      %s192 = scalar_lea.vmem %s0, %s191
      %p193 = scmp.lt.s32.totalorder %s15, 1
      %s194 = scalar_select %p193, %s15, 1
      %s195 = smul.addr %s194, 2
      %s196 = smul.addr %s195, 8
      %s197 = scalar_lea.vmem %s4, %s196
      %v199 = vld [vmem:[%s1] sm:$0xf]
      %v200 = vld [vmem:[%s1 + $0x4] sm:$0xf]
      %v201 = vld [vmem:[%s192] sm:$0xf]
      %v202 = vld [vmem:[%s192 + $0x4] sm:$0xf]
      %v203 = vld [vmem:[%s192 + $0x8] sm:$0xf]
      %v204 = vld [vmem:[%s192 + $0xc] sm:$0xf]
      %v205 = vld [vmem:[%s192 + $0x10] sm:$0xf]
      %v206 = vld [vmem:[%s192 + $0x14] sm:$0xf]
      %v207 = vld [vmem:[%s192 + $0x18] sm:$0xf]
      %v208 = vld [vmem:[%s192 + $0x1c] sm:$0xf]
      %v209 = vld [vmem:[%s192 + $0x20] sm:$0xf]
      %v212 = vunpack.c.l.b16 %v199
      %v213 = vunpack.c.l.b16 %v200
      %v214 = vpack.c.b16 %v213, %v212
      %v224 = vunpack.c.l.b16 %v201
      %v225 = vunpack.c.l.b16 %v202
      %v226 = vunpack.c.l.b16 %v203
      %v227 = vunpack.c.l.b16 %v204
      %v228 = vunpack.c.l.b16 %v205
      %v229 = vunpack.c.l.b16 %v206
      %v230 = vunpack.c.l.b16 %v207
      %v231 = vunpack.c.l.b16 %v208
      %v232 = vunpack.c.l.b16 %v209
      %v233 = vpack.c.b16 %v225, %v224
      %v234 = vpack.c.b16 %v227, %v226
      %v235 = vpack.c.b16 %v229, %v228
      %v236 = vpack.c.b16 %v231, %v230
      %v237 = vpack.c.b16 %v232, %v232
      %vm242 = vcmask 588800
      %v244 = vsel %vm242, %v214, 0
      %vm246 = vcmask 1043456
      %v248 = vsel %vm246, %v237, 0
      %250 = vmatprep.subr.bf16.mxu0 0
      %251 = vmatpush1.bf16.msra.mxu0 0
      %252 = vmatprep.subr.bf16.mxu0 0
      %253 = vmatpush1.bf16.msra.mxu0 0
      %254 = vmatprep.subr.bf16.mxu0 0
      %255 = vmatpush1.bf16.msra.mxu0 0
      %256 = vmatprep.subr.bf16.mxu0 0
      %257 = vmatpush1.bf16.msra.mxu0 %v248
      %258 = vmatprep.subr.bf16.mxu0 0
      %259 = vmatpush1.bf16.msra.mxu0 %v236
      %260 = vmatprep.subr.bf16.mxu0 0
      %261 = vmatpush1.bf16.msra.mxu0 %v235
      %262 = vmatprep.subr.bf16.mxu0 0
      %263 = vmatpush1.bf16.msra.mxu0 %v234
      %264 = vmatprep.subr.bf16.mxu0 0
      %265 = vmatpush1.bf16.msra.mxu0 %v233
      %266 = vmatprep.subr.bf16.mxu0 0
      %267 = vmatpush2.bf16.msra.mxu0 0
      %268 = vmatprep.subr.bf16.mxu0 0
      %269 = vmatpush2.bf16.msra.mxu0 0
      %270 = vmatprep.subr.bf16.mxu0 0
      %271 = vmatpush2.bf16.msra.mxu0 0
      %272 = vmatprep.subr.bf16.mxu0 0
      %273 = vmatpush2.bf16.msra.mxu0 0
      %274 = vmatprep.subr.bf16.mxu0 0
      %275 = vmatpush2.bf16.msra.mxu0 0
      %276 = vmatprep.subr.bf16.mxu0 0
      %277 = vmatpush2.bf16.msra.mxu0 0
      %278 = vmatprep.subr.bf16.mxu0 0
      %279 = vmatpush2.bf16.msra.mxu0 0
      %280 = vmatprep.subr.bf16.mxu0 0
      %281 = vmatpush2.bf16.msra.mxu0 0
      %282 = vmatprep.mubr.bf16.mxu0 0
      %283 = vmatmul.mubr.bf16.gmra.mxu0 %v244
      %v284 = vpop.f32.mrf.mxu0
      %v285 = vadd.f32 0.0, %v284
      %v286 = vpop.f32.mrf.mxu0
      %v287 = vpop.f32.mrf.mxu0
      %v288 = vadd.f32 0.0, %v287
      %v289 = vpop.f32.mrf.mxu0
      %290 = vdwg.mxu0
      %v291 = vld [vmem:[%s2] sm:$0xff]
      %v292 = vld [vmem:[%s2 + $0x8] sm:$0xff]
      %v293 = vld [vmem:[%s3] sm:$0xff]
      %v294 = vld [vmem:[%s3 + $0x8] sm:$0xff]
      %vm295 = vcmask 523264
      %v296 = vsel %vm295, %v285, 0.0
      %297 = vadd.xlane.f32.xlu0 %v296
      %v298 = vpop.xlane.xlu0 %297
      %v299 = vsel %vm295, %v288, 0.0
      %300 = vadd.xlane.f32.xlu0 %v299
      %v301 = vpop.xlane.xlu0 %300
      %v302 = vrcp.pop 64.0
      %v303 = vmul.f32 %v298, %v302
      %v304 = vmul.f32 %v301, %v302
      %v305 = vsub.f32 %v285, %v303
      %v306 = vsub.f32 %v288, %v304
      %v307 = vmul.f32 %v305, %v305
      %v308 = vmul.f32 %v306, %v306
      %v309 = vsel %vm295, %v307, 0.0
      %310 = vadd.xlane.f32.xlu0 %v309
      %v311 = vpop.xlane.xlu0 %310
      %v312 = vsel %vm295, %v308, 0.0
      %313 = vadd.xlane.f32.xlu0 %v312
      %v314 = vpop.xlane.xlu0 %313
      %v315 = vmul.f32 %v311, %v302
      %v316 = vmul.f32 %v314, %v302
      %v317 = vadd.f32 %v315, 1e-05
      %v318 = vadd.f32 %v316, 1e-05
      %v319 = vrsqrt.pop %v317
      %v320 = vrsqrt.pop %v318
      %v321 = vmul.f32 %v305, %v319
      %v322 = vmul.f32 %v306, %v320
      %324 = vset.pattern.permute.xlu0 0
      %325 = vperm.xlu0 %324, %v291
      %v326 = vpop.permute.xlu0 %325
      %329 = vset.pattern.permute.xlu0 0
      %330 = vperm.xlu0 %329, %v292
      %v331 = vpop.permute.xlu0 %330
      %v333 = vmul.f32 %v321, %v326
      %v334 = vmul.f32 %v322, %v331
      %336 = vset.pattern.permute.xlu0 0
      %337 = vperm.xlu0 %336, %v293
      %v338 = vpop.permute.xlu0 %337
      %341 = vset.pattern.permute.xlu0 0
      %342 = vperm.xlu0 %341, %v294
      %v343 = vpop.permute.xlu0 %342
      %v345 = vadd.f32 %v333, %v338
      %v346 = vadd.f32 %v334, %v343
      %vm347 = vcmp.ge.f32.partialorder %v345, 0.0
      %vm348 = vcmp.ge.f32.partialorder %v346, 0.0
      %v349 = vmul.f32 %v345, 0.01
      %v350 = vmul.f32 %v346, 0.01
      %v351 = vsel %vm347, %v345, %v349
      %v352 = vsel %vm348, %v346, %v350
      %353 = vst.msk [vmem:[%s197] sm:$0xff] %vm295, %v351
      %354 = vst.msk [vmem:[%s197 + $0x8] sm:$0xff] %vm295, %v352
      %p355 = scmp.lt.s32.totalorder %s15, 1
      %s356 = scalar_select %p355, %s15, 1
      %s357 = smul.addr %s356, 2
      %s358 = smul.addr %s357, 8
      %s359 = scalar_lea.vmem %s4, %s358
      // Predicated region
      $region37: #{_lambda_.16} parent=35 // pred_check
        %p360 = pneg %p122
      $region38: #{_lambda_.16} parent=35 // pred_check_branch
        %362 = sbr.rel (%p360) target = $region40
      $region39: #{_lambda_.16} parent=35 // pred_region
        _
      $region40: #{_lambda_.16} parent=35 // pred_fallthru
        _
    $region36: #{_lambda_.16} parent=5 // pred_fallthru
      _
    %p363 = scmp.le.s32.totalorder 2, %s10
    // Predicated region
    $region41: #{_lambda_.16} parent=5 // pred_check
      %p364 = pneg %p363
    $region42: #{_lambda_.16} parent=5 // pred_check_branch
      %366 = sbr.rel (%p364) target = $region44
    $region43: #{_lambda_.16} parent=5 // pred_region
      %s367 = ssub.s32 %s10, 2
      // Predicated region
      $region45: #{_lambda_.16} parent=43 // pred_check
        %p368 = pneg %p128
      $region46: #{_lambda_.16} parent=43 // pred_check_branch
        %370 = sbr.rel (%p368) target = $region48
      $region47: #{_lambda_.16} parent=43 // pred_region
        %p371 = scmp.lt.s32.totalorder %s16, 1
        %s372 = scalar_select %p371, %s16, 1
        %s373 = smul.addr %s372, 2
        %s374 = smul.addr %s373, 8
        %s375 = scalar_lea.vmem %s4, %s374
      $region48: #{_lambda_.16} parent=43 // pred_fallthru
        _
    $region44: #{_lambda_.16} parent=5 // pred_fallthru
      _
  $region6: #{_lambda_.16} parent=0 // loop_footer
    %s14 = sadd.s32 1, %s10
  $region7: #{_lambda_.16} parent=0 // loop_footer_branch
    %9 = sbr.rel target = $region3
  $region8: #{_lambda_.16} parent=0 // loop_exit
    _

// kernel: _lambda_.18
$region0: #{_lambda_.18}
  #allocation0 [shape = 'u32[]', space=smem, size = 0x4, offset = 0x4, fixed_abs, tag = 'smem constant byte address 0x4 - core index']
  #allocation1 [shape = 'u32[144,128]{1,0:T(1,128)}', space=vmem, size = 0x12000, scoped, tag = 'internal scratch']
  %s0 = inlined_call_operand.vmem [shape: bf16[2,144,64], index: 0, kind: input, shape index: {}]
  %s1 = inlined_call_operand.vmem [shape: bf16[16,144], index: 1, kind: input, shape index: {}]
  %s2 = inlined_call_operand.vmem [shape: f32[16,1], index: 2, kind: input, shape index: {}]
  %s3 = inlined_call_operand.vmem [shape: f32[16,1], index: 3, kind: input, shape index: {}]
  %s4 = inlined_call_operand.vmem [shape: f32[2,16,64], index: 4, kind: input, shape index: {}]
  %s5 = inlined_call_operand.vmem [shape: f32[2,16,64], index: 5, kind: output, shape index: {}]
  %s6 = sld [smem:[#allocation0]]
  $region53: #{_lambda_.18} parent=0
    _
  %s8 = ssub.s32 1, %s6
  %s9 = scalar_select 0, %s8, %s6
  loop: start=0, step=1, limit=4
  $region2: #{_lambda_.18} parent=0 // loop_pre_header
    _
  $region3: #{_lambda_.18} parent=0 // loop_header
    %s11 = sphi 0, %s15
    %p12 = scmp.ge.s32.totalorder %s11, 4
    %s21 = sphi 0, %s23
    %s24 = sphi 0, %s21
    %s25 = sphi 0, %s24
    %s41 = sphi 0, %s25
    %s45 = sphi 0, %s45
    %s47 = sphi 0, %s45
    %s48 = sphi 0, %s47
    %s62 = sphi 0, %s48
    %s66 = sphi 0, %s66
    %s68 = sphi 0, %s66
    %s69 = sphi 0, %s68
    %s83 = sphi 0, %s69
    %s87 = sphi 0, %s87
    %s89 = sphi 0, %s87
    %s90 = sphi 0, %s89
    %s104 = sphi 0, %s90
    %s110 = sphi 0, %s112
    %s113 = sphi 0, %s110
    %s114 = sphi 0, %s113
    %s130 = sphi 0, %s114
    %s136 = sphi 0, %s138
    %s139 = sphi 0, %s136
    %s140 = sphi 0, %s139
    %s156 = sphi 0, %s140
  $region4: #{_lambda_.18} parent=0 // loop_header_branch
    %14 = sbr.rel (%p12) target = $region8
  $region5: #{_lambda_.18} parent=0 // loop_body
    %s16 = ssub.s32 %s11, 1
    %s17 = ssub.s32 %s11, 2
    %s18 = sadd.s32 %s11, 1
    %s19 = ssub.s32 %s11, %s18
    %p20 = scmp.eq.s32.totalorder %s19, 0
    %s22 = sadd.s32 %s21, 1
    %s23 = scalar_select %p20, %s21, %s22
    %p26 = pneg %p20
    %p27 = scmp.eq.s32.totalorder %s11, 1
    %p28 = por %p26, %p27
    %p29 = scmp.ne.s32.totalorder %s21, %s24
    %p30 = scmp.eq.s32.totalorder %s11, 0
    %p31 = por %p29, %p30
    %p32 = scmp.ne.s32.totalorder %s21, %s24
    %p33 = scmp.eq.s32.totalorder %s16, 1
    %p34 = por %p32, %p33
    %p35 = scmp.ne.s32.totalorder %s24, %s25
    %p36 = scmp.eq.s32.totalorder %s16, 0
    %p37 = por %p35, %p36
    %p38 = scmp.ne.s32.totalorder %s24, %s25
    %p39 = scmp.eq.s32.totalorder %s17, 1
    %p40 = por %p38, %p39
    %p42 = scmp.ne.s32.totalorder %s25, %s41
    %p43 = scmp.eq.s32.totalorder %s17, 0
    %p44 = por %p42, %p43
    %s46 = sadd.s32 %s45, 1
    %p49 = scmp.eq.s32.totalorder %s11, 1
    %p50 = scmp.ne.s32.totalorder %s45, %s47
    %p51 = scmp.eq.s32.totalorder %s11, 0
    %p52 = por %p50, %p51
    %p53 = scmp.ne.s32.totalorder %s45, %s47
    %p54 = scmp.eq.s32.totalorder %s16, 1
    %p55 = por %p53, %p54
    %p56 = scmp.ne.s32.totalorder %s47, %s48
    %p57 = scmp.eq.s32.totalorder %s16, 0
    %p58 = por %p56, %p57
    %p59 = scmp.ne.s32.totalorder %s47, %s48
    %p60 = scmp.eq.s32.totalorder %s17, 1
    %p61 = por %p59, %p60
    %p63 = scmp.ne.s32.totalorder %s48, %s62
    %p64 = scmp.eq.s32.totalorder %s17, 0
    %p65 = por %p63, %p64
    %s67 = sadd.s32 %s66, 1
    %p70 = scmp.eq.s32.totalorder %s11, 1
    %p71 = scmp.ne.s32.totalorder %s66, %s68
    %p72 = scmp.eq.s32.totalorder %s11, 0
    %p73 = por %p71, %p72
    %p74 = scmp.ne.s32.totalorder %s66, %s68
    %p75 = scmp.eq.s32.totalorder %s16, 1
    %p76 = por %p74, %p75
    %p77 = scmp.ne.s32.totalorder %s68, %s69
    %p78 = scmp.eq.s32.totalorder %s16, 0
    %p79 = por %p77, %p78
    %p80 = scmp.ne.s32.totalorder %s68, %s69
    %p81 = scmp.eq.s32.totalorder %s17, 1
    %p82 = por %p80, %p81
    %p84 = scmp.ne.s32.totalorder %s69, %s83
    %p85 = scmp.eq.s32.totalorder %s17, 0
    %p86 = por %p84, %p85
    %s88 = sadd.s32 %s87, 1
    %p91 = scmp.eq.s32.totalorder %s11, 1
    %p92 = scmp.ne.s32.totalorder %s87, %s89
    %p93 = scmp.eq.s32.totalorder %s11, 0
    %p94 = por %p92, %p93
    %p95 = scmp.ne.s32.totalorder %s87, %s89
    %p96 = scmp.eq.s32.totalorder %s16, 1
    %p97 = por %p95, %p96
    %p98 = scmp.ne.s32.totalorder %s89, %s90
    %p99 = scmp.eq.s32.totalorder %s16, 0
    %p100 = por %p98, %p99
    %p101 = scmp.ne.s32.totalorder %s89, %s90
    %p102 = scmp.eq.s32.totalorder %s17, 1
    %p103 = por %p101, %p102
    %p105 = scmp.ne.s32.totalorder %s90, %s104
    %p106 = scmp.eq.s32.totalorder %s17, 0
    %p107 = por %p105, %p106
    %s108 = ssub.s32 %s11, %s18
    %p109 = scmp.eq.s32.totalorder %s108, 0
    %s111 = sadd.s32 %s110, 1
    %s112 = scalar_select %p109, %s110, %s111
    %p115 = pneg %p109
    %p116 = scmp.eq.s32.totalorder %s11, 1
    %p117 = por %p115, %p116
    %p118 = scmp.ne.s32.totalorder %s110, %s113
    %p119 = scmp.eq.s32.totalorder %s11, 0
    %p120 = por %p118, %p119
    %p121 = scmp.ne.s32.totalorder %s110, %s113
    %p122 = scmp.eq.s32.totalorder %s16, 1
    %p123 = por %p121, %p122
    %p124 = scmp.ne.s32.totalorder %s113, %s114
    %p125 = scmp.eq.s32.totalorder %s16, 0
    %p126 = por %p124, %p125
    %p127 = scmp.ne.s32.totalorder %s113, %s114
    %p128 = scmp.eq.s32.totalorder %s17, 1
    %p129 = por %p127, %p128
    %p131 = scmp.ne.s32.totalorder %s114, %s130
    %p132 = scmp.eq.s32.totalorder %s17, 0
    %p133 = por %p131, %p132
    %s134 = ssub.s32 %s11, %s18
    %p135 = scmp.eq.s32.totalorder %s134, 0
    %s137 = sadd.s32 %s136, 1
    %s138 = scalar_select %p135, %s136, %s137
    %p141 = pneg %p135
    %p142 = scmp.eq.s32.totalorder %s11, 1
    %p143 = por %p141, %p142
    %p144 = scmp.ne.s32.totalorder %s136, %s139
    %p145 = scmp.eq.s32.totalorder %s11, 0
    %p146 = por %p144, %p145
    %p147 = scmp.ne.s32.totalorder %s136, %s139
    %p148 = scmp.eq.s32.totalorder %s16, 1
    %p149 = por %p147, %p148
    %p150 = scmp.ne.s32.totalorder %s139, %s140
    %p151 = scmp.eq.s32.totalorder %s16, 0
    %p152 = por %p150, %p151
    %p153 = scmp.ne.s32.totalorder %s139, %s140
    %p154 = scmp.eq.s32.totalorder %s17, 1
    %p155 = por %p153, %p154
    %p157 = scmp.ne.s32.totalorder %s140, %s156
    %p158 = scmp.eq.s32.totalorder %s17, 0
    %p159 = por %p157, %p158
    %p160 = scmp.le.s32.totalorder 1, %s11
    %p161 = scmp.lt.s32.totalorder %s11, 3
    %p162 = pnand %p160, %p161
    %p163 = pneg %p162
    // Predicated region
    $region9: #{_lambda_.18} parent=5 // pred_check
      _
    $region10: #{_lambda_.18} parent=5 // pred_check_branch
      %165 = sbr.rel (%p162) target = $region12
    $region11: #{_lambda_.18} parent=5 // pred_region
      %s166 = ssub.s32 %s11, 1
      // Predicated region
      $region13: #{_lambda_.18} parent=11 // pred_check
        %p167 = pneg %p58
      $region14: #{_lambda_.18} parent=11 // pred_check_branch
        %169 = sbr.rel (%p167) target = $region16
      $region15: #{_lambda_.18} parent=11 // pred_region
        _
      $region16: #{_lambda_.18} parent=11 // pred_fallthru
        _
      // Predicated region
      $region17: #{_lambda_.18} parent=11 // pred_check
        %p170 = pneg %p79
      $region18: #{_lambda_.18} parent=11 // pred_check_branch
        %172 = sbr.rel (%p170) target = $region20
      $region19: #{_lambda_.18} parent=11 // pred_region
        _
      $region20: #{_lambda_.18} parent=11 // pred_fallthru
        _
      // Predicated region
      $region21: #{_lambda_.18} parent=11 // pred_check
        %p173 = pneg %p100
      $region22: #{_lambda_.18} parent=11 // pred_check_branch
        %175 = sbr.rel (%p173) target = $region24
      $region23: #{_lambda_.18} parent=11 // pred_region
        _
      $region24: #{_lambda_.18} parent=11 // pred_fallthru
        _
    $region12: #{_lambda_.18} parent=5 // pred_fallthru
      _
    %p176 = scmp.lt.s32.totalorder %s11, 2
    // Predicated region
    $region25: #{_lambda_.18} parent=5 // pred_check
      %p177 = pneg %p176
    $region26: #{_lambda_.18} parent=5 // pred_check_branch
      %179 = sbr.rel (%p177) target = $region28
    $region27: #{_lambda_.18} parent=5 // pred_region
      // Predicated region
      $region29: #{_lambda_.18} parent=27 // pred_check
        %p180 = pneg %p31
      $region30: #{_lambda_.18} parent=27 // pred_check_branch
        %182 = sbr.rel (%p180) target = $region32
      $region31: #{_lambda_.18} parent=27 // pred_region
        %p183 = scmp.lt.s32.totalorder %s11, 1
        %s184 = scalar_select %p183, %s11, 1
        %s185 = smul.addr %s184, 18
        %s186 = smul.addr %s185, 4
        %s187 = scalar_lea.vmem %s0, %s186
      $region32: #{_lambda_.18} parent=27 // pred_fallthru
        _
      // Predicated region
      $region33: #{_lambda_.18} parent=27 // pred_check
        %p188 = pneg %p120
      $region34: #{_lambda_.18} parent=27 // pred_check_branch
        %190 = sbr.rel (%p188) target = $region36
      $region35: #{_lambda_.18} parent=27 // pred_region
        %p191 = scmp.lt.s32.totalorder %s11, 1
        %s192 = scalar_select %p191, %s11, 1
        %s193 = smul.addr %s192, 2
        %s194 = smul.addr %s193, 8
        %s195 = scalar_lea.vmem %s4, %s194
      $region36: #{_lambda_.18} parent=27 // pred_fallthru
        _
    $region28: #{_lambda_.18} parent=5 // pred_fallthru
      _
    %p196 = scmp.le.s32.totalorder 1, %s11
    %p197 = scmp.lt.s32.totalorder %s11, 3
    %p198 = pnand %p196, %p197
    %p199 = pneg %p198
    // Predicated region
    $region37: #{_lambda_.18} parent=5 // pred_check
      _
    $region38: #{_lambda_.18} parent=5 // pred_check_branch
      %201 = sbr.rel (%p198) target = $region40
    $region39: #{_lambda_.18} parent=5 // pred_region
      %s202 = ssub.s32 %s11, 1
      %p203 = scmp.lt.s32.totalorder %s16, 1
      %s204 = scalar_select %p203, %s16, 1
      %s205 = smul.addr %s204, 18
      %s206 = smul.addr %s205, 4
      %s207 = scalar_lea.vmem %s0, %s206
      %p208 = pneg %p37
      %p209 = pneg %p34
      %p210 = pneg %p58
      %p211 = pneg %p55
      %p212 = pneg %p79
      %p213 = pneg %p76
      %p214 = pneg %p100
      %p215 = pneg %p97
      %p216 = scmp.lt.s32.totalorder %s16, 1
      %s217 = scalar_select %p216, %s16, 1
      %s218 = smul.addr %s217, 2
      %s219 = smul.addr %s218, 8
      %s220 = scalar_lea.vmem %s4, %s219
      %p221 = pneg %p126
      %p222 = pneg %p123
      %p223 = pneg %p152
      %p224 = pneg %p149
      %p225 = scmp.lt.s32.totalorder %s16, 1
      %s226 = scalar_select %p225, %s16, 1
      %s227 = smul.addr %s226, 2
      %s228 = smul.addr %s227, 8
      %s229 = scalar_lea.vmem %s5, %s228
      %p230 = scmp.lt.s32.totalorder %s16, 1
      %s231 = scalar_select %p230, %s16, 1
      %s232 = smul.addr %s231, 18
      %s233 = smul.addr %s232, 4
      %s234 = scalar_lea.vmem %s0, %s233
      %p235 = scmp.lt.s32.totalorder %s16, 1
      %s236 = scalar_select %p235, %s16, 1
      %s237 = smul.addr %s236, 2
      %s238 = smul.addr %s237, 8
      %s239 = scalar_lea.vmem %s4, %s238
      %p240 = scmp.lt.s32.totalorder %s16, 1
      %s241 = scalar_select %p240, %s16, 1
      %s242 = smul.addr %s241, 2
      %s243 = smul.addr %s242, 8
      %s244 = scalar_lea.vmem %s5, %s243
      %v246 = vld [vmem:[%s1] sm:$0xff]
      %v247 = vld [vmem:[%s1 + $0x8] sm:$0xff]
      %v248 = vld [vmem:[%s234] sm:$0xf]
      %v249 = vld [vmem:[%s234 + $0x4] sm:$0xf]
      %v250 = vld [vmem:[%s234 + $0x8] sm:$0xf]
      %v251 = vld [vmem:[%s234 + $0xc] sm:$0xf]
      %v252 = vld [vmem:[%s234 + $0x10] sm:$0xf]
      %v253 = vld [vmem:[%s234 + $0x14] sm:$0xf]
      %v254 = vld [vmem:[%s234 + $0x18] sm:$0xf]
      %v255 = vld [vmem:[%s234 + $0x1c] sm:$0xf]
      %v256 = vld [vmem:[%s234 + $0x20] sm:$0xf]
      %v257 = vld [vmem:[%s234 + $0x24] sm:$0xf]
      %v258 = vld [vmem:[%s234 + $0x28] sm:$0xf]
      %v259 = vld [vmem:[%s234 + $0x2c] sm:$0xf]
      %v260 = vld [vmem:[%s234 + $0x30] sm:$0xf]
      %v261 = vld [vmem:[%s234 + $0x34] sm:$0xf]
      %v262 = vld [vmem:[%s234 + $0x38] sm:$0xf]
      %v263 = vld [vmem:[%s234 + $0x3c] sm:$0xf]
      %v264 = vld [vmem:[%s234 + $0x40] sm:$0xf]
      %v265 = vld [vmem:[%s234 + $0x44] sm:$0xf]
      %v268 = vunpack.c.l.b16 %v246
      %v269 = vunpack.c.h.b16 %v246
      %v270 = vunpack.c.l.b16 %v247
      %v271 = vunpack.c.h.b16 %v247
      %v272 = vpack.c.b16 %v270, %v268
      %v273 = vpack.c.b16 %v271, %v269
      %v293 = vunpack.c.l.b16 %v248
      %v294 = vunpack.c.l.b16 %v249
      %v295 = vunpack.c.l.b16 %v250
      %v296 = vunpack.c.l.b16 %v251
      %v297 = vunpack.c.l.b16 %v252
      %v298 = vunpack.c.l.b16 %v253
      %v299 = vunpack.c.l.b16 %v254
      %v300 = vunpack.c.l.b16 %v255
      %v301 = vunpack.c.l.b16 %v256
      %v302 = vunpack.c.l.b16 %v257
      %v303 = vunpack.c.l.b16 %v258
      %v304 = vunpack.c.l.b16 %v259
      %v305 = vunpack.c.l.b16 %v260
      %v306 = vunpack.c.l.b16 %v261
      %v307 = vunpack.c.l.b16 %v262
      %v308 = vunpack.c.l.b16 %v263
      %v309 = vunpack.c.l.b16 %v264
      %v310 = vunpack.c.l.b16 %v265
      %v311 = vpack.c.b16 %v294, %v293
      %v312 = vpack.c.b16 %v296, %v295
      %v313 = vpack.c.b16 %v298, %v297
      %v314 = vpack.c.b16 %v300, %v299
      %v315 = vpack.c.b16 %v302, %v301
      %v316 = vpack.c.b16 %v304, %v303
      %v317 = vpack.c.b16 %v306, %v305
      %v318 = vpack.c.b16 %v308, %v307
      %v319 = vpack.c.b16 %v310, %v309
      %vm329 = vcmask 130048
      %v331 = vsel %vm329, %v273, 0
      %333 = vmatprep.subr.bf16.mxu0 0
      %334 = vmatpush1.bf16.msra.mxu0 %v318
      %335 = vmatprep.subr.bf16.mxu0 0
      %336 = vmatpush1.bf16.msra.mxu0 %v317
      %337 = vmatprep.subr.bf16.mxu0 0
      %338 = vmatpush1.bf16.msra.mxu0 %v316
      %339 = vmatprep.subr.bf16.mxu0 0
      %340 = vmatpush1.bf16.msra.mxu0 %v315
      %341 = vmatprep.subr.bf16.mxu0 0
      %342 = vmatpush1.bf16.msra.mxu0 %v314
      %343 = vmatprep.subr.bf16.mxu0 0
      %344 = vmatpush1.bf16.msra.mxu0 %v313
      %345 = vmatprep.subr.bf16.mxu0 0
      %346 = vmatpush1.bf16.msra.mxu0 %v312
      %347 = vmatprep.subr.bf16.mxu0 0
      %348 = vmatpush1.bf16.msra.mxu0 %v311
      %349 = vmatprep.subr.bf16.mxu0 0
      %350 = vmatpush2.bf16.msra.mxu0 0
      %351 = vmatprep.subr.bf16.mxu0 0
      %352 = vmatpush2.bf16.msra.mxu0 0
      %353 = vmatprep.subr.bf16.mxu0 0
      %354 = vmatpush2.bf16.msra.mxu0 0
      %355 = vmatprep.subr.bf16.mxu0 0
      %356 = vmatpush2.bf16.msra.mxu0 0
      %357 = vmatprep.subr.bf16.mxu0 0
      %358 = vmatpush2.bf16.msra.mxu0 0
      %359 = vmatprep.subr.bf16.mxu0 0
      %360 = vmatpush2.bf16.msra.mxu0 0
      %361 = vmatprep.subr.bf16.mxu0 0
      %362 = vmatpush2.bf16.msra.mxu0 0
      %363 = vmatprep.subr.bf16.mxu0 0
      %364 = vmatpush2.bf16.msra.mxu0 %v319
      %365 = vmatprep.mubr.bf16.mxu0 %v331
      %366 = vmatmul.mubr.bf16.gmra.mxu0 %v272
      %v367 = vpop.f32.mrf.mxu0
      %v368 = vadd.f32 0.0, %v367
      %v369 = vpop.f32.mrf.mxu0
      %v370 = vpop.f32.mrf.mxu0
      %v371 = vadd.f32 0.0, %v370
      %v372 = vpop.f32.mrf.mxu0
      %373 = vdwg.mxu0
      %v374 = vld [vmem:[%s2] sm:$0xff]
      %v375 = vld [vmem:[%s2 + $0x8] sm:$0xff]
      %v376 = vld [vmem:[%s3] sm:$0xff]
      %v377 = vld [vmem:[%s3 + $0x8] sm:$0xff]
      %vm378 = vcmask 523264
      %v379 = vsel %vm378, %v368, 0.0
      %380 = vadd.xlane.f32.xlu0 %v379
      %v381 = vpop.xlane.xlu0 %380
      %v382 = vsel %vm378, %v371, 0.0
      %383 = vadd.xlane.f32.xlu0 %v382
      %v384 = vpop.xlane.xlu0 %383
      %v385 = vrcp.pop 64.0
      %v386 = vmul.f32 %v381, %v385
      %v387 = vmul.f32 %v384, %v385
      %v388 = vsub.f32 %v368, %v386
      %v389 = vsub.f32 %v371, %v387
      %v390 = vmul.f32 %v388, %v388
      %v391 = vmul.f32 %v389, %v389
      %v392 = vsel %vm378, %v390, 0.0
      %393 = vadd.xlane.f32.xlu0 %v392
      %v394 = vpop.xlane.xlu0 %393
      %v395 = vsel %vm378, %v391, 0.0
      %396 = vadd.xlane.f32.xlu0 %v395
      %v397 = vpop.xlane.xlu0 %396
      %v398 = vmul.f32 %v394, %v385
      %v399 = vmul.f32 %v397, %v385
      %v400 = vadd.f32 %v398, 1e-05
      %v401 = vadd.f32 %v399, 1e-05
      %v402 = vrsqrt.pop %v400
      %v403 = vrsqrt.pop %v401
      %v404 = vmul.f32 %v388, %v402
      %v405 = vmul.f32 %v389, %v403
      %407 = vset.pattern.permute.xlu0 0
      %408 = vperm.xlu0 %407, %v374
      %v409 = vpop.permute.xlu0 %408
      %412 = vset.pattern.permute.xlu0 0
      %413 = vperm.xlu0 %412, %v375
      %v414 = vpop.permute.xlu0 %413
      %v416 = vmul.f32 %v404, %v409
      %v417 = vmul.f32 %v405, %v414
      %419 = vset.pattern.permute.xlu0 0
      %420 = vperm.xlu0 %419, %v376
      %v421 = vpop.permute.xlu0 %420
      %424 = vset.pattern.permute.xlu0 0
      %425 = vperm.xlu0 %424, %v377
      %v426 = vpop.permute.xlu0 %425
      %v428 = vadd.f32 %v416, %v421
      %v429 = vadd.f32 %v417, %v426
      %v430 = vld [vmem:[%s239] sm:$0xff]
      %v431 = vld [vmem:[%s239 + $0x8] sm:$0xff]
      %v432 = vadd.f32 %v428, %v430
      %v433 = vadd.f32 %v429, %v431
      %vm434 = vcmp.ge.f32.partialorder %v432, 0.0
      %vm435 = vcmp.ge.f32.partialorder %v433, 0.0
      %v436 = vmul.f32 %v432, 0.01
      %v437 = vmul.f32 %v433, 0.01
      %v438 = vsel %vm434, %v432, %v436
      %v439 = vsel %vm435, %v433, %v437
      %440 = vst.msk [vmem:[%s244] sm:$0xff] %vm378, %v438
      %441 = vst.msk [vmem:[%s244 + $0x8] sm:$0xff] %vm378, %v439
      %p442 = scmp.lt.s32.totalorder %s16, 1
      %s443 = scalar_select %p442, %s16, 1
      %s444 = smul.addr %s443, 2
      %s445 = smul.addr %s444, 8
      %s446 = scalar_lea.vmem %s5, %s445
      // Predicated region
      $region41: #{_lambda_.18} parent=39 // pred_check
        %p447 = pneg %p149
      $region42: #{_lambda_.18} parent=39 // pred_check_branch
        %449 = sbr.rel (%p447) target = $region44
      $region43: #{_lambda_.18} parent=39 // pred_region
        _
      $region44: #{_lambda_.18} parent=39 // pred_fallthru
        _
    $region40: #{_lambda_.18} parent=5 // pred_fallthru
      _
    %p450 = scmp.le.s32.totalorder 2, %s11
    // Predicated region
    $region45: #{_lambda_.18} parent=5 // pred_check
      %p451 = pneg %p450
    $region46: #{_lambda_.18} parent=5 // pred_check_branch
      %453 = sbr.rel (%p451) target = $region48
    $region47: #{_lambda_.18} parent=5 // pred_region
      %s454 = ssub.s32 %s11, 2
      // Predicated region
      $region49: #{_lambda_.18} parent=47 // pred_check
        %p455 = pneg %p155
      $region50: #{_lambda_.18} parent=47 // pred_check_branch
        %457 = sbr.rel (%p455) target = $region52
      $region51: #{_lambda_.18} parent=47 // pred_region
        %p458 = scmp.lt.s32.totalorder %s17, 1
        %s459 = scalar_select %p458, %s17, 1
        %s460 = smul.addr %s459, 2
        %s461 = smul.addr %s460, 8
        %s462 = scalar_lea.vmem %s5, %s461
      $region52: #{_lambda_.18} parent=47 // pred_fallthru
        _
    $region48: #{_lambda_.18} parent=5 // pred_fallthru
      _
  $region6: #{_lambda_.18} parent=0 // loop_footer
    %s15 = sadd.s32 1, %s11
  $region7: #{_lambda_.18} parent=0 // loop_footer_branch
    %10 = sbr.rel target = $region3
  $region8: #{_lambda_.18} parent=0 // loop_exit
    _

// kernel: _lambda_.20
$region0: #{_lambda_.20}
  #allocation0 [shape = 'u32[]', space=smem, size = 0x4, offset = 0x4, fixed_abs, tag = 'smem constant byte address 0x4 - core index']
  #allocation1 [shape = 'u32[144,128]{1,0:T(1,128)}', space=vmem, size = 0x12000, scoped, tag = 'internal scratch']
  %s0 = inlined_call_operand.vmem [shape: f32[2,16,16], index: 0, kind: input, shape index: {}]
  %s1 = inlined_call_operand.vmem [shape: f32[2,16,16], index: 1, kind: input, shape index: {}]
  %s2 = inlined_call_operand.vmem [shape: f32[2,16,16], index: 2, kind: input, shape index: {}]
  %s3 = inlined_call_operand.vmem [shape: f32[2,16,16], index: 3, kind: input, shape index: {}]
  %s4 = inlined_call_operand.vmem [shape: f32[2,16,16], index: 4, kind: output, shape index: {}]
  %s5 = sld [smem:[#allocation0]]
  $region49: #{_lambda_.20} parent=0
    _
  %s7 = ssub.s32 1, %s5
  %s8 = scalar_select 0, %s7, %s5
  loop: start=0, step=1, limit=4
  $region2: #{_lambda_.20} parent=0 // loop_pre_header
    _
  $region3: #{_lambda_.20} parent=0 // loop_header
    %s10 = sphi 0, %s14
    %p11 = scmp.ge.s32.totalorder %s10, 4
    %s20 = sphi 0, %s22
    %s23 = sphi 0, %s20
    %s24 = sphi 0, %s23
    %s40 = sphi 0, %s24
    %s46 = sphi 0, %s48
    %s49 = sphi 0, %s46
    %s50 = sphi 0, %s49
    %s66 = sphi 0, %s50
    %s72 = sphi 0, %s74
    %s75 = sphi 0, %s72
    %s76 = sphi 0, %s75
    %s92 = sphi 0, %s76
    %s98 = sphi 0, %s100
    %s101 = sphi 0, %s98
    %s102 = sphi 0, %s101
    %s118 = sphi 0, %s102
    %s124 = sphi 0, %s126
    %s127 = sphi 0, %s124
    %s128 = sphi 0, %s127
    %s144 = sphi 0, %s128
  $region4: #{_lambda_.20} parent=0 // loop_header_branch
    %13 = sbr.rel (%p11) target = $region8
  $region5: #{_lambda_.20} parent=0 // loop_body
    %s15 = ssub.s32 %s10, 1
    %s16 = ssub.s32 %s10, 2
    %s17 = sadd.s32 %s10, 1
    %s18 = ssub.s32 %s10, %s17
    %p19 = scmp.eq.s32.totalorder %s18, 0
    %s21 = sadd.s32 %s20, 1
    %s22 = scalar_select %p19, %s20, %s21
    %p25 = pneg %p19
    %p26 = scmp.eq.s32.totalorder %s10, 1
    %p27 = por %p25, %p26
    %p28 = scmp.ne.s32.totalorder %s20, %s23
    %p29 = scmp.eq.s32.totalorder %s10, 0
    %p30 = por %p28, %p29
    %p31 = scmp.ne.s32.totalorder %s20, %s23
    %p32 = scmp.eq.s32.totalorder %s15, 1
    %p33 = por %p31, %p32
    %p34 = scmp.ne.s32.totalorder %s23, %s24
    %p35 = scmp.eq.s32.totalorder %s15, 0
    %p36 = por %p34, %p35
    %p37 = scmp.ne.s32.totalorder %s23, %s24
    %p38 = scmp.eq.s32.totalorder %s16, 1
    %p39 = por %p37, %p38
    %p41 = scmp.ne.s32.totalorder %s24, %s40
    %p42 = scmp.eq.s32.totalorder %s16, 0
    %p43 = por %p41, %p42
    %s44 = ssub.s32 %s10, %s17
    %p45 = scmp.eq.s32.totalorder %s44, 0
    %s47 = sadd.s32 %s46, 1
    %s48 = scalar_select %p45, %s46, %s47
    %p51 = pneg %p45
    %p52 = scmp.eq.s32.totalorder %s10, 1
    %p53 = por %p51, %p52
    %p54 = scmp.ne.s32.totalorder %s46, %s49
    %p55 = scmp.eq.s32.totalorder %s10, 0
    %p56 = por %p54, %p55
    %p57 = scmp.ne.s32.totalorder %s46, %s49
    %p58 = scmp.eq.s32.totalorder %s15, 1
    %p59 = por %p57, %p58
    %p60 = scmp.ne.s32.totalorder %s49, %s50
    %p61 = scmp.eq.s32.totalorder %s15, 0
    %p62 = por %p60, %p61
    %p63 = scmp.ne.s32.totalorder %s49, %s50
    %p64 = scmp.eq.s32.totalorder %s16, 1
    %p65 = por %p63, %p64
    %p67 = scmp.ne.s32.totalorder %s50, %s66
    %p68 = scmp.eq.s32.totalorder %s16, 0
    %p69 = por %p67, %p68
    %s70 = ssub.s32 %s10, %s17
    %p71 = scmp.eq.s32.totalorder %s70, 0
    %s73 = sadd.s32 %s72, 1
    %s74 = scalar_select %p71, %s72, %s73
    %p77 = pneg %p71
    %p78 = scmp.eq.s32.totalorder %s10, 1
    %p79 = por %p77, %p78
    %p80 = scmp.ne.s32.totalorder %s72, %s75
    %p81 = scmp.eq.s32.totalorder %s10, 0
    %p82 = por %p80, %p81
    %p83 = scmp.ne.s32.totalorder %s72, %s75
    %p84 = scmp.eq.s32.totalorder %s15, 1
    %p85 = por %p83, %p84
    %p86 = scmp.ne.s32.totalorder %s75, %s76
    %p87 = scmp.eq.s32.totalorder %s15, 0
    %p88 = por %p86, %p87
    %p89 = scmp.ne.s32.totalorder %s75, %s76
    %p90 = scmp.eq.s32.totalorder %s16, 1
    %p91 = por %p89, %p90
    %p93 = scmp.ne.s32.totalorder %s76, %s92
    %p94 = scmp.eq.s32.totalorder %s16, 0
    %p95 = por %p93, %p94
    %s96 = ssub.s32 %s10, %s17
    %p97 = scmp.eq.s32.totalorder %s96, 0
    %s99 = sadd.s32 %s98, 1
    %s100 = scalar_select %p97, %s98, %s99
    %p103 = pneg %p97
    %p104 = scmp.eq.s32.totalorder %s10, 1
    %p105 = por %p103, %p104
    %p106 = scmp.ne.s32.totalorder %s98, %s101
    %p107 = scmp.eq.s32.totalorder %s10, 0
    %p108 = por %p106, %p107
    %p109 = scmp.ne.s32.totalorder %s98, %s101
    %p110 = scmp.eq.s32.totalorder %s15, 1
    %p111 = por %p109, %p110
    %p112 = scmp.ne.s32.totalorder %s101, %s102
    %p113 = scmp.eq.s32.totalorder %s15, 0
    %p114 = por %p112, %p113
    %p115 = scmp.ne.s32.totalorder %s101, %s102
    %p116 = scmp.eq.s32.totalorder %s16, 1
    %p117 = por %p115, %p116
    %p119 = scmp.ne.s32.totalorder %s102, %s118
    %p120 = scmp.eq.s32.totalorder %s16, 0
    %p121 = por %p119, %p120
    %s122 = ssub.s32 %s10, %s17
    %p123 = scmp.eq.s32.totalorder %s122, 0
    %s125 = sadd.s32 %s124, 1
    %s126 = scalar_select %p123, %s124, %s125
    %p129 = pneg %p123
    %p130 = scmp.eq.s32.totalorder %s10, 1
    %p131 = por %p129, %p130
    %p132 = scmp.ne.s32.totalorder %s124, %s127
    %p133 = scmp.eq.s32.totalorder %s10, 0
    %p134 = por %p132, %p133
    %p135 = scmp.ne.s32.totalorder %s124, %s127
    %p136 = scmp.eq.s32.totalorder %s15, 1
    %p137 = por %p135, %p136
    %p138 = scmp.ne.s32.totalorder %s127, %s128
    %p139 = scmp.eq.s32.totalorder %s15, 0
    %p140 = por %p138, %p139
    %p141 = scmp.ne.s32.totalorder %s127, %s128
    %p142 = scmp.eq.s32.totalorder %s16, 1
    %p143 = por %p141, %p142
    %p145 = scmp.ne.s32.totalorder %s128, %s144
    %p146 = scmp.eq.s32.totalorder %s16, 0
    %p147 = por %p145, %p146
    %p148 = scmp.le.s32.totalorder 1, %s10
    %p149 = scmp.lt.s32.totalorder %s10, 3
    %p150 = pnand %p148, %p149
    %p151 = pneg %p150
    // Predicated region
    $region9: #{_lambda_.20} parent=5 // pred_check
      _
    $region10: #{_lambda_.20} parent=5 // pred_check_branch
      %153 = sbr.rel (%p150) target = $region12
    $region11: #{_lambda_.20} parent=5 // pred_region
      %s154 = ssub.s32 %s10, 1
    $region12: #{_lambda_.20} parent=5 // pred_fallthru
      _
    %p155 = scmp.lt.s32.totalorder %s10, 2
    // Predicated region
    $region13: #{_lambda_.20} parent=5 // pred_check
      %p156 = pneg %p155
    $region14: #{_lambda_.20} parent=5 // pred_check_branch
      %158 = sbr.rel (%p156) target = $region16
    $region15: #{_lambda_.20} parent=5 // pred_region
      // Predicated region
      $region17: #{_lambda_.20} parent=15 // pred_check
        %p159 = pneg %p30
      $region18: #{_lambda_.20} parent=15 // pred_check_branch
        %161 = sbr.rel (%p159) target = $region20
      $region19: #{_lambda_.20} parent=15 // pred_region
        %p162 = scmp.lt.s32.totalorder %s10, 1
        %s163 = scalar_select %p162, %s10, 1
        %s164 = smul.addr %s163, 2
        %s165 = smul.addr %s164, 8
        %s166 = scalar_lea.vmem %s0, %s165
      $region20: #{_lambda_.20} parent=15 // pred_fallthru
        _
      // Predicated region
      $region21: #{_lambda_.20} parent=15 // pred_check
        %p167 = pneg %p56
      $region22: #{_lambda_.20} parent=15 // pred_check_branch
        %169 = sbr.rel (%p167) target = $region24
      $region23: #{_lambda_.20} parent=15 // pred_region
        %p170 = scmp.lt.s32.totalorder %s10, 1
        %s171 = scalar_select %p170, %s10, 1
        %s172 = smul.addr %s171, 2
        %s173 = smul.addr %s172, 8
        %s174 = scalar_lea.vmem %s1, %s173
      $region24: #{_lambda_.20} parent=15 // pred_fallthru
        _
      // Predicated region
      $region25: #{_lambda_.20} parent=15 // pred_check
        %p175 = pneg %p82
      $region26: #{_lambda_.20} parent=15 // pred_check_branch
        %177 = sbr.rel (%p175) target = $region28
      $region27: #{_lambda_.20} parent=15 // pred_region
        %p178 = scmp.lt.s32.totalorder %s10, 1
        %s179 = scalar_select %p178, %s10, 1
        %s180 = smul.addr %s179, 2
        %s181 = smul.addr %s180, 8
        %s182 = scalar_lea.vmem %s2, %s181
      $region28: #{_lambda_.20} parent=15 // pred_fallthru
        _
      // Predicated region
      $region29: #{_lambda_.20} parent=15 // pred_check
        %p183 = pneg %p108
      $region30: #{_lambda_.20} parent=15 // pred_check_branch
        %185 = sbr.rel (%p183) target = $region32
      $region31: #{_lambda_.20} parent=15 // pred_region
        %p186 = scmp.lt.s32.totalorder %s10, 1
        %s187 = scalar_select %p186, %s10, 1
        %s188 = smul.addr %s187, 2
        %s189 = smul.addr %s188, 8
        %s190 = scalar_lea.vmem %s3, %s189
      $region32: #{_lambda_.20} parent=15 // pred_fallthru
        _
    $region16: #{_lambda_.20} parent=5 // pred_fallthru
      _
    %p191 = scmp.le.s32.totalorder 1, %s10
    %p192 = scmp.lt.s32.totalorder %s10, 3
    %p193 = pnand %p191, %p192
    %p194 = pneg %p193
    // Predicated region
    $region33: #{_lambda_.20} parent=5 // pred_check
      _
    $region34: #{_lambda_.20} parent=5 // pred_check_branch
      %196 = sbr.rel (%p193) target = $region36
    $region35: #{_lambda_.20} parent=5 // pred_region
      %s197 = ssub.s32 %s10, 1
      %p198 = scmp.lt.s32.totalorder %s15, 1
      %s199 = scalar_select %p198, %s15, 1
      %s200 = smul.addr %s199, 2
      %s201 = smul.addr %s200, 8
      %s202 = scalar_lea.vmem %s0, %s201
      %p203 = pneg %p36
      %p204 = pneg %p33
      %p205 = scmp.lt.s32.totalorder %s15, 1
      %s206 = scalar_select %p205, %s15, 1
      %s207 = smul.addr %s206, 2
      %s208 = smul.addr %s207, 8
      %s209 = scalar_lea.vmem %s1, %s208
      %p210 = pneg %p62
      %p211 = pneg %p59
      %p212 = scmp.lt.s32.totalorder %s15, 1
      %s213 = scalar_select %p212, %s15, 1
      %s214 = smul.addr %s213, 2
      %s215 = smul.addr %s214, 8
      %s216 = scalar_lea.vmem %s2, %s215
      %p217 = pneg %p88
      %p218 = pneg %p85
      %p219 = scmp.lt.s32.totalorder %s15, 1
      %s220 = scalar_select %p219, %s15, 1
      %s221 = smul.addr %s220, 2
      %s222 = smul.addr %s221, 8
      %s223 = scalar_lea.vmem %s3, %s222
      %p224 = pneg %p114
      %p225 = pneg %p111
      %p226 = pneg %p140
      %p227 = pneg %p137
      %p228 = scmp.lt.s32.totalorder %s15, 1
      %s229 = scalar_select %p228, %s15, 1
      %s230 = smul.addr %s229, 2
      %s231 = smul.addr %s230, 8
      %s232 = scalar_lea.vmem %s4, %s231
      %p233 = scmp.lt.s32.totalorder %s15, 1
      %s234 = scalar_select %p233, %s15, 1
      %s235 = smul.addr %s234, 2
      %s236 = smul.addr %s235, 8
      %s237 = scalar_lea.vmem %s0, %s236
      %p238 = scmp.lt.s32.totalorder %s15, 1
      %s239 = scalar_select %p238, %s15, 1
      %s240 = smul.addr %s239, 2
      %s241 = smul.addr %s240, 8
      %s242 = scalar_lea.vmem %s1, %s241
      %p243 = scmp.lt.s32.totalorder %s15, 1
      %s244 = scalar_select %p243, %s15, 1
      %s245 = smul.addr %s244, 2
      %s246 = smul.addr %s245, 8
      %s247 = scalar_lea.vmem %s2, %s246
      %p248 = scmp.lt.s32.totalorder %s15, 1
      %s249 = scalar_select %p248, %s15, 1
      %s250 = smul.addr %s249, 2
      %s251 = smul.addr %s250, 8
      %s252 = scalar_lea.vmem %s3, %s251
      %p253 = scmp.lt.s32.totalorder %s15, 1
      %s254 = scalar_select %p253, %s15, 1
      %s255 = smul.addr %s254, 2
      %s256 = smul.addr %s255, 8
      %s257 = scalar_lea.vmem %s4, %s256
      %v258 = vld [vmem:[%s237] sm:$0xff]
      %v259 = vld [vmem:[%s237 + $0x8] sm:$0xff]
      %v260 = vld [vmem:[%s242] sm:$0xff]
      %v261 = vld [vmem:[%s242 + $0x8] sm:$0xff]
      %v262 = vadd.f32 %v258, %v260
      %v263 = vadd.f32 %v259, %v261
      %v264 = vld [vmem:[%s247] sm:$0xff]
      %v265 = vld [vmem:[%s247 + $0x8] sm:$0xff]
      %v266 = vadd.f32 %v262, %v264
      %v267 = vadd.f32 %v263, %v265
      %v268 = vld [vmem:[%s252] sm:$0xff]
      %v269 = vld [vmem:[%s252 + $0x8] sm:$0xff]
      %v270 = vadd.f32 %v266, %v268
      %v271 = vadd.f32 %v267, %v269
      %v272 = vmul.f32 %v270, 0.25
      %v273 = vmul.f32 %v271, 0.25
      %vm274 = vcmask 130048
      %275 = vst.msk [vmem:[%s257] sm:$0xff] %vm274, %v272
      %276 = vst.msk [vmem:[%s257 + $0x8] sm:$0xff] %vm274, %v273
      %p277 = scmp.lt.s32.totalorder %s15, 1
      %s278 = scalar_select %p277, %s15, 1
      %s279 = smul.addr %s278, 2
      %s280 = smul.addr %s279, 8
      %s281 = scalar_lea.vmem %s4, %s280
      // Predicated region
      $region37: #{_lambda_.20} parent=35 // pred_check
        %p282 = pneg %p137
      $region38: #{_lambda_.20} parent=35 // pred_check_branch
        %284 = sbr.rel (%p282) target = $region40
      $region39: #{_lambda_.20} parent=35 // pred_region
        _
      $region40: #{_lambda_.20} parent=35 // pred_fallthru
        _
    $region36: #{_lambda_.20} parent=5 // pred_fallthru
      _
    %p285 = scmp.le.s32.totalorder 2, %s10
    // Predicated region
    $region41: #{_lambda_.20} parent=5 // pred_check
      %p286 = pneg %p285
    $region42: #{_lambda_.20} parent=5 // pred_check_branch
      %288 = sbr.rel (%p286) target = $region44
    $region43: #{_lambda_.20} parent=5 // pred_region
      %s289 = ssub.s32 %s10, 2
      // Predicated region
      $region45: #{_lambda_.20} parent=43 // pred_check
        %p290 = pneg %p143
      $region46: #{_lambda_.20} parent=43 // pred_check_branch
        %292 = sbr.rel (%p290) target = $region48
      $region47: #{_lambda_.20} parent=43 // pred_region
        %p293 = scmp.lt.s32.totalorder %s16, 1
        %s294 = scalar_select %p293, %s16, 1
        %s295 = smul.addr %s294, 2
        %s296 = smul.addr %s295, 8
        %s297 = scalar_lea.vmem %s4, %s296
      $region48: #{_lambda_.20} parent=43 // pred_fallthru
        _
    $region44: #{_lambda_.20} parent=5 // pred_fallthru
      _
  $region6: #{_lambda_.20} parent=0 // loop_footer
    %s14 = sadd.s32 1, %s10
  $region7: #{_lambda_.20} parent=0 // loop_footer_branch
    %9 = sbr.rel target = $region3
  $region8: #{_lambda_.20} parent=0 // loop_exit
    _

// kernel: _lambda_.19
$region0: #{_lambda_.19}
  #allocation0 [shape = 'u32[]', space=smem, size = 0x4, offset = 0x4, fixed_abs, tag = 'smem constant byte address 0x4 - core index']
  #allocation1 [shape = 'u32[144,128]{1,0:T(1,128)}', space=vmem, size = 0x12000, scoped, tag = 'internal scratch']
  %s0 = inlined_call_operand.vmem [shape: bf16[2,144,16], index: 0, kind: input, shape index: {}]
  %s1 = inlined_call_operand.vmem [shape: bf16[16,144], index: 1, kind: input, shape index: {}]
  %s2 = inlined_call_operand.vmem [shape: f32[16,1], index: 2, kind: input, shape index: {}]
  %s3 = inlined_call_operand.vmem [shape: f32[16,1], index: 3, kind: input, shape index: {}]
  %s4 = inlined_call_operand.vmem [shape: f32[2,16,16], index: 4, kind: output, shape index: {}]
  %s5 = sld [smem:[#allocation0]]
  $region49: #{_lambda_.19} parent=0
    _
  %s7 = ssub.s32 1, %s5
  %s8 = scalar_select 0, %s7, %s5
  loop: start=0, step=1, limit=4
  $region2: #{_lambda_.19} parent=0 // loop_pre_header
    _
  $region3: #{_lambda_.19} parent=0 // loop_header
    %s10 = sphi 0, %s14
    %p11 = scmp.ge.s32.totalorder %s10, 4
    %s20 = sphi 0, %s22
    %s23 = sphi 0, %s20
    %s24 = sphi 0, %s23
    %s40 = sphi 0, %s24
    %s44 = sphi 0, %s44
    %s46 = sphi 0, %s44
    %s47 = sphi 0, %s46
    %s61 = sphi 0, %s47
    %s65 = sphi 0, %s65
    %s67 = sphi 0, %s65
    %s68 = sphi 0, %s67
    %s82 = sphi 0, %s68
    %s86 = sphi 0, %s86
    %s88 = sphi 0, %s86
    %s89 = sphi 0, %s88
    %s103 = sphi 0, %s89
    %s109 = sphi 0, %s111
    %s112 = sphi 0, %s109
    %s113 = sphi 0, %s112
    %s129 = sphi 0, %s113
  $region4: #{_lambda_.19} parent=0 // loop_header_branch
    %13 = sbr.rel (%p11) target = $region8
  $region5: #{_lambda_.19} parent=0 // loop_body
    %s15 = ssub.s32 %s10, 1
    %s16 = ssub.s32 %s10, 2
    %s17 = sadd.s32 %s10, 1
    %s18 = ssub.s32 %s10, %s17
    %p19 = scmp.eq.s32.totalorder %s18, 0
    %s21 = sadd.s32 %s20, 1
    %s22 = scalar_select %p19, %s20, %s21
    %p25 = pneg %p19
    %p26 = scmp.eq.s32.totalorder %s10, 1
    %p27 = por %p25, %p26
    %p28 = scmp.ne.s32.totalorder %s20, %s23
    %p29 = scmp.eq.s32.totalorder %s10, 0
    %p30 = por %p28, %p29
    %p31 = scmp.ne.s32.totalorder %s20, %s23
    %p32 = scmp.eq.s32.totalorder %s15, 1
    %p33 = por %p31, %p32
    %p34 = scmp.ne.s32.totalorder %s23, %s24
    %p35 = scmp.eq.s32.totalorder %s15, 0
    %p36 = por %p34, %p35
    %p37 = scmp.ne.s32.totalorder %s23, %s24
    %p38 = scmp.eq.s32.totalorder %s16, 1
    %p39 = por %p37, %p38
    %p41 = scmp.ne.s32.totalorder %s24, %s40
    %p42 = scmp.eq.s32.totalorder %s16, 0
    %p43 = por %p41, %p42
    %s45 = sadd.s32 %s44, 1
    %p48 = scmp.eq.s32.totalorder %s10, 1
    %p49 = scmp.ne.s32.totalorder %s44, %s46
    %p50 = scmp.eq.s32.totalorder %s10, 0
    %p51 = por %p49, %p50
    %p52 = scmp.ne.s32.totalorder %s44, %s46
    %p53 = scmp.eq.s32.totalorder %s15, 1
    %p54 = por %p52, %p53
    %p55 = scmp.ne.s32.totalorder %s46, %s47
    %p56 = scmp.eq.s32.totalorder %s15, 0
    %p57 = por %p55, %p56
    %p58 = scmp.ne.s32.totalorder %s46, %s47
    %p59 = scmp.eq.s32.totalorder %s16, 1
    %p60 = por %p58, %p59
    %p62 = scmp.ne.s32.totalorder %s47, %s61
    %p63 = scmp.eq.s32.totalorder %s16, 0
    %p64 = por %p62, %p63
    %s66 = sadd.s32 %s65, 1
    %p69 = scmp.eq.s32.totalorder %s10, 1
    %p70 = scmp.ne.s32.totalorder %s65, %s67
    %p71 = scmp.eq.s32.totalorder %s10, 0
    %p72 = por %p70, %p71
    %p73 = scmp.ne.s32.totalorder %s65, %s67
    %p74 = scmp.eq.s32.totalorder %s15, 1
    %p75 = por %p73, %p74
    %p76 = scmp.ne.s32.totalorder %s67, %s68
    %p77 = scmp.eq.s32.totalorder %s15, 0
    %p78 = por %p76, %p77
    %p79 = scmp.ne.s32.totalorder %s67, %s68
    %p80 = scmp.eq.s32.totalorder %s16, 1
    %p81 = por %p79, %p80
    %p83 = scmp.ne.s32.totalorder %s68, %s82
    %p84 = scmp.eq.s32.totalorder %s16, 0
    %p85 = por %p83, %p84
    %s87 = sadd.s32 %s86, 1
    %p90 = scmp.eq.s32.totalorder %s10, 1
    %p91 = scmp.ne.s32.totalorder %s86, %s88
    %p92 = scmp.eq.s32.totalorder %s10, 0
    %p93 = por %p91, %p92
    %p94 = scmp.ne.s32.totalorder %s86, %s88
    %p95 = scmp.eq.s32.totalorder %s15, 1
    %p96 = por %p94, %p95
    %p97 = scmp.ne.s32.totalorder %s88, %s89
    %p98 = scmp.eq.s32.totalorder %s15, 0
    %p99 = por %p97, %p98
    %p100 = scmp.ne.s32.totalorder %s88, %s89
    %p101 = scmp.eq.s32.totalorder %s16, 1
    %p102 = por %p100, %p101
    %p104 = scmp.ne.s32.totalorder %s89, %s103
    %p105 = scmp.eq.s32.totalorder %s16, 0
    %p106 = por %p104, %p105
    %s107 = ssub.s32 %s10, %s17
    %p108 = scmp.eq.s32.totalorder %s107, 0
    %s110 = sadd.s32 %s109, 1
    %s111 = scalar_select %p108, %s109, %s110
    %p114 = pneg %p108
    %p115 = scmp.eq.s32.totalorder %s10, 1
    %p116 = por %p114, %p115
    %p117 = scmp.ne.s32.totalorder %s109, %s112
    %p118 = scmp.eq.s32.totalorder %s10, 0
    %p119 = por %p117, %p118
    %p120 = scmp.ne.s32.totalorder %s109, %s112
    %p121 = scmp.eq.s32.totalorder %s15, 1
    %p122 = por %p120, %p121
    %p123 = scmp.ne.s32.totalorder %s112, %s113
    %p124 = scmp.eq.s32.totalorder %s15, 0
    %p125 = por %p123, %p124
    %p126 = scmp.ne.s32.totalorder %s112, %s113
    %p127 = scmp.eq.s32.totalorder %s16, 1
    %p128 = por %p126, %p127
    %p130 = scmp.ne.s32.totalorder %s113, %s129
    %p131 = scmp.eq.s32.totalorder %s16, 0
    %p132 = por %p130, %p131
    %p133 = scmp.le.s32.totalorder 1, %s10
    %p134 = scmp.lt.s32.totalorder %s10, 3
    %p135 = pnand %p133, %p134
    %p136 = pneg %p135
    // Predicated region
    $region9: #{_lambda_.19} parent=5 // pred_check
      _
    $region10: #{_lambda_.19} parent=5 // pred_check_branch
      %138 = sbr.rel (%p135) target = $region12
    $region11: #{_lambda_.19} parent=5 // pred_region
      %s139 = ssub.s32 %s10, 1
      // Predicated region
      $region13: #{_lambda_.19} parent=11 // pred_check
        %p140 = pneg %p57
      $region14: #{_lambda_.19} parent=11 // pred_check_branch
        %142 = sbr.rel (%p140) target = $region16
      $region15: #{_lambda_.19} parent=11 // pred_region
        _
      $region16: #{_lambda_.19} parent=11 // pred_fallthru
        _
      // Predicated region
      $region17: #{_lambda_.19} parent=11 // pred_check
        %p143 = pneg %p78
      $region18: #{_lambda_.19} parent=11 // pred_check_branch
        %145 = sbr.rel (%p143) target = $region20
      $region19: #{_lambda_.19} parent=11 // pred_region
        _
      $region20: #{_lambda_.19} parent=11 // pred_fallthru
        _
      // Predicated region
      $region21: #{_lambda_.19} parent=11 // pred_check
        %p146 = pneg %p99
      $region22: #{_lambda_.19} parent=11 // pred_check_branch
        %148 = sbr.rel (%p146) target = $region24
      $region23: #{_lambda_.19} parent=11 // pred_region
        _
      $region24: #{_lambda_.19} parent=11 // pred_fallthru
        _
    $region12: #{_lambda_.19} parent=5 // pred_fallthru
      _
    %p149 = scmp.lt.s32.totalorder %s10, 2
    // Predicated region
    $region25: #{_lambda_.19} parent=5 // pred_check
      %p150 = pneg %p149
    $region26: #{_lambda_.19} parent=5 // pred_check_branch
      %152 = sbr.rel (%p150) target = $region28
    $region27: #{_lambda_.19} parent=5 // pred_region
      // Predicated region
      $region29: #{_lambda_.19} parent=27 // pred_check
        %p153 = pneg %p30
      $region30: #{_lambda_.19} parent=27 // pred_check_branch
        %155 = sbr.rel (%p153) target = $region32
      $region31: #{_lambda_.19} parent=27 // pred_region
        %p156 = scmp.lt.s32.totalorder %s10, 1
        %s157 = scalar_select %p156, %s10, 1
        %s158 = smul.addr %s157, 18
        %s159 = smul.addr %s158, 4
        %s160 = scalar_lea.vmem %s0, %s159
      $region32: #{_lambda_.19} parent=27 // pred_fallthru
        _
    $region28: #{_lambda_.19} parent=5 // pred_fallthru
      _
    %p161 = scmp.le.s32.totalorder 1, %s10
    %p162 = scmp.lt.s32.totalorder %s10, 3
    %p163 = pnand %p161, %p162
    %p164 = pneg %p163
    // Predicated region
    $region33: #{_lambda_.19} parent=5 // pred_check
      _
    $region34: #{_lambda_.19} parent=5 // pred_check_branch
      %166 = sbr.rel (%p163) target = $region36
    $region35: #{_lambda_.19} parent=5 // pred_region
      %s167 = ssub.s32 %s10, 1
      %p168 = scmp.lt.s32.totalorder %s15, 1
      %s169 = scalar_select %p168, %s15, 1
      %s170 = smul.addr %s169, 18
      %s171 = smul.addr %s170, 4
      %s172 = scalar_lea.vmem %s0, %s171
      %p173 = pneg %p36
      %p174 = pneg %p33
      %p175 = pneg %p57
      %p176 = pneg %p54
      %p177 = pneg %p78
      %p178 = pneg %p75
      %p179 = pneg %p99
      %p180 = pneg %p96
      %p181 = pneg %p125
      %p182 = pneg %p122
      %p183 = scmp.lt.s32.totalorder %s15, 1
      %s184 = scalar_select %p183, %s15, 1
      %s185 = smul.addr %s184, 2
      %s186 = smul.addr %s185, 8
      %s187 = scalar_lea.vmem %s4, %s186
      %p188 = scmp.lt.s32.totalorder %s15, 1
      %s189 = scalar_select %p188, %s15, 1
      %s190 = smul.addr %s189, 18
      %s191 = smul.addr %s190, 4
      %s192 = scalar_lea.vmem %s0, %s191
      %p193 = scmp.lt.s32.totalorder %s15, 1
      %s194 = scalar_select %p193, %s15, 1
      %s195 = smul.addr %s194, 2
      %s196 = smul.addr %s195, 8
      %s197 = scalar_lea.vmem %s4, %s196
      %v199 = vld [vmem:[%s1] sm:$0xff]
      %v200 = vld [vmem:[%s1 + $0x8] sm:$0xff]
      %v201 = vld [vmem:[%s192] sm:$0xf]
      %v202 = vld [vmem:[%s192 + $0x4] sm:$0xf]
      %v203 = vld [vmem:[%s192 + $0x8] sm:$0xf]
      %v204 = vld [vmem:[%s192 + $0xc] sm:$0xf]
      %v205 = vld [vmem:[%s192 + $0x10] sm:$0xf]
      %v206 = vld [vmem:[%s192 + $0x14] sm:$0xf]
      %v207 = vld [vmem:[%s192 + $0x18] sm:$0xf]
      %v208 = vld [vmem:[%s192 + $0x1c] sm:$0xf]
      %v209 = vld [vmem:[%s192 + $0x20] sm:$0xf]
      %v210 = vld [vmem:[%s192 + $0x24] sm:$0xf]
      %v211 = vld [vmem:[%s192 + $0x28] sm:$0xf]
      %v212 = vld [vmem:[%s192 + $0x2c] sm:$0xf]
      %v213 = vld [vmem:[%s192 + $0x30] sm:$0xf]
      %v214 = vld [vmem:[%s192 + $0x34] sm:$0xf]
      %v215 = vld [vmem:[%s192 + $0x38] sm:$0xf]
      %v216 = vld [vmem:[%s192 + $0x3c] sm:$0xf]
      %v217 = vld [vmem:[%s192 + $0x40] sm:$0xf]
      %v218 = vld [vmem:[%s192 + $0x44] sm:$0xf]
      %v221 = vunpack.c.l.b16 %v199
      %v222 = vunpack.c.h.b16 %v199
      %v223 = vunpack.c.l.b16 %v200
      %v224 = vunpack.c.h.b16 %v200
      %v225 = vpack.c.b16 %v223, %v221
      %v226 = vpack.c.b16 %v224, %v222
      %v246 = vunpack.c.l.b16 %v201
      %v247 = vunpack.c.l.b16 %v202
      %v248 = vunpack.c.l.b16 %v203
      %v249 = vunpack.c.l.b16 %v204
      %v250 = vunpack.c.l.b16 %v205
      %v251 = vunpack.c.l.b16 %v206
      %v252 = vunpack.c.l.b16 %v207
      %v253 = vunpack.c.l.b16 %v208
      %v254 = vunpack.c.l.b16 %v209
      %v255 = vunpack.c.l.b16 %v210
      %v256 = vunpack.c.l.b16 %v211
      %v257 = vunpack.c.l.b16 %v212
      %v258 = vunpack.c.l.b16 %v213
      %v259 = vunpack.c.l.b16 %v214
      %v260 = vunpack.c.l.b16 %v215
      %v261 = vunpack.c.l.b16 %v216
      %v262 = vunpack.c.l.b16 %v217
      %v263 = vunpack.c.l.b16 %v218
      %v264 = vpack.c.b16 %v247, %v246
      %v265 = vpack.c.b16 %v249, %v248
      %v266 = vpack.c.b16 %v251, %v250
      %v267 = vpack.c.b16 %v253, %v252
      %v268 = vpack.c.b16 %v255, %v254
      %v269 = vpack.c.b16 %v257, %v256
      %v270 = vpack.c.b16 %v259, %v258
      %v271 = vpack.c.b16 %v261, %v260
      %v272 = vpack.c.b16 %v263, %v262
      %vm282 = vcmask 130048
      %v284 = vsel %vm282, %v226, 0
      %286 = vmatprep.subr.bf16.mxu0 0
      %287 = vmatpush1.bf16.msra.mxu0 %v271
      %288 = vmatprep.subr.bf16.mxu0 0
      %289 = vmatpush1.bf16.msra.mxu0 %v270
      %290 = vmatprep.subr.bf16.mxu0 0
      %291 = vmatpush1.bf16.msra.mxu0 %v269
      %292 = vmatprep.subr.bf16.mxu0 0
      %293 = vmatpush1.bf16.msra.mxu0 %v268
      %294 = vmatprep.subr.bf16.mxu0 0
      %295 = vmatpush1.bf16.msra.mxu0 %v267
      %296 = vmatprep.subr.bf16.mxu0 0
      %297 = vmatpush1.bf16.msra.mxu0 %v266
      %298 = vmatprep.subr.bf16.mxu0 0
      %299 = vmatpush1.bf16.msra.mxu0 %v265
      %300 = vmatprep.subr.bf16.mxu0 0
      %301 = vmatpush1.bf16.msra.mxu0 %v264
      %302 = vmatprep.subr.bf16.mxu0 0
      %303 = vmatpush2.bf16.msra.mxu0 0
      %304 = vmatprep.subr.bf16.mxu0 0
      %305 = vmatpush2.bf16.msra.mxu0 0
      %306 = vmatprep.subr.bf16.mxu0 0
      %307 = vmatpush2.bf16.msra.mxu0 0
      %308 = vmatprep.subr.bf16.mxu0 0
      %309 = vmatpush2.bf16.msra.mxu0 0
      %310 = vmatprep.subr.bf16.mxu0 0
      %311 = vmatpush2.bf16.msra.mxu0 0
      %312 = vmatprep.subr.bf16.mxu0 0
      %313 = vmatpush2.bf16.msra.mxu0 0
      %314 = vmatprep.subr.bf16.mxu0 0
      %315 = vmatpush2.bf16.msra.mxu0 0
      %316 = vmatprep.subr.bf16.mxu0 0
      %317 = vmatpush2.bf16.msra.mxu0 %v272
      %318 = vmatprep.mubr.bf16.mxu0 %v284
      %319 = vmatmul.mubr.bf16.gmra.mxu0 %v225
      %v320 = vpop.f32.mrf.mxu0
      %v321 = vadd.f32 0.0, %v320
      %v322 = vpop.f32.mrf.mxu0
      %v323 = vpop.f32.mrf.mxu0
      %v324 = vadd.f32 0.0, %v323
      %v325 = vpop.f32.mrf.mxu0
      %326 = vdwg.mxu0
      %v327 = vld [vmem:[%s2] sm:$0xff]
      %v328 = vld [vmem:[%s2 + $0x8] sm:$0xff]
      %v329 = vld [vmem:[%s3] sm:$0xff]
      %v330 = vld [vmem:[%s3 + $0x8] sm:$0xff]
      %v331 = vsel %vm282, %v321, 0.0
      %332 = vadd.xlane.f32.xlu0 %v331
      %v333 = vpop.xlane.xlu0 %332
      %v334 = vsel %vm282, %v324, 0.0
      %335 = vadd.xlane.f32.xlu0 %v334
      %v336 = vpop.xlane.xlu0 %335
      %v337 = vrcp.pop 16.0
      %v338 = vmul.f32 %v333, %v337
      %v339 = vmul.f32 %v336, %v337
      %v340 = vsub.f32 %v321, %v338
      %v341 = vsub.f32 %v324, %v339
      %v342 = vmul.f32 %v340, %v340
      %v343 = vmul.f32 %v341, %v341
      %v344 = vsel %vm282, %v342, 0.0
      %345 = vadd.xlane.f32.xlu0 %v344
      %v346 = vpop.xlane.xlu0 %345
      %v347 = vsel %vm282, %v343, 0.0
      %348 = vadd.xlane.f32.xlu0 %v347
      %v349 = vpop.xlane.xlu0 %348
      %v350 = vmul.f32 %v346, %v337
      %v351 = vmul.f32 %v349, %v337
      %v352 = vadd.f32 %v350, 1e-05
      %v353 = vadd.f32 %v351, 1e-05
      %v354 = vrsqrt.pop %v352
      %v355 = vrsqrt.pop %v353
      %v356 = vmul.f32 %v340, %v354
      %v357 = vmul.f32 %v341, %v355
      %359 = vset.pattern.permute.xlu0 0
      %360 = vperm.xlu0 %359, %v327
      %v361 = vpop.permute.xlu0 %360
      %364 = vset.pattern.permute.xlu0 0
      %365 = vperm.xlu0 %364, %v328
      %v366 = vpop.permute.xlu0 %365
      %v368 = vmul.f32 %v356, %v361
      %v369 = vmul.f32 %v357, %v366
      %371 = vset.pattern.permute.xlu0 0
      %372 = vperm.xlu0 %371, %v329
      %v373 = vpop.permute.xlu0 %372
      %376 = vset.pattern.permute.xlu0 0
      %377 = vperm.xlu0 %376, %v330
      %v378 = vpop.permute.xlu0 %377
      %v380 = vadd.f32 %v368, %v373
      %v381 = vadd.f32 %v369, %v378
      %vm382 = vcmp.ge.f32.partialorder %v380, 0.0
      %vm383 = vcmp.ge.f32.partialorder %v381, 0.0
      %v384 = vmul.f32 %v380, 0.01
      %v385 = vmul.f32 %v381, 0.01
      %v386 = vsel %vm382, %v380, %v384
      %v387 = vsel %vm383, %v381, %v385
      %388 = vst.msk [vmem:[%s197] sm:$0xff] %vm282, %v386
      %389 = vst.msk [vmem:[%s197 + $0x8] sm:$0xff] %vm282, %v387
      %p390 = scmp.lt.s32.totalorder %s15, 1
      %s391 = scalar_select %p390, %s15, 1
      %s392 = smul.addr %s391, 2
      %s393 = smul.addr %s392, 8
      %s394 = scalar_lea.vmem %s4, %s393
      // Predicated region
      $region37: #{_lambda_.19} parent=35 // pred_check
        %p395 = pneg %p122
      $region38: #{_lambda_.19} parent=35 // pred_check_branch
        %397 = sbr.rel (%p395) target = $region40
      $region39: #{_lambda_.19} parent=35 // pred_region
        _
      $region40: #{_lambda_.19} parent=35 // pred_fallthru
        _
    $region36: #{_lambda_.19} parent=5 // pred_fallthru
      _
    %p398 = scmp.le.s32.totalorder 2, %s10
    // Predicated region
    $region41: #{_lambda_.19} parent=5 // pred_check
      %p399 = pneg %p398
    $region42: #{_lambda_.19} parent=5 // pred_check_branch
      %401 = sbr.rel (%p399) target = $region44
    $region43: #{_lambda_.19} parent=5 // pred_region
      %s402 = ssub.s32 %s10, 2
      // Predicated region
      $region45: #{_lambda_.19} parent=43 // pred_check
        %p403 = pneg %p128
      $region46: #{_lambda_.19} parent=43 // pred_check_branch
        %405 = sbr.rel (%p403) target = $region48
      $region47: #{_lambda_.19} parent=43 // pred_region
        %p406 = scmp.lt.s32.totalorder %s16, 1
        %s407 = scalar_select %p406, %s16, 1
        %s408 = smul.addr %s407, 2
        %s409 = smul.addr %s408, 8
        %s410 = scalar_lea.vmem %s4, %s409
      $region48: #{_lambda_.19} parent=43 // pred_fallthru
        _
    $region44: #{_lambda_.19} parent=5 // pred_fallthru
      _
  $region6: #{_lambda_.19} parent=0 // loop_footer
    %s14 = sadd.s32 1, %s10
  $region7: #{_lambda_.19} parent=0 // loop_footer_branch
    %9 = sbr.rel target = $region3
  $region8: #{_lambda_.19} parent=0 // loop_exit
    _

// kernel: _lambda_.21
$region0: #{_lambda_.21}
  #allocation0 [shape = 'u32[]', space=smem, size = 0x4, offset = 0x4, fixed_abs, tag = 'smem constant byte address 0x4 - core index']
  #allocation1 [shape = 'u32[144,128]{1,0:T(1,128)}', space=vmem, size = 0x12000, scoped, tag = 'internal scratch']
  %s0 = inlined_call_operand.vmem [shape: bf16[2,144,16], index: 0, kind: input, shape index: {}]
  %s1 = inlined_call_operand.vmem [shape: bf16[16,144], index: 1, kind: input, shape index: {}]
  %s2 = inlined_call_operand.vmem [shape: f32[16,1], index: 2, kind: input, shape index: {}]
  %s3 = inlined_call_operand.vmem [shape: f32[16,1], index: 3, kind: input, shape index: {}]
  %s4 = inlined_call_operand.vmem [shape: f32[2,16,16], index: 4, kind: input, shape index: {}]
  %s5 = inlined_call_operand.vmem [shape: f32[2,16,16], index: 5, kind: output, shape index: {}]
  %s6 = sld [smem:[#allocation0]]
  $region53: #{_lambda_.21} parent=0
    _
  %s8 = ssub.s32 1, %s6
  %s9 = scalar_select 0, %s8, %s6
  loop: start=0, step=1, limit=4
  $region2: #{_lambda_.21} parent=0 // loop_pre_header
    _
  $region3: #{_lambda_.21} parent=0 // loop_header
    %s11 = sphi 0, %s15
    %p12 = scmp.ge.s32.totalorder %s11, 4
    %s21 = sphi 0, %s23
    %s24 = sphi 0, %s21
    %s25 = sphi 0, %s24
    %s41 = sphi 0, %s25
    %s45 = sphi 0, %s45
    %s47 = sphi 0, %s45
    %s48 = sphi 0, %s47
    %s62 = sphi 0, %s48
    %s66 = sphi 0, %s66
    %s68 = sphi 0, %s66
    %s69 = sphi 0, %s68
    %s83 = sphi 0, %s69
    %s87 = sphi 0, %s87
    %s89 = sphi 0, %s87
    %s90 = sphi 0, %s89
    %s104 = sphi 0, %s90
    %s110 = sphi 0, %s112
    %s113 = sphi 0, %s110
    %s114 = sphi 0, %s113
    %s130 = sphi 0, %s114
    %s136 = sphi 0, %s138
    %s139 = sphi 0, %s136
    %s140 = sphi 0, %s139
    %s156 = sphi 0, %s140
  $region4: #{_lambda_.21} parent=0 // loop_header_branch
    %14 = sbr.rel (%p12) target = $region8
  $region5: #{_lambda_.21} parent=0 // loop_body
    %s16 = ssub.s32 %s11, 1
    %s17 = ssub.s32 %s11, 2
    %s18 = sadd.s32 %s11, 1
    %s19 = ssub.s32 %s11, %s18
    %p20 = scmp.eq.s32.totalorder %s19, 0
    %s22 = sadd.s32 %s21, 1
    %s23 = scalar_select %p20, %s21, %s22
    %p26 = pneg %p20
    %p27 = scmp.eq.s32.totalorder %s11, 1
    %p28 = por %p26, %p27
    %p29 = scmp.ne.s32.totalorder %s21, %s24
    %p30 = scmp.eq.s32.totalorder %s11, 0
    %p31 = por %p29, %p30
    %p32 = scmp.ne.s32.totalorder %s21, %s24
    %p33 = scmp.eq.s32.totalorder %s16, 1
    %p34 = por %p32, %p33
    %p35 = scmp.ne.s32.totalorder %s24, %s25
    %p36 = scmp.eq.s32.totalorder %s16, 0
    %p37 = por %p35, %p36
    %p38 = scmp.ne.s32.totalorder %s24, %s25
    %p39 = scmp.eq.s32.totalorder %s17, 1
    %p40 = por %p38, %p39
    %p42 = scmp.ne.s32.totalorder %s25, %s41
    %p43 = scmp.eq.s32.totalorder %s17, 0
    %p44 = por %p42, %p43
    %s46 = sadd.s32 %s45, 1
    %p49 = scmp.eq.s32.totalorder %s11, 1
    %p50 = scmp.ne.s32.totalorder %s45, %s47
    %p51 = scmp.eq.s32.totalorder %s11, 0
    %p52 = por %p50, %p51
    %p53 = scmp.ne.s32.totalorder %s45, %s47
    %p54 = scmp.eq.s32.totalorder %s16, 1
    %p55 = por %p53, %p54
    %p56 = scmp.ne.s32.totalorder %s47, %s48
    %p57 = scmp.eq.s32.totalorder %s16, 0
    %p58 = por %p56, %p57
    %p59 = scmp.ne.s32.totalorder %s47, %s48
    %p60 = scmp.eq.s32.totalorder %s17, 1
    %p61 = por %p59, %p60
    %p63 = scmp.ne.s32.totalorder %s48, %s62
    %p64 = scmp.eq.s32.totalorder %s17, 0
    %p65 = por %p63, %p64
    %s67 = sadd.s32 %s66, 1
    %p70 = scmp.eq.s32.totalorder %s11, 1
    %p71 = scmp.ne.s32.totalorder %s66, %s68
    %p72 = scmp.eq.s32.totalorder %s11, 0
    %p73 = por %p71, %p72
    %p74 = scmp.ne.s32.totalorder %s66, %s68
    %p75 = scmp.eq.s32.totalorder %s16, 1
    %p76 = por %p74, %p75
    %p77 = scmp.ne.s32.totalorder %s68, %s69
    %p78 = scmp.eq.s32.totalorder %s16, 0
    %p79 = por %p77, %p78
    %p80 = scmp.ne.s32.totalorder %s68, %s69
    %p81 = scmp.eq.s32.totalorder %s17, 1
    %p82 = por %p80, %p81
    %p84 = scmp.ne.s32.totalorder %s69, %s83
    %p85 = scmp.eq.s32.totalorder %s17, 0
    %p86 = por %p84, %p85
    %s88 = sadd.s32 %s87, 1
    %p91 = scmp.eq.s32.totalorder %s11, 1
    %p92 = scmp.ne.s32.totalorder %s87, %s89
    %p93 = scmp.eq.s32.totalorder %s11, 0
    %p94 = por %p92, %p93
    %p95 = scmp.ne.s32.totalorder %s87, %s89
    %p96 = scmp.eq.s32.totalorder %s16, 1
    %p97 = por %p95, %p96
    %p98 = scmp.ne.s32.totalorder %s89, %s90
    %p99 = scmp.eq.s32.totalorder %s16, 0
    %p100 = por %p98, %p99
    %p101 = scmp.ne.s32.totalorder %s89, %s90
    %p102 = scmp.eq.s32.totalorder %s17, 1
    %p103 = por %p101, %p102
    %p105 = scmp.ne.s32.totalorder %s90, %s104
    %p106 = scmp.eq.s32.totalorder %s17, 0
    %p107 = por %p105, %p106
    %s108 = ssub.s32 %s11, %s18
    %p109 = scmp.eq.s32.totalorder %s108, 0
    %s111 = sadd.s32 %s110, 1
    %s112 = scalar_select %p109, %s110, %s111
    %p115 = pneg %p109
    %p116 = scmp.eq.s32.totalorder %s11, 1
    %p117 = por %p115, %p116
    %p118 = scmp.ne.s32.totalorder %s110, %s113
    %p119 = scmp.eq.s32.totalorder %s11, 0
    %p120 = por %p118, %p119
    %p121 = scmp.ne.s32.totalorder %s110, %s113
    %p122 = scmp.eq.s32.totalorder %s16, 1
    %p123 = por %p121, %p122
    %p124 = scmp.ne.s32.totalorder %s113, %s114
    %p125 = scmp.eq.s32.totalorder %s16, 0
    %p126 = por %p124, %p125
    %p127 = scmp.ne.s32.totalorder %s113, %s114
    %p128 = scmp.eq.s32.totalorder %s17, 1
    %p129 = por %p127, %p128
    %p131 = scmp.ne.s32.totalorder %s114, %s130
    %p132 = scmp.eq.s32.totalorder %s17, 0
    %p133 = por %p131, %p132
    %s134 = ssub.s32 %s11, %s18
    %p135 = scmp.eq.s32.totalorder %s134, 0
    %s137 = sadd.s32 %s136, 1
    %s138 = scalar_select %p135, %s136, %s137
    %p141 = pneg %p135
    %p142 = scmp.eq.s32.totalorder %s11, 1
    %p143 = por %p141, %p142
    %p144 = scmp.ne.s32.totalorder %s136, %s139
    %p145 = scmp.eq.s32.totalorder %s11, 0
    %p146 = por %p144, %p145
    %p147 = scmp.ne.s32.totalorder %s136, %s139
    %p148 = scmp.eq.s32.totalorder %s16, 1
    %p149 = por %p147, %p148
    %p150 = scmp.ne.s32.totalorder %s139, %s140
    %p151 = scmp.eq.s32.totalorder %s16, 0
    %p152 = por %p150, %p151
    %p153 = scmp.ne.s32.totalorder %s139, %s140
    %p154 = scmp.eq.s32.totalorder %s17, 1
    %p155 = por %p153, %p154
    %p157 = scmp.ne.s32.totalorder %s140, %s156
    %p158 = scmp.eq.s32.totalorder %s17, 0
    %p159 = por %p157, %p158
    %p160 = scmp.le.s32.totalorder 1, %s11
    %p161 = scmp.lt.s32.totalorder %s11, 3
    %p162 = pnand %p160, %p161
    %p163 = pneg %p162
    // Predicated region
    $region9: #{_lambda_.21} parent=5 // pred_check
      _
    $region10: #{_lambda_.21} parent=5 // pred_check_branch
      %165 = sbr.rel (%p162) target = $region12
    $region11: #{_lambda_.21} parent=5 // pred_region
      %s166 = ssub.s32 %s11, 1
      // Predicated region
      $region13: #{_lambda_.21} parent=11 // pred_check
        %p167 = pneg %p58
      $region14: #{_lambda_.21} parent=11 // pred_check_branch
        %169 = sbr.rel (%p167) target = $region16
      $region15: #{_lambda_.21} parent=11 // pred_region
        _
      $region16: #{_lambda_.21} parent=11 // pred_fallthru
        _
      // Predicated region
      $region17: #{_lambda_.21} parent=11 // pred_check
        %p170 = pneg %p79
      $region18: #{_lambda_.21} parent=11 // pred_check_branch
        %172 = sbr.rel (%p170) target = $region20
      $region19: #{_lambda_.21} parent=11 // pred_region
        _
      $region20: #{_lambda_.21} parent=11 // pred_fallthru
        _
      // Predicated region
      $region21: #{_lambda_.21} parent=11 // pred_check
        %p173 = pneg %p100
      $region22: #{_lambda_.21} parent=11 // pred_check_branch
        %175 = sbr.rel (%p173) target = $region24
      $region23: #{_lambda_.21} parent=11 // pred_region
        _
      $region24: #{_lambda_.21} parent=11 // pred_fallthru
        _
    $region12: #{_lambda_.21} parent=5 // pred_fallthru
      _
    %p176 = scmp.lt.s32.totalorder %s11, 2
    // Predicated region
    $region25: #{_lambda_.21} parent=5 // pred_check
      %p177 = pneg %p176
    $region26: #{_lambda_.21} parent=5 // pred_check_branch
      %179 = sbr.rel (%p177) target = $region28
    $region27: #{_lambda_.21} parent=5 // pred_region
      // Predicated region
      $region29: #{_lambda_.21} parent=27 // pred_check
        %p180 = pneg %p31
      $region30: #{_lambda_.21} parent=27 // pred_check_branch
        %182 = sbr.rel (%p180) target = $region32
      $region31: #{_lambda_.21} parent=27 // pred_region
        %p183 = scmp.lt.s32.totalorder %s11, 1
        %s184 = scalar_select %p183, %s11, 1
        %s185 = smul.addr %s184, 18
        %s186 = smul.addr %s185, 4
        %s187 = scalar_lea.vmem %s0, %s186
      $region32: #{_lambda_.21} parent=27 // pred_fallthru
        _
      // Predicated region
      $region33: #{_lambda_.21} parent=27 // pred_check
        %p188 = pneg %p120
      $region34: #{_lambda_.21} parent=27 // pred_check_branch
        %190 = sbr.rel (%p188) target = $region36
      $region35: #{_lambda_.21} parent=27 // pred_region
        %p191 = scmp.lt.s32.totalorder %s11, 1
        %s192 = scalar_select %p191, %s11, 1
        %s193 = smul.addr %s192, 2
        %s194 = smul.addr %s193, 8
        %s195 = scalar_lea.vmem %s4, %s194
      $region36: #{_lambda_.21} parent=27 // pred_fallthru
        _
    $region28: #{_lambda_.21} parent=5 // pred_fallthru
      _
    %p196 = scmp.le.s32.totalorder 1, %s11
    %p197 = scmp.lt.s32.totalorder %s11, 3
    %p198 = pnand %p196, %p197
    %p199 = pneg %p198
    // Predicated region
    $region37: #{_lambda_.21} parent=5 // pred_check
      _
    $region38: #{_lambda_.21} parent=5 // pred_check_branch
      %201 = sbr.rel (%p198) target = $region40
    $region39: #{_lambda_.21} parent=5 // pred_region
      %s202 = ssub.s32 %s11, 1
      %p203 = scmp.lt.s32.totalorder %s16, 1
      %s204 = scalar_select %p203, %s16, 1
      %s205 = smul.addr %s204, 18
      %s206 = smul.addr %s205, 4
      %s207 = scalar_lea.vmem %s0, %s206
      %p208 = pneg %p37
      %p209 = pneg %p34
      %p210 = pneg %p58
      %p211 = pneg %p55
      %p212 = pneg %p79
      %p213 = pneg %p76
      %p214 = pneg %p100
      %p215 = pneg %p97
      %p216 = scmp.lt.s32.totalorder %s16, 1
      %s217 = scalar_select %p216, %s16, 1
      %s218 = smul.addr %s217, 2
      %s219 = smul.addr %s218, 8
      %s220 = scalar_lea.vmem %s4, %s219
      %p221 = pneg %p126
      %p222 = pneg %p123
      %p223 = pneg %p152
      %p224 = pneg %p149
      %p225 = scmp.lt.s32.totalorder %s16, 1
      %s226 = scalar_select %p225, %s16, 1
      %s227 = smul.addr %s226, 2
      %s228 = smul.addr %s227, 8
      %s229 = scalar_lea.vmem %s5, %s228
      %p230 = scmp.lt.s32.totalorder %s16, 1
      %s231 = scalar_select %p230, %s16, 1
      %s232 = smul.addr %s231, 18
      %s233 = smul.addr %s232, 4
      %s234 = scalar_lea.vmem %s0, %s233
      %p235 = scmp.lt.s32.totalorder %s16, 1
      %s236 = scalar_select %p235, %s16, 1
      %s237 = smul.addr %s236, 2
      %s238 = smul.addr %s237, 8
      %s239 = scalar_lea.vmem %s4, %s238
      %p240 = scmp.lt.s32.totalorder %s16, 1
      %s241 = scalar_select %p240, %s16, 1
      %s242 = smul.addr %s241, 2
      %s243 = smul.addr %s242, 8
      %s244 = scalar_lea.vmem %s5, %s243
      %v246 = vld [vmem:[%s1] sm:$0xff]
      %v247 = vld [vmem:[%s1 + $0x8] sm:$0xff]
      %v248 = vld [vmem:[%s234] sm:$0xf]
      %v249 = vld [vmem:[%s234 + $0x4] sm:$0xf]
      %v250 = vld [vmem:[%s234 + $0x8] sm:$0xf]
      %v251 = vld [vmem:[%s234 + $0xc] sm:$0xf]
      %v252 = vld [vmem:[%s234 + $0x10] sm:$0xf]
      %v253 = vld [vmem:[%s234 + $0x14] sm:$0xf]
      %v254 = vld [vmem:[%s234 + $0x18] sm:$0xf]
      %v255 = vld [vmem:[%s234 + $0x1c] sm:$0xf]
      %v256 = vld [vmem:[%s234 + $0x20] sm:$0xf]
      %v257 = vld [vmem:[%s234 + $0x24] sm:$0xf]
      %v258 = vld [vmem:[%s234 + $0x28] sm:$0xf]
      %v259 = vld [vmem:[%s234 + $0x2c] sm:$0xf]
      %v260 = vld [vmem:[%s234 + $0x30] sm:$0xf]
      %v261 = vld [vmem:[%s234 + $0x34] sm:$0xf]
      %v262 = vld [vmem:[%s234 + $0x38] sm:$0xf]
      %v263 = vld [vmem:[%s234 + $0x3c] sm:$0xf]
      %v264 = vld [vmem:[%s234 + $0x40] sm:$0xf]
      %v265 = vld [vmem:[%s234 + $0x44] sm:$0xf]
      %v268 = vunpack.c.l.b16 %v246
      %v269 = vunpack.c.h.b16 %v246
      %v270 = vunpack.c.l.b16 %v247
      %v271 = vunpack.c.h.b16 %v247
      %v272 = vpack.c.b16 %v270, %v268
      %v273 = vpack.c.b16 %v271, %v269
      %v293 = vunpack.c.l.b16 %v248
      %v294 = vunpack.c.l.b16 %v249
      %v295 = vunpack.c.l.b16 %v250
      %v296 = vunpack.c.l.b16 %v251
      %v297 = vunpack.c.l.b16 %v252
      %v298 = vunpack.c.l.b16 %v253
      %v299 = vunpack.c.l.b16 %v254
      %v300 = vunpack.c.l.b16 %v255
      %v301 = vunpack.c.l.b16 %v256
      %v302 = vunpack.c.l.b16 %v257
      %v303 = vunpack.c.l.b16 %v258
      %v304 = vunpack.c.l.b16 %v259
      %v305 = vunpack.c.l.b16 %v260
      %v306 = vunpack.c.l.b16 %v261
      %v307 = vunpack.c.l.b16 %v262
      %v308 = vunpack.c.l.b16 %v263
      %v309 = vunpack.c.l.b16 %v264
      %v310 = vunpack.c.l.b16 %v265
      %v311 = vpack.c.b16 %v294, %v293
      %v312 = vpack.c.b16 %v296, %v295
      %v313 = vpack.c.b16 %v298, %v297
      %v314 = vpack.c.b16 %v300, %v299
      %v315 = vpack.c.b16 %v302, %v301
      %v316 = vpack.c.b16 %v304, %v303
      %v317 = vpack.c.b16 %v306, %v305
      %v318 = vpack.c.b16 %v308, %v307
      %v319 = vpack.c.b16 %v310, %v309
      %vm329 = vcmask 130048
      %v331 = vsel %vm329, %v273, 0
      %333 = vmatprep.subr.bf16.mxu0 0
      %334 = vmatpush1.bf16.msra.mxu0 %v318
      %335 = vmatprep.subr.bf16.mxu0 0
      %336 = vmatpush1.bf16.msra.mxu0 %v317
      %337 = vmatprep.subr.bf16.mxu0 0
      %338 = vmatpush1.bf16.msra.mxu0 %v316
      %339 = vmatprep.subr.bf16.mxu0 0
      %340 = vmatpush1.bf16.msra.mxu0 %v315
      %341 = vmatprep.subr.bf16.mxu0 0
      %342 = vmatpush1.bf16.msra.mxu0 %v314
      %343 = vmatprep.subr.bf16.mxu0 0
      %344 = vmatpush1.bf16.msra.mxu0 %v313
      %345 = vmatprep.subr.bf16.mxu0 0
      %346 = vmatpush1.bf16.msra.mxu0 %v312
      %347 = vmatprep.subr.bf16.mxu0 0
      %348 = vmatpush1.bf16.msra.mxu0 %v311
      %349 = vmatprep.subr.bf16.mxu0 0
      %350 = vmatpush2.bf16.msra.mxu0 0
      %351 = vmatprep.subr.bf16.mxu0 0
      %352 = vmatpush2.bf16.msra.mxu0 0
      %353 = vmatprep.subr.bf16.mxu0 0
      %354 = vmatpush2.bf16.msra.mxu0 0
      %355 = vmatprep.subr.bf16.mxu0 0
      %356 = vmatpush2.bf16.msra.mxu0 0
      %357 = vmatprep.subr.bf16.mxu0 0
      %358 = vmatpush2.bf16.msra.mxu0 0
      %359 = vmatprep.subr.bf16.mxu0 0
      %360 = vmatpush2.bf16.msra.mxu0 0
      %361 = vmatprep.subr.bf16.mxu0 0
      %362 = vmatpush2.bf16.msra.mxu0 0
      %363 = vmatprep.subr.bf16.mxu0 0
      %364 = vmatpush2.bf16.msra.mxu0 %v319
      %365 = vmatprep.mubr.bf16.mxu0 %v331
      %366 = vmatmul.mubr.bf16.gmra.mxu0 %v272
      %v367 = vpop.f32.mrf.mxu0
      %v368 = vadd.f32 0.0, %v367
      %v369 = vpop.f32.mrf.mxu0
      %v370 = vpop.f32.mrf.mxu0
      %v371 = vadd.f32 0.0, %v370
      %v372 = vpop.f32.mrf.mxu0
      %373 = vdwg.mxu0
      %v374 = vld [vmem:[%s2] sm:$0xff]
      %v375 = vld [vmem:[%s2 + $0x8] sm:$0xff]
      %v376 = vld [vmem:[%s3] sm:$0xff]
      %v377 = vld [vmem:[%s3 + $0x8] sm:$0xff]
      %v378 = vsel %vm329, %v368, 0.0
      %379 = vadd.xlane.f32.xlu0 %v378
      %v380 = vpop.xlane.xlu0 %379
      %v381 = vsel %vm329, %v371, 0.0
      %382 = vadd.xlane.f32.xlu0 %v381
      %v383 = vpop.xlane.xlu0 %382
      %v384 = vrcp.pop 16.0
      %v385 = vmul.f32 %v380, %v384
      %v386 = vmul.f32 %v383, %v384
      %v387 = vsub.f32 %v368, %v385
      %v388 = vsub.f32 %v371, %v386
      %v389 = vmul.f32 %v387, %v387
      %v390 = vmul.f32 %v388, %v388
      %v391 = vsel %vm329, %v389, 0.0
      %392 = vadd.xlane.f32.xlu0 %v391
      %v393 = vpop.xlane.xlu0 %392
      %v394 = vsel %vm329, %v390, 0.0
      %395 = vadd.xlane.f32.xlu0 %v394
      %v396 = vpop.xlane.xlu0 %395
      %v397 = vmul.f32 %v393, %v384
      %v398 = vmul.f32 %v396, %v384
      %v399 = vadd.f32 %v397, 1e-05
      %v400 = vadd.f32 %v398, 1e-05
      %v401 = vrsqrt.pop %v399
      %v402 = vrsqrt.pop %v400
      %v403 = vmul.f32 %v387, %v401
      %v404 = vmul.f32 %v388, %v402
      %406 = vset.pattern.permute.xlu0 0
      %407 = vperm.xlu0 %406, %v374
      %v408 = vpop.permute.xlu0 %407
      %411 = vset.pattern.permute.xlu0 0
      %412 = vperm.xlu0 %411, %v375
      %v413 = vpop.permute.xlu0 %412
      %v415 = vmul.f32 %v403, %v408
      %v416 = vmul.f32 %v404, %v413
      %418 = vset.pattern.permute.xlu0 0
      %419 = vperm.xlu0 %418, %v376
      %v420 = vpop.permute.xlu0 %419
      %423 = vset.pattern.permute.xlu0 0
      %424 = vperm.xlu0 %423, %v377
      %v425 = vpop.permute.xlu0 %424
      %v427 = vadd.f32 %v415, %v420
      %v428 = vadd.f32 %v416, %v425
      %v429 = vld [vmem:[%s239] sm:$0xff]
      %v430 = vld [vmem:[%s239 + $0x8] sm:$0xff]
      %v431 = vadd.f32 %v427, %v429
      %v432 = vadd.f32 %v428, %v430
      %vm433 = vcmp.ge.f32.partialorder %v431, 0.0
      %vm434 = vcmp.ge.f32.partialorder %v432, 0.0
      %v435 = vmul.f32 %v431, 0.01
      %v436 = vmul.f32 %v432, 0.01
      %v437 = vsel %vm433, %v431, %v435
      %v438 = vsel %vm434, %v432, %v436
      %439 = vst.msk [vmem:[%s244] sm:$0xff] %vm329, %v437
      %440 = vst.msk [vmem:[%s244 + $0x8] sm:$0xff] %vm329, %v438
      %p441 = scmp.lt.s32.totalorder %s16, 1
      %s442 = scalar_select %p441, %s16, 1
      %s443 = smul.addr %s442, 2
      %s444 = smul.addr %s443, 8
      %s445 = scalar_lea.vmem %s5, %s444
      // Predicated region
      $region41: #{_lambda_.21} parent=39 // pred_check
        %p446 = pneg %p149
      $region42: #{_lambda_.21} parent=39 // pred_check_branch
        %448 = sbr.rel (%p446) target = $region44
      $region43: #{_lambda_.21} parent=39 // pred_region
        _
      $region44: #{_lambda_.21} parent=39 // pred_fallthru
        _
    $region40: #{_lambda_.21} parent=5 // pred_fallthru
      _
    %p449 = scmp.le.s32.totalorder 2, %s11
    // Predicated region
    $region45: #{_lambda_.21} parent=5 // pred_check
      %p450 = pneg %p449
    $region46: #{_lambda_.21} parent=5 // pred_check_branch
      %452 = sbr.rel (%p450) target = $region48
    $region47: #{_lambda_.21} parent=5 // pred_region
      %s453 = ssub.s32 %s11, 2
      // Predicated region
      $region49: #{_lambda_.21} parent=47 // pred_check
        %p454 = pneg %p155
      $region50: #{_lambda_.21} parent=47 // pred_check_branch
        %456 = sbr.rel (%p454) target = $region52
      $region51: #{_lambda_.21} parent=47 // pred_region
        %p457 = scmp.lt.s32.totalorder %s17, 1
        %s458 = scalar_select %p457, %s17, 1
        %s459 = smul.addr %s458, 2
        %s460 = smul.addr %s459, 8
        %s461 = scalar_lea.vmem %s5, %s460
      $region52: #{_lambda_.21} parent=47 // pred_fallthru
        _
    $region48: #{_lambda_.21} parent=5 // pred_fallthru
      _
  $region6: #{_lambda_.21} parent=0 // loop_footer
    %s15 = sadd.s32 1, %s11
  $region7: #{_lambda_.21} parent=0 // loop_footer_branch
    %10 = sbr.rel target = $region3
  $region8: #{_lambda_.21} parent=0 // loop_exit
    _

// kernel: _lambda_.23
$region0: #{_lambda_.23}
  #allocation0 [shape = 'u32[]', space=smem, size = 0x4, offset = 0x4, fixed_abs, tag = 'smem constant byte address 0x4 - core index']
  #allocation1 [shape = 'u32[144,128]{1,0:T(1,128)}', space=vmem, size = 0x12000, scoped, tag = 'internal scratch']
  %s0 = inlined_call_operand.vmem [shape: f32[2,16,4], index: 0, kind: input, shape index: {}]
  %s1 = inlined_call_operand.vmem [shape: f32[2,16,4], index: 1, kind: input, shape index: {}]
  %s2 = inlined_call_operand.vmem [shape: f32[2,16,4], index: 2, kind: input, shape index: {}]
  %s3 = inlined_call_operand.vmem [shape: f32[2,16,4], index: 3, kind: input, shape index: {}]
  %s4 = inlined_call_operand.vmem [shape: f32[2,16,4], index: 4, kind: output, shape index: {}]
  %s5 = sld [smem:[#allocation0]]
  $region49: #{_lambda_.23} parent=0
    _
  %s7 = ssub.s32 1, %s5
  %s8 = scalar_select 0, %s7, %s5
  loop: start=0, step=1, limit=4
  $region2: #{_lambda_.23} parent=0 // loop_pre_header
    _
  $region3: #{_lambda_.23} parent=0 // loop_header
    %s10 = sphi 0, %s14
    %p11 = scmp.ge.s32.totalorder %s10, 4
    %s20 = sphi 0, %s22
    %s23 = sphi 0, %s20
    %s24 = sphi 0, %s23
    %s40 = sphi 0, %s24
    %s46 = sphi 0, %s48
    %s49 = sphi 0, %s46
    %s50 = sphi 0, %s49
    %s66 = sphi 0, %s50
    %s72 = sphi 0, %s74
    %s75 = sphi 0, %s72
    %s76 = sphi 0, %s75
    %s92 = sphi 0, %s76
    %s98 = sphi 0, %s100
    %s101 = sphi 0, %s98
    %s102 = sphi 0, %s101
    %s118 = sphi 0, %s102
    %s124 = sphi 0, %s126
    %s127 = sphi 0, %s124
    %s128 = sphi 0, %s127
    %s144 = sphi 0, %s128
  $region4: #{_lambda_.23} parent=0 // loop_header_branch
    %13 = sbr.rel (%p11) target = $region8
  $region5: #{_lambda_.23} parent=0 // loop_body
    %s15 = ssub.s32 %s10, 1
    %s16 = ssub.s32 %s10, 2
    %s17 = sadd.s32 %s10, 1
    %s18 = ssub.s32 %s10, %s17
    %p19 = scmp.eq.s32.totalorder %s18, 0
    %s21 = sadd.s32 %s20, 1
    %s22 = scalar_select %p19, %s20, %s21
    %p25 = pneg %p19
    %p26 = scmp.eq.s32.totalorder %s10, 1
    %p27 = por %p25, %p26
    %p28 = scmp.ne.s32.totalorder %s20, %s23
    %p29 = scmp.eq.s32.totalorder %s10, 0
    %p30 = por %p28, %p29
    %p31 = scmp.ne.s32.totalorder %s20, %s23
    %p32 = scmp.eq.s32.totalorder %s15, 1
    %p33 = por %p31, %p32
    %p34 = scmp.ne.s32.totalorder %s23, %s24
    %p35 = scmp.eq.s32.totalorder %s15, 0
    %p36 = por %p34, %p35
    %p37 = scmp.ne.s32.totalorder %s23, %s24
    %p38 = scmp.eq.s32.totalorder %s16, 1
    %p39 = por %p37, %p38
    %p41 = scmp.ne.s32.totalorder %s24, %s40
    %p42 = scmp.eq.s32.totalorder %s16, 0
    %p43 = por %p41, %p42
    %s44 = ssub.s32 %s10, %s17
    %p45 = scmp.eq.s32.totalorder %s44, 0
    %s47 = sadd.s32 %s46, 1
    %s48 = scalar_select %p45, %s46, %s47
    %p51 = pneg %p45
    %p52 = scmp.eq.s32.totalorder %s10, 1
    %p53 = por %p51, %p52
    %p54 = scmp.ne.s32.totalorder %s46, %s49
    %p55 = scmp.eq.s32.totalorder %s10, 0
    %p56 = por %p54, %p55
    %p57 = scmp.ne.s32.totalorder %s46, %s49
    %p58 = scmp.eq.s32.totalorder %s15, 1
    %p59 = por %p57, %p58
    %p60 = scmp.ne.s32.totalorder %s49, %s50
    %p61 = scmp.eq.s32.totalorder %s15, 0
    %p62 = por %p60, %p61
    %p63 = scmp.ne.s32.totalorder %s49, %s50
    %p64 = scmp.eq.s32.totalorder %s16, 1
    %p65 = por %p63, %p64
    %p67 = scmp.ne.s32.totalorder %s50, %s66
    %p68 = scmp.eq.s32.totalorder %s16, 0
    %p69 = por %p67, %p68
    %s70 = ssub.s32 %s10, %s17
    %p71 = scmp.eq.s32.totalorder %s70, 0
    %s73 = sadd.s32 %s72, 1
    %s74 = scalar_select %p71, %s72, %s73
    %p77 = pneg %p71
    %p78 = scmp.eq.s32.totalorder %s10, 1
    %p79 = por %p77, %p78
    %p80 = scmp.ne.s32.totalorder %s72, %s75
    %p81 = scmp.eq.s32.totalorder %s10, 0
    %p82 = por %p80, %p81
    %p83 = scmp.ne.s32.totalorder %s72, %s75
    %p84 = scmp.eq.s32.totalorder %s15, 1
    %p85 = por %p83, %p84
    %p86 = scmp.ne.s32.totalorder %s75, %s76
    %p87 = scmp.eq.s32.totalorder %s15, 0
    %p88 = por %p86, %p87
    %p89 = scmp.ne.s32.totalorder %s75, %s76
    %p90 = scmp.eq.s32.totalorder %s16, 1
    %p91 = por %p89, %p90
    %p93 = scmp.ne.s32.totalorder %s76, %s92
    %p94 = scmp.eq.s32.totalorder %s16, 0
    %p95 = por %p93, %p94
    %s96 = ssub.s32 %s10, %s17
    %p97 = scmp.eq.s32.totalorder %s96, 0
    %s99 = sadd.s32 %s98, 1
    %s100 = scalar_select %p97, %s98, %s99
    %p103 = pneg %p97
    %p104 = scmp.eq.s32.totalorder %s10, 1
    %p105 = por %p103, %p104
    %p106 = scmp.ne.s32.totalorder %s98, %s101
    %p107 = scmp.eq.s32.totalorder %s10, 0
    %p108 = por %p106, %p107
    %p109 = scmp.ne.s32.totalorder %s98, %s101
    %p110 = scmp.eq.s32.totalorder %s15, 1
    %p111 = por %p109, %p110
    %p112 = scmp.ne.s32.totalorder %s101, %s102
    %p113 = scmp.eq.s32.totalorder %s15, 0
    %p114 = por %p112, %p113
    %p115 = scmp.ne.s32.totalorder %s101, %s102
    %p116 = scmp.eq.s32.totalorder %s16, 1
    %p117 = por %p115, %p116
    %p119 = scmp.ne.s32.totalorder %s102, %s118
    %p120 = scmp.eq.s32.totalorder %s16, 0
    %p121 = por %p119, %p120
    %s122 = ssub.s32 %s10, %s17
    %p123 = scmp.eq.s32.totalorder %s122, 0
    %s125 = sadd.s32 %s124, 1
    %s126 = scalar_select %p123, %s124, %s125
    %p129 = pneg %p123
    %p130 = scmp.eq.s32.totalorder %s10, 1
    %p131 = por %p129, %p130
    %p132 = scmp.ne.s32.totalorder %s124, %s127
    %p133 = scmp.eq.s32.totalorder %s10, 0
    %p134 = por %p132, %p133
    %p135 = scmp.ne.s32.totalorder %s124, %s127
    %p136 = scmp.eq.s32.totalorder %s15, 1
    %p137 = por %p135, %p136
    %p138 = scmp.ne.s32.totalorder %s127, %s128
    %p139 = scmp.eq.s32.totalorder %s15, 0
    %p140 = por %p138, %p139
    %p141 = scmp.ne.s32.totalorder %s127, %s128
    %p142 = scmp.eq.s32.totalorder %s16, 1
    %p143 = por %p141, %p142
    %p145 = scmp.ne.s32.totalorder %s128, %s144
    %p146 = scmp.eq.s32.totalorder %s16, 0
    %p147 = por %p145, %p146
    %p148 = scmp.le.s32.totalorder 1, %s10
    %p149 = scmp.lt.s32.totalorder %s10, 3
    %p150 = pnand %p148, %p149
    %p151 = pneg %p150
    // Predicated region
    $region9: #{_lambda_.23} parent=5 // pred_check
      _
    $region10: #{_lambda_.23} parent=5 // pred_check_branch
      %153 = sbr.rel (%p150) target = $region12
    $region11: #{_lambda_.23} parent=5 // pred_region
      %s154 = ssub.s32 %s10, 1
    $region12: #{_lambda_.23} parent=5 // pred_fallthru
      _
    %p155 = scmp.lt.s32.totalorder %s10, 2
    // Predicated region
    $region13: #{_lambda_.23} parent=5 // pred_check
      %p156 = pneg %p155
    $region14: #{_lambda_.23} parent=5 // pred_check_branch
      %158 = sbr.rel (%p156) target = $region16
    $region15: #{_lambda_.23} parent=5 // pred_region
      // Predicated region
      $region17: #{_lambda_.23} parent=15 // pred_check
        %p159 = pneg %p30
      $region18: #{_lambda_.23} parent=15 // pred_check_branch
        %161 = sbr.rel (%p159) target = $region20
      $region19: #{_lambda_.23} parent=15 // pred_region
        %p162 = scmp.lt.s32.totalorder %s10, 1
        %s163 = scalar_select %p162, %s10, 1
        %s164 = smul.addr %s163, 2
        %s165 = smul.addr %s164, 8
        %s166 = scalar_lea.vmem %s0, %s165
      $region20: #{_lambda_.23} parent=15 // pred_fallthru
        _
      // Predicated region
      $region21: #{_lambda_.23} parent=15 // pred_check
        %p167 = pneg %p56
      $region22: #{_lambda_.23} parent=15 // pred_check_branch
        %169 = sbr.rel (%p167) target = $region24
      $region23: #{_lambda_.23} parent=15 // pred_region
        %p170 = scmp.lt.s32.totalorder %s10, 1
        %s171 = scalar_select %p170, %s10, 1
        %s172 = smul.addr %s171, 2
        %s173 = smul.addr %s172, 8
        %s174 = scalar_lea.vmem %s1, %s173
      $region24: #{_lambda_.23} parent=15 // pred_fallthru
        _
      // Predicated region
      $region25: #{_lambda_.23} parent=15 // pred_check
        %p175 = pneg %p82
      $region26: #{_lambda_.23} parent=15 // pred_check_branch
        %177 = sbr.rel (%p175) target = $region28
      $region27: #{_lambda_.23} parent=15 // pred_region
        %p178 = scmp.lt.s32.totalorder %s10, 1
        %s179 = scalar_select %p178, %s10, 1
        %s180 = smul.addr %s179, 2
        %s181 = smul.addr %s180, 8
        %s182 = scalar_lea.vmem %s2, %s181
      $region28: #{_lambda_.23} parent=15 // pred_fallthru
        _
      // Predicated region
      $region29: #{_lambda_.23} parent=15 // pred_check
        %p183 = pneg %p108
      $region30: #{_lambda_.23} parent=15 // pred_check_branch
        %185 = sbr.rel (%p183) target = $region32
      $region31: #{_lambda_.23} parent=15 // pred_region
        %p186 = scmp.lt.s32.totalorder %s10, 1
        %s187 = scalar_select %p186, %s10, 1
        %s188 = smul.addr %s187, 2
        %s189 = smul.addr %s188, 8
        %s190 = scalar_lea.vmem %s3, %s189
      $region32: #{_lambda_.23} parent=15 // pred_fallthru
        _
    $region16: #{_lambda_.23} parent=5 // pred_fallthru
      _
    %p191 = scmp.le.s32.totalorder 1, %s10
    %p192 = scmp.lt.s32.totalorder %s10, 3
    %p193 = pnand %p191, %p192
    %p194 = pneg %p193
    // Predicated region
    $region33: #{_lambda_.23} parent=5 // pred_check
      _
    $region34: #{_lambda_.23} parent=5 // pred_check_branch
      %196 = sbr.rel (%p193) target = $region36
    $region35: #{_lambda_.23} parent=5 // pred_region
      %s197 = ssub.s32 %s10, 1
      %p198 = scmp.lt.s32.totalorder %s15, 1
      %s199 = scalar_select %p198, %s15, 1
      %s200 = smul.addr %s199, 2
      %s201 = smul.addr %s200, 8
      %s202 = scalar_lea.vmem %s0, %s201
      %p203 = pneg %p36
      %p204 = pneg %p33
      %p205 = scmp.lt.s32.totalorder %s15, 1
      %s206 = scalar_select %p205, %s15, 1
      %s207 = smul.addr %s206, 2
      %s208 = smul.addr %s207, 8
      %s209 = scalar_lea.vmem %s1, %s208
      %p210 = pneg %p62
      %p211 = pneg %p59
      %p212 = scmp.lt.s32.totalorder %s15, 1
      %s213 = scalar_select %p212, %s15, 1
      %s214 = smul.addr %s213, 2
      %s215 = smul.addr %s214, 8
      %s216 = scalar_lea.vmem %s2, %s215
      %p217 = pneg %p88
      %p218 = pneg %p85
      %p219 = scmp.lt.s32.totalorder %s15, 1
      %s220 = scalar_select %p219, %s15, 1
      %s221 = smul.addr %s220, 2
      %s222 = smul.addr %s221, 8
      %s223 = scalar_lea.vmem %s3, %s222
      %p224 = pneg %p114
      %p225 = pneg %p111
      %p226 = pneg %p140
      %p227 = pneg %p137
      %p228 = scmp.lt.s32.totalorder %s15, 1
      %s229 = scalar_select %p228, %s15, 1
      %s230 = smul.addr %s229, 2
      %s231 = smul.addr %s230, 8
      %s232 = scalar_lea.vmem %s4, %s231
      %p233 = scmp.lt.s32.totalorder %s15, 1
      %s234 = scalar_select %p233, %s15, 1
      %s235 = smul.addr %s234, 2
      %s236 = smul.addr %s235, 8
      %s237 = scalar_lea.vmem %s0, %s236
      %p238 = scmp.lt.s32.totalorder %s15, 1
      %s239 = scalar_select %p238, %s15, 1
      %s240 = smul.addr %s239, 2
      %s241 = smul.addr %s240, 8
      %s242 = scalar_lea.vmem %s1, %s241
      %p243 = scmp.lt.s32.totalorder %s15, 1
      %s244 = scalar_select %p243, %s15, 1
      %s245 = smul.addr %s244, 2
      %s246 = smul.addr %s245, 8
      %s247 = scalar_lea.vmem %s2, %s246
      %p248 = scmp.lt.s32.totalorder %s15, 1
      %s249 = scalar_select %p248, %s15, 1
      %s250 = smul.addr %s249, 2
      %s251 = smul.addr %s250, 8
      %s252 = scalar_lea.vmem %s3, %s251
      %p253 = scmp.lt.s32.totalorder %s15, 1
      %s254 = scalar_select %p253, %s15, 1
      %s255 = smul.addr %s254, 2
      %s256 = smul.addr %s255, 8
      %s257 = scalar_lea.vmem %s4, %s256
      %v258 = vld [vmem:[%s237] sm:$0xff]
      %v259 = vld [vmem:[%s237 + $0x8] sm:$0xff]
      %v260 = vld [vmem:[%s242] sm:$0xff]
      %v261 = vld [vmem:[%s242 + $0x8] sm:$0xff]
      %v262 = vadd.f32 %v258, %v260
      %v263 = vadd.f32 %v259, %v261
      %v264 = vld [vmem:[%s247] sm:$0xff]
      %v265 = vld [vmem:[%s247 + $0x8] sm:$0xff]
      %v266 = vadd.f32 %v262, %v264
      %v267 = vadd.f32 %v263, %v265
      %v268 = vld [vmem:[%s252] sm:$0xff]
      %v269 = vld [vmem:[%s252 + $0x8] sm:$0xff]
      %v270 = vadd.f32 %v266, %v268
      %v271 = vadd.f32 %v267, %v269
      %v272 = vmul.f32 %v270, 0.25
      %v273 = vmul.f32 %v271, 0.25
      %vm274 = vcmask 31744
      %275 = vst.msk [vmem:[%s257] sm:$0xff] %vm274, %v272
      %276 = vst.msk [vmem:[%s257 + $0x8] sm:$0xff] %vm274, %v273
      %p277 = scmp.lt.s32.totalorder %s15, 1
      %s278 = scalar_select %p277, %s15, 1
      %s279 = smul.addr %s278, 2
      %s280 = smul.addr %s279, 8
      %s281 = scalar_lea.vmem %s4, %s280
      // Predicated region
      $region37: #{_lambda_.23} parent=35 // pred_check
        %p282 = pneg %p137
      $region38: #{_lambda_.23} parent=35 // pred_check_branch
        %284 = sbr.rel (%p282) target = $region40
      $region39: #{_lambda_.23} parent=35 // pred_region
        _
      $region40: #{_lambda_.23} parent=35 // pred_fallthru
        _
    $region36: #{_lambda_.23} parent=5 // pred_fallthru
      _
    %p285 = scmp.le.s32.totalorder 2, %s10
    // Predicated region
    $region41: #{_lambda_.23} parent=5 // pred_check
      %p286 = pneg %p285
    $region42: #{_lambda_.23} parent=5 // pred_check_branch
      %288 = sbr.rel (%p286) target = $region44
    $region43: #{_lambda_.23} parent=5 // pred_region
      %s289 = ssub.s32 %s10, 2
      // Predicated region
      $region45: #{_lambda_.23} parent=43 // pred_check
        %p290 = pneg %p143
      $region46: #{_lambda_.23} parent=43 // pred_check_branch
        %292 = sbr.rel (%p290) target = $region48
      $region47: #{_lambda_.23} parent=43 // pred_region
        %p293 = scmp.lt.s32.totalorder %s16, 1
        %s294 = scalar_select %p293, %s16, 1
        %s295 = smul.addr %s294, 2
        %s296 = smul.addr %s295, 8
        %s297 = scalar_lea.vmem %s4, %s296
      $region48: #{_lambda_.23} parent=43 // pred_fallthru
        _
    $region44: #{_lambda_.23} parent=5 // pred_fallthru
      _
  $region6: #{_lambda_.23} parent=0 // loop_footer
    %s14 = sadd.s32 1, %s10
  $region7: #{_lambda_.23} parent=0 // loop_footer_branch
    %9 = sbr.rel target = $region3
  $region8: #{_lambda_.23} parent=0 // loop_exit
    _

// kernel: _lambda_.22
$region0: #{_lambda_.22}
  #allocation0 [shape = 'u32[]', space=smem, size = 0x4, offset = 0x4, fixed_abs, tag = 'smem constant byte address 0x4 - core index']
  #allocation1 [shape = 'u32[144,128]{1,0:T(1,128)}', space=vmem, size = 0x12000, scoped, tag = 'internal scratch']
  %s0 = inlined_call_operand.vmem [shape: bf16[2,144,4], index: 0, kind: input, shape index: {}]
  %s1 = inlined_call_operand.vmem [shape: bf16[16,144], index: 1, kind: input, shape index: {}]
  %s2 = inlined_call_operand.vmem [shape: f32[16,1], index: 2, kind: input, shape index: {}]
  %s3 = inlined_call_operand.vmem [shape: f32[16,1], index: 3, kind: input, shape index: {}]
  %s4 = inlined_call_operand.vmem [shape: f32[2,16,4], index: 4, kind: output, shape index: {}]
  %s5 = sld [smem:[#allocation0]]
  $region49: #{_lambda_.22} parent=0
    _
  %s7 = ssub.s32 1, %s5
  %s8 = scalar_select 0, %s7, %s5
  loop: start=0, step=1, limit=4
  $region2: #{_lambda_.22} parent=0 // loop_pre_header
    _
  $region3: #{_lambda_.22} parent=0 // loop_header
    %s10 = sphi 0, %s14
    %p11 = scmp.ge.s32.totalorder %s10, 4
    %s20 = sphi 0, %s22
    %s23 = sphi 0, %s20
    %s24 = sphi 0, %s23
    %s40 = sphi 0, %s24
    %s44 = sphi 0, %s44
    %s46 = sphi 0, %s44
    %s47 = sphi 0, %s46
    %s61 = sphi 0, %s47
    %s65 = sphi 0, %s65
    %s67 = sphi 0, %s65
    %s68 = sphi 0, %s67
    %s82 = sphi 0, %s68
    %s86 = sphi 0, %s86
    %s88 = sphi 0, %s86
    %s89 = sphi 0, %s88
    %s103 = sphi 0, %s89
    %s109 = sphi 0, %s111
    %s112 = sphi 0, %s109
    %s113 = sphi 0, %s112
    %s129 = sphi 0, %s113
  $region4: #{_lambda_.22} parent=0 // loop_header_branch
    %13 = sbr.rel (%p11) target = $region8
  $region5: #{_lambda_.22} parent=0 // loop_body
    %s15 = ssub.s32 %s10, 1
    %s16 = ssub.s32 %s10, 2
    %s17 = sadd.s32 %s10, 1
    %s18 = ssub.s32 %s10, %s17
    %p19 = scmp.eq.s32.totalorder %s18, 0
    %s21 = sadd.s32 %s20, 1
    %s22 = scalar_select %p19, %s20, %s21
    %p25 = pneg %p19
    %p26 = scmp.eq.s32.totalorder %s10, 1
    %p27 = por %p25, %p26
    %p28 = scmp.ne.s32.totalorder %s20, %s23
    %p29 = scmp.eq.s32.totalorder %s10, 0
    %p30 = por %p28, %p29
    %p31 = scmp.ne.s32.totalorder %s20, %s23
    %p32 = scmp.eq.s32.totalorder %s15, 1
    %p33 = por %p31, %p32
    %p34 = scmp.ne.s32.totalorder %s23, %s24
    %p35 = scmp.eq.s32.totalorder %s15, 0
    %p36 = por %p34, %p35
    %p37 = scmp.ne.s32.totalorder %s23, %s24
    %p38 = scmp.eq.s32.totalorder %s16, 1
    %p39 = por %p37, %p38
    %p41 = scmp.ne.s32.totalorder %s24, %s40
    %p42 = scmp.eq.s32.totalorder %s16, 0
    %p43 = por %p41, %p42
    %s45 = sadd.s32 %s44, 1
    %p48 = scmp.eq.s32.totalorder %s10, 1
    %p49 = scmp.ne.s32.totalorder %s44, %s46
    %p50 = scmp.eq.s32.totalorder %s10, 0
    %p51 = por %p49, %p50
    %p52 = scmp.ne.s32.totalorder %s44, %s46
    %p53 = scmp.eq.s32.totalorder %s15, 1
    %p54 = por %p52, %p53
    %p55 = scmp.ne.s32.totalorder %s46, %s47
    %p56 = scmp.eq.s32.totalorder %s15, 0
    %p57 = por %p55, %p56
    %p58 = scmp.ne.s32.totalorder %s46, %s47
    %p59 = scmp.eq.s32.totalorder %s16, 1
    %p60 = por %p58, %p59
    %p62 = scmp.ne.s32.totalorder %s47, %s61
    %p63 = scmp.eq.s32.totalorder %s16, 0
    %p64 = por %p62, %p63
    %s66 = sadd.s32 %s65, 1
    %p69 = scmp.eq.s32.totalorder %s10, 1
    %p70 = scmp.ne.s32.totalorder %s65, %s67
    %p71 = scmp.eq.s32.totalorder %s10, 0
    %p72 = por %p70, %p71
    %p73 = scmp.ne.s32.totalorder %s65, %s67
    %p74 = scmp.eq.s32.totalorder %s15, 1
    %p75 = por %p73, %p74
    %p76 = scmp.ne.s32.totalorder %s67, %s68
    %p77 = scmp.eq.s32.totalorder %s15, 0
    %p78 = por %p76, %p77
    %p79 = scmp.ne.s32.totalorder %s67, %s68
    %p80 = scmp.eq.s32.totalorder %s16, 1
    %p81 = por %p79, %p80
    %p83 = scmp.ne.s32.totalorder %s68, %s82
    %p84 = scmp.eq.s32.totalorder %s16, 0
    %p85 = por %p83, %p84
    %s87 = sadd.s32 %s86, 1
    %p90 = scmp.eq.s32.totalorder %s10, 1
    %p91 = scmp.ne.s32.totalorder %s86, %s88
    %p92 = scmp.eq.s32.totalorder %s10, 0
    %p93 = por %p91, %p92
    %p94 = scmp.ne.s32.totalorder %s86, %s88
    %p95 = scmp.eq.s32.totalorder %s15, 1
    %p96 = por %p94, %p95
    %p97 = scmp.ne.s32.totalorder %s88, %s89
    %p98 = scmp.eq.s32.totalorder %s15, 0
    %p99 = por %p97, %p98
    %p100 = scmp.ne.s32.totalorder %s88, %s89
    %p101 = scmp.eq.s32.totalorder %s16, 1
    %p102 = por %p100, %p101
    %p104 = scmp.ne.s32.totalorder %s89, %s103
    %p105 = scmp.eq.s32.totalorder %s16, 0
    %p106 = por %p104, %p105
    %s107 = ssub.s32 %s10, %s17
    %p108 = scmp.eq.s32.totalorder %s107, 0
    %s110 = sadd.s32 %s109, 1
    %s111 = scalar_select %p108, %s109, %s110
    %p114 = pneg %p108
    %p115 = scmp.eq.s32.totalorder %s10, 1
    %p116 = por %p114, %p115
    %p117 = scmp.ne.s32.totalorder %s109, %s112
    %p118 = scmp.eq.s32.totalorder %s10, 0
    %p119 = por %p117, %p118
    %p120 = scmp.ne.s32.totalorder %s109, %s112
    %p121 = scmp.eq.s32.totalorder %s15, 1
    %p122 = por %p120, %p121
    %p123 = scmp.ne.s32.totalorder %s112, %s113
    %p124 = scmp.eq.s32.totalorder %s15, 0
    %p125 = por %p123, %p124
    %p126 = scmp.ne.s32.totalorder %s112, %s113
    %p127 = scmp.eq.s32.totalorder %s16, 1
    %p128 = por %p126, %p127
    %p130 = scmp.ne.s32.totalorder %s113, %s129
    %p131 = scmp.eq.s32.totalorder %s16, 0
    %p132 = por %p130, %p131
    %p133 = scmp.le.s32.totalorder 1, %s10
    %p134 = scmp.lt.s32.totalorder %s10, 3
    %p135 = pnand %p133, %p134
    %p136 = pneg %p135
    // Predicated region
    $region9: #{_lambda_.22} parent=5 // pred_check
      _
    $region10: #{_lambda_.22} parent=5 // pred_check_branch
      %138 = sbr.rel (%p135) target = $region12
    $region11: #{_lambda_.22} parent=5 // pred_region
      %s139 = ssub.s32 %s10, 1
      // Predicated region
      $region13: #{_lambda_.22} parent=11 // pred_check
        %p140 = pneg %p57
      $region14: #{_lambda_.22} parent=11 // pred_check_branch
        %142 = sbr.rel (%p140) target = $region16
      $region15: #{_lambda_.22} parent=11 // pred_region
        _
      $region16: #{_lambda_.22} parent=11 // pred_fallthru
        _
      // Predicated region
      $region17: #{_lambda_.22} parent=11 // pred_check
        %p143 = pneg %p78
      $region18: #{_lambda_.22} parent=11 // pred_check_branch
        %145 = sbr.rel (%p143) target = $region20
      $region19: #{_lambda_.22} parent=11 // pred_region
        _
      $region20: #{_lambda_.22} parent=11 // pred_fallthru
        _
      // Predicated region
      $region21: #{_lambda_.22} parent=11 // pred_check
        %p146 = pneg %p99
      $region22: #{_lambda_.22} parent=11 // pred_check_branch
        %148 = sbr.rel (%p146) target = $region24
      $region23: #{_lambda_.22} parent=11 // pred_region
        _
      $region24: #{_lambda_.22} parent=11 // pred_fallthru
        _
    $region12: #{_lambda_.22} parent=5 // pred_fallthru
      _
    %p149 = scmp.lt.s32.totalorder %s10, 2
    // Predicated region
    $region25: #{_lambda_.22} parent=5 // pred_check
      %p150 = pneg %p149
    $region26: #{_lambda_.22} parent=5 // pred_check_branch
      %152 = sbr.rel (%p150) target = $region28
    $region27: #{_lambda_.22} parent=5 // pred_region
      // Predicated region
      $region29: #{_lambda_.22} parent=27 // pred_check
        %p153 = pneg %p30
      $region30: #{_lambda_.22} parent=27 // pred_check_branch
        %155 = sbr.rel (%p153) target = $region32
      $region31: #{_lambda_.22} parent=27 // pred_region
        %p156 = scmp.lt.s32.totalorder %s10, 1
        %s157 = scalar_select %p156, %s10, 1
        %s158 = smul.addr %s157, 18
        %s159 = smul.addr %s158, 4
        %s160 = scalar_lea.vmem %s0, %s159
      $region32: #{_lambda_.22} parent=27 // pred_fallthru
        _
    $region28: #{_lambda_.22} parent=5 // pred_fallthru
      _
    %p161 = scmp.le.s32.totalorder 1, %s10
    %p162 = scmp.lt.s32.totalorder %s10, 3
    %p163 = pnand %p161, %p162
    %p164 = pneg %p163
    // Predicated region
    $region33: #{_lambda_.22} parent=5 // pred_check
      _
    $region34: #{_lambda_.22} parent=5 // pred_check_branch
      %166 = sbr.rel (%p163) target = $region36
    $region35: #{_lambda_.22} parent=5 // pred_region
      %s167 = ssub.s32 %s10, 1
      %p168 = scmp.lt.s32.totalorder %s15, 1
      %s169 = scalar_select %p168, %s15, 1
      %s170 = smul.addr %s169, 18
      %s171 = smul.addr %s170, 4
      %s172 = scalar_lea.vmem %s0, %s171
      %p173 = pneg %p36
      %p174 = pneg %p33
      %p175 = pneg %p57
      %p176 = pneg %p54
      %p177 = pneg %p78
      %p178 = pneg %p75
      %p179 = pneg %p99
      %p180 = pneg %p96
      %p181 = pneg %p125
      %p182 = pneg %p122
      %p183 = scmp.lt.s32.totalorder %s15, 1
      %s184 = scalar_select %p183, %s15, 1
      %s185 = smul.addr %s184, 2
      %s186 = smul.addr %s185, 8
      %s187 = scalar_lea.vmem %s4, %s186
      %p188 = scmp.lt.s32.totalorder %s15, 1
      %s189 = scalar_select %p188, %s15, 1
      %s190 = smul.addr %s189, 18
      %s191 = smul.addr %s190, 4
      %s192 = scalar_lea.vmem %s0, %s191
      %p193 = scmp.lt.s32.totalorder %s15, 1
      %s194 = scalar_select %p193, %s15, 1
      %s195 = smul.addr %s194, 2
      %s196 = smul.addr %s195, 8
      %s197 = scalar_lea.vmem %s4, %s196
      %v199 = vld [vmem:[%s1] sm:$0xff]
      %v200 = vld [vmem:[%s1 + $0x8] sm:$0xff]
      %v201 = vld [vmem:[%s192] sm:$0xf]
      %v202 = vld [vmem:[%s192 + $0x4] sm:$0xf]
      %v203 = vld [vmem:[%s192 + $0x8] sm:$0xf]
      %v204 = vld [vmem:[%s192 + $0xc] sm:$0xf]
      %v205 = vld [vmem:[%s192 + $0x10] sm:$0xf]
      %v206 = vld [vmem:[%s192 + $0x14] sm:$0xf]
      %v207 = vld [vmem:[%s192 + $0x18] sm:$0xf]
      %v208 = vld [vmem:[%s192 + $0x1c] sm:$0xf]
      %v209 = vld [vmem:[%s192 + $0x20] sm:$0xf]
      %v210 = vld [vmem:[%s192 + $0x24] sm:$0xf]
      %v211 = vld [vmem:[%s192 + $0x28] sm:$0xf]
      %v212 = vld [vmem:[%s192 + $0x2c] sm:$0xf]
      %v213 = vld [vmem:[%s192 + $0x30] sm:$0xf]
      %v214 = vld [vmem:[%s192 + $0x34] sm:$0xf]
      %v215 = vld [vmem:[%s192 + $0x38] sm:$0xf]
      %v216 = vld [vmem:[%s192 + $0x3c] sm:$0xf]
      %v217 = vld [vmem:[%s192 + $0x40] sm:$0xf]
      %v218 = vld [vmem:[%s192 + $0x44] sm:$0xf]
      %v221 = vunpack.c.l.b16 %v199
      %v222 = vunpack.c.h.b16 %v199
      %v223 = vunpack.c.l.b16 %v200
      %v224 = vunpack.c.h.b16 %v200
      %v225 = vpack.c.b16 %v223, %v221
      %v226 = vpack.c.b16 %v224, %v222
      %v246 = vunpack.c.l.b16 %v201
      %v247 = vunpack.c.l.b16 %v202
      %v248 = vunpack.c.l.b16 %v203
      %v249 = vunpack.c.l.b16 %v204
      %v250 = vunpack.c.l.b16 %v205
      %v251 = vunpack.c.l.b16 %v206
      %v252 = vunpack.c.l.b16 %v207
      %v253 = vunpack.c.l.b16 %v208
      %v254 = vunpack.c.l.b16 %v209
      %v255 = vunpack.c.l.b16 %v210
      %v256 = vunpack.c.l.b16 %v211
      %v257 = vunpack.c.l.b16 %v212
      %v258 = vunpack.c.l.b16 %v213
      %v259 = vunpack.c.l.b16 %v214
      %v260 = vunpack.c.l.b16 %v215
      %v261 = vunpack.c.l.b16 %v216
      %v262 = vunpack.c.l.b16 %v217
      %v263 = vunpack.c.l.b16 %v218
      %v264 = vpack.c.b16 %v247, %v246
      %v265 = vpack.c.b16 %v249, %v248
      %v266 = vpack.c.b16 %v251, %v250
      %v267 = vpack.c.b16 %v253, %v252
      %v268 = vpack.c.b16 %v255, %v254
      %v269 = vpack.c.b16 %v257, %v256
      %v270 = vpack.c.b16 %v259, %v258
      %v271 = vpack.c.b16 %v261, %v260
      %v272 = vpack.c.b16 %v263, %v262
      %vm282 = vcmask 130048
      %v284 = vsel %vm282, %v226, 0
      %286 = vmatprep.subr.bf16.mxu0 0
      %287 = vmatpush1.bf16.msra.mxu0 %v271
      %288 = vmatprep.subr.bf16.mxu0 0
      %289 = vmatpush1.bf16.msra.mxu0 %v270
      %290 = vmatprep.subr.bf16.mxu0 0
      %291 = vmatpush1.bf16.msra.mxu0 %v269
      %292 = vmatprep.subr.bf16.mxu0 0
      %293 = vmatpush1.bf16.msra.mxu0 %v268
      %294 = vmatprep.subr.bf16.mxu0 0
      %295 = vmatpush1.bf16.msra.mxu0 %v267
      %296 = vmatprep.subr.bf16.mxu0 0
      %297 = vmatpush1.bf16.msra.mxu0 %v266
      %298 = vmatprep.subr.bf16.mxu0 0
      %299 = vmatpush1.bf16.msra.mxu0 %v265
      %300 = vmatprep.subr.bf16.mxu0 0
      %301 = vmatpush1.bf16.msra.mxu0 %v264
      %302 = vmatprep.subr.bf16.mxu0 0
      %303 = vmatpush2.bf16.msra.mxu0 0
      %304 = vmatprep.subr.bf16.mxu0 0
      %305 = vmatpush2.bf16.msra.mxu0 0
      %306 = vmatprep.subr.bf16.mxu0 0
      %307 = vmatpush2.bf16.msra.mxu0 0
      %308 = vmatprep.subr.bf16.mxu0 0
      %309 = vmatpush2.bf16.msra.mxu0 0
      %310 = vmatprep.subr.bf16.mxu0 0
      %311 = vmatpush2.bf16.msra.mxu0 0
      %312 = vmatprep.subr.bf16.mxu0 0
      %313 = vmatpush2.bf16.msra.mxu0 0
      %314 = vmatprep.subr.bf16.mxu0 0
      %315 = vmatpush2.bf16.msra.mxu0 0
      %316 = vmatprep.subr.bf16.mxu0 0
      %317 = vmatpush2.bf16.msra.mxu0 %v272
      %318 = vmatprep.mubr.bf16.mxu0 %v284
      %319 = vmatmul.mubr.bf16.gmra.mxu0 %v225
      %v320 = vpop.f32.mrf.mxu0
      %v321 = vadd.f32 0.0, %v320
      %v322 = vpop.f32.mrf.mxu0
      %v323 = vpop.f32.mrf.mxu0
      %v324 = vadd.f32 0.0, %v323
      %v325 = vpop.f32.mrf.mxu0
      %326 = vdwg.mxu0
      %v327 = vld [vmem:[%s2] sm:$0xff]
      %v328 = vld [vmem:[%s2 + $0x8] sm:$0xff]
      %v329 = vld [vmem:[%s3] sm:$0xff]
      %v330 = vld [vmem:[%s3 + $0x8] sm:$0xff]
      %vm331 = vcmask 31744
      %v332 = vsel %vm331, %v321, 0.0
      %333 = vadd.xlane.f32.xlu0 %v332
      %v334 = vpop.xlane.xlu0 %333
      %v335 = vsel %vm331, %v324, 0.0
      %336 = vadd.xlane.f32.xlu0 %v335
      %v337 = vpop.xlane.xlu0 %336
      %v338 = vrcp.pop 4.0
      %v339 = vmul.f32 %v334, %v338
      %v340 = vmul.f32 %v337, %v338
      %v341 = vsub.f32 %v321, %v339
      %v342 = vsub.f32 %v324, %v340
      %v343 = vmul.f32 %v341, %v341
      %v344 = vmul.f32 %v342, %v342
      %v345 = vsel %vm331, %v343, 0.0
      %346 = vadd.xlane.f32.xlu0 %v345
      %v347 = vpop.xlane.xlu0 %346
      %v348 = vsel %vm331, %v344, 0.0
      %349 = vadd.xlane.f32.xlu0 %v348
      %v350 = vpop.xlane.xlu0 %349
      %v351 = vmul.f32 %v347, %v338
      %v352 = vmul.f32 %v350, %v338
      %v353 = vadd.f32 %v351, 1e-05
      %v354 = vadd.f32 %v352, 1e-05
      %v355 = vrsqrt.pop %v353
      %v356 = vrsqrt.pop %v354
      %v357 = vmul.f32 %v341, %v355
      %v358 = vmul.f32 %v342, %v356
      %360 = vset.pattern.permute.xlu0 0
      %361 = vperm.xlu0 %360, %v327
      %v362 = vpop.permute.xlu0 %361
      %365 = vset.pattern.permute.xlu0 0
      %366 = vperm.xlu0 %365, %v328
      %v367 = vpop.permute.xlu0 %366
      %v369 = vmul.f32 %v357, %v362
      %v370 = vmul.f32 %v358, %v367
      %372 = vset.pattern.permute.xlu0 0
      %373 = vperm.xlu0 %372, %v329
      %v374 = vpop.permute.xlu0 %373
      %377 = vset.pattern.permute.xlu0 0
      %378 = vperm.xlu0 %377, %v330
      %v379 = vpop.permute.xlu0 %378
      %v381 = vadd.f32 %v369, %v374
      %v382 = vadd.f32 %v370, %v379
      %vm383 = vcmp.ge.f32.partialorder %v381, 0.0
      %vm384 = vcmp.ge.f32.partialorder %v382, 0.0
      %v385 = vmul.f32 %v381, 0.01
      %v386 = vmul.f32 %v382, 0.01
      %v387 = vsel %vm383, %v381, %v385
      %v388 = vsel %vm384, %v382, %v386
      %389 = vst.msk [vmem:[%s197] sm:$0xff] %vm331, %v387
      %390 = vst.msk [vmem:[%s197 + $0x8] sm:$0xff] %vm331, %v388
      %p391 = scmp.lt.s32.totalorder %s15, 1
      %s392 = scalar_select %p391, %s15, 1
      %s393 = smul.addr %s392, 2
      %s394 = smul.addr %s393, 8
      %s395 = scalar_lea.vmem %s4, %s394
      // Predicated region
      $region37: #{_lambda_.22} parent=35 // pred_check
        %p396 = pneg %p122
      $region38: #{_lambda_.22} parent=35 // pred_check_branch
        %398 = sbr.rel (%p396) target = $region40
      $region39: #{_lambda_.22} parent=35 // pred_region
        _
      $region40: #{_lambda_.22} parent=35 // pred_fallthru
        _
    $region36: #{_lambda_.22} parent=5 // pred_fallthru
      _
    %p399 = scmp.le.s32.totalorder 2, %s10
    // Predicated region
    $region41: #{_lambda_.22} parent=5 // pred_check
      %p400 = pneg %p399
    $region42: #{_lambda_.22} parent=5 // pred_check_branch
      %402 = sbr.rel (%p400) target = $region44
    $region43: #{_lambda_.22} parent=5 // pred_region
      %s403 = ssub.s32 %s10, 2
      // Predicated region
      $region45: #{_lambda_.22} parent=43 // pred_check
        %p404 = pneg %p128
      $region46: #{_lambda_.22} parent=43 // pred_check_branch
        %406 = sbr.rel (%p404) target = $region48
      $region47: #{_lambda_.22} parent=43 // pred_region
        %p407 = scmp.lt.s32.totalorder %s16, 1
        %s408 = scalar_select %p407, %s16, 1
        %s409 = smul.addr %s408, 2
        %s410 = smul.addr %s409, 8
        %s411 = scalar_lea.vmem %s4, %s410
      $region48: #{_lambda_.22} parent=43 // pred_fallthru
        _
    $region44: #{_lambda_.22} parent=5 // pred_fallthru
      _
  $region6: #{_lambda_.22} parent=0 // loop_footer
    %s14 = sadd.s32 1, %s10
  $region7: #{_lambda_.22} parent=0 // loop_footer_branch
    %9 = sbr.rel target = $region3
  $region8: #{_lambda_.22} parent=0 // loop_exit
    _

// kernel: _lambda_.24
$region0: #{_lambda_.24}
  #allocation0 [shape = 'u32[]', space=smem, size = 0x4, offset = 0x4, fixed_abs, tag = 'smem constant byte address 0x4 - core index']
  #allocation1 [shape = 'u32[144,128]{1,0:T(1,128)}', space=vmem, size = 0x12000, scoped, tag = 'internal scratch']
  %s0 = inlined_call_operand.vmem [shape: bf16[2,144,4], index: 0, kind: input, shape index: {}]
  %s1 = inlined_call_operand.vmem [shape: bf16[16,144], index: 1, kind: input, shape index: {}]
  %s2 = inlined_call_operand.vmem [shape: f32[16,1], index: 2, kind: input, shape index: {}]
  %s3 = inlined_call_operand.vmem [shape: f32[16,1], index: 3, kind: input, shape index: {}]
  %s4 = inlined_call_operand.vmem [shape: f32[2,16,4], index: 4, kind: input, shape index: {}]
  %s5 = inlined_call_operand.vmem [shape: f32[2,16,4], index: 5, kind: output, shape index: {}]
  %s6 = sld [smem:[#allocation0]]
  $region53: #{_lambda_.24} parent=0
    _
  %s8 = ssub.s32 1, %s6
  %s9 = scalar_select 0, %s8, %s6
  loop: start=0, step=1, limit=4
  $region2: #{_lambda_.24} parent=0 // loop_pre_header
    _
  $region3: #{_lambda_.24} parent=0 // loop_header
    %s11 = sphi 0, %s15
    %p12 = scmp.ge.s32.totalorder %s11, 4
    %s21 = sphi 0, %s23
    %s24 = sphi 0, %s21
    %s25 = sphi 0, %s24
    %s41 = sphi 0, %s25
    %s45 = sphi 0, %s45
    %s47 = sphi 0, %s45
    %s48 = sphi 0, %s47
    %s62 = sphi 0, %s48
    %s66 = sphi 0, %s66
    %s68 = sphi 0, %s66
    %s69 = sphi 0, %s68
    %s83 = sphi 0, %s69
    %s87 = sphi 0, %s87
    %s89 = sphi 0, %s87
    %s90 = sphi 0, %s89
    %s104 = sphi 0, %s90
    %s110 = sphi 0, %s112
    %s113 = sphi 0, %s110
    %s114 = sphi 0, %s113
    %s130 = sphi 0, %s114
    %s136 = sphi 0, %s138
    %s139 = sphi 0, %s136
    %s140 = sphi 0, %s139
    %s156 = sphi 0, %s140
  $region4: #{_lambda_.24} parent=0 // loop_header_branch
    %14 = sbr.rel (%p12) target = $region8
  $region5: #{_lambda_.24} parent=0 // loop_body
    %s16 = ssub.s32 %s11, 1
    %s17 = ssub.s32 %s11, 2
    %s18 = sadd.s32 %s11, 1
    %s19 = ssub.s32 %s11, %s18
    %p20 = scmp.eq.s32.totalorder %s19, 0
    %s22 = sadd.s32 %s21, 1
    %s23 = scalar_select %p20, %s21, %s22
    %p26 = pneg %p20
    %p27 = scmp.eq.s32.totalorder %s11, 1
    %p28 = por %p26, %p27
    %p29 = scmp.ne.s32.totalorder %s21, %s24
    %p30 = scmp.eq.s32.totalorder %s11, 0
    %p31 = por %p29, %p30
    %p32 = scmp.ne.s32.totalorder %s21, %s24
    %p33 = scmp.eq.s32.totalorder %s16, 1
    %p34 = por %p32, %p33
    %p35 = scmp.ne.s32.totalorder %s24, %s25
    %p36 = scmp.eq.s32.totalorder %s16, 0
    %p37 = por %p35, %p36
    %p38 = scmp.ne.s32.totalorder %s24, %s25
    %p39 = scmp.eq.s32.totalorder %s17, 1
    %p40 = por %p38, %p39
    %p42 = scmp.ne.s32.totalorder %s25, %s41
    %p43 = scmp.eq.s32.totalorder %s17, 0
    %p44 = por %p42, %p43
    %s46 = sadd.s32 %s45, 1
    %p49 = scmp.eq.s32.totalorder %s11, 1
    %p50 = scmp.ne.s32.totalorder %s45, %s47
    %p51 = scmp.eq.s32.totalorder %s11, 0
    %p52 = por %p50, %p51
    %p53 = scmp.ne.s32.totalorder %s45, %s47
    %p54 = scmp.eq.s32.totalorder %s16, 1
    %p55 = por %p53, %p54
    %p56 = scmp.ne.s32.totalorder %s47, %s48
    %p57 = scmp.eq.s32.totalorder %s16, 0
    %p58 = por %p56, %p57
    %p59 = scmp.ne.s32.totalorder %s47, %s48
    %p60 = scmp.eq.s32.totalorder %s17, 1
    %p61 = por %p59, %p60
    %p63 = scmp.ne.s32.totalorder %s48, %s62
    %p64 = scmp.eq.s32.totalorder %s17, 0
    %p65 = por %p63, %p64
    %s67 = sadd.s32 %s66, 1
    %p70 = scmp.eq.s32.totalorder %s11, 1
    %p71 = scmp.ne.s32.totalorder %s66, %s68
    %p72 = scmp.eq.s32.totalorder %s11, 0
    %p73 = por %p71, %p72
    %p74 = scmp.ne.s32.totalorder %s66, %s68
    %p75 = scmp.eq.s32.totalorder %s16, 1
    %p76 = por %p74, %p75
    %p77 = scmp.ne.s32.totalorder %s68, %s69
    %p78 = scmp.eq.s32.totalorder %s16, 0
    %p79 = por %p77, %p78
    %p80 = scmp.ne.s32.totalorder %s68, %s69
    %p81 = scmp.eq.s32.totalorder %s17, 1
    %p82 = por %p80, %p81
    %p84 = scmp.ne.s32.totalorder %s69, %s83
    %p85 = scmp.eq.s32.totalorder %s17, 0
    %p86 = por %p84, %p85
    %s88 = sadd.s32 %s87, 1
    %p91 = scmp.eq.s32.totalorder %s11, 1
    %p92 = scmp.ne.s32.totalorder %s87, %s89
    %p93 = scmp.eq.s32.totalorder %s11, 0
    %p94 = por %p92, %p93
    %p95 = scmp.ne.s32.totalorder %s87, %s89
    %p96 = scmp.eq.s32.totalorder %s16, 1
    %p97 = por %p95, %p96
    %p98 = scmp.ne.s32.totalorder %s89, %s90
    %p99 = scmp.eq.s32.totalorder %s16, 0
    %p100 = por %p98, %p99
    %p101 = scmp.ne.s32.totalorder %s89, %s90
    %p102 = scmp.eq.s32.totalorder %s17, 1
    %p103 = por %p101, %p102
    %p105 = scmp.ne.s32.totalorder %s90, %s104
    %p106 = scmp.eq.s32.totalorder %s17, 0
    %p107 = por %p105, %p106
    %s108 = ssub.s32 %s11, %s18
    %p109 = scmp.eq.s32.totalorder %s108, 0
    %s111 = sadd.s32 %s110, 1
    %s112 = scalar_select %p109, %s110, %s111
    %p115 = pneg %p109
    %p116 = scmp.eq.s32.totalorder %s11, 1
    %p117 = por %p115, %p116
    %p118 = scmp.ne.s32.totalorder %s110, %s113
    %p119 = scmp.eq.s32.totalorder %s11, 0
    %p120 = por %p118, %p119
    %p121 = scmp.ne.s32.totalorder %s110, %s113
    %p122 = scmp.eq.s32.totalorder %s16, 1
    %p123 = por %p121, %p122
    %p124 = scmp.ne.s32.totalorder %s113, %s114
    %p125 = scmp.eq.s32.totalorder %s16, 0
    %p126 = por %p124, %p125
    %p127 = scmp.ne.s32.totalorder %s113, %s114
    %p128 = scmp.eq.s32.totalorder %s17, 1
    %p129 = por %p127, %p128
    %p131 = scmp.ne.s32.totalorder %s114, %s130
    %p132 = scmp.eq.s32.totalorder %s17, 0
    %p133 = por %p131, %p132
    %s134 = ssub.s32 %s11, %s18
    %p135 = scmp.eq.s32.totalorder %s134, 0
    %s137 = sadd.s32 %s136, 1
    %s138 = scalar_select %p135, %s136, %s137
    %p141 = pneg %p135
    %p142 = scmp.eq.s32.totalorder %s11, 1
    %p143 = por %p141, %p142
    %p144 = scmp.ne.s32.totalorder %s136, %s139
    %p145 = scmp.eq.s32.totalorder %s11, 0
    %p146 = por %p144, %p145
    %p147 = scmp.ne.s32.totalorder %s136, %s139
    %p148 = scmp.eq.s32.totalorder %s16, 1
    %p149 = por %p147, %p148
    %p150 = scmp.ne.s32.totalorder %s139, %s140
    %p151 = scmp.eq.s32.totalorder %s16, 0
    %p152 = por %p150, %p151
    %p153 = scmp.ne.s32.totalorder %s139, %s140
    %p154 = scmp.eq.s32.totalorder %s17, 1
    %p155 = por %p153, %p154
    %p157 = scmp.ne.s32.totalorder %s140, %s156
    %p158 = scmp.eq.s32.totalorder %s17, 0
    %p159 = por %p157, %p158
    %p160 = scmp.le.s32.totalorder 1, %s11
    %p161 = scmp.lt.s32.totalorder %s11, 3
    %p162 = pnand %p160, %p161
    %p163 = pneg %p162
    // Predicated region
    $region9: #{_lambda_.24} parent=5 // pred_check
      _
    $region10: #{_lambda_.24} parent=5 // pred_check_branch
      %165 = sbr.rel (%p162) target = $region12
    $region11: #{_lambda_.24} parent=5 // pred_region
      %s166 = ssub.s32 %s11, 1
      // Predicated region
      $region13: #{_lambda_.24} parent=11 // pred_check
        %p167 = pneg %p58
      $region14: #{_lambda_.24} parent=11 // pred_check_branch
        %169 = sbr.rel (%p167) target = $region16
      $region15: #{_lambda_.24} parent=11 // pred_region
        _
      $region16: #{_lambda_.24} parent=11 // pred_fallthru
        _
      // Predicated region
      $region17: #{_lambda_.24} parent=11 // pred_check
        %p170 = pneg %p79
      $region18: #{_lambda_.24} parent=11 // pred_check_branch
        %172 = sbr.rel (%p170) target = $region20
      $region19: #{_lambda_.24} parent=11 // pred_region
        _
      $region20: #{_lambda_.24} parent=11 // pred_fallthru
        _
      // Predicated region
      $region21: #{_lambda_.24} parent=11 // pred_check
        %p173 = pneg %p100
      $region22: #{_lambda_.24} parent=11 // pred_check_branch
        %175 = sbr.rel (%p173) target = $region24
      $region23: #{_lambda_.24} parent=11 // pred_region
        _
      $region24: #{_lambda_.24} parent=11 // pred_fallthru
        _
    $region12: #{_lambda_.24} parent=5 // pred_fallthru
      _
    %p176 = scmp.lt.s32.totalorder %s11, 2
    // Predicated region
    $region25: #{_lambda_.24} parent=5 // pred_check
      %p177 = pneg %p176
    $region26: #{_lambda_.24} parent=5 // pred_check_branch
      %179 = sbr.rel (%p177) target = $region28
    $region27: #{_lambda_.24} parent=5 // pred_region
      // Predicated region
      $region29: #{_lambda_.24} parent=27 // pred_check
        %p180 = pneg %p31
      $region30: #{_lambda_.24} parent=27 // pred_check_branch
        %182 = sbr.rel (%p180) target = $region32
      $region31: #{_lambda_.24} parent=27 // pred_region
        %p183 = scmp.lt.s32.totalorder %s11, 1
        %s184 = scalar_select %p183, %s11, 1
        %s185 = smul.addr %s184, 18
        %s186 = smul.addr %s185, 4
        %s187 = scalar_lea.vmem %s0, %s186
      $region32: #{_lambda_.24} parent=27 // pred_fallthru
        _
      // Predicated region
      $region33: #{_lambda_.24} parent=27 // pred_check
        %p188 = pneg %p120
      $region34: #{_lambda_.24} parent=27 // pred_check_branch
        %190 = sbr.rel (%p188) target = $region36
      $region35: #{_lambda_.24} parent=27 // pred_region
        %p191 = scmp.lt.s32.totalorder %s11, 1
        %s192 = scalar_select %p191, %s11, 1
        %s193 = smul.addr %s192, 2
        %s194 = smul.addr %s193, 8
        %s195 = scalar_lea.vmem %s4, %s194
      $region36: #{_lambda_.24} parent=27 // pred_fallthru
        _
    $region28: #{_lambda_.24} parent=5 // pred_fallthru
      _
    %p196 = scmp.le.s32.totalorder 1, %s11
    %p197 = scmp.lt.s32.totalorder %s11, 3
    %p198 = pnand %p196, %p197
    %p199 = pneg %p198
    // Predicated region
    $region37: #{_lambda_.24} parent=5 // pred_check
      _
    $region38: #{_lambda_.24} parent=5 // pred_check_branch
      %201 = sbr.rel (%p198) target = $region40
    $region39: #{_lambda_.24} parent=5 // pred_region
      %s202 = ssub.s32 %s11, 1
      %p203 = scmp.lt.s32.totalorder %s16, 1
      %s204 = scalar_select %p203, %s16, 1
      %s205 = smul.addr %s204, 18
      %s206 = smul.addr %s205, 4
      %s207 = scalar_lea.vmem %s0, %s206
      %p208 = pneg %p37
      %p209 = pneg %p34
      %p210 = pneg %p58
      %p211 = pneg %p55
      %p212 = pneg %p79
      %p213 = pneg %p76
      %p214 = pneg %p100
      %p215 = pneg %p97
      %p216 = scmp.lt.s32.totalorder %s16, 1
      %s217 = scalar_select %p216, %s16, 1
      %s218 = smul.addr %s217, 2
      %s219 = smul.addr %s218, 8
      %s220 = scalar_lea.vmem %s4, %s219
      %p221 = pneg %p126
      %p222 = pneg %p123
      %p223 = pneg %p152
      %p224 = pneg %p149
      %p225 = scmp.lt.s32.totalorder %s16, 1
      %s226 = scalar_select %p225, %s16, 1
      %s227 = smul.addr %s226, 2
      %s228 = smul.addr %s227, 8
      %s229 = scalar_lea.vmem %s5, %s228
      %p230 = scmp.lt.s32.totalorder %s16, 1
      %s231 = scalar_select %p230, %s16, 1
      %s232 = smul.addr %s231, 18
      %s233 = smul.addr %s232, 4
      %s234 = scalar_lea.vmem %s0, %s233
      %p235 = scmp.lt.s32.totalorder %s16, 1
      %s236 = scalar_select %p235, %s16, 1
      %s237 = smul.addr %s236, 2
      %s238 = smul.addr %s237, 8
      %s239 = scalar_lea.vmem %s4, %s238
      %p240 = scmp.lt.s32.totalorder %s16, 1
      %s241 = scalar_select %p240, %s16, 1
      %s242 = smul.addr %s241, 2
      %s243 = smul.addr %s242, 8
      %s244 = scalar_lea.vmem %s5, %s243
      %v246 = vld [vmem:[%s1] sm:$0xff]
      %v247 = vld [vmem:[%s1 + $0x8] sm:$0xff]
      %v248 = vld [vmem:[%s234] sm:$0xf]
      %v249 = vld [vmem:[%s234 + $0x4] sm:$0xf]
      %v250 = vld [vmem:[%s234 + $0x8] sm:$0xf]
      %v251 = vld [vmem:[%s234 + $0xc] sm:$0xf]
      %v252 = vld [vmem:[%s234 + $0x10] sm:$0xf]
      %v253 = vld [vmem:[%s234 + $0x14] sm:$0xf]
      %v254 = vld [vmem:[%s234 + $0x18] sm:$0xf]
      %v255 = vld [vmem:[%s234 + $0x1c] sm:$0xf]
      %v256 = vld [vmem:[%s234 + $0x20] sm:$0xf]
      %v257 = vld [vmem:[%s234 + $0x24] sm:$0xf]
      %v258 = vld [vmem:[%s234 + $0x28] sm:$0xf]
      %v259 = vld [vmem:[%s234 + $0x2c] sm:$0xf]
      %v260 = vld [vmem:[%s234 + $0x30] sm:$0xf]
      %v261 = vld [vmem:[%s234 + $0x34] sm:$0xf]
      %v262 = vld [vmem:[%s234 + $0x38] sm:$0xf]
      %v263 = vld [vmem:[%s234 + $0x3c] sm:$0xf]
      %v264 = vld [vmem:[%s234 + $0x40] sm:$0xf]
      %v265 = vld [vmem:[%s234 + $0x44] sm:$0xf]
      %v268 = vunpack.c.l.b16 %v246
      %v269 = vunpack.c.h.b16 %v246
      %v270 = vunpack.c.l.b16 %v247
      %v271 = vunpack.c.h.b16 %v247
      %v272 = vpack.c.b16 %v270, %v268
      %v273 = vpack.c.b16 %v271, %v269
      %v293 = vunpack.c.l.b16 %v248
      %v294 = vunpack.c.l.b16 %v249
      %v295 = vunpack.c.l.b16 %v250
      %v296 = vunpack.c.l.b16 %v251
      %v297 = vunpack.c.l.b16 %v252
      %v298 = vunpack.c.l.b16 %v253
      %v299 = vunpack.c.l.b16 %v254
      %v300 = vunpack.c.l.b16 %v255
      %v301 = vunpack.c.l.b16 %v256
      %v302 = vunpack.c.l.b16 %v257
      %v303 = vunpack.c.l.b16 %v258
      %v304 = vunpack.c.l.b16 %v259
      %v305 = vunpack.c.l.b16 %v260
      %v306 = vunpack.c.l.b16 %v261
      %v307 = vunpack.c.l.b16 %v262
      %v308 = vunpack.c.l.b16 %v263
      %v309 = vunpack.c.l.b16 %v264
      %v310 = vunpack.c.l.b16 %v265
      %v311 = vpack.c.b16 %v294, %v293
      %v312 = vpack.c.b16 %v296, %v295
      %v313 = vpack.c.b16 %v298, %v297
      %v314 = vpack.c.b16 %v300, %v299
      %v315 = vpack.c.b16 %v302, %v301
      %v316 = vpack.c.b16 %v304, %v303
      %v317 = vpack.c.b16 %v306, %v305
      %v318 = vpack.c.b16 %v308, %v307
      %v319 = vpack.c.b16 %v310, %v309
      %vm329 = vcmask 130048
      %v331 = vsel %vm329, %v273, 0
      %333 = vmatprep.subr.bf16.mxu0 0
      %334 = vmatpush1.bf16.msra.mxu0 %v318
      %335 = vmatprep.subr.bf16.mxu0 0
      %336 = vmatpush1.bf16.msra.mxu0 %v317
      %337 = vmatprep.subr.bf16.mxu0 0
      %338 = vmatpush1.bf16.msra.mxu0 %v316
      %339 = vmatprep.subr.bf16.mxu0 0
      %340 = vmatpush1.bf16.msra.mxu0 %v315
      %341 = vmatprep.subr.bf16.mxu0 0
      %342 = vmatpush1.bf16.msra.mxu0 %v314
      %343 = vmatprep.subr.bf16.mxu0 0
      %344 = vmatpush1.bf16.msra.mxu0 %v313
      %345 = vmatprep.subr.bf16.mxu0 0
      %346 = vmatpush1.bf16.msra.mxu0 %v312
      %347 = vmatprep.subr.bf16.mxu0 0
      %348 = vmatpush1.bf16.msra.mxu0 %v311
      %349 = vmatprep.subr.bf16.mxu0 0
      %350 = vmatpush2.bf16.msra.mxu0 0
      %351 = vmatprep.subr.bf16.mxu0 0
      %352 = vmatpush2.bf16.msra.mxu0 0
      %353 = vmatprep.subr.bf16.mxu0 0
      %354 = vmatpush2.bf16.msra.mxu0 0
      %355 = vmatprep.subr.bf16.mxu0 0
      %356 = vmatpush2.bf16.msra.mxu0 0
      %357 = vmatprep.subr.bf16.mxu0 0
      %358 = vmatpush2.bf16.msra.mxu0 0
      %359 = vmatprep.subr.bf16.mxu0 0
      %360 = vmatpush2.bf16.msra.mxu0 0
      %361 = vmatprep.subr.bf16.mxu0 0
      %362 = vmatpush2.bf16.msra.mxu0 0
      %363 = vmatprep.subr.bf16.mxu0 0
      %364 = vmatpush2.bf16.msra.mxu0 %v319
      %365 = vmatprep.mubr.bf16.mxu0 %v331
      %366 = vmatmul.mubr.bf16.gmra.mxu0 %v272
      %v367 = vpop.f32.mrf.mxu0
      %v368 = vadd.f32 0.0, %v367
      %v369 = vpop.f32.mrf.mxu0
      %v370 = vpop.f32.mrf.mxu0
      %v371 = vadd.f32 0.0, %v370
      %v372 = vpop.f32.mrf.mxu0
      %373 = vdwg.mxu0
      %v374 = vld [vmem:[%s2] sm:$0xff]
      %v375 = vld [vmem:[%s2 + $0x8] sm:$0xff]
      %v376 = vld [vmem:[%s3] sm:$0xff]
      %v377 = vld [vmem:[%s3 + $0x8] sm:$0xff]
      %vm378 = vcmask 31744
      %v379 = vsel %vm378, %v368, 0.0
      %380 = vadd.xlane.f32.xlu0 %v379
      %v381 = vpop.xlane.xlu0 %380
      %v382 = vsel %vm378, %v371, 0.0
      %383 = vadd.xlane.f32.xlu0 %v382
      %v384 = vpop.xlane.xlu0 %383
      %v385 = vrcp.pop 4.0
      %v386 = vmul.f32 %v381, %v385
      %v387 = vmul.f32 %v384, %v385
      %v388 = vsub.f32 %v368, %v386
      %v389 = vsub.f32 %v371, %v387
      %v390 = vmul.f32 %v388, %v388
      %v391 = vmul.f32 %v389, %v389
      %v392 = vsel %vm378, %v390, 0.0
      %393 = vadd.xlane.f32.xlu0 %v392
      %v394 = vpop.xlane.xlu0 %393
      %v395 = vsel %vm378, %v391, 0.0
      %396 = vadd.xlane.f32.xlu0 %v395
      %v397 = vpop.xlane.xlu0 %396
      %v398 = vmul.f32 %v394, %v385
      %v399 = vmul.f32 %v397, %v385
      %v400 = vadd.f32 %v398, 1e-05
      %v401 = vadd.f32 %v399, 1e-05
      %v402 = vrsqrt.pop %v400
      %v403 = vrsqrt.pop %v401
      %v404 = vmul.f32 %v388, %v402
      %v405 = vmul.f32 %v389, %v403
      %407 = vset.pattern.permute.xlu0 0
      %408 = vperm.xlu0 %407, %v374
      %v409 = vpop.permute.xlu0 %408
      %412 = vset.pattern.permute.xlu0 0
      %413 = vperm.xlu0 %412, %v375
      %v414 = vpop.permute.xlu0 %413
      %v416 = vmul.f32 %v404, %v409
      %v417 = vmul.f32 %v405, %v414
      %419 = vset.pattern.permute.xlu0 0
      %420 = vperm.xlu0 %419, %v376
      %v421 = vpop.permute.xlu0 %420
      %424 = vset.pattern.permute.xlu0 0
      %425 = vperm.xlu0 %424, %v377
      %v426 = vpop.permute.xlu0 %425
      %v428 = vadd.f32 %v416, %v421
      %v429 = vadd.f32 %v417, %v426
      %v430 = vld [vmem:[%s239] sm:$0xff]
      %v431 = vld [vmem:[%s239 + $0x8] sm:$0xff]
      %v432 = vadd.f32 %v428, %v430
      %v433 = vadd.f32 %v429, %v431
      %vm434 = vcmp.ge.f32.partialorder %v432, 0.0
      %vm435 = vcmp.ge.f32.partialorder %v433, 0.0
      %v436 = vmul.f32 %v432, 0.01
      %v437 = vmul.f32 %v433, 0.01
      %v438 = vsel %vm434, %v432, %v436
      %v439 = vsel %vm435, %v433, %v437
      %440 = vst.msk [vmem:[%s244] sm:$0xff] %vm378, %v438
      %441 = vst.msk [vmem:[%s244 + $0x8] sm:$0xff] %vm378, %v439
      %p442 = scmp.lt.s32.totalorder %s16, 1
      %s443 = scalar_select %p442, %s16, 1
      %s444 = smul.addr %s443, 2
      %s445 = smul.addr %s444, 8
      %s446 = scalar_lea.vmem %s5, %s445
      // Predicated region
      $region41: #{_lambda_.24} parent=39 // pred_check
        %p447 = pneg %p149
      $region42: #{_lambda_.24} parent=39 // pred_check_branch
        %449 = sbr.rel (%p447) target = $region44
      $region43: #{_lambda_.24} parent=39 // pred_region
        _
      $region44: #{_lambda_.24} parent=39 // pred_fallthru
        _
    $region40: #{_lambda_.24} parent=5 // pred_fallthru
      _
    %p450 = scmp.le.s32.totalorder 2, %s11
    // Predicated region
    $region45: #{_lambda_.24} parent=5 // pred_check
      %p451 = pneg %p450
    $region46: #{_lambda_.24} parent=5 // pred_check_branch
      %453 = sbr.rel (%p451) target = $region48
    $region47: #{_lambda_.24} parent=5 // pred_region
      %s454 = ssub.s32 %s11, 2
      // Predicated region
      $region49: #{_lambda_.24} parent=47 // pred_check
        %p455 = pneg %p155
      $region50: #{_lambda_.24} parent=47 // pred_check_branch
        %457 = sbr.rel (%p455) target = $region52
      $region51: #{_lambda_.24} parent=47 // pred_region
        %p458 = scmp.lt.s32.totalorder %s17, 1
        %s459 = scalar_select %p458, %s17, 1
        %s460 = smul.addr %s459, 2
        %s461 = smul.addr %s460, 8
        %s462 = scalar_lea.vmem %s5, %s461
      $region52: #{_lambda_.24} parent=47 // pred_fallthru
        _
    $region48: #{_lambda_.24} parent=5 // pred_fallthru
      _
  $region6: #{_lambda_.24} parent=0 // loop_footer
    %s15 = sadd.s32 1, %s11
  $region7: #{_lambda_.24} parent=0 // loop_footer_branch
    %10 = sbr.rel target = $region3
  $region8: #{_lambda_.24} parent=0 // loop_exit
    _

// kernel: _lambda_.25
$region0: #{_lambda_.25}
  #allocation0 [shape = 'u32[]', space=smem, size = 0x4, offset = 0x4, fixed_abs, tag = 'smem constant byte address 0x4 - core index']
  #allocation1 [shape = 'u32[144,128]{1,0:T(1,128)}', space=vmem, size = 0x12000, scoped, tag = 'internal scratch']
  #allocation2 [shape = 'f32[7,32]{1,0:T(8,128)}', space=vmem, size = 0x1000, scoped, tag = 'scratch operand']
  #allocation3 [shape = 'f32[4,16,32]{2,1,0:T(8,128)}', space=vmem, size = 0x8000, scoped, tag = 'scratch operand']
  #allocation4 [shape = 'f32[4,16,32]{2,1,0:T(8,128)}', space=vmem, size = 0x8000, scoped, tag = 'scratch operand']
  #allocation5 [shape = 'f32[4,16,32]{2,1,0:T(8,128)}', space=vmem, size = 0x8000, scoped, tag = 'scratch operand']
  #allocation6 [shape = 'f32[4,32]{1,0:T(4,128)}', space=vmem, size = 0x800, scoped, tag = 'scratch operand']
  %s0 = inlined_call_operand.vmem [shape: f32[2,4,16], index: 0, kind: input, shape index: {}]
  %s1 = inlined_call_operand.vmem [shape: f32[1,16], index: 1, kind: input, shape index: {}]
  %s2 = inlined_call_operand.vmem [shape: f32[1,16], index: 2, kind: input, shape index: {}]
  %s3 = inlined_call_operand.vmem [shape: f32[16,64], index: 3, kind: input, shape index: {}]
  %s4 = inlined_call_operand.vmem [shape: f32[4,32], index: 4, kind: input, shape index: {}]
  %s5 = inlined_call_operand.vmem [shape: f32[1,32], index: 5, kind: input, shape index: {}]
  %s6 = inlined_call_operand.vmem [shape: f32[32,33], index: 6, kind: input, shape index: {}]
  %s7 = inlined_call_operand.vmem [shape: f32[1,32], index: 7, kind: input, shape index: {}]
  %s8 = inlined_call_operand.vmem [shape: f32[1,32], index: 8, kind: input, shape index: {}]
  %s9 = inlined_call_operand.vmem [shape: f32[16,32], index: 9, kind: input, shape index: {}]
  %s10 = inlined_call_operand.vmem [shape: f32[1,32], index: 10, kind: input, shape index: {}]
  %s11 = inlined_call_operand.vmem [shape: f32[32,16], index: 11, kind: input, shape index: {}]
  %s12 = inlined_call_operand.hbm [shape: f32[2,4,16], index: 12, kind: output, shape index: {}]
  %s13 = sld [smem:[#allocation0]]
  $region81: #{_lambda_.25} parent=0
    _
  %s15 = ssub.s32 1, %s13
  %s16 = scalar_select 0, %s15, %s13
  $region1: #{_lambda_.25} parent=0
    #allocation7 [shape = 'u8[4096]{0}', space=vmem, size = 0x1000, scoped, tag = 'output window, operand 0']
    #allocation8 [shape = 's32[2]{0}', space=sflag, size = 0x8, scoped, tag = 'scoped memory for _lambda_.25']
    %17 = vsyncpa [#allocation8], 0
    %s18 = scalar_lea.sflag [#allocation8], 1
    %19 = vsyncpa %s18, 0
    loop: start=0, step=1, limit=4
    $region2: #{_lambda_.25} parent=1 // loop_pre_header
      _
    $region3: #{_lambda_.25} parent=1 // loop_header
      %s21 = sphi 0, %s25
      %p22 = scmp.ge.s32.totalorder %s21, 4
      %s31 = sphi 0, %s33
      %s34 = sphi 0, %s31
      %s35 = sphi 0, %s34
      %s51 = sphi 0, %s35
      %s55 = sphi 0, %s55
      %s57 = sphi 0, %s55
      %s58 = sphi 0, %s57
      %s72 = sphi 0, %s58
      %s76 = sphi 0, %s76
      %s78 = sphi 0, %s76
      %s79 = sphi 0, %s78
      %s93 = sphi 0, %s79
      %s97 = sphi 0, %s97
      %s99 = sphi 0, %s97
      %s100 = sphi 0, %s99
      %s114 = sphi 0, %s100
      %s118 = sphi 0, %s118
      %s120 = sphi 0, %s118
      %s121 = sphi 0, %s120
      %s135 = sphi 0, %s121
      %s139 = sphi 0, %s139
      %s141 = sphi 0, %s139
      %s142 = sphi 0, %s141
      %s156 = sphi 0, %s142
      %s160 = sphi 0, %s160
      %s162 = sphi 0, %s160
      %s163 = sphi 0, %s162
      %s177 = sphi 0, %s163
      %s181 = sphi 0, %s181
      %s183 = sphi 0, %s181
      %s184 = sphi 0, %s183
      %s198 = sphi 0, %s184
      %s202 = sphi 0, %s202
      %s204 = sphi 0, %s202
      %s205 = sphi 0, %s204
      %s219 = sphi 0, %s205
      %s223 = sphi 0, %s223
      %s225 = sphi 0, %s223
      %s226 = sphi 0, %s225
      %s240 = sphi 0, %s226
      %s244 = sphi 0, %s244
      %s246 = sphi 0, %s244
      %s247 = sphi 0, %s246
      %s261 = sphi 0, %s247
      %s265 = sphi 0, %s265
      %s267 = sphi 0, %s265
      %s268 = sphi 0, %s267
      %s282 = sphi 0, %s268
      %s288 = sphi 0, %s290
      %s291 = sphi 0, %s288
      %s292 = sphi 0, %s291
      %s308 = sphi 0, %s292
    $region4: #{_lambda_.25} parent=1 // loop_header_branch
      %24 = sbr.rel (%p22) target = $region8
    $region5: #{_lambda_.25} parent=1 // loop_body
      %s26 = ssub.s32 %s21, 1
      %s27 = ssub.s32 %s21, 2
      %s28 = sadd.s32 %s21, 1
      %s29 = ssub.s32 %s21, %s28
      %p30 = scmp.eq.s32.totalorder %s29, 0
      %s32 = sadd.s32 %s31, 1
      %s33 = scalar_select %p30, %s31, %s32
      %p36 = pneg %p30
      %p37 = scmp.eq.s32.totalorder %s21, 1
      %p38 = por %p36, %p37
      %p39 = scmp.ne.s32.totalorder %s31, %s34
      %p40 = scmp.eq.s32.totalorder %s21, 0
      %p41 = por %p39, %p40
      %p42 = scmp.ne.s32.totalorder %s31, %s34
      %p43 = scmp.eq.s32.totalorder %s26, 1
      %p44 = por %p42, %p43
      %p45 = scmp.ne.s32.totalorder %s34, %s35
      %p46 = scmp.eq.s32.totalorder %s26, 0
      %p47 = por %p45, %p46
      %p48 = scmp.ne.s32.totalorder %s34, %s35
      %p49 = scmp.eq.s32.totalorder %s27, 1
      %p50 = por %p48, %p49
      %p52 = scmp.ne.s32.totalorder %s35, %s51
      %p53 = scmp.eq.s32.totalorder %s27, 0
      %p54 = por %p52, %p53
      %s56 = sadd.s32 %s55, 1
      %p59 = scmp.eq.s32.totalorder %s21, 1
      %p60 = scmp.ne.s32.totalorder %s55, %s57
      %p61 = scmp.eq.s32.totalorder %s21, 0
      %p62 = por %p60, %p61
      %p63 = scmp.ne.s32.totalorder %s55, %s57
      %p64 = scmp.eq.s32.totalorder %s26, 1
      %p65 = por %p63, %p64
      %p66 = scmp.ne.s32.totalorder %s57, %s58
      %p67 = scmp.eq.s32.totalorder %s26, 0
      %p68 = por %p66, %p67
      %p69 = scmp.ne.s32.totalorder %s57, %s58
      %p70 = scmp.eq.s32.totalorder %s27, 1
      %p71 = por %p69, %p70
      %p73 = scmp.ne.s32.totalorder %s58, %s72
      %p74 = scmp.eq.s32.totalorder %s27, 0
      %p75 = por %p73, %p74
      %s77 = sadd.s32 %s76, 1
      %p80 = scmp.eq.s32.totalorder %s21, 1
      %p81 = scmp.ne.s32.totalorder %s76, %s78
      %p82 = scmp.eq.s32.totalorder %s21, 0
      %p83 = por %p81, %p82
      %p84 = scmp.ne.s32.totalorder %s76, %s78
      %p85 = scmp.eq.s32.totalorder %s26, 1
      %p86 = por %p84, %p85
      %p87 = scmp.ne.s32.totalorder %s78, %s79
      %p88 = scmp.eq.s32.totalorder %s26, 0
      %p89 = por %p87, %p88
      %p90 = scmp.ne.s32.totalorder %s78, %s79
      %p91 = scmp.eq.s32.totalorder %s27, 1
      %p92 = por %p90, %p91
      %p94 = scmp.ne.s32.totalorder %s79, %s93
      %p95 = scmp.eq.s32.totalorder %s27, 0
      %p96 = por %p94, %p95
      %s98 = sadd.s32 %s97, 1
      %p101 = scmp.eq.s32.totalorder %s21, 1
      %p102 = scmp.ne.s32.totalorder %s97, %s99
      %p103 = scmp.eq.s32.totalorder %s21, 0
      %p104 = por %p102, %p103
      %p105 = scmp.ne.s32.totalorder %s97, %s99
      %p106 = scmp.eq.s32.totalorder %s26, 1
      %p107 = por %p105, %p106
      %p108 = scmp.ne.s32.totalorder %s99, %s100
      %p109 = scmp.eq.s32.totalorder %s26, 0
      %p110 = por %p108, %p109
      %p111 = scmp.ne.s32.totalorder %s99, %s100
      %p112 = scmp.eq.s32.totalorder %s27, 1
      %p113 = por %p111, %p112
      %p115 = scmp.ne.s32.totalorder %s100, %s114
      %p116 = scmp.eq.s32.totalorder %s27, 0
      %p117 = por %p115, %p116
      %s119 = sadd.s32 %s118, 1
      %p122 = scmp.eq.s32.totalorder %s21, 1
      %p123 = scmp.ne.s32.totalorder %s118, %s120
      %p124 = scmp.eq.s32.totalorder %s21, 0
      %p125 = por %p123, %p124
      %p126 = scmp.ne.s32.totalorder %s118, %s120
      %p127 = scmp.eq.s32.totalorder %s26, 1
      %p128 = por %p126, %p127
      %p129 = scmp.ne.s32.totalorder %s120, %s121
      %p130 = scmp.eq.s32.totalorder %s26, 0
      %p131 = por %p129, %p130
      %p132 = scmp.ne.s32.totalorder %s120, %s121
      %p133 = scmp.eq.s32.totalorder %s27, 1
      %p134 = por %p132, %p133
      %p136 = scmp.ne.s32.totalorder %s121, %s135
      %p137 = scmp.eq.s32.totalorder %s27, 0
      %p138 = por %p136, %p137
      %s140 = sadd.s32 %s139, 1
      %p143 = scmp.eq.s32.totalorder %s21, 1
      %p144 = scmp.ne.s32.totalorder %s139, %s141
      %p145 = scmp.eq.s32.totalorder %s21, 0
      %p146 = por %p144, %p145
      %p147 = scmp.ne.s32.totalorder %s139, %s141
      %p148 = scmp.eq.s32.totalorder %s26, 1
      %p149 = por %p147, %p148
      %p150 = scmp.ne.s32.totalorder %s141, %s142
      %p151 = scmp.eq.s32.totalorder %s26, 0
      %p152 = por %p150, %p151
      %p153 = scmp.ne.s32.totalorder %s141, %s142
      %p154 = scmp.eq.s32.totalorder %s27, 1
      %p155 = por %p153, %p154
      %p157 = scmp.ne.s32.totalorder %s142, %s156
      %p158 = scmp.eq.s32.totalorder %s27, 0
      %p159 = por %p157, %p158
      %s161 = sadd.s32 %s160, 1
      %p164 = scmp.eq.s32.totalorder %s21, 1
      %p165 = scmp.ne.s32.totalorder %s160, %s162
      %p166 = scmp.eq.s32.totalorder %s21, 0
      %p167 = por %p165, %p166
      %p168 = scmp.ne.s32.totalorder %s160, %s162
      %p169 = scmp.eq.s32.totalorder %s26, 1
      %p170 = por %p168, %p169
      %p171 = scmp.ne.s32.totalorder %s162, %s163
      %p172 = scmp.eq.s32.totalorder %s26, 0
      %p173 = por %p171, %p172
      %p174 = scmp.ne.s32.totalorder %s162, %s163
      %p175 = scmp.eq.s32.totalorder %s27, 1
      %p176 = por %p174, %p175
      %p178 = scmp.ne.s32.totalorder %s163, %s177
      %p179 = scmp.eq.s32.totalorder %s27, 0
      %p180 = por %p178, %p179
      %s182 = sadd.s32 %s181, 1
      %p185 = scmp.eq.s32.totalorder %s21, 1
      %p186 = scmp.ne.s32.totalorder %s181, %s183
      %p187 = scmp.eq.s32.totalorder %s21, 0
      %p188 = por %p186, %p187
      %p189 = scmp.ne.s32.totalorder %s181, %s183
      %p190 = scmp.eq.s32.totalorder %s26, 1
      %p191 = por %p189, %p190
      %p192 = scmp.ne.s32.totalorder %s183, %s184
      %p193 = scmp.eq.s32.totalorder %s26, 0
      %p194 = por %p192, %p193
      %p195 = scmp.ne.s32.totalorder %s183, %s184
      %p196 = scmp.eq.s32.totalorder %s27, 1
      %p197 = por %p195, %p196
      %p199 = scmp.ne.s32.totalorder %s184, %s198
      %p200 = scmp.eq.s32.totalorder %s27, 0
      %p201 = por %p199, %p200
      %s203 = sadd.s32 %s202, 1
      %p206 = scmp.eq.s32.totalorder %s21, 1
      %p207 = scmp.ne.s32.totalorder %s202, %s204
      %p208 = scmp.eq.s32.totalorder %s21, 0
      %p209 = por %p207, %p208
      %p210 = scmp.ne.s32.totalorder %s202, %s204
      %p211 = scmp.eq.s32.totalorder %s26, 1
      %p212 = por %p210, %p211
      %p213 = scmp.ne.s32.totalorder %s204, %s205
      %p214 = scmp.eq.s32.totalorder %s26, 0
      %p215 = por %p213, %p214
      %p216 = scmp.ne.s32.totalorder %s204, %s205
      %p217 = scmp.eq.s32.totalorder %s27, 1
      %p218 = por %p216, %p217
      %p220 = scmp.ne.s32.totalorder %s205, %s219
      %p221 = scmp.eq.s32.totalorder %s27, 0
      %p222 = por %p220, %p221
      %s224 = sadd.s32 %s223, 1
      %p227 = scmp.eq.s32.totalorder %s21, 1
      %p228 = scmp.ne.s32.totalorder %s223, %s225
      %p229 = scmp.eq.s32.totalorder %s21, 0
      %p230 = por %p228, %p229
      %p231 = scmp.ne.s32.totalorder %s223, %s225
      %p232 = scmp.eq.s32.totalorder %s26, 1
      %p233 = por %p231, %p232
      %p234 = scmp.ne.s32.totalorder %s225, %s226
      %p235 = scmp.eq.s32.totalorder %s26, 0
      %p236 = por %p234, %p235
      %p237 = scmp.ne.s32.totalorder %s225, %s226
      %p238 = scmp.eq.s32.totalorder %s27, 1
      %p239 = por %p237, %p238
      %p241 = scmp.ne.s32.totalorder %s226, %s240
      %p242 = scmp.eq.s32.totalorder %s27, 0
      %p243 = por %p241, %p242
      %s245 = sadd.s32 %s244, 1
      %p248 = scmp.eq.s32.totalorder %s21, 1
      %p249 = scmp.ne.s32.totalorder %s244, %s246
      %p250 = scmp.eq.s32.totalorder %s21, 0
      %p251 = por %p249, %p250
      %p252 = scmp.ne.s32.totalorder %s244, %s246
      %p253 = scmp.eq.s32.totalorder %s26, 1
      %p254 = por %p252, %p253
      %p255 = scmp.ne.s32.totalorder %s246, %s247
      %p256 = scmp.eq.s32.totalorder %s26, 0
      %p257 = por %p255, %p256
      %p258 = scmp.ne.s32.totalorder %s246, %s247
      %p259 = scmp.eq.s32.totalorder %s27, 1
      %p260 = por %p258, %p259
      %p262 = scmp.ne.s32.totalorder %s247, %s261
      %p263 = scmp.eq.s32.totalorder %s27, 0
      %p264 = por %p262, %p263
      %s266 = sadd.s32 %s265, 1
      %p269 = scmp.eq.s32.totalorder %s21, 1
      %p270 = scmp.ne.s32.totalorder %s265, %s267
      %p271 = scmp.eq.s32.totalorder %s21, 0
      %p272 = por %p270, %p271
      %p273 = scmp.ne.s32.totalorder %s265, %s267
      %p274 = scmp.eq.s32.totalorder %s26, 1
      %p275 = por %p273, %p274
      %p276 = scmp.ne.s32.totalorder %s267, %s268
      %p277 = scmp.eq.s32.totalorder %s26, 0
      %p278 = por %p276, %p277
      %p279 = scmp.ne.s32.totalorder %s267, %s268
      %p280 = scmp.eq.s32.totalorder %s27, 1
      %p281 = por %p279, %p280
      %p283 = scmp.ne.s32.totalorder %s268, %s282
      %p284 = scmp.eq.s32.totalorder %s27, 0
      %p285 = por %p283, %p284
      %s286 = ssub.s32 %s21, %s28
      %p287 = scmp.eq.s32.totalorder %s286, 0
      %s289 = sadd.s32 %s288, 1
      %s290 = scalar_select %p287, %s288, %s289
      %p293 = pneg %p287
      %p294 = scmp.eq.s32.totalorder %s21, 1
      %p295 = por %p293, %p294
      %p296 = scmp.ne.s32.totalorder %s288, %s291
      %p297 = scmp.eq.s32.totalorder %s21, 0
      %p298 = por %p296, %p297
      %p299 = scmp.ne.s32.totalorder %s288, %s291
      %p300 = scmp.eq.s32.totalorder %s26, 1
      %p301 = por %p299, %p300
      %p302 = scmp.ne.s32.totalorder %s291, %s292
      %p303 = scmp.eq.s32.totalorder %s26, 0
      %p304 = por %p302, %p303
      %p305 = scmp.ne.s32.totalorder %s291, %s292
      %p306 = scmp.eq.s32.totalorder %s27, 1
      %p307 = por %p305, %p306
      %p309 = scmp.ne.s32.totalorder %s292, %s308
      %p310 = scmp.eq.s32.totalorder %s27, 0
      %p311 = por %p309, %p310
      %p312 = scmp.le.s32.totalorder 1, %s21
      %p313 = scmp.lt.s32.totalorder %s21, 3
      %p314 = pnand %p312, %p313
      %p315 = pneg %p314
      // Predicated region
      $region9: #{_lambda_.25} parent=5 // pred_check
        _
      $region10: #{_lambda_.25} parent=5 // pred_check_branch
        %317 = sbr.rel (%p314) target = $region12
      $region11: #{_lambda_.25} parent=5 // pred_region
        %s318 = ssub.s32 %s21, 1
        // Predicated region
        $region13: #{_lambda_.25} parent=11 // pred_check
          %p319 = pneg %p68
        $region14: #{_lambda_.25} parent=11 // pred_check_branch
          %321 = sbr.rel (%p319) target = $region16
        $region15: #{_lambda_.25} parent=11 // pred_region
          _
        $region16: #{_lambda_.25} parent=11 // pred_fallthru
          _
        // Predicated region
        $region17: #{_lambda_.25} parent=11 // pred_check
          %p322 = pneg %p89
        $region18: #{_lambda_.25} parent=11 // pred_check_branch
          %324 = sbr.rel (%p322) target = $region20
        $region19: #{_lambda_.25} parent=11 // pred_region
          _
        $region20: #{_lambda_.25} parent=11 // pred_fallthru
          _
        // Predicated region
        $region21: #{_lambda_.25} parent=11 // pred_check
          %p325 = pneg %p110
        $region22: #{_lambda_.25} parent=11 // pred_check_branch
          %327 = sbr.rel (%p325) target = $region24
        $region23: #{_lambda_.25} parent=11 // pred_region
          _
        $region24: #{_lambda_.25} parent=11 // pred_fallthru
          _
        // Predicated region
        $region25: #{_lambda_.25} parent=11 // pred_check
          %p328 = pneg %p131
        $region26: #{_lambda_.25} parent=11 // pred_check_branch
          %330 = sbr.rel (%p328) target = $region28
        $region27: #{_lambda_.25} parent=11 // pred_region
          _
        $region28: #{_lambda_.25} parent=11 // pred_fallthru
          _
        // Predicated region
        $region29: #{_lambda_.25} parent=11 // pred_check
          %p331 = pneg %p152
        $region30: #{_lambda_.25} parent=11 // pred_check_branch
          %333 = sbr.rel (%p331) target = $region32
        $region31: #{_lambda_.25} parent=11 // pred_region
          _
        $region32: #{_lambda_.25} parent=11 // pred_fallthru
          _
        // Predicated region
        $region33: #{_lambda_.25} parent=11 // pred_check
          %p334 = pneg %p173
        $region34: #{_lambda_.25} parent=11 // pred_check_branch
          %336 = sbr.rel (%p334) target = $region36
        $region35: #{_lambda_.25} parent=11 // pred_region
          _
        $region36: #{_lambda_.25} parent=11 // pred_fallthru
          _
        // Predicated region
        $region37: #{_lambda_.25} parent=11 // pred_check
          %p337 = pneg %p194
        $region38: #{_lambda_.25} parent=11 // pred_check_branch
          %339 = sbr.rel (%p337) target = $region40
        $region39: #{_lambda_.25} parent=11 // pred_region
          _
        $region40: #{_lambda_.25} parent=11 // pred_fallthru
          _
        // Predicated region
        $region41: #{_lambda_.25} parent=11 // pred_check
          %p340 = pneg %p215
        $region42: #{_lambda_.25} parent=11 // pred_check_branch
          %342 = sbr.rel (%p340) target = $region44
        $region43: #{_lambda_.25} parent=11 // pred_region
          _
        $region44: #{_lambda_.25} parent=11 // pred_fallthru
          _
        // Predicated region
        $region45: #{_lambda_.25} parent=11 // pred_check
          %p343 = pneg %p236
        $region46: #{_lambda_.25} parent=11 // pred_check_branch
          %345 = sbr.rel (%p343) target = $region48
        $region47: #{_lambda_.25} parent=11 // pred_region
          _
        $region48: #{_lambda_.25} parent=11 // pred_fallthru
          _
        // Predicated region
        $region49: #{_lambda_.25} parent=11 // pred_check
          %p346 = pneg %p257
        $region50: #{_lambda_.25} parent=11 // pred_check_branch
          %348 = sbr.rel (%p346) target = $region52
        $region51: #{_lambda_.25} parent=11 // pred_region
          _
        $region52: #{_lambda_.25} parent=11 // pred_fallthru
          _
        // Predicated region
        $region53: #{_lambda_.25} parent=11 // pred_check
          %p349 = pneg %p278
        $region54: #{_lambda_.25} parent=11 // pred_check_branch
          %351 = sbr.rel (%p349) target = $region56
        $region55: #{_lambda_.25} parent=11 // pred_region
          _
        $region56: #{_lambda_.25} parent=11 // pred_fallthru
          _
      $region12: #{_lambda_.25} parent=5 // pred_fallthru
        _
      %p352 = scmp.lt.s32.totalorder %s21, 2
      // Predicated region
      $region57: #{_lambda_.25} parent=5 // pred_check
        %p353 = pneg %p352
      $region58: #{_lambda_.25} parent=5 // pred_check_branch
        %355 = sbr.rel (%p353) target = $region60
      $region59: #{_lambda_.25} parent=5 // pred_region
        // Predicated region
        $region61: #{_lambda_.25} parent=59 // pred_check
          %p356 = pneg %p41
        $region62: #{_lambda_.25} parent=59 // pred_check_branch
          %358 = sbr.rel (%p356) target = $region64
        $region63: #{_lambda_.25} parent=59 // pred_region
          %p359 = scmp.lt.s32.totalorder %s21, 1
          %s360 = scalar_select %p359, %s21, 1
          %s361 = smul.addr %s360, 4
          %s362 = scalar_lea.vmem %s0, %s361
        $region64: #{_lambda_.25} parent=59 // pred_fallthru
          _
      $region60: #{_lambda_.25} parent=5 // pred_fallthru
        _
      %p363 = scmp.le.s32.totalorder 1, %s21
      %p364 = scmp.lt.s32.totalorder %s21, 3
      %p365 = pnand %p363, %p364
      %p366 = pneg %p365
      // Predicated region
      $region65: #{_lambda_.25} parent=5 // pred_check
        _
      $region66: #{_lambda_.25} parent=5 // pred_check_branch
        %368 = sbr.rel (%p365) target = $region68
      $region67: #{_lambda_.25} parent=5 // pred_region
        %s369 = ssub.s32 %s21, 1
        %p370 = scmp.lt.s32.totalorder %s26, 1
        %s371 = scalar_select %p370, %s26, 1
        %s372 = smul.addr %s371, 4
        %s373 = scalar_lea.vmem %s0, %s372
        %p374 = pneg %p47
        %p375 = pneg %p44
        %p376 = pneg %p68
        %p377 = pneg %p65
        %p378 = pneg %p89
        %p379 = pneg %p86
        %p380 = pneg %p110
        %p381 = pneg %p107
        %p382 = pneg %p131
        %p383 = pneg %p128
        %p384 = pneg %p152
        %p385 = pneg %p149
        %p386 = pneg %p173
        %p387 = pneg %p170
        %p388 = pneg %p194
        %p389 = pneg %p191
        %p390 = pneg %p215
        %p391 = pneg %p212
        %p392 = pneg %p236
        %p393 = pneg %p233
        %p394 = pneg %p257
        %p395 = pneg %p254
        %p396 = pneg %p278
        %p397 = pneg %p275
        %p398 = pneg %p304
        %p399 = pneg %p301
        %s400 = sand.u32 %s291, 1
        %s401 = scalar_lea.sflag [#allocation8], %s400
        %s402 = sand.u32 %s291, 1
        %s403 = smul.addr %s402, 4
        %s404 = scalar_lea.vmem [#allocation7], %s403
        %p405 = scmp.lt.s32.totalorder %s26, 1
        %s406 = scalar_select %p405, %s26, 1
        %s407 = smul.addr %s406, 4
        %s408 = scalar_lea.vmem %s0, %s407
        %v409 = vld [vmem:[%s408] sm:$0xf]
        %vm410 = vcmask 125952
        %v411 = vsel %vm410, %v409, 0.0
        %412 = vadd.xlane.f32.xlu0 %v411
        %v413 = vpop.xlane.xlu0 %412
        %v414 = vrcp.pop 16.0
        %v415 = vmul.f32 %v413, %v414
        %v416 = vsub.f32 %v409, %v415
        %v417 = vmul.f32 %v416, %v416
        %v418 = vsel %vm410, %v417, 0.0
        %419 = vadd.xlane.f32.xlu0 %v418
        %v420 = vpop.xlane.xlu0 %419
        %v421 = vmul.f32 %v420, %v414
        %v422 = vadd.f32 %v421, 1e-05
        %v423 = vrsqrt.pop %v422
        %v424 = vmul.f32 %v416, %v423
        %v425 = vld [vmem:[%s1] sm:$0x1]
        %v427 = vlaneseq
        %v428 = vshrl.u32 %v427, 7
        %v429 = vsub.s32 0, %v428
        %v430 = vrot.slane %v425, %v429
        %v432 = vmul.f32 %v424, %v430
        %v433 = vld [vmem:[%s2] sm:$0x1]
        %v435 = vlaneseq
        %v436 = vshrl.u32 %v435, 7
        %v437 = vsub.s32 0, %v436
        %v438 = vrot.slane %v433, %v437
        %v440 = vadd.f32 %v432, %v438
        %v441 = vld [vmem:[%s3] sm:$0xff]
        %v442 = vld [vmem:[%s3 + $0x8] sm:$0xff]
        %vm443 = vcmask 130048
        %v445 = vsel %vm443, %v440, 0
        %447 = vmatprep.subr.mxu0 0.0
        %448 = vmatpush1.msra.mxu0 0.0
        %449 = vmatprep.subr.mxu0 0.0
        %450 = vmatpush1.msra.mxu0 0.0
        %451 = vmatprep.subr.mxu0 0.0
        %452 = vmatpush1.msra.mxu0 0.0
        %453 = vmatprep.subr.mxu0 0.0
        %454 = vmatpush1.msra.mxu0 0.0
        %455 = vmatprep.subr.mxu0 0.0
        %456 = vmatpush1.msra.mxu0 0.0
        %457 = vmatprep.subr.mxu0 0.0
        %458 = vmatpush1.msra.mxu0 0.0
        %459 = vmatprep.subr.mxu0 0.0
        %460 = vmatpush1.msra.mxu0 0.0
        %461 = vmatprep.subr.mxu0 0.0
        %462 = vmatpush1.msra.mxu0 0.0
        %463 = vmatprep.subr.mxu0 0.0
        %464 = vmatpush1.msra.mxu0 0.0
        %465 = vmatprep.subr.mxu0 0.0
        %466 = vmatpush1.msra.mxu0 0.0
        %467 = vmatprep.subr.mxu0 0.0
        %468 = vmatpush1.msra.mxu0 0.0
        %469 = vmatprep.subr.mxu0 0.0
        %470 = vmatpush1.msra.mxu0 0.0
        %471 = vmatprep.subr.mxu0 0.0
        %472 = vmatpush1.msra.mxu0 0.0
        %473 = vmatprep.subr.mxu0 0.0
        %474 = vmatpush1.msra.mxu0 0.0
        %475 = vmatprep.subr.mxu0 0.0
        %476 = vmatpush1.msra.mxu0 %v442
        %477 = vmatprep.subr.mxu0 0.0
        %478 = vmatpush1.msra.mxu0 %v441
        %479 = vmatprep.subr.mxu0 0.0
        %480 = vmatpush2.msra.mxu0 0.0
        %481 = vmatprep.subr.mxu0 0.0
        %482 = vmatpush2.msra.mxu0 0.0
        %483 = vmatprep.subr.mxu0 0.0
        %484 = vmatpush2.msra.mxu0 0.0
        %485 = vmatprep.subr.mxu0 0.0
        %486 = vmatpush2.msra.mxu0 0.0
        %487 = vmatprep.subr.mxu0 0.0
        %488 = vmatpush2.msra.mxu0 0.0
        %489 = vmatprep.subr.mxu0 0.0
        %490 = vmatpush2.msra.mxu0 0.0
        %491 = vmatprep.subr.mxu0 0.0
        %492 = vmatpush2.msra.mxu0 0.0
        %493 = vmatprep.subr.mxu0 0.0
        %494 = vmatpush2.msra.mxu0 0.0
        %495 = vmatprep.subr.mxu0 0.0
        %496 = vmatpush2.msra.mxu0 0.0
        %497 = vmatprep.subr.mxu0 0.0
        %498 = vmatpush2.msra.mxu0 0.0
        %499 = vmatprep.subr.mxu0 0.0
        %500 = vmatpush2.msra.mxu0 0.0
        %501 = vmatprep.subr.mxu0 0.0
        %502 = vmatpush2.msra.mxu0 0.0
        %503 = vmatprep.subr.mxu0 0.0
        %504 = vmatpush2.msra.mxu0 0.0
        %505 = vmatprep.subr.mxu0 0.0
        %506 = vmatpush2.msra.mxu0 0.0
        %507 = vmatprep.subr.mxu0 0.0
        %508 = vmatpush2.msra.mxu0 0.0
        %509 = vmatprep.subr.mxu0 0.0
        %510 = vmatpush2.msra.mxu0 0.0
        %511 = vmatprep.mubr.f32.mxu0 0.0
        %512 = vmatmul.mubr.f32.gmra.mxu0 %v445
        %v513 = vpop.f32.mrf.mxu0
        %v514 = vadd.f32 0.0, %v513
        %v515 = vpop.f32.mrf.mxu0
        %516 = vdwg.mxu0
        %vm517 = vcmask 260096
        %518 = vst.msk [vmem:[#allocation2] sm:$0x7f] %vm517, 0.0
        %vm519 = vcmask 257024
        %520 = vst.msk [vmem:[#allocation2 + $0x3] sm:$0xf] %vm519, %v514
        %v521 = vld [vmem:[%s4] sm:$0xf]
        %v522 = vld [vmem:[#allocation2] sm:$0xf]
        %v523 = vlaneseq
        %v524 = vshrl.u32 %v523, 7
        %v525 = vsub.s32 0, %v524
        %v526 = vrot.slane %v521, %v525
        %v527 = vmul.f32 %v522, %v526
        %v528 = vadd.f32 %v527, 0.0
        %v529 = vld [vmem:[#allocation2 + $0x1] sm:$0xf]
        %v530 = vlaneseq
        %v531 = vshrl.u32 %v530, 7
        %v532 = vsub.s32 1, %v531
        %v533 = vrot.slane %v521, %v532
        %v534 = vmul.f32 %v529, %v533
        %v535 = vadd.f32 %v528, %v534
        %v536 = vld [vmem:[#allocation2 + $0x2] sm:$0xf]
        %v537 = vlaneseq
        %v538 = vshrl.u32 %v537, 7
        %v539 = vsub.s32 2, %v538
        %v540 = vrot.slane %v521, %v539
        %v541 = vmul.f32 %v536, %v540
        %v542 = vadd.f32 %v535, %v541
        %v543 = vld [vmem:[#allocation2 + $0x3] sm:$0xf]
        %v544 = vlaneseq
        %v545 = vshrl.u32 %v544, 7
        %v546 = vsub.s32 3, %v545
        %v547 = vrot.slane %v521, %v546
        %v548 = vmul.f32 %v543, %v547
        %v549 = vadd.f32 %v542, %v548
        %v550 = vld [vmem:[%s5] sm:$0x1]
        %v552 = vlaneseq
        %v553 = vshrl.u32 %v552, 7
        %v554 = vsub.s32 0, %v553
        %v555 = vrot.slane %v550, %v554
        %v557 = vadd.f32 %v549, %v555
        %v558 = vxor.u32 %v557, 2147483648
        %v559 = vmul.f32 %v558, 1.442695
        %v560 = vpow.pop %v559
        %v561 = vadd.f32 %v560, 1.0
        %v562 = vrcp.pop %v561
        %v563 = vmul.f32 1.0, %v562
        %v564 = vmul.f32 %v557, %v563
        %v565 = vld [vmem:[%s6] sm:$0xff]
        %v566 = vld [vmem:[%s6 + $0x8] sm:$0xff]
        %v567 = vld [vmem:[%s6 + $0x10] sm:$0xff]
        %v568 = vld [vmem:[%s6 + $0x18] sm:$0xff]
        %vm569 = vcmask 261120
        %v571 = vsel %vm569, %v564, 0
        %573 = vmatprep.subr.mxu0 0.0
        %574 = vmatpush1.msra.mxu0 0.0
        %575 = vmatprep.subr.mxu0 0.0
        %576 = vmatpush1.msra.mxu0 0.0
        %577 = vmatprep.subr.mxu0 0.0
        %578 = vmatpush1.msra.mxu0 0.0
        %579 = vmatprep.subr.mxu0 0.0
        %580 = vmatpush1.msra.mxu0 0.0
        %581 = vmatprep.subr.mxu0 0.0
        %582 = vmatpush1.msra.mxu0 0.0
        %583 = vmatprep.subr.mxu0 0.0
        %584 = vmatpush1.msra.mxu0 0.0
        %585 = vmatprep.subr.mxu0 0.0
        %586 = vmatpush1.msra.mxu0 0.0
        %587 = vmatprep.subr.mxu0 0.0
        %588 = vmatpush1.msra.mxu0 0.0
        %589 = vmatprep.subr.mxu0 0.0
        %590 = vmatpush1.msra.mxu0 0.0
        %591 = vmatprep.subr.mxu0 0.0
        %592 = vmatpush1.msra.mxu0 0.0
        %593 = vmatprep.subr.mxu0 0.0
        %594 = vmatpush1.msra.mxu0 0.0
        %595 = vmatprep.subr.mxu0 0.0
        %596 = vmatpush1.msra.mxu0 0.0
        %597 = vmatprep.subr.mxu0 0.0
        %598 = vmatpush1.msra.mxu0 %v568
        %599 = vmatprep.subr.mxu0 0.0
        %600 = vmatpush1.msra.mxu0 %v567
        %601 = vmatprep.subr.mxu0 0.0
        %602 = vmatpush1.msra.mxu0 %v566
        %603 = vmatprep.subr.mxu0 0.0
        %604 = vmatpush1.msra.mxu0 %v565
        %605 = vmatprep.subr.mxu0 0.0
        %606 = vmatpush2.msra.mxu0 0.0
        %607 = vmatprep.subr.mxu0 0.0
        %608 = vmatpush2.msra.mxu0 0.0
        %609 = vmatprep.subr.mxu0 0.0
        %610 = vmatpush2.msra.mxu0 0.0
        %611 = vmatprep.subr.mxu0 0.0
        %612 = vmatpush2.msra.mxu0 0.0
        %613 = vmatprep.subr.mxu0 0.0
        %614 = vmatpush2.msra.mxu0 0.0
        %615 = vmatprep.subr.mxu0 0.0
        %616 = vmatpush2.msra.mxu0 0.0
        %617 = vmatprep.subr.mxu0 0.0
        %618 = vmatpush2.msra.mxu0 0.0
        %619 = vmatprep.subr.mxu0 0.0
        %620 = vmatpush2.msra.mxu0 0.0
        %621 = vmatprep.subr.mxu0 0.0
        %622 = vmatpush2.msra.mxu0 0.0
        %623 = vmatprep.subr.mxu0 0.0
        %624 = vmatpush2.msra.mxu0 0.0
        %625 = vmatprep.subr.mxu0 0.0
        %626 = vmatpush2.msra.mxu0 0.0
        %627 = vmatprep.subr.mxu0 0.0
        %628 = vmatpush2.msra.mxu0 0.0
        %629 = vmatprep.subr.mxu0 0.0
        %630 = vmatpush2.msra.mxu0 0.0
        %631 = vmatprep.subr.mxu0 0.0
        %632 = vmatpush2.msra.mxu0 0.0
        %633 = vmatprep.subr.mxu0 0.0
        %634 = vmatpush2.msra.mxu0 0.0
        %635 = vmatprep.subr.mxu0 0.0
        %636 = vmatpush2.msra.mxu0 0.0
        %637 = vmatprep.mubr.f32.mxu0 0.0
        %638 = vmatmul.mubr.f32.gmra.mxu0 %v571
        %v639 = vpop.f32.mrf.mxu0
        %v640 = vadd.f32 0.0, %v639
        %v641 = vpop.f32.mrf.mxu0
        %642 = vdwg.mxu0
        %v643 = vld [vmem:[%s7] sm:$0x1]
        %v644 = vld [vmem:[%s8] sm:$0x1]
        %v646 = vlaneseq
        %v647 = vshrl.u32 %v646, 7
        %v648 = vsub.s32 0, %v647
        %v649 = vrot.slane %v644, %v648
        %vm651 = vcmask 7168
        %v653 = vsel %vm651, %v640, 0
        %vm655 = vcmask 1040384
        %v657 = vsel %vm655, %v643, 0
        %659 = vmatprep.subr.mxu0 0.0
        %660 = vmatpush1.msra.mxu0 0.0
        %661 = vmatprep.subr.mxu0 0.0
        %662 = vmatpush1.msra.mxu0 0.0
        %663 = vmatprep.subr.mxu0 0.0
        %664 = vmatpush1.msra.mxu0 0.0
        %665 = vmatprep.subr.mxu0 0.0
        %666 = vmatpush1.msra.mxu0 0.0
        %667 = vmatprep.subr.mxu0 0.0
        %668 = vmatpush1.msra.mxu0 0.0
        %669 = vmatprep.subr.mxu0 0.0
        %670 = vmatpush1.msra.mxu0 0.0
        %671 = vmatprep.subr.mxu0 0.0
        %672 = vmatpush1.msra.mxu0 0.0
        %673 = vmatprep.subr.mxu0 0.0
        %674 = vmatpush1.msra.mxu0 0.0
        %675 = vmatprep.subr.mxu0 0.0
        %676 = vmatpush1.msra.mxu0 0.0
        %677 = vmatprep.subr.mxu0 0.0
        %678 = vmatpush1.msra.mxu0 0.0
        %679 = vmatprep.subr.mxu0 0.0
        %680 = vmatpush1.msra.mxu0 0.0
        %681 = vmatprep.subr.mxu0 0.0
        %682 = vmatpush1.msra.mxu0 0.0
        %683 = vmatprep.subr.mxu0 0.0
        %684 = vmatpush1.msra.mxu0 0.0
        %685 = vmatprep.subr.mxu0 0.0
        %686 = vmatpush1.msra.mxu0 0.0
        %687 = vmatprep.subr.mxu0 0.0
        %688 = vmatpush1.msra.mxu0 0.0
        %689 = vmatprep.subr.mxu0 0.0
        %690 = vmatpush1.msra.mxu0 %v657
        %691 = vmatprep.subr.mxu0 0.0
        %692 = vmatpush2.msra.mxu0 0.0
        %693 = vmatprep.subr.mxu0 0.0
        %694 = vmatpush2.msra.mxu0 0.0
        %695 = vmatprep.subr.mxu0 0.0
        %696 = vmatpush2.msra.mxu0 0.0
        %697 = vmatprep.subr.mxu0 0.0
        %698 = vmatpush2.msra.mxu0 0.0
        %699 = vmatprep.subr.mxu0 0.0
        %700 = vmatpush2.msra.mxu0 0.0
        %701 = vmatprep.subr.mxu0 0.0
        %702 = vmatpush2.msra.mxu0 0.0
        %703 = vmatprep.subr.mxu0 0.0
        %704 = vmatpush2.msra.mxu0 0.0
        %705 = vmatprep.subr.mxu0 0.0
        %706 = vmatpush2.msra.mxu0 0.0
        %707 = vmatprep.subr.mxu0 0.0
        %708 = vmatpush2.msra.mxu0 0.0
        %709 = vmatprep.subr.mxu0 0.0
        %710 = vmatpush2.msra.mxu0 0.0
        %711 = vmatprep.subr.mxu0 0.0
        %712 = vmatpush2.msra.mxu0 0.0
        %713 = vmatprep.subr.mxu0 0.0
        %714 = vmatpush2.msra.mxu0 0.0
        %715 = vmatprep.subr.mxu0 0.0
        %716 = vmatpush2.msra.mxu0 0.0
        %717 = vmatprep.subr.mxu0 0.0
        %718 = vmatpush2.msra.mxu0 0.0
        %719 = vmatprep.subr.mxu0 0.0
        %720 = vmatpush2.msra.mxu0 0.0
        %721 = vmatprep.subr.mxu0 0.0
        %722 = vmatpush2.msra.mxu0 0.0
        %723 = vmatprep.mubr.f32.mxu0 0.0
        %724 = vmatmul.mubr.f32.gmra.mxu0 %v653
        %v725 = vpop.f32.mrf.mxu0
        %v726 = vadd.f32 %v649, %v725
        %v727 = vpop.f32.mrf.mxu0
        %728 = vdwg.mxu0
        %v729 = vmax.f32 %v726, 0.0
        %vm730 = vcmp.ne.f32.partialorder %v726, %v726
        %v731 = vadd.f32 %v726, 0.0
        %v732 = vand.u32 2147483647, %v726
        %v733 = vsub.f32 0.0, %v732
        %v734 = vmul.f32 %v733, 1.442695
        %v735 = vpow.pop %v734
        %v736 = vadd.f32 %v735, 1.0
        %v737 = vlog2.pop %v736
        %v738 = vmul.f32 %v737, 0.6931472
        %v739 = vmul.f32 -0.5, %v735
        %v740 = vadd.f32 %v739, 1.0
        %v741 = vmul.f32 %v740, %v735
        %v742 = vand.u32 2147483647, %v735
        %vm743 = vcmp.lt.f32.partialorder %v742, 0.0004427343
        %v744 = vsel %vm743, %v741, %v738
        %v745 = vadd.f32 %v729, %v744
        %v746 = vsel %vm730, %v731, %v745
        %v747 = vxor.u32 %v514, 2147483648
        %v748 = vmul.f32 %v747, 1.442695
        %v749 = vpow.pop %v748
        %v750 = vadd.f32 %v749, 1.0
        %v751 = vrcp.pop %v750
        %v752 = vmul.f32 1.0, %v751
        %v753 = vmul.f32 %v514, %v752
        %v754 = vmul.f32 %v746, %v564
        %v757 = vunpack.c.l.s4 1966171168
        %v758 = vunpack.c.0.s8 %v757
        %v759 = vlaneseq
        %v760 = vshrl.u32 %v759, 7
        %v761 = vsub.s32 %v758, %v760
        %v762 = vrot.slane %v746, %v761
        %v763 = vcombine.high %v762, %v762
        %v765 = vunpack.c.l.s4 1966171168
        %v766 = vunpack.c.0.s8 %v765
        %v767 = vlaneseq
        %v768 = vshrl.u32 %v767, 7
        %v769 = vsub.s32 %v766, %v768
        %v770 = vrot.slane %v762, %v769
        %v772 = vunpack.c.l.s4 1966171168
        %v773 = vunpack.c.0.s8 %v772
        %v774 = vlaneseq
        %v775 = vshrl.u32 %v774, 7
        %v776 = vsub.s32 %v773, %v775
        %v777 = vrot.slane %v763, %v776
        %v778 = vcombine.high %v770, %v770
        %v779 = vcombine.high %v777, %v777
        %v780 = vld [vmem:[%s9] sm:$0xff]
        %v781 = vld [vmem:[%s9 + $0x8] sm:$0xff]
        %v782 = vlaneseq
        %v783 = vshrl.u32 %v782, 7
        %v784 = vsub.s32 0, %v783
        %v785 = vrot.slane %v770, %v784
        %v786 = vlaneseq
        %v787 = vshrl.u32 %v786, 7
        %v788 = vsub.s32 0, %v787
        %v789 = vrot.slane %v777, %v788
        %v790 = vlaneseq
        %v791 = vshrl.u32 %v790, 7
        %v792 = vsub.s32 0, %v791
        %v793 = vrot.slane %v778, %v792
        %v794 = vlaneseq
        %v795 = vshrl.u32 %v794, 7
        %v796 = vsub.s32 0, %v795
        %v797 = vrot.slane %v779, %v796
        %v802 = vmul.f32 %v785, %v780
        %v803 = vmul.f32 %v785, %v781
        %v804 = vmul.f32 %v789, %v780
        %v805 = vmul.f32 %v789, %v781
        %v806 = vmul.f32 %v793, %v780
        %v807 = vmul.f32 %v793, %v781
        %v808 = vmul.f32 %v797, %v780
        %v809 = vmul.f32 %v797, %v781
        %v810 = vmul.f32 %v802, 1.442695
        %v811 = vpow.pop %v810
        %v812 = vmul.f32 %v803, 1.442695
        %v813 = vpow.pop %v812
        %v814 = vmul.f32 %v804, 1.442695
        %v815 = vpow.pop %v814
        %v816 = vmul.f32 %v805, 1.442695
        %v817 = vpow.pop %v816
        %v818 = vmul.f32 %v806, 1.442695
        %v819 = vpow.pop %v818
        %v820 = vmul.f32 %v807, 1.442695
        %v821 = vpow.pop %v820
        %v822 = vmul.f32 %v808, 1.442695
        %v823 = vpow.pop %v822
        %v824 = vmul.f32 %v809, 1.442695
        %v825 = vpow.pop %v824
        %826 = vst.msk [vmem:[#allocation3] sm:$0xff] %vm569, %v811
        %827 = vst.msk [vmem:[#allocation3 + $0x8] sm:$0xff] %vm569, %v813
        %828 = vst.msk [vmem:[#allocation3 + $0x10] sm:$0xff] %vm569, %v815
        %829 = vst.msk [vmem:[#allocation3 + $0x18] sm:$0xff] %vm569, %v817
        %830 = vst.msk [vmem:[#allocation3 + $0x20] sm:$0xff] %vm569, %v819
        %831 = vst.msk [vmem:[#allocation3 + $0x28] sm:$0xff] %vm569, %v821
        %832 = vst.msk [vmem:[#allocation3 + $0x30] sm:$0xff] %vm569, %v823
        %833 = vst.msk [vmem:[#allocation3 + $0x38] sm:$0xff] %vm569, %v825
        %v834 = vlaneseq
        %v835 = vshrl.u32 %v834, 7
        %v836 = vsub.s32 0, %v835
        %v837 = vrot.slane %v640, %v836
        %s839 = sor.u32 256, 1
        %840 = vbcast.lane.b32.xlu0 %v837, %s839
        %v841 = vpop.permute.xlu0 %840
        %s843 = sor.u32 256, 9
        %844 = vbcast.lane.b32.xlu0 %v837, %s843
        %v845 = vpop.permute.xlu0 %844
        %v846 = vlaneseq
        %v847 = vshrl.u32 %v846, 7
        %v848 = vsub.s32 1, %v847
        %v849 = vrot.slane %v640, %v848
        %s851 = sor.u32 256, 1
        %852 = vbcast.lane.b32.xlu0 %v849, %s851
        %v853 = vpop.permute.xlu0 %852
        %s855 = sor.u32 256, 9
        %856 = vbcast.lane.b32.xlu0 %v849, %s855
        %v857 = vpop.permute.xlu0 %856
        %v858 = vlaneseq
        %v859 = vshrl.u32 %v858, 7
        %v860 = vsub.s32 2, %v859
        %v861 = vrot.slane %v640, %v860
        %s863 = sor.u32 256, 1
        %864 = vbcast.lane.b32.xlu0 %v861, %s863
        %v865 = vpop.permute.xlu0 %864
        %s867 = sor.u32 256, 9
        %868 = vbcast.lane.b32.xlu0 %v861, %s867
        %v869 = vpop.permute.xlu0 %868
        %v870 = vlaneseq
        %v871 = vshrl.u32 %v870, 7
        %v872 = vsub.s32 3, %v871
        %v873 = vrot.slane %v640, %v872
        %s875 = sor.u32 256, 1
        %876 = vbcast.lane.b32.xlu0 %v873, %s875
        %v877 = vpop.permute.xlu0 %876
        %s879 = sor.u32 256, 9
        %880 = vbcast.lane.b32.xlu0 %v873, %s879
        %v881 = vpop.permute.xlu0 %880
        %v884 = vunpack.c.l.s4 1966171168
        %v885 = vunpack.c.0.s8 %v884
        %v886 = vlaneseq
        %v887 = vshrl.u32 %v886, 7
        %v888 = vsub.s32 %v885, %v887
        %v889 = vrot.slane %v754, %v888
        %v890 = vcombine.high %v889, %v889
        %v892 = vunpack.c.l.s4 1966171168
        %v893 = vunpack.c.0.s8 %v892
        %v894 = vlaneseq
        %v895 = vshrl.u32 %v894, 7
        %v896 = vsub.s32 %v893, %v895
        %v897 = vrot.slane %v889, %v896
        %v899 = vunpack.c.l.s4 1966171168
        %v900 = vunpack.c.0.s8 %v899
        %v901 = vlaneseq
        %v902 = vshrl.u32 %v901, 7
        %v903 = vsub.s32 %v900, %v902
        %v904 = vrot.slane %v890, %v903
        %v905 = vcombine.high %v897, %v897
        %v906 = vcombine.high %v904, %v904
        %v907 = vlaneseq
        %v908 = vshrl.u32 %v907, 7
        %v909 = vsub.s32 0, %v908
        %v910 = vrot.slane %v897, %v909
        %v911 = vlaneseq
        %v912 = vshrl.u32 %v911, 7
        %v913 = vsub.s32 0, %v912
        %v914 = vrot.slane %v904, %v913
        %v915 = vlaneseq
        %v916 = vshrl.u32 %v915, 7
        %v917 = vsub.s32 0, %v916
        %v918 = vrot.slane %v905, %v917
        %v919 = vlaneseq
        %v920 = vshrl.u32 %v919, 7
        %v921 = vsub.s32 0, %v920
        %v922 = vrot.slane %v906, %v921
        %v927 = vmul.f32 %v841, %v910
        %v928 = vmul.f32 %v845, %v910
        %v929 = vmul.f32 %v853, %v914
        %v930 = vmul.f32 %v857, %v914
        %v931 = vmul.f32 %v865, %v918
        %v932 = vmul.f32 %v869, %v918
        %v933 = vmul.f32 %v877, %v922
        %v934 = vmul.f32 %v881, %v922
        %935 = vst.msk [vmem:[#allocation4] sm:$0xff] %vm569, %v927
        %936 = vst.msk [vmem:[#allocation4 + $0x8] sm:$0xff] %vm569, %v928
        %937 = vst.msk [vmem:[#allocation4 + $0x10] sm:$0xff] %vm569, %v929
        %938 = vst.msk [vmem:[#allocation4 + $0x18] sm:$0xff] %vm569, %v930
        %939 = vst.msk [vmem:[#allocation4 + $0x20] sm:$0xff] %vm569, %v931
        %940 = vst.msk [vmem:[#allocation4 + $0x28] sm:$0xff] %vm569, %v932
        %941 = vst.msk [vmem:[#allocation4 + $0x30] sm:$0xff] %vm569, %v933
        %942 = vst.msk [vmem:[#allocation4 + $0x38] sm:$0xff] %vm569, %v934
        %s944 = sor.u32 256, 17
        %945 = vbcast.lane.b32.xlu0 %v837, %s944
        %v946 = vpop.permute.xlu0 %945
        %s948 = sor.u32 256, 25
        %949 = vbcast.lane.b32.xlu0 %v837, %s948
        %v950 = vpop.permute.xlu0 %949
        %s952 = sor.u32 256, 17
        %953 = vbcast.lane.b32.xlu0 %v849, %s952
        %v954 = vpop.permute.xlu0 %953
        %s956 = sor.u32 256, 25
        %957 = vbcast.lane.b32.xlu0 %v849, %s956
        %v958 = vpop.permute.xlu0 %957
        %s960 = sor.u32 256, 17
        %961 = vbcast.lane.b32.xlu0 %v861, %s960
        %v962 = vpop.permute.xlu0 %961
        %s964 = sor.u32 256, 25
        %965 = vbcast.lane.b32.xlu0 %v861, %s964
        %v966 = vpop.permute.xlu0 %965
        %s968 = sor.u32 256, 17
        %969 = vbcast.lane.b32.xlu0 %v873, %s968
        %v970 = vpop.permute.xlu0 %969
        %s972 = sor.u32 256, 25
        %973 = vbcast.lane.b32.xlu0 %v873, %s972
        %v974 = vpop.permute.xlu0 %973
        %975 = vst.msk [vmem:[#allocation5] sm:$0xff] %vm569, %v946
        %976 = vst.msk [vmem:[#allocation5 + $0x8] sm:$0xff] %vm569, %v950
        %977 = vst.msk [vmem:[#allocation5 + $0x10] sm:$0xff] %vm569, %v954
        %978 = vst.msk [vmem:[#allocation5 + $0x18] sm:$0xff] %vm569, %v958
        %979 = vst.msk [vmem:[#allocation5 + $0x20] sm:$0xff] %vm569, %v962
        %980 = vst.msk [vmem:[#allocation5 + $0x28] sm:$0xff] %vm569, %v966
        %981 = vst.msk [vmem:[#allocation5 + $0x30] sm:$0xff] %vm569, %v970
        %982 = vst.msk [vmem:[#allocation5 + $0x38] sm:$0xff] %vm569, %v974
        %v983 = vld [vmem:[#allocation3] sm:$0xff]
        %v984 = vld [vmem:[#allocation3 + $0x8] sm:$0xff]
        %v985 = vmul.f32 %v983, 0.0
        %v986 = vmul.f32 %v984, 0.0
        %v987 = vld [vmem:[#allocation4] sm:$0xff]
        %v988 = vld [vmem:[#allocation4 + $0x8] sm:$0xff]
        %v989 = vadd.f32 %v985, %v987
        %v990 = vadd.f32 %v986, %v988
        %v991 = vld [vmem:[#allocation5] sm:$0xff]
        %v992 = vld [vmem:[#allocation5 + $0x8] sm:$0xff]
        %v993 = vmul.f32 %v989, %v991
        %v994 = vmul.f32 %v990, %v992
        %v995 = vsel %vm569, %v993, 0.0
        %v996 = vsel %vm569, %v994, 0.0
        %v997 = vadd.f32 %v995, %v996
        %v998 = vrot.slane %v997, 4
        %v999 = vadd.f32 %v997, %v998
        %v1000 = vrot.slane %v999, 2
        %v1001 = vadd.f32 %v999, %v1000
        %v1002 = vrot.slane %v1001, 1
        %v1003 = vadd.f32 %v1001, %v1002
        %vm1004 = vcmask 253952
        %1005 = vst.msk [vmem:[#allocation6] sm:$0x1] %vm1004, %v1003
        %s1006 = scalar_lea.vmem [#allocation3], 16
        %v1007 = vld [vmem:[%s1006] sm:$0xff]
        %v1008 = vld [vmem:[%s1006 + $0x8] sm:$0xff]
        %v1009 = vmul.f32 %v1007, %v989
        %v1010 = vmul.f32 %v1008, %v990
        %s1011 = scalar_lea.vmem [#allocation4], 16
        %v1012 = vld [vmem:[%s1011] sm:$0xff]
        %v1013 = vld [vmem:[%s1011 + $0x8] sm:$0xff]
        %v1014 = vadd.f32 %v1009, %v1012
        %v1015 = vadd.f32 %v1010, %v1013
        %s1016 = scalar_lea.vmem [#allocation5], 16
        %v1017 = vld [vmem:[%s1016] sm:$0xff]
        %v1018 = vld [vmem:[%s1016 + $0x8] sm:$0xff]
        %v1019 = vmul.f32 %v1014, %v1017
        %v1020 = vmul.f32 %v1015, %v1018
        %v1021 = vsel %vm569, %v1019, 0.0
        %v1022 = vsel %vm569, %v1020, 0.0
        %v1023 = vadd.f32 %v1021, %v1022
        %v1024 = vrot.slane %v1023, 4
        %v1025 = vadd.f32 %v1023, %v1024
        %v1026 = vrot.slane %v1025, 2
        %v1027 = vadd.f32 %v1025, %v1026
        %v1028 = vrot.slane %v1027, 1
        %v1029 = vadd.f32 %v1027, %v1028
        %1030 = vst.msk [vmem:[#allocation6 + $0x1] sm:$0x1] %vm1004, %v1029
        %s1031 = scalar_lea.vmem [#allocation3], 32
        %v1032 = vld [vmem:[%s1031] sm:$0xff]
        %v1033 = vld [vmem:[%s1031 + $0x8] sm:$0xff]
        %v1034 = vmul.f32 %v1032, %v1014
        %v1035 = vmul.f32 %v1033, %v1015
        %s1036 = scalar_lea.vmem [#allocation4], 32
        %v1037 = vld [vmem:[%s1036] sm:$0xff]
        %v1038 = vld [vmem:[%s1036 + $0x8] sm:$0xff]
        %v1039 = vadd.f32 %v1034, %v1037
        %v1040 = vadd.f32 %v1035, %v1038
        %s1041 = scalar_lea.vmem [#allocation5], 32
        %v1042 = vld [vmem:[%s1041] sm:$0xff]
        %v1043 = vld [vmem:[%s1041 + $0x8] sm:$0xff]
        %v1044 = vmul.f32 %v1039, %v1042
        %v1045 = vmul.f32 %v1040, %v1043
        %v1046 = vsel %vm569, %v1044, 0.0
        %v1047 = vsel %vm569, %v1045, 0.0
        %v1048 = vadd.f32 %v1046, %v1047
        %v1049 = vrot.slane %v1048, 4
        %v1050 = vadd.f32 %v1048, %v1049
        %v1051 = vrot.slane %v1050, 2
        %v1052 = vadd.f32 %v1050, %v1051
        %v1053 = vrot.slane %v1052, 1
        %v1054 = vadd.f32 %v1052, %v1053
        %1055 = vst.msk [vmem:[#allocation6 + $0x2] sm:$0x1] %vm1004, %v1054
        %s1056 = scalar_lea.vmem [#allocation3], 48
        %v1057 = vld [vmem:[%s1056] sm:$0xff]
        %v1058 = vld [vmem:[%s1056 + $0x8] sm:$0xff]
        %v1059 = vmul.f32 %v1057, %v1039
        %v1060 = vmul.f32 %v1058, %v1040
        %s1061 = scalar_lea.vmem [#allocation4], 48
        %v1062 = vld [vmem:[%s1061] sm:$0xff]
        %v1063 = vld [vmem:[%s1061 + $0x8] sm:$0xff]
        %v1064 = vadd.f32 %v1059, %v1062
        %v1065 = vadd.f32 %v1060, %v1063
        %s1066 = scalar_lea.vmem [#allocation5], 48
        %v1067 = vld [vmem:[%s1066] sm:$0xff]
        %v1068 = vld [vmem:[%s1066 + $0x8] sm:$0xff]
        %v1069 = vmul.f32 %v1064, %v1067
        %v1070 = vmul.f32 %v1065, %v1068
        %v1071 = vsel %vm569, %v1069, 0.0
        %v1072 = vsel %vm569, %v1070, 0.0
        %v1073 = vadd.f32 %v1071, %v1072
        %v1074 = vrot.slane %v1073, 4
        %v1075 = vadd.f32 %v1073, %v1074
        %v1076 = vrot.slane %v1075, 2
        %v1077 = vadd.f32 %v1075, %v1076
        %v1078 = vrot.slane %v1077, 1
        %v1079 = vadd.f32 %v1077, %v1078
        %1080 = vst.msk [vmem:[#allocation6 + $0x3] sm:$0x1] %vm1004, %v1079
        %v1081 = vld [vmem:[#allocation6] sm:$0xf]
        %v1082 = vld [vmem:[%s10] sm:$0x1]
        %v1084 = vlaneseq
        %v1085 = vshrl.u32 %v1084, 7
        %v1086 = vsub.s32 0, %v1085
        %v1087 = vrot.slane %v1082, %v1086
        %v1089 = vmul.f32 %v564, %v1087
        %v1090 = vadd.f32 %v1081, %v1089
        %1092 = vrot.lane.b32.xlu0 %v753, 96
        %v1093 = vpop.permute.xlu0 %1092
        %v1095 = vmul.f32 %v1090, %v1093
        %v1096 = vld [vmem:[%s11] sm:$0xff]
        %v1097 = vld [vmem:[%s11 + $0x8] sm:$0xff]
        %v1098 = vld [vmem:[%s11 + $0x10] sm:$0xff]
        %v1099 = vld [vmem:[%s11 + $0x18] sm:$0xff]
        %v1101 = vsel %vm569, %v1095, 0
        %1103 = vmatprep.subr.mxu0 0.0
        %1104 = vmatpush1.msra.mxu0 0.0
        %1105 = vmatprep.subr.mxu0 0.0
        %1106 = vmatpush1.msra.mxu0 0.0
        %1107 = vmatprep.subr.mxu0 0.0
        %1108 = vmatpush1.msra.mxu0 0.0
        %1109 = vmatprep.subr.mxu0 0.0
        %1110 = vmatpush1.msra.mxu0 0.0
        %1111 = vmatprep.subr.mxu0 0.0
        %1112 = vmatpush1.msra.mxu0 0.0
        %1113 = vmatprep.subr.mxu0 0.0
        %1114 = vmatpush1.msra.mxu0 0.0
        %1115 = vmatprep.subr.mxu0 0.0
        %1116 = vmatpush1.msra.mxu0 0.0
        %1117 = vmatprep.subr.mxu0 0.0
        %1118 = vmatpush1.msra.mxu0 0.0
        %1119 = vmatprep.subr.mxu0 0.0
        %1120 = vmatpush1.msra.mxu0 0.0
        %1121 = vmatprep.subr.mxu0 0.0
        %1122 = vmatpush1.msra.mxu0 0.0
        %1123 = vmatprep.subr.mxu0 0.0
        %1124 = vmatpush1.msra.mxu0 0.0
        %1125 = vmatprep.subr.mxu0 0.0
        %1126 = vmatpush1.msra.mxu0 0.0
        %1127 = vmatprep.subr.mxu0 0.0
        %1128 = vmatpush1.msra.mxu0 %v1099
        %1129 = vmatprep.subr.mxu0 0.0
        %1130 = vmatpush1.msra.mxu0 %v1098
        %1131 = vmatprep.subr.mxu0 0.0
        %1132 = vmatpush1.msra.mxu0 %v1097
        %1133 = vmatprep.subr.mxu0 0.0
        %1134 = vmatpush1.msra.mxu0 %v1096
        %1135 = vmatprep.subr.mxu0 0.0
        %1136 = vmatpush2.msra.mxu0 0.0
        %1137 = vmatprep.subr.mxu0 0.0
        %1138 = vmatpush2.msra.mxu0 0.0
        %1139 = vmatprep.subr.mxu0 0.0
        %1140 = vmatpush2.msra.mxu0 0.0
        %1141 = vmatprep.subr.mxu0 0.0
        %1142 = vmatpush2.msra.mxu0 0.0
        %1143 = vmatprep.subr.mxu0 0.0
        %1144 = vmatpush2.msra.mxu0 0.0
        %1145 = vmatprep.subr.mxu0 0.0
        %1146 = vmatpush2.msra.mxu0 0.0
        %1147 = vmatprep.subr.mxu0 0.0
        %1148 = vmatpush2.msra.mxu0 0.0
        %1149 = vmatprep.subr.mxu0 0.0
        %1150 = vmatpush2.msra.mxu0 0.0
        %1151 = vmatprep.subr.mxu0 0.0
        %1152 = vmatpush2.msra.mxu0 0.0
        %1153 = vmatprep.subr.mxu0 0.0
        %1154 = vmatpush2.msra.mxu0 0.0
        %1155 = vmatprep.subr.mxu0 0.0
        %1156 = vmatpush2.msra.mxu0 0.0
        %1157 = vmatprep.subr.mxu0 0.0
        %1158 = vmatpush2.msra.mxu0 0.0
        %1159 = vmatprep.subr.mxu0 0.0
        %1160 = vmatpush2.msra.mxu0 0.0
        %1161 = vmatprep.subr.mxu0 0.0
        %1162 = vmatpush2.msra.mxu0 0.0
        %1163 = vmatprep.subr.mxu0 0.0
        %1164 = vmatpush2.msra.mxu0 0.0
        %1165 = vmatprep.subr.mxu0 0.0
        %1166 = vmatpush2.msra.mxu0 0.0
        %1167 = vmatprep.mubr.f32.mxu0 0.0
        %1168 = vmatmul.mubr.f32.gmra.mxu0 %v1101
        %v1169 = vpop.f32.mrf.mxu0
        %v1170 = vadd.f32 0.0, %v1169
        %v1171 = vpop.f32.mrf.mxu0
        %1172 = vdwg.mxu0
        %1173 = vst.msk [vmem:[%s404] sm:$0xf] %vm410, %v1170
        %s1174 = sand.u32 %s291, 1
        %s1175 = scalar_lea.sflag [#allocation8], %s1174
        %s1176 = sand.u32 %s291, 1
        %s1177 = smul.addr %s1176, 4
        %s1178 = scalar_lea.vmem [#allocation7], %s1177
        // Predicated region
        $region69: #{_lambda_.25} parent=67 // pred_check
          %p1179 = pneg %p301
        $region70: #{_lambda_.25} parent=67 // pred_check_branch
          %1181 = sbr.rel (%p1179) target = $region72
        $region71: #{_lambda_.25} parent=67 // pred_region
          %s1183 = ssub.s32 64, 64
          %1184 = vsyncadd %s1175, %s1183
          %s1185 = smul.addr %s26, 64
          %s1186 = scalar_lea.hbm %s12, %s1185
          %s1188 = sshll.u32 %s1178, 4
          %s1189 = int_to_ptr.vmem [resolvable:$true] %s1188
          %1191 = dma.vmem_to_hbm [thread:$0]  %s1189, 64, %s1186, %s1175
        $region72: #{_lambda_.25} parent=67 // pred_fallthru
          _
      $region68: #{_lambda_.25} parent=5 // pred_fallthru
        _
      %p1192 = scmp.le.s32.totalorder 2, %s21
      // Predicated region
      $region73: #{_lambda_.25} parent=5 // pred_check
        %p1193 = pneg %p1192
      $region74: #{_lambda_.25} parent=5 // pred_check_branch
        %1195 = sbr.rel (%p1193) target = $region76
      $region75: #{_lambda_.25} parent=5 // pred_region
        %s1196 = ssub.s32 %s21, 2
        // Predicated region
        $region77: #{_lambda_.25} parent=75 // pred_check
          %p1197 = pneg %p307
        $region78: #{_lambda_.25} parent=75 // pred_check_branch
          %1199 = sbr.rel (%p1197) target = $region80
        $region79: #{_lambda_.25} parent=75 // pred_region
          %s1200 = sand.u32 %s292, 1
          %s1201 = scalar_lea.sflag [#allocation8], %s1200
          %s1202 = sand.u32 %s292, 1
          %s1203 = smul.addr %s1202, 4
          %s1204 = scalar_lea.vmem [#allocation7], %s1203
          %1205 = dma.done %s1201, 64
        $region80: #{_lambda_.25} parent=75 // pred_fallthru
          _
      $region76: #{_lambda_.25} parent=5 // pred_fallthru
        _
    $region6: #{_lambda_.25} parent=1 // loop_footer
      %s25 = sadd.s32 1, %s21
    $region7: #{_lambda_.25} parent=1 // loop_footer_branch
      %20 = sbr.rel target = $region3
    $region8: #{_lambda_.25} parent=1 // loop_exit
      _
    %1206 = vsyncpa [#allocation8], 1
    %s1207 = scalar_lea.sflag [#allocation8], 1
    %1208 = vsyncpa %s1207, 1

</llo_original>
